<compile_context>
chip_gen: v7x
topology: tpu7x:2x2x1
jax: 0.10.0
libtpu: 0.0.40
codegen_flags: <defaults>
</compile_context>

<pallas_src>
import functools

import jax
import jax.numpy as jnp
from jax.experimental import pallas as pl
from jax.experimental.pallas import tpu as pltpu


def _encoder_block_kernel(
    xq_ref, xkv_ref, mask_ref,
    wq_ref, wk_ref, wv_ref, wo_ref,
    g1_ref, b1_ref,
    wff1_ref, bff1_ref, wff2_ref, bff2_ref,
    g2_ref, b2_ref,
    o_ref,
    k_cache_ref, v_cache_ref,
    *, num_heads: int, d_k: int, scale: float,
):
    H = num_heads
    TQ, D = xq_ref.shape[1], xq_ref.shape[2]
    S = xkv_ref.shape[1]

    # ---- K/V projections: computed once per batch element (first q-tile) and
    # cached in VMEM scratch as (H, S, d_k) bf16.  The q grid axis is marked
    # "arbitrary" (sequential per core), so later q-tiles safely reuse the cache.
    @pl.when(pl.program_id(1) == 0)
    def _():
        xkv = xkv_ref[0]                                              # (S, D) bf16
        k = jnp.dot(xkv, wk_ref[...], preferred_element_type=jnp.float32)
        v = jnp.dot(xkv, wv_ref[...], preferred_element_type=jnp.float32)
        k_cache_ref[...] = (
            k.reshape(S, H, d_k).transpose(1, 0, 2).astype(jnp.bfloat16))
        v_cache_ref[...] = (
            v.reshape(S, H, d_k).transpose(1, 0, 2).astype(jnp.bfloat16))

    xq = xq_ref[0]                     # (TQ, D) f32 — kept f32 for the residual
    xq_b = xq.astype(jnp.bfloat16)

    # ---- Q projection (reference scales by sqrt(d_model); folded into q) ----
    q = jnp.dot(xq_b, wq_ref[...], preferred_element_type=jnp.float32) * scale
    q_h = q.reshape(TQ, H, d_k).transpose(1, 0, 2).astype(jnp.bfloat16)  # (H,TQ,dk)
    k_h = k_cache_ref[...]                                               # (H,S,dk)
    v_h = v_cache_ref[...]                                               # (H,S,dk)

    # ---- Batched multi-head attention (no per-head loop, no concat) ---------
    s = jnp.einsum("hqd,hkd->hqk", q_h, k_h,
                   preferred_element_type=jnp.float32)                   # (H,TQ,S)
    m = mask_ref[0].astype(jnp.float32)                                  # (TQ,S)
    bias = jnp.where(m == 0.0, jnp.float32(-1e30), jnp.float32(0.0))
    s = s + bias[None, :, :]
    s = s - jnp.max(s, axis=-1, keepdims=True)
    p = jnp.exp(s)
    p = p * pl.reciprocal(jnp.sum(p, axis=-1, keepdims=True), approx=False)
    # TODO(synk): attention dropout treated as identity (eval mode).

    attn_h = jnp.einsum("hqk,hkd->hqd", p.astype(jnp.bfloat16), v_h,
                        preferred_element_type=jnp.float32)              # (H,TQ,dk)
    attn = attn_h.transpose(1, 0, 2).reshape(TQ, D)
    attn = jnp.dot(attn.astype(jnp.bfloat16), wo_ref[...],
                   preferred_element_type=jnp.float32)

    # ---- Residual + LayerNorm 1 (f32) ---------------------------------------
    x1 = xq + attn
    mu1 = jnp.mean(x1, axis=-1, keepdims=True)
    xc1 = x1 - mu1
    var1 = jnp.mean(xc1 * xc1, axis=-1, keepdims=True)
    x1n = xc1 * jax.lax.rsqrt(var1 + 1e-5) * g1_ref[...] + b1_ref[...]

    # ---- FeedForward ---------------------------------------------------------
    h = jnp.dot(x1n.astype(jnp.bfloat16), wff1_ref[...],
                preferred_element_type=jnp.float32) + bff1_ref[...]
    h = jnp.maximum(h, 0.0)
    ff = jnp.dot(h.astype(jnp.bfloat16), wff2_ref[...],
                 preferred_element_type=jnp.float32) + bff2_ref[...]
    # TODO(synk): FFN dropout treated as identity (eval mode).

    # ---- Residual + LayerNorm 2 (f32) ---------------------------------------
    x2 = x1n + ff
    mu2 = jnp.mean(x2, axis=-1, keepdims=True)
    xc2 = x2 - mu2
    var2 = jnp.mean(xc2 * xc2, axis=-1, keepdims=True)
    o_ref[0] = xc2 * jax.lax.rsqrt(var2 + 1e-5) * g2_ref[...] + b2_ref[...]


def encoder_block(x, mask, params, *, num_heads: int, q_tile: int | None = None):
    """x: (B, S, D) f32; mask: (B, S, S), nonzero = keep, 0 = masked (head-shared)."""
    B, S, D = x.shape
    assert D % num_heads == 0
    d_k = D // num_heads
    d_ff = 4 * D
    scale = 1.0 / (float(D) ** 0.5)    # matches reference: divide by sqrt(d_model)
    f32b, bf16b = 4, 2

    # ---- Generation-aware VMEM budget (128 MiB on v5e/v6e, 64 MiB on v7x) ---
    try:
        vmem_cap = int(pltpu.get_tpu_info().vmem_capacity_bytes)
    except Exception:
        vmem_cap = 64 << 20
    vmem_budget = max(32 << 20, vmem_cap - (16 << 20))   # headroom for internal scratch

    # Fixed residency: single-buffered weights, bf16 K/V cache, double-buffered
    # bf16 full-sequence x, and the transient f32 K/V of the first q-tile.
    weight_bytes = 12 * D * D * bf16b + (d_ff + 5 * D) * f32b
    fixed_bytes = (weight_bytes
                   + 2 * S * D * bf16b             # K/V cache scratch
                   + 2 * S * D * bf16b             # bf16 x (K/V input), 2 buffers
                   + 2 * S * D * f32b)             # transient f32 K/V at q-tile 0

    def step_bytes(q):
        io = 2 * (2 * q * D * f32b)                # xq + out tiles, double-buffered
        io += 2 * q * S                            # int8 mask tile, double-buffered
        live = (3 * num_heads * q * S * f32b       # scores / probs / bias broadcast
                + q * d_ff * f32b                  # FFN hidden
                + 8 * q * D * f32b)                # misc (TQ, D) f32 temporaries
        return io + live

    auto = q_tile is None
    if auto:
        q_tile = min(S, 256)
    assert S % q_tile == 0, "q_tile must divide S"
    assert q_tile == S or q_tile % 8 == 0, "q_tile must be a multiple of 8 (or == S)"
    if auto:
        # Auto-shrink q_tile so the attention live set fits the VMEM budget.
        # TODO(synk): a flash-style inner-S loop would keep q_tile at 256 for
        # very long sequences instead of shrinking it.
        while (q_tile > 8 and (q_tile // 2) % 8 == 0
               and fixed_bytes + int(1.25 * step_bytes(q_tile)) > vmem_budget):
            q_tile //= 2
    nq = S // q_tile

    needed = fixed_bytes + int(1.5 * step_bytes(q_tile))
    vmem_limit = min(vmem_budget, max(32 << 20, needed))

    # Compact head-shared mask (int8) — additive bias is built in-kernel.
    mask_i8 = (mask != 0).astype(jnp.int8)
    # bf16 K/V input: halves its HBM traffic and VMEM residency.
    x_kv = x.astype(jnp.bfloat16)

    kern = functools.partial(_encoder_block_kernel,
                             num_heads=num_heads, d_k=d_k, scale=scale)

    def const_spec(shape):
        # Constant operands: single-buffered (their block index never changes,
        # so double-buffering only wastes VMEM).
        n = len(shape)
        return pl.BlockSpec(shape, lambda b, q, _n=n: (0,) * _n,
                            pipeline_mode=pl.Buffered(1))

    in_specs = [
        pl.BlockSpec((1, q_tile, D), lambda b, q: (b, q, 0)),   # x query tile (f32)
        pl.BlockSpec((1, S, D),      lambda b, q: (b, 0, 0)),   # x full seq (bf16)
        pl.BlockSpec((1, q_tile, S), lambda b, q: (b, q, 0)),   # mask tile (int8)
        const_spec((D, D)),       # Wq  (in, out) bf16
        const_spec((D, D)),       # Wk
        const_spec((D, D)),       # Wv
        const_spec((D, D)),       # Wo
        const_spec((1, D)),       # ln_1 gamma (f32)
        const_spec((1, D)),       # ln_1 beta
        const_spec((D, d_ff)),    # FFN W1 bf16
        const_spec((1, d_ff)),    # FFN b1 (f32)
        const_spec((d_ff, D)),    # FFN W2 bf16
        const_spec((1, D)),       # FFN b2 (f32)
        const_spec((1, D)),       # ln_2 gamma
        const_spec((1, D)),       # ln_2 beta
    ]
    out_spec = pl.BlockSpec((1, q_tile, D), lambda b, q: (b, q, 0))

    # ---- Cost hint (K/V are computed once per batch element, not per q-tile) -
    flops = B * (24 * S * D * D + 4 * S * S * D)
    transcendentals = B * num_heads * S * S + 4 * B * S
    bytes_accessed = (B * S * D * (f32b + bf16b + f32b)   # x f32 in, x bf16 in, out
                      + B * S * S                          # int8 mask
                      + weight_bytes)

    return pl.pallas_call(
        kern,
        out_shape=jax.ShapeDtypeStruct((B, S, D), jnp.float32),
        grid_spec=pltpu.PrefetchScalarGridSpec(
            num_scalar_prefetch=0,
            grid=(B, nq),
            in_specs=in_specs,
            out_specs=out_spec,
            scratch_shapes=[
                pltpu.VMEM((num_heads, S, d_k), jnp.bfloat16),   # K cache
                pltpu.VMEM((num_heads, S, d_k), jnp.bfloat16),   # V cache
            ],
        ),
        compiler_params=pltpu.CompilerParams(
            # q axis must run sequentially ("arbitrary") so the K/V cache written
            # on q-tile 0 is valid for later q-tiles; batch stays parallel
            # (megacore sharding on v7x).
            dimension_semantics=("parallel", "arbitrary"),
            vmem_limit_bytes=int(vmem_limit),
        ),
        cost_estimate=pl.CostEstimate(
            flops=int(flops),
            transcendentals=int(transcendentals),
            bytes_accessed=int(bytes_accessed),
        ),
    )(
        x, x_kv, mask_i8,
        params["wq"], params["wk"], params["wv"], params["wo"],
        params["ln1_g"], params["ln1_b"],
        params["ff_w1"], params["ff_b1"], params["ff_w2"], params["ff_b2"],
        params["ln2_g"], params["ln2_b"],
    )


def init_params(key, d_model: int):
    """Deterministic synthetic parameters (shapes match the PyTorch module).

    nn.Linear stores (out, in); we keep (in, out) so the kernel does x @ W.
    Matmul weights are stored in bf16 (MXU operands); biases / LN params in f32.
    """
    d_ff = 4 * d_model
    ks = jax.random.split(key, 8)
    s = 0.02

    def w(k, shape):
        return (s * jax.random.normal(k, shape, jnp.float32)).astype(jnp.bfloat16)

    return {
        "wq": w(ks[0], (d_model, d_model)),
        "wk": w(ks[1], (d_model, d_model)),
        "wv": w(ks[2], (d_model, d_model)),
        "wo": w(ks[3], (d_model, d_model)),
        "ln1_g": jnp.ones((1, d_model), jnp.float32),
        "ln1_b": jnp.zeros((1, d_model), jnp.float32),
        "ff_w1": w(ks[4], (d_model, d_ff)),
        "ff_b1": s * jax.random.normal(ks[5], (1, d_ff), jnp.float32),
        "ff_w2": w(ks[6], (d_ff, d_model)),
        "ff_b2": s * jax.random.normal(ks[7], (1, d_model), jnp.float32),
        "ln2_g": jnp.ones((1, d_model), jnp.float32),
        "ln2_b": jnp.zeros((1, d_model), jnp.float32),
    }


def encoder_block_ref(x, mask, params, *, num_heads: int):
    """Pure-JAX f32 reference mirroring the PyTorch EncoderBlock forward."""
    B, S, D = x.shape
    H = num_heads
    d_k = D // H
    f32 = lambda a: a.astype(jnp.float32)

    q = x @ f32(params["wq"])
    k = x @ f32(params["wk"])
    v = x @ f32(params["wv"])
    qh = q.reshape(B, S, H, d_k).transpose(0, 2, 1, 3)
    kh = k.reshape(B, S, H, d_k).transpose(0, 2, 1, 3)
    vh = v.reshape(B, S, H, d_k).transpose(0, 2, 1, 3)
    s = jnp.einsum("bhqd,bhkd->bhqk", qh, kh) / (float(D) ** 0.5)
    s = jnp.where(mask[:, None, :, :] == 0, -1e30, s)
    p = jax.nn.softmax(s, axis=-1)
    attn = jnp.einsum("bhqk,bhkd->bhqd", p, vh).transpose(0, 2, 1, 3).reshape(B, S, D)
    attn = attn @ f32(params["wo"])

    def ln(z, g, b):
        mu = jnp.mean(z, axis=-1, keepdims=True)
        var = jnp.mean((z - mu) ** 2, axis=-1, keepdims=True)
        return (z - mu) * jax.lax.rsqrt(var + 1e-5) * g + b

    x1 = ln(x + attn, params["ln1_g"], params["ln1_b"])
    h = jnp.maximum(x1 @ f32(params["ff_w1"]) + params["ff_b1"], 0.0)
    ff = h @ f32(params["ff_w2"]) + params["ff_b2"]
    return ln(x1 + ff, params["ln2_g"], params["ln2_b"])


if __name__ == "__main__":
    # Small lane/tile-friendly shapes: D multiple of 128, d_k = 128, S multiple
    # of 128 so the int8 mask block is natively tiled; q_tile=64 gives nq=2 so
    # the K/V-cache reuse path (q-tile > 0) is exercised.
    B, S, D, H = 2, 128, 256, 2

    key = jax.random.PRNGKey(0)
    kx, kp = jax.random.split(key)

    x = jax.random.normal(kx, (B, S, D), jnp.float32)
    # Causal-style mask (1 = keep, 0 = masked), shared across heads.
    causal = jnp.tril(jnp.ones((S, S), jnp.float32))
    mask = jnp.broadcast_to(causal, (B, S, S))

    params = init_params(kp, D)

    out = encoder_block(x, mask, params, num_heads=H, q_tile=64)
    out = jax.block_until_ready(out)
    assert out.shape == (B, S, D)
    assert bool(jnp.all(jnp.isfinite(out)))

    # Loose tolerance: kernel runs matmuls with bf16 operands (f32 accumulation).
    ref = encoder_block_ref(x, mask, params, num_heads=H)
    err = float(jnp.max(jnp.abs(out - ref)))
    assert err < 1e-1, f"max abs error vs reference: {err}"

    print("KERNEL_OK")
</pallas_src>

<mosaic_0001>
module attributes {stable_mosaic.version = 11 : i64} {
  func.func @_encoder_block_kernel(%arg0: i32, %arg1: i32, %arg2: memref<1x64x256xf32, #tpu.memory_space<vmem>>, %arg3: memref<1x128x256xbf16, #tpu.memory_space<vmem>>, %arg4: memref<1x64x128xi8, #tpu.memory_space<vmem>>, %arg5: memref<256x256xbf16, #tpu.memory_space<vmem>>, %arg6: memref<256x256xbf16, #tpu.memory_space<vmem>>, %arg7: memref<256x256xbf16, #tpu.memory_space<vmem>>, %arg8: memref<256x256xbf16, #tpu.memory_space<vmem>>, %arg9: memref<1x256xf32, #tpu.memory_space<vmem>>, %arg10: memref<1x256xf32, #tpu.memory_space<vmem>>, %arg11: memref<256x1024xbf16, #tpu.memory_space<vmem>>, %arg12: memref<1x1024xf32, #tpu.memory_space<vmem>>, %arg13: memref<1024x256xbf16, #tpu.memory_space<vmem>>, %arg14: memref<1x256xf32, #tpu.memory_space<vmem>>, %arg15: memref<1x256xf32, #tpu.memory_space<vmem>>, %arg16: memref<1x256xf32, #tpu.memory_space<vmem>>, %arg17: memref<1x64x256xf32, #tpu.memory_space<vmem>>, %arg18: memref<2x128x128xbf16, #tpu.memory_space<vmem>>, %arg19: memref<2x128x128xbf16, #tpu.memory_space<vmem>>) attributes {dimension_semantics = [#tpu.dimension_semantics<parallel>, #tpu.dimension_semantics<arbitrary>], iteration_bounds = array<i64: 2, 2>, scalar_prefetch = 0 : i64, scratch_operands = 2 : i64, tpu.core_type = #tpu.core_type<tc>, window_params = [{transform_indices = @transform_0, window_bounds = array<i64: 1, 64, 256>}, {transform_indices = @transform_1, window_bounds = array<i64: 1, 128, 256>}, {transform_indices = @transform_2, window_bounds = array<i64: 1, 64, 128>}, {pipeline_mode = #tpu.pipeline_mode<synchronous>, transform_indices = @transform_3, window_bounds = array<i64: 256, 256>}, {pipeline_mode = #tpu.pipeline_mode<synchronous>, transform_indices = @transform_4, window_bounds = array<i64: 256, 256>}, {pipeline_mode = #tpu.pipeline_mode<synchronous>, transform_indices = @transform_5, window_bounds = array<i64: 256, 256>}, {pipeline_mode = #tpu.pipeline_mode<synchronous>, transform_indices = @transform_6, window_bounds = array<i64: 256, 256>}, {pipeline_mode = #tpu.pipeline_mode<synchronous>, transform_indices = @transform_7, window_bounds = array<i64: 1, 256>}, {pipeline_mode = #tpu.pipeline_mode<synchronous>, transform_indices = @transform_8, window_bounds = array<i64: 1, 256>}, {pipeline_mode = #tpu.pipeline_mode<synchronous>, transform_indices = @transform_9, window_bounds = array<i64: 256, 1024>}, {pipeline_mode = #tpu.pipeline_mode<synchronous>, transform_indices = @transform_10, window_bounds = array<i64: 1, 1024>}, {pipeline_mode = #tpu.pipeline_mode<synchronous>, transform_indices = @transform_11, window_bounds = array<i64: 1024, 256>}, {pipeline_mode = #tpu.pipeline_mode<synchronous>, transform_indices = @transform_12, window_bounds = array<i64: 1, 256>}, {pipeline_mode = #tpu.pipeline_mode<synchronous>, transform_indices = @transform_13, window_bounds = array<i64: 1, 256>}, {pipeline_mode = #tpu.pipeline_mode<synchronous>, transform_indices = @transform_14, window_bounds = array<i64: 1, 256>}, {transform_indices = @transform_15, window_bounds = array<i64: 1, 64, 256>}]} {
    %c0_i32 = arith.constant 0 : i32
    %0 = arith.cmpi eq, %arg1, %c0_i32 : i32
    %1 = arith.extui %0 : i1 to i32
    %c0_i32_0 = arith.constant 0 : i32
    %2 = arith.cmpi ne, %1, %c0_i32_0 : i32
    scf.if %2 {
      %c0_57 = arith.constant 0 : index
      %c0_58 = arith.constant 0 : index
      %c0_59 = arith.constant 0 : index
      %107 = vector.load %arg3[%c0_57, %c0_58, %c0_59] : memref<1x128x256xbf16, #tpu.memory_space<vmem>>, vector<1x128x256xbf16>
      %108 = vector.shape_cast %107 : vector<1x128x256xbf16> to vector<128x256xbf16>
      %c0_60 = arith.constant 0 : index
      %c0_61 = arith.constant 0 : index
      %109 = vector.load %arg6[%c0_60, %c0_61] : memref<256x256xbf16, #tpu.memory_space<vmem>>, vector<256x256xbf16>
      %cst_62 = arith.constant dense<0.000000e+00> : vector<128x256xf32>
      %110 = tpu.matmul %108, %109, %cst_62 {dimension_numbers = #tpu.dot_dimension_numbers<[1], [0], [0], [1], [0, 0, 1, 1], [], []>} : vector<128x256xbf16>, vector<256x256xbf16>, vector<128x256xf32> -> vector<128x256xf32>
      %c0_63 = arith.constant 0 : index
      %c0_64 = arith.constant 0 : index
      %111 = vector.load %arg7[%c0_63, %c0_64] : memref<256x256xbf16, #tpu.memory_space<vmem>>, vector<256x256xbf16>
      %cst_65 = arith.constant dense<0.000000e+00> : vector<128x256xf32>
      %112 = tpu.matmul %108, %111, %cst_65 {dimension_numbers = #tpu.dot_dimension_numbers<[1], [0], [0], [1], [0, 0, 1, 1], [], []>} : vector<128x256xbf16>, vector<256x256xbf16>, vector<128x256xf32> -> vector<128x256xf32>
      %113 = vector.shape_cast %110 : vector<128x256xf32> to vector<128x2x128xf32>
      %114 = tpu.transpose %113, [1, 0, 2] : vector<128x2x128xf32> -> vector<2x128x128xf32>
      %115 = arith.truncf %114 : vector<2x128x128xf32> to vector<2x128x128xbf16>
      %c0_66 = arith.constant 0 : index
      %c0_67 = arith.constant 0 : index
      %c0_68 = arith.constant 0 : index
      %116 = vector.load %arg18[%c0_66, %c0_67, %c0_68] : memref<2x128x128xbf16, #tpu.memory_space<vmem>>, vector<2x128x128xbf16>
      tpu.vector_store %arg18[%c0_66, %c0_67, %c0_68], %115 {strides = array<i32>} : memref<2x128x128xbf16, #tpu.memory_space<vmem>>, vector<2x128x128xbf16>,
      %117 = vector.shape_cast %112 : vector<128x256xf32> to vector<128x2x128xf32>
      %118 = tpu.transpose %117, [1, 0, 2] : vector<128x2x128xf32> -> vector<2x128x128xf32>
      %119 = arith.truncf %118 : vector<2x128x128xf32> to vector<2x128x128xbf16>
      %c0_69 = arith.constant 0 : index
      %c0_70 = arith.constant 0 : index
      %c0_71 = arith.constant 0 : index
      %120 = vector.load %arg19[%c0_69, %c0_70, %c0_71] : memref<2x128x128xbf16, #tpu.memory_space<vmem>>, vector<2x128x128xbf16>
      tpu.vector_store %arg19[%c0_69, %c0_70, %c0_71], %119 {strides = array<i32>} : memref<2x128x128xbf16, #tpu.memory_space<vmem>>, vector<2x128x128xbf16>,
    } else {
    }
    %c0 = arith.constant 0 : index
    %c0_1 = arith.constant 0 : index
    %c0_2 = arith.constant 0 : index
    %3 = vector.load %arg2[%c0, %c0_1, %c0_2] : memref<1x64x256xf32, #tpu.memory_space<vmem>>, vector<1x64x256xf32>
    %4 = vector.shape_cast %3 : vector<1x64x256xf32> to vector<64x256xf32>
    %5 = arith.truncf %4 : vector<64x256xf32> to vector<64x256xbf16>
    %c0_3 = arith.constant 0 : index
    %c0_4 = arith.constant 0 : index
    %6 = vector.load %arg5[%c0_3, %c0_4] : memref<256x256xbf16, #tpu.memory_space<vmem>>, vector<256x256xbf16>
    %cst = arith.constant dense<0.000000e+00> : vector<64x256xf32>
    %7 = tpu.matmul %5, %6, %cst {dimension_numbers = #tpu.dot_dimension_numbers<[1], [0], [0], [1], [0, 0, 1, 1], [], []>} : vector<64x256xbf16>, vector<256x256xbf16>, vector<64x256xf32> -> vector<64x256xf32>
    %cst_5 = arith.constant 6.250000e-02 : f32
    %8 = vector.broadcast %cst_5 : f32 to vector<64x256xf32>
    %9 = arith.mulf %7, %8 : vector<64x256xf32>
    %10 = vector.shape_cast %9 : vector<64x256xf32> to vector<64x2x128xf32>
    %11 = tpu.transpose %10, [1, 0, 2] : vector<64x2x128xf32> -> vector<2x64x128xf32>
    %12 = arith.truncf %11 : vector<2x64x128xf32> to vector<2x64x128xbf16>
    %c0_6 = arith.constant 0 : index
    %c0_7 = arith.constant 0 : index
    %c0_8 = arith.constant 0 : index
    %13 = vector.load %arg18[%c0_6, %c0_7, %c0_8] : memref<2x128x128xbf16, #tpu.memory_space<vmem>>, vector<2x128x128xbf16>
    %c0_9 = arith.constant 0 : index
    %c0_10 = arith.constant 0 : index
    %c0_11 = arith.constant 0 : index
    %14 = vector.load %arg19[%c0_9, %c0_10, %c0_11] : memref<2x128x128xbf16, #tpu.memory_space<vmem>>, vector<2x128x128xbf16>
    "tpu.trace_start"() <{level = 10 : i32, message = "hqd,hkd->hqk"}> : () -> ()
    %cst_12 = arith.constant dense<0.000000e+00> : vector<2x64x128xf32>
    %15 = tpu.matmul %12, %13, %cst_12 {dimension_numbers = #tpu.dot_dimension_numbers<[2], [2], [1], [1], [0, 0, 0, 1, 1, 1], [0], [0]>} : vector<2x64x128xbf16>, vector<2x128x128xbf16>, vector<2x64x128xf32> -> vector<2x64x128xf32>
    "tpu.trace_stop"() : () -> ()
    %c0_13 = arith.constant 0 : index
    %c0_14 = arith.constant 0 : index
    %c0_15 = arith.constant 0 : index
    %16 = vector.load %arg4[%c0_13, %c0_14, %c0_15] : memref<1x64x128xi8, #tpu.memory_space<vmem>>, vector<1x64x128xi8>
    %17 = vector.shape_cast %16 : vector<1x64x128xi8> to vector<64x128xi8>
    %18 = arith.sitofp %17 : vector<64x128xi8> to vector<64x128xf32>
    %cst_16 = arith.constant 0.000000e+00 : f32
    %19 = vector.broadcast %cst_16 : f32 to vector<64x128xf32>
    %20 = arith.cmpf oeq, %18, %19 : vector<64x128xf32>
    %cst_17 = arith.constant -1.000000e+30 : f32
    %cst_18 = arith.constant 0.000000e+00 : f32
    %21 = vector.broadcast %cst_17 : f32 to vector<64x128xf32>
    %22 = vector.broadcast %cst_18 : f32 to vector<64x128xf32>
    %23 = arith.select %20, %21, %22 : vector<64x128xi1>, vector<64x128xf32>
    %24 = vector.shape_cast %23 : vector<64x128xf32> to vector<1x64x128xf32>
    %25 = vector.broadcast %24 : vector<1x64x128xf32> to vector<2x64x128xf32>
    %26 = arith.addf %15, %25 : vector<2x64x128xf32>
    %cst_19 = arith.constant dense<0xFF800000> : vector<2x64xf32>
    %27 = vector.multi_reduction <maximumf>, %26, %cst_19 [2] : vector<2x64x128xf32> to vector<2x64xf32>
    %28 = vector.shape_cast %27 : vector<2x64xf32> to vector<2x64x1xf32>
    %29 = vector.broadcast %28 : vector<2x64x1xf32> to vector<2x64x128xf32>
    %30 = arith.subf %26, %29 : vector<2x64x128xf32>
    %31 = math.exp %30 : vector<2x64x128xf32>
    %cst_20 = arith.constant dense<0.000000e+00> : vector<2x64xf32>
    %32 = vector.multi_reduction <add>, %31, %cst_20 [2] : vector<2x64x128xf32> to vector<2x64xf32>
    %33 = vector.shape_cast %32 : vector<2x64xf32> to vector<2x64x1xf32>
    %34 = tpu.reciprocal %33 : vector<2x64x1xf32> -> vector<2x64x1xf32>
    %35 = vector.broadcast %34 : vector<2x64x1xf32> to vector<2x64x128xf32>
    %36 = arith.mulf %31, %35 : vector<2x64x128xf32>
    %37 = arith.truncf %36 : vector<2x64x128xf32> to vector<2x64x128xbf16>
    "tpu.trace_start"() <{level = 10 : i32, message = "hqk,hkd->hqd"}> : () -> ()
    %cst_21 = arith.constant dense<0.000000e+00> : vector<2x64x128xf32>
    %38 = tpu.matmul %37, %14, %cst_21 {dimension_numbers = #tpu.dot_dimension_numbers<[2], [1], [1], [2], [0, 0, 0, 1, 1, 2], [0], [0]>} : vector<2x64x128xbf16>, vector<2x128x128xbf16>, vector<2x64x128xf32> -> vector<2x64x128xf32>
    "tpu.trace_stop"() : () -> ()
    %39 = tpu.transpose %38, [1, 0, 2] : vector<2x64x128xf32> -> vector<64x2x128xf32>
    %40 = vector.shape_cast %39 : vector<64x2x128xf32> to vector<64x256xf32>
    %41 = arith.truncf %40 : vector<64x256xf32> to vector<64x256xbf16>
    %c0_22 = arith.constant 0 : index
    %c0_23 = arith.constant 0 : index
    %42 = vector.load %arg8[%c0_22, %c0_23] : memref<256x256xbf16, #tpu.memory_space<vmem>>, vector<256x256xbf16>
    %cst_24 = arith.constant dense<0.000000e+00> : vector<64x256xf32>
    %43 = tpu.matmul %41, %42, %cst_24 {dimension_numbers = #tpu.dot_dimension_numbers<[1], [0], [0], [1], [0, 0, 1, 1], [], []>} : vector<64x256xbf16>, vector<256x256xbf16>, vector<64x256xf32> -> vector<64x256xf32>
    %44 = arith.addf %4, %43 : vector<64x256xf32>
    %cst_25 = arith.constant dense<0.000000e+00> : vector<64xf32>
    %45 = vector.multi_reduction <add>, %44, %cst_25 [1] : vector<64x256xf32> to vector<64xf32>
    %46 = vector.shape_cast %45 : vector<64xf32> to vector<64x1xf32>
    %cst_26 = arith.constant 2.560000e+02 : f32
    %47 = vector.broadcast %cst_26 : f32 to vector<64x1xf32>
    %48 = arith.divf %46, %47 : vector<64x1xf32>
    %49 = vector.broadcast %48 : vector<64x1xf32> to vector<64x256xf32>
    %50 = arith.subf %44, %49 : vector<64x256xf32>
    %51 = arith.mulf %50, %50 : vector<64x256xf32>
    %cst_27 = arith.constant dense<0.000000e+00> : vector<64xf32>
    %52 = vector.multi_reduction <add>, %51, %cst_27 [1] : vector<64x256xf32> to vector<64xf32>
    %53 = vector.shape_cast %52 : vector<64xf32> to vector<64x1xf32>
    %cst_28 = arith.constant 2.560000e+02 : f32
    %54 = vector.broadcast %cst_28 : f32 to vector<64x1xf32>
    %55 = arith.divf %53, %54 : vector<64x1xf32>
    %cst_29 = arith.constant 9.99999974E-6 : f32
    %56 = vector.broadcast %cst_29 : f32 to vector<64x1xf32>
    %57 = arith.addf %55, %56 : vector<64x1xf32>
    %58 = math.rsqrt %57 : vector<64x1xf32>
    %59 = vector.broadcast %58 : vector<64x1xf32> to vector<64x256xf32>
    %60 = arith.mulf %50, %59 : vector<64x256xf32>
    %c0_30 = arith.constant 0 : index
    %c0_31 = arith.constant 0 : index
    %61 = vector.load %arg9[%c0_30, %c0_31] : memref<1x256xf32, #tpu.memory_space<vmem>>, vector<1x256xf32>
    %62 = vector.broadcast %61 : vector<1x256xf32> to vector<64x256xf32>
    %63 = arith.mulf %60, %62 : vector<64x256xf32>
    %c0_32 = arith.constant 0 : index
    %c0_33 = arith.constant 0 : index
    %64 = vector.load %arg10[%c0_32, %c0_33] : memref<1x256xf32, #tpu.memory_space<vmem>>, vector<1x256xf32>
    %65 = vector.broadcast %64 : vector<1x256xf32> to vector<64x256xf32>
    %66 = arith.addf %63, %65 : vector<64x256xf32>
    %67 = arith.truncf %66 : vector<64x256xf32> to vector<64x256xbf16>
    %c0_34 = arith.constant 0 : index
    %c0_35 = arith.constant 0 : index
    %68 = vector.load %arg11[%c0_34, %c0_35] : memref<256x1024xbf16, #tpu.memory_space<vmem>>, vector<256x1024xbf16>
    %cst_36 = arith.constant dense<0.000000e+00> : vector<64x1024xf32>
    %69 = tpu.matmul %67, %68, %cst_36 {dimension_numbers = #tpu.dot_dimension_numbers<[1], [0], [0], [1], [0, 0, 1, 1], [], []>} : vector<64x256xbf16>, vector<256x1024xbf16>, vector<64x1024xf32> -> vector<64x1024xf32>
    %c0_37 = arith.constant 0 : index
    %c0_38 = arith.constant 0 : index
    %70 = vector.load %arg12[%c0_37, %c0_38] : memref<1x1024xf32, #tpu.memory_space<vmem>>, vector<1x1024xf32>
    %71 = vector.broadcast %70 : vector<1x1024xf32> to vector<64x1024xf32>
    %72 = arith.addf %69, %71 : vector<64x1024xf32>
    %cst_39 = arith.constant 0.000000e+00 : f32
    %73 = vector.broadcast %cst_39 : f32 to vector<64x1024xf32>
    %74 = arith.maximumf %72, %73 : vector<64x1024xf32>
    %75 = arith.truncf %74 : vector<64x1024xf32> to vector<64x1024xbf16>
    %c0_40 = arith.constant 0 : index
    %c0_41 = arith.constant 0 : index
    %76 = vector.load %arg13[%c0_40, %c0_41] : memref<1024x256xbf16, #tpu.memory_space<vmem>>, vector<1024x256xbf16>
    %cst_42 = arith.constant dense<0.000000e+00> : vector<64x256xf32>
    %77 = tpu.matmul %75, %76, %cst_42 {dimension_numbers = #tpu.dot_dimension_numbers<[1], [0], [0], [1], [0, 0, 1, 1], [], []>} : vector<64x1024xbf16>, vector<1024x256xbf16>, vector<64x256xf32> -> vector<64x256xf32>
    %c0_43 = arith.constant 0 : index
    %c0_44 = arith.constant 0 : index
    %78 = vector.load %arg14[%c0_43, %c0_44] : memref<1x256xf32, #tpu.memory_space<vmem>>, vector<1x256xf32>
    %79 = vector.broadcast %78 : vector<1x256xf32> to vector<64x256xf32>
    %80 = arith.addf %77, %79 : vector<64x256xf32>
    %81 = arith.addf %66, %80 : vector<64x256xf32>
    %cst_45 = arith.constant dense<0.000000e+00> : vector<64xf32>
    %82 = vector.multi_reduction <add>, %81, %cst_45 [1] : vector<64x256xf32> to vector<64xf32>
    %83 = vector.shape_cast %82 : vector<64xf32> to vector<64x1xf32>
    %cst_46 = arith.constant 2.560000e+02 : f32
    %84 = vector.broadcast %cst_46 : f32 to vector<64x1xf32>
    %85 = arith.divf %83, %84 : vector<64x1xf32>
    %86 = vector.broadcast %85 : vector<64x1xf32> to vector<64x256xf32>
    %87 = arith.subf %81, %86 : vector<64x256xf32>
    %88 = arith.mulf %87, %87 : vector<64x256xf32>
    %cst_47 = arith.constant dense<0.000000e+00> : vector<64xf32>
    %89 = vector.multi_reduction <add>, %88, %cst_47 [1] : vector<64x256xf32> to vector<64xf32>
    %90 = vector.shape_cast %89 : vector<64xf32> to vector<64x1xf32>
    %cst_48 = arith.constant 2.560000e+02 : f32
    %91 = vector.broadcast %cst_48 : f32 to vector<64x1xf32>
    %92 = arith.divf %90, %91 : vector<64x1xf32>
    %cst_49 = arith.constant 9.99999974E-6 : f32
    %93 = vector.broadcast %cst_49 : f32 to vector<64x1xf32>
    %94 = arith.addf %92, %93 : vector<64x1xf32>
    %95 = math.rsqrt %94 : vector<64x1xf32>
    %96 = vector.broadcast %95 : vector<64x1xf32> to vector<64x256xf32>
    %97 = arith.mulf %87, %96 : vector<64x256xf32>
    %c0_50 = arith.constant 0 : index
    %c0_51 = arith.constant 0 : index
    %98 = vector.load %arg15[%c0_50, %c0_51] : memref<1x256xf32, #tpu.memory_space<vmem>>, vector<1x256xf32>
    %99 = vector.broadcast %98 : vector<1x256xf32> to vector<64x256xf32>
    %100 = arith.mulf %97, %99 : vector<64x256xf32>
    %c0_52 = arith.constant 0 : index
    %c0_53 = arith.constant 0 : index
    %101 = vector.load %arg16[%c0_52, %c0_53] : memref<1x256xf32, #tpu.memory_space<vmem>>, vector<1x256xf32>
    %102 = vector.broadcast %101 : vector<1x256xf32> to vector<64x256xf32>
    %103 = arith.addf %100, %102 : vector<64x256xf32>
    %c0_54 = arith.constant 0 : index
    %c0_55 = arith.constant 0 : index
    %c0_56 = arith.constant 0 : index
    %104 = vector.load %arg17[%c0_54, %c0_55, %c0_56] : memref<1x64x256xf32, #tpu.memory_space<vmem>>, vector<1x64x256xf32>
    %105 = vector.shape_cast %104 : vector<1x64x256xf32> to vector<64x256xf32>
    %106 = vector.shape_cast %103 : vector<64x256xf32> to vector<1x64x256xf32>
    tpu.vector_store %arg17[%c0_54, %c0_55, %c0_56], %106 {strides = array<i32>} : memref<1x64x256xf32, #tpu.memory_space<vmem>>, vector<1x64x256xf32>,
    return
  }
  func.func @transform_0(%arg0: i32, %arg1: i32) -> (i32, i32, i32) {
    %c0_i32 = arith.constant 0 : i32
    %c0_i32_0 = arith.constant 0 : i32
    return %arg0, %arg1, %c0_i32 : i32, i32, i32
  }
  func.func @transform_1(%arg0: i32, %arg1: i32) -> (i32, i32, i32) {
    %c0_i32 = arith.constant 0 : i32
    %c0_i32_0 = arith.constant 0 : i32
    %c0_i32_1 = arith.constant 0 : i32
    return %arg0, %c0_i32, %c0_i32_0 : i32, i32, i32
  }
  func.func @transform_2(%arg0: i32, %arg1: i32) -> (i32, i32, i32) {
    %c0_i32 = arith.constant 0 : i32
    %c0_i32_0 = arith.constant 0 : i32
    return %arg0, %arg1, %c0_i32 : i32, i32, i32
  }
  func.func @transform_3(%arg0: i32, %arg1: i32) -> (i32, i32) {
    %c0_i32 = arith.constant 0 : i32
    %c0_i32_0 = arith.constant 0 : i32
    %c0_i32_1 = arith.constant 0 : i32
    return %c0_i32, %c0_i32_0 : i32, i32
  }
  func.func @transform_4(%arg0: i32, %arg1: i32) -> (i32, i32) {
    %c0_i32 = arith.constant 0 : i32
    %c0_i32_0 = arith.constant 0 : i32
    %c0_i32_1 = arith.constant 0 : i32
    return %c0_i32, %c0_i32_0 : i32, i32
  }
  func.func @transform_5(%arg0: i32, %arg1: i32) -> (i32, i32) {
    %c0_i32 = arith.constant 0 : i32
    %c0_i32_0 = arith.constant 0 : i32
    %c0_i32_1 = arith.constant 0 : i32
    return %c0_i32, %c0_i32_0 : i32, i32
  }
  func.func @transform_6(%arg0: i32, %arg1: i32) -> (i32, i32) {
    %c0_i32 = arith.constant 0 : i32
    %c0_i32_0 = arith.constant 0 : i32
    %c0_i32_1 = arith.constant 0 : i32
    return %c0_i32, %c0_i32_0 : i32, i32
  }
  func.func @transform_7(%arg0: i32, %arg1: i32) -> (i32, i32) {
    %c0_i32 = arith.constant 0 : i32
    %c0_i32_0 = arith.constant 0 : i32
    %c0_i32_1 = arith.constant 0 : i32
    return %c0_i32, %c0_i32_0 : i32, i32
  }
  func.func @transform_8(%arg0: i32, %arg1: i32) -> (i32, i32) {
    %c0_i32 = arith.constant 0 : i32
    %c0_i32_0 = arith.constant 0 : i32
    %c0_i32_1 = arith.constant 0 : i32
    return %c0_i32, %c0_i32_0 : i32, i32
  }
  func.func @transform_9(%arg0: i32, %arg1: i32) -> (i32, i32) {
    %c0_i32 = arith.constant 0 : i32
    %c0_i32_0 = arith.constant 0 : i32
    %c0_i32_1 = arith.constant 0 : i32
    return %c0_i32, %c0_i32_0 : i32, i32
  }
  func.func @transform_10(%arg0: i32, %arg1: i32) -> (i32, i32) {
    %c0_i32 = arith.constant 0 : i32
    %c0_i32_0 = arith.constant 0 : i32
    %c0_i32_1 = arith.constant 0 : i32
    return %c0_i32, %c0_i32_0 : i32, i32
  }
  func.func @transform_11(%arg0: i32, %arg1: i32) -> (i32, i32) {
    %c0_i32 = arith.constant 0 : i32
    %c0_i32_0 = arith.constant 0 : i32
    %c0_i32_1 = arith.constant 0 : i32
    return %c0_i32, %c0_i32_0 : i32, i32
  }
  func.func @transform_12(%arg0: i32, %arg1: i32) -> (i32, i32) {
    %c0_i32 = arith.constant 0 : i32
    %c0_i32_0 = arith.constant 0 : i32
    %c0_i32_1 = arith.constant 0 : i32
    return %c0_i32, %c0_i32_0 : i32, i32
  }
  func.func @transform_13(%arg0: i32, %arg1: i32) -> (i32, i32) {
    %c0_i32 = arith.constant 0 : i32
    %c0_i32_0 = arith.constant 0 : i32
    %c0_i32_1 = arith.constant 0 : i32
    return %c0_i32, %c0_i32_0 : i32, i32
  }
  func.func @transform_14(%arg0: i32, %arg1: i32) -> (i32, i32) {
    %c0_i32 = arith.constant 0 : i32
    %c0_i32_0 = arith.constant 0 : i32
    %c0_i32_1 = arith.constant 0 : i32
    return %c0_i32, %c0_i32_0 : i32, i32
  }
  func.func @transform_15(%arg0: i32, %arg1: i32) -> (i32, i32, i32) {
    %c0_i32 = arith.constant 0 : i32
    %c0_i32_0 = arith.constant 0 : i32
    return %arg0, %arg1, %c0_i32 : i32, i32, i32
  }
}

</mosaic_0001>

<llo_original>
// kernel: tpu_custom_call.1
$region0: #{tpu_custom_call.1}
  #allocation0 [shape = 'u32[]', space=smem, size = 0x4, offset = 0x4, fixed_abs, tag = 'smem constant byte address 0x4 - core index']
  #allocation1 [shape = 'u32[144,128]{1,0:T(1,128)}', space=vmem, size = 0x12000, scoped, tag = 'internal scratch']
  #allocation2 [shape = 'bf16[2,128,128]{2,1,0:T(16,128)(2,1)}', space=vmem, size = 0x10000, scoped, tag = 'scratch operand']
  #allocation3 [shape = 'bf16[2,128,128]{2,1,0:T(16,128)(2,1)}', space=vmem, size = 0x10000, scoped, tag = 'scratch operand']
  %s0 = inlined_call_operand.hbm [shape: f32[2,128,256], index: 0, kind: input, shape index: {}]
  %s1 = inlined_call_operand.hbm [shape: bf16[2,128,256], index: 1, kind: input, shape index: {}]
  %s2 = inlined_call_operand.hbm [shape: s8[2,128,128], index: 2, kind: input, shape index: {}]
  %s3 = inlined_call_operand.hbm [shape: bf16[256,256], index: 3, kind: input, shape index: {}]
  %s4 = inlined_call_operand.hbm [shape: bf16[256,256], index: 4, kind: input, shape index: {}]
  %s5 = inlined_call_operand.hbm [shape: bf16[256,256], index: 5, kind: input, shape index: {}]
  %s6 = inlined_call_operand.hbm [shape: bf16[256,256], index: 6, kind: input, shape index: {}]
  %s7 = inlined_call_operand.vmem [shape: f32[1,256], index: 7, kind: input, shape index: {}]
  %s8 = inlined_call_operand.vmem [shape: f32[1,256], index: 8, kind: input, shape index: {}]
  %s9 = inlined_call_operand.hbm [shape: bf16[256,1024], index: 9, kind: input, shape index: {}]
  %s10 = inlined_call_operand.vmem [shape: f32[1,1024], index: 10, kind: input, shape index: {}]
  %s11 = inlined_call_operand.hbm [shape: bf16[1024,256], index: 11, kind: input, shape index: {}]
  %s12 = inlined_call_operand.vmem [shape: f32[1,256], index: 12, kind: input, shape index: {}]
  %s13 = inlined_call_operand.vmem [shape: f32[1,256], index: 13, kind: input, shape index: {}]
  %s14 = inlined_call_operand.vmem [shape: f32[1,256], index: 14, kind: input, shape index: {}]
  %s15 = inlined_call_operand.hbm [shape: f32[2,128,256], index: 15, kind: output, shape index: {}]
  %s16 = sld [smem:[#allocation0]]
  $region133: #{tpu_custom_call.1} parent=0
    _
  %s18 = ssub.s32 1, %s16
  %s19 = scalar_select 0, %s18, %s16
  $region1: #{tpu_custom_call.1} parent=0
    #allocation4 [shape = 'u8[131072]{0}', space=vmem, size = 0x20000, scoped, tag = 'input window, operand 0']
    #allocation5 [shape = 's32[2]{0}', space=sflag, size = 0x8, scoped, tag = 'scoped memory for tpu_custom_call.1']
    #allocation6 [shape = 's32[2]{0}', space=sflag, size = 0x8, scoped, tag = 'scoped memory for tpu_custom_call.1']
    #allocation7 [shape = 'u8[131072]{0}', space=vmem, size = 0x20000, scoped, tag = 'input window, operand 1']
    #allocation8 [shape = 's32[2]{0}', space=sflag, size = 0x8, scoped, tag = 'scoped memory for tpu_custom_call.1']
    #allocation9 [shape = 'u8[16384]{0}', space=vmem, size = 0x4000, scoped, tag = 'input window, operand 2']
    #allocation10 [shape = 'u8[131072]{0}', space=vmem, size = 0x20000, scoped, tag = 'input window, operand 3, single buffered']
    #allocation11 [shape = 's32[1]{0}', space=sflag, size = 0x4, scoped, tag = 'scoped memory for tpu_custom_call.1']
    #allocation12 [shape = 'u8[131072]{0}', space=vmem, size = 0x20000, scoped, tag = 'input window, operand 4, single buffered']
    #allocation13 [shape = 'u8[131072]{0}', space=vmem, size = 0x20000, scoped, tag = 'input window, operand 5, single buffered']
    #allocation14 [shape = 's32[1]{0}', space=sflag, size = 0x4, scoped, tag = 'scoped memory for tpu_custom_call.1']
    #allocation15 [shape = 'u8[131072]{0}', space=vmem, size = 0x20000, scoped, tag = 'input window, operand 6, single buffered']
    #allocation16 [shape = 'u8[524288]{0}', space=vmem, size = 0x80000, scoped, tag = 'input window, operand 9, single buffered']
    #allocation17 [shape = 's32[1]{0}', space=sflag, size = 0x4, scoped, tag = 'scoped memory for tpu_custom_call.1']
    #allocation18 [shape = 'u8[524288]{0}', space=vmem, size = 0x80000, scoped, tag = 'input window, operand 11, single buffered']
    #allocation19 [shape = 'u8[131072]{0}', space=vmem, size = 0x20000, scoped, tag = 'output window, operand 0']
    %20 = vsyncpa [#allocation5], 0
    %s21 = scalar_lea.sflag [#allocation5], 1
    %22 = vsyncpa %s21, 0
    %23 = vsyncpa [#allocation8], 0
    %s24 = scalar_lea.sflag [#allocation8], 1
    %25 = vsyncpa %s24, 0
    %26 = vsyncpa [#allocation11], 0
    %27 = vsyncpa [#allocation14], 0
    %28 = vsyncpa [#allocation17], 0
    %29 = vsyncpa [#allocation6], 0
    %s30 = scalar_lea.sflag [#allocation6], 1
    %31 = vsyncpa %s30, 0
    loop: start=0, step=1, limit=6
    $region2: #{tpu_custom_call.1} parent=1 // loop_pre_header
      _
    $region3: #{tpu_custom_call.1} parent=1 // loop_header
      %s33 = sphi 0, %s37
      %p34 = scmp.ge.s32.totalorder %s33, 6
      %s40 = sphi 0, %s52
      %s41 = sphi 0, %s48
      %s42 = sphi 0, %s40
      %s43 = sphi 0, %s41
      %s44 = sphi 0, %s42
      %s45 = sphi 0, %s43
      %s57 = sphi 0, %s59
      %s60 = sphi 0, %s57
      %s61 = sphi 0, %s60
      %s77 = sphi 0, %s61
      %s83 = sphi 0, %s85
      %s86 = sphi 0, %s83
      %s87 = sphi 0, %s86
      %s103 = sphi 0, %s87
      %s111 = sphi 0, %s113
      %s114 = sphi 0, %s111
      %s115 = sphi 0, %s114
      %s131 = sphi 0, %s115
      %s135 = sphi 0, %s135
      %s137 = sphi 0, %s135
      %s138 = sphi 0, %s137
      %s152 = sphi 0, %s138
      %s156 = sphi 0, %s156
      %s158 = sphi 0, %s156
      %s159 = sphi 0, %s158
      %s173 = sphi 0, %s159
      %s177 = sphi 0, %s177
      %s179 = sphi 0, %s177
      %s180 = sphi 0, %s179
      %s194 = sphi 0, %s180
      %s198 = sphi 0, %s198
      %s200 = sphi 0, %s198
      %s201 = sphi 0, %s200
      %s215 = sphi 0, %s201
      %s219 = sphi 0, %s219
      %s221 = sphi 0, %s219
      %s222 = sphi 0, %s221
      %s236 = sphi 0, %s222
      %s240 = sphi 0, %s240
      %s242 = sphi 0, %s240
      %s243 = sphi 0, %s242
      %s257 = sphi 0, %s243
      %s261 = sphi 0, %s261
      %s263 = sphi 0, %s261
      %s264 = sphi 0, %s263
      %s278 = sphi 0, %s264
      %s282 = sphi 0, %s282
      %s284 = sphi 0, %s282
      %s285 = sphi 0, %s284
      %s299 = sphi 0, %s285
      %s303 = sphi 0, %s303
      %s305 = sphi 0, %s303
      %s306 = sphi 0, %s305
      %s320 = sphi 0, %s306
      %s324 = sphi 0, %s324
      %s326 = sphi 0, %s324
      %s327 = sphi 0, %s326
      %s341 = sphi 0, %s327
      %s345 = sphi 0, %s345
      %s347 = sphi 0, %s345
      %s348 = sphi 0, %s347
      %s362 = sphi 0, %s348
      %s366 = sphi 0, %s366
      %s368 = sphi 0, %s366
      %s369 = sphi 0, %s368
      %s383 = sphi 0, %s369
      %s391 = sphi 0, %s393
      %s394 = sphi 0, %s391
      %s395 = sphi 0, %s394
      %s411 = sphi 0, %s395
    $region4: #{tpu_custom_call.1} parent=1 // loop_header_branch
      %36 = sbr.rel (%p34) target = $region8
    $region5: #{tpu_custom_call.1} parent=1 // loop_body
      %s38 = ssub.s32 %s33, 1
      %s39 = ssub.s32 %s33, 2
      %s46 = sadd.s32 1, %s41
      %p47 = scmp.ge.s32.totalorder %s46, 2
      %s48 = scalar_select %p47, 0, %s46
      %s49 = sadd.s32 1, %s40
      %s50 = scalar_select %p47, %s49, %s40
      %p51 = scmp.ge.s32.totalorder %s50, 2
      %s52 = scalar_select %p51, 0, %s50
      %s53 = ssub.s32 %s40, %s52
      %s54 = ssub.s32 %s41, %s48
      %s55 = sor.u32 %s53, %s54
      %p56 = scmp.eq.s32.totalorder %s55, 0
      %s58 = sadd.s32 %s57, 1
      %s59 = scalar_select %p56, %s57, %s58
      %p62 = pneg %p56
      %p63 = scmp.eq.s32.totalorder %s33, 3
      %p64 = por %p62, %p63
      %p65 = scmp.ne.s32.totalorder %s57, %s60
      %p66 = scmp.eq.s32.totalorder %s33, 0
      %p67 = por %p65, %p66
      %p68 = scmp.ne.s32.totalorder %s57, %s60
      %p69 = scmp.eq.s32.totalorder %s38, 3
      %p70 = por %p68, %p69
      %p71 = scmp.ne.s32.totalorder %s60, %s61
      %p72 = scmp.eq.s32.totalorder %s38, 0
      %p73 = por %p71, %p72
      %p74 = scmp.ne.s32.totalorder %s60, %s61
      %p75 = scmp.eq.s32.totalorder %s39, 3
      %p76 = por %p74, %p75
      %p78 = scmp.ne.s32.totalorder %s61, %s77
      %p79 = scmp.eq.s32.totalorder %s39, 0
      %p80 = por %p78, %p79
      %s81 = ssub.s32 %s40, %s52
      %p82 = scmp.eq.s32.totalorder %s81, 0
      %s84 = sadd.s32 %s83, 1
      %s85 = scalar_select %p82, %s83, %s84
      %p88 = pneg %p82
      %p89 = scmp.eq.s32.totalorder %s33, 3
      %p90 = por %p88, %p89
      %p91 = scmp.ne.s32.totalorder %s83, %s86
      %p92 = scmp.eq.s32.totalorder %s33, 0
      %p93 = por %p91, %p92
      %p94 = scmp.ne.s32.totalorder %s83, %s86
      %p95 = scmp.eq.s32.totalorder %s38, 3
      %p96 = por %p94, %p95
      %p97 = scmp.ne.s32.totalorder %s86, %s87
      %p98 = scmp.eq.s32.totalorder %s38, 0
      %p99 = por %p97, %p98
      %p100 = scmp.ne.s32.totalorder %s86, %s87
      %p101 = scmp.eq.s32.totalorder %s39, 3
      %p102 = por %p100, %p101
      %p104 = scmp.ne.s32.totalorder %s87, %s103
      %p105 = scmp.eq.s32.totalorder %s39, 0
      %p106 = por %p104, %p105
      %s107 = ssub.s32 %s40, %s52
      %s108 = ssub.s32 %s41, %s48
      %s109 = sor.u32 %s107, %s108
      %p110 = scmp.eq.s32.totalorder %s109, 0
      %s112 = sadd.s32 %s111, 1
      %s113 = scalar_select %p110, %s111, %s112
      %p116 = pneg %p110
      %p117 = scmp.eq.s32.totalorder %s33, 3
      %p118 = por %p116, %p117
      %p119 = scmp.ne.s32.totalorder %s111, %s114
      %p120 = scmp.eq.s32.totalorder %s33, 0
      %p121 = por %p119, %p120
      %p122 = scmp.ne.s32.totalorder %s111, %s114
      %p123 = scmp.eq.s32.totalorder %s38, 3
      %p124 = por %p122, %p123
      %p125 = scmp.ne.s32.totalorder %s114, %s115
      %p126 = scmp.eq.s32.totalorder %s38, 0
      %p127 = por %p125, %p126
      %p128 = scmp.ne.s32.totalorder %s114, %s115
      %p129 = scmp.eq.s32.totalorder %s39, 3
      %p130 = por %p128, %p129
      %p132 = scmp.ne.s32.totalorder %s115, %s131
      %p133 = scmp.eq.s32.totalorder %s39, 0
      %p134 = por %p132, %p133
      %s136 = sadd.s32 %s135, 1
      %p139 = scmp.eq.s32.totalorder %s33, 3
      %p140 = scmp.ne.s32.totalorder %s135, %s137
      %p141 = scmp.eq.s32.totalorder %s33, 0
      %p142 = por %p140, %p141
      %p143 = scmp.ne.s32.totalorder %s135, %s137
      %p144 = scmp.eq.s32.totalorder %s38, 3
      %p145 = por %p143, %p144
      %p146 = scmp.ne.s32.totalorder %s137, %s138
      %p147 = scmp.eq.s32.totalorder %s38, 0
      %p148 = por %p146, %p147
      %p149 = scmp.ne.s32.totalorder %s137, %s138
      %p150 = scmp.eq.s32.totalorder %s39, 3
      %p151 = por %p149, %p150
      %p153 = scmp.ne.s32.totalorder %s138, %s152
      %p154 = scmp.eq.s32.totalorder %s39, 0
      %p155 = por %p153, %p154
      %s157 = sadd.s32 %s156, 1
      %p160 = scmp.eq.s32.totalorder %s33, 3
      %p161 = scmp.ne.s32.totalorder %s156, %s158
      %p162 = scmp.eq.s32.totalorder %s33, 0
      %p163 = por %p161, %p162
      %p164 = scmp.ne.s32.totalorder %s156, %s158
      %p165 = scmp.eq.s32.totalorder %s38, 3
      %p166 = por %p164, %p165
      %p167 = scmp.ne.s32.totalorder %s158, %s159
      %p168 = scmp.eq.s32.totalorder %s38, 0
      %p169 = por %p167, %p168
      %p170 = scmp.ne.s32.totalorder %s158, %s159
      %p171 = scmp.eq.s32.totalorder %s39, 3
      %p172 = por %p170, %p171
      %p174 = scmp.ne.s32.totalorder %s159, %s173
      %p175 = scmp.eq.s32.totalorder %s39, 0
      %p176 = por %p174, %p175
      %s178 = sadd.s32 %s177, 1
      %p181 = scmp.eq.s32.totalorder %s33, 3
      %p182 = scmp.ne.s32.totalorder %s177, %s179
      %p183 = scmp.eq.s32.totalorder %s33, 0
      %p184 = por %p182, %p183
      %p185 = scmp.ne.s32.totalorder %s177, %s179
      %p186 = scmp.eq.s32.totalorder %s38, 3
      %p187 = por %p185, %p186
      %p188 = scmp.ne.s32.totalorder %s179, %s180
      %p189 = scmp.eq.s32.totalorder %s38, 0
      %p190 = por %p188, %p189
      %p191 = scmp.ne.s32.totalorder %s179, %s180
      %p192 = scmp.eq.s32.totalorder %s39, 3
      %p193 = por %p191, %p192
      %p195 = scmp.ne.s32.totalorder %s180, %s194
      %p196 = scmp.eq.s32.totalorder %s39, 0
      %p197 = por %p195, %p196
      %s199 = sadd.s32 %s198, 1
      %p202 = scmp.eq.s32.totalorder %s33, 3
      %p203 = scmp.ne.s32.totalorder %s198, %s200
      %p204 = scmp.eq.s32.totalorder %s33, 0
      %p205 = por %p203, %p204
      %p206 = scmp.ne.s32.totalorder %s198, %s200
      %p207 = scmp.eq.s32.totalorder %s38, 3
      %p208 = por %p206, %p207
      %p209 = scmp.ne.s32.totalorder %s200, %s201
      %p210 = scmp.eq.s32.totalorder %s38, 0
      %p211 = por %p209, %p210
      %p212 = scmp.ne.s32.totalorder %s200, %s201
      %p213 = scmp.eq.s32.totalorder %s39, 3
      %p214 = por %p212, %p213
      %p216 = scmp.ne.s32.totalorder %s201, %s215
      %p217 = scmp.eq.s32.totalorder %s39, 0
      %p218 = por %p216, %p217
      %s220 = sadd.s32 %s219, 1
      %p223 = scmp.eq.s32.totalorder %s33, 3
      %p224 = scmp.ne.s32.totalorder %s219, %s221
      %p225 = scmp.eq.s32.totalorder %s33, 0
      %p226 = por %p224, %p225
      %p227 = scmp.ne.s32.totalorder %s219, %s221
      %p228 = scmp.eq.s32.totalorder %s38, 3
      %p229 = por %p227, %p228
      %p230 = scmp.ne.s32.totalorder %s221, %s222
      %p231 = scmp.eq.s32.totalorder %s38, 0
      %p232 = por %p230, %p231
      %p233 = scmp.ne.s32.totalorder %s221, %s222
      %p234 = scmp.eq.s32.totalorder %s39, 3
      %p235 = por %p233, %p234
      %p237 = scmp.ne.s32.totalorder %s222, %s236
      %p238 = scmp.eq.s32.totalorder %s39, 0
      %p239 = por %p237, %p238
      %s241 = sadd.s32 %s240, 1
      %p244 = scmp.eq.s32.totalorder %s33, 3
      %p245 = scmp.ne.s32.totalorder %s240, %s242
      %p246 = scmp.eq.s32.totalorder %s33, 0
      %p247 = por %p245, %p246
      %p248 = scmp.ne.s32.totalorder %s240, %s242
      %p249 = scmp.eq.s32.totalorder %s38, 3
      %p250 = por %p248, %p249
      %p251 = scmp.ne.s32.totalorder %s242, %s243
      %p252 = scmp.eq.s32.totalorder %s38, 0
      %p253 = por %p251, %p252
      %p254 = scmp.ne.s32.totalorder %s242, %s243
      %p255 = scmp.eq.s32.totalorder %s39, 3
      %p256 = por %p254, %p255
      %p258 = scmp.ne.s32.totalorder %s243, %s257
      %p259 = scmp.eq.s32.totalorder %s39, 0
      %p260 = por %p258, %p259
      %s262 = sadd.s32 %s261, 1
      %p265 = scmp.eq.s32.totalorder %s33, 3
      %p266 = scmp.ne.s32.totalorder %s261, %s263
      %p267 = scmp.eq.s32.totalorder %s33, 0
      %p268 = por %p266, %p267
      %p269 = scmp.ne.s32.totalorder %s261, %s263
      %p270 = scmp.eq.s32.totalorder %s38, 3
      %p271 = por %p269, %p270
      %p272 = scmp.ne.s32.totalorder %s263, %s264
      %p273 = scmp.eq.s32.totalorder %s38, 0
      %p274 = por %p272, %p273
      %p275 = scmp.ne.s32.totalorder %s263, %s264
      %p276 = scmp.eq.s32.totalorder %s39, 3
      %p277 = por %p275, %p276
      %p279 = scmp.ne.s32.totalorder %s264, %s278
      %p280 = scmp.eq.s32.totalorder %s39, 0
      %p281 = por %p279, %p280
      %s283 = sadd.s32 %s282, 1
      %p286 = scmp.eq.s32.totalorder %s33, 3
      %p287 = scmp.ne.s32.totalorder %s282, %s284
      %p288 = scmp.eq.s32.totalorder %s33, 0
      %p289 = por %p287, %p288
      %p290 = scmp.ne.s32.totalorder %s282, %s284
      %p291 = scmp.eq.s32.totalorder %s38, 3
      %p292 = por %p290, %p291
      %p293 = scmp.ne.s32.totalorder %s284, %s285
      %p294 = scmp.eq.s32.totalorder %s38, 0
      %p295 = por %p293, %p294
      %p296 = scmp.ne.s32.totalorder %s284, %s285
      %p297 = scmp.eq.s32.totalorder %s39, 3
      %p298 = por %p296, %p297
      %p300 = scmp.ne.s32.totalorder %s285, %s299
      %p301 = scmp.eq.s32.totalorder %s39, 0
      %p302 = por %p300, %p301
      %s304 = sadd.s32 %s303, 1
      %p307 = scmp.eq.s32.totalorder %s33, 3
      %p308 = scmp.ne.s32.totalorder %s303, %s305
      %p309 = scmp.eq.s32.totalorder %s33, 0
      %p310 = por %p308, %p309
      %p311 = scmp.ne.s32.totalorder %s303, %s305
      %p312 = scmp.eq.s32.totalorder %s38, 3
      %p313 = por %p311, %p312
      %p314 = scmp.ne.s32.totalorder %s305, %s306
      %p315 = scmp.eq.s32.totalorder %s38, 0
      %p316 = por %p314, %p315
      %p317 = scmp.ne.s32.totalorder %s305, %s306
      %p318 = scmp.eq.s32.totalorder %s39, 3
      %p319 = por %p317, %p318
      %p321 = scmp.ne.s32.totalorder %s306, %s320
      %p322 = scmp.eq.s32.totalorder %s39, 0
      %p323 = por %p321, %p322
      %s325 = sadd.s32 %s324, 1
      %p328 = scmp.eq.s32.totalorder %s33, 3
      %p329 = scmp.ne.s32.totalorder %s324, %s326
      %p330 = scmp.eq.s32.totalorder %s33, 0
      %p331 = por %p329, %p330
      %p332 = scmp.ne.s32.totalorder %s324, %s326
      %p333 = scmp.eq.s32.totalorder %s38, 3
      %p334 = por %p332, %p333
      %p335 = scmp.ne.s32.totalorder %s326, %s327
      %p336 = scmp.eq.s32.totalorder %s38, 0
      %p337 = por %p335, %p336
      %p338 = scmp.ne.s32.totalorder %s326, %s327
      %p339 = scmp.eq.s32.totalorder %s39, 3
      %p340 = por %p338, %p339
      %p342 = scmp.ne.s32.totalorder %s327, %s341
      %p343 = scmp.eq.s32.totalorder %s39, 0
      %p344 = por %p342, %p343
      %s346 = sadd.s32 %s345, 1
      %p349 = scmp.eq.s32.totalorder %s33, 3
      %p350 = scmp.ne.s32.totalorder %s345, %s347
      %p351 = scmp.eq.s32.totalorder %s33, 0
      %p352 = por %p350, %p351
      %p353 = scmp.ne.s32.totalorder %s345, %s347
      %p354 = scmp.eq.s32.totalorder %s38, 3
      %p355 = por %p353, %p354
      %p356 = scmp.ne.s32.totalorder %s347, %s348
      %p357 = scmp.eq.s32.totalorder %s38, 0
      %p358 = por %p356, %p357
      %p359 = scmp.ne.s32.totalorder %s347, %s348
      %p360 = scmp.eq.s32.totalorder %s39, 3
      %p361 = por %p359, %p360
      %p363 = scmp.ne.s32.totalorder %s348, %s362
      %p364 = scmp.eq.s32.totalorder %s39, 0
      %p365 = por %p363, %p364
      %s367 = sadd.s32 %s366, 1
      %p370 = scmp.eq.s32.totalorder %s33, 3
      %p371 = scmp.ne.s32.totalorder %s366, %s368
      %p372 = scmp.eq.s32.totalorder %s33, 0
      %p373 = por %p371, %p372
      %p374 = scmp.ne.s32.totalorder %s366, %s368
      %p375 = scmp.eq.s32.totalorder %s38, 3
      %p376 = por %p374, %p375
      %p377 = scmp.ne.s32.totalorder %s368, %s369
      %p378 = scmp.eq.s32.totalorder %s38, 0
      %p379 = por %p377, %p378
      %p380 = scmp.ne.s32.totalorder %s368, %s369
      %p381 = scmp.eq.s32.totalorder %s39, 3
      %p382 = por %p380, %p381
      %p384 = scmp.ne.s32.totalorder %s369, %s383
      %p385 = scmp.eq.s32.totalorder %s39, 0
      %p386 = por %p384, %p385
      %s387 = ssub.s32 %s40, %s52
      %s388 = ssub.s32 %s41, %s48
      %s389 = sor.u32 %s387, %s388
      %p390 = scmp.eq.s32.totalorder %s389, 0
      %s392 = sadd.s32 %s391, 1
      %s393 = scalar_select %p390, %s391, %s392
      %p396 = pneg %p390
      %p397 = scmp.eq.s32.totalorder %s33, 3
      %p398 = por %p396, %p397
      %p399 = scmp.ne.s32.totalorder %s391, %s394
      %p400 = scmp.eq.s32.totalorder %s33, 0
      %p401 = por %p399, %p400
      %p402 = scmp.ne.s32.totalorder %s391, %s394
      %p403 = scmp.eq.s32.totalorder %s38, 3
      %p404 = por %p402, %p403
      %p405 = scmp.ne.s32.totalorder %s394, %s395
      %p406 = scmp.eq.s32.totalorder %s38, 0
      %p407 = por %p405, %p406
      %p408 = scmp.ne.s32.totalorder %s394, %s395
      %p409 = scmp.eq.s32.totalorder %s39, 3
      %p410 = por %p408, %p409
      %p412 = scmp.ne.s32.totalorder %s395, %s411
      %p413 = scmp.eq.s32.totalorder %s39, 0
      %p414 = por %p412, %p413
      %p415 = scmp.le.s32.totalorder 1, %s33
      %p416 = scmp.lt.s32.totalorder %s33, 5
      %p417 = pnand %p415, %p416
      %p418 = pneg %p417
      // Predicated region
      $region9: #{tpu_custom_call.1} parent=5 // pred_check
        _
      $region10: #{tpu_custom_call.1} parent=5 // pred_check_branch
        %420 = sbr.rel (%p417) target = $region12
      $region11: #{tpu_custom_call.1} parent=5 // pred_region
        %s421 = ssub.s32 %s33, 1
        // Predicated region
        $region13: #{tpu_custom_call.1} parent=11 // pred_check
          %p422 = pneg %p148
        $region14: #{tpu_custom_call.1} parent=11 // pred_check_branch
          %424 = sbr.rel (%p422) target = $region16
        $region15: #{tpu_custom_call.1} parent=11 // pred_region
          %s426 = ssub.s32 4096, 4096
          %427 = vsyncadd [#allocation11], %s426
          %s428 = sshll.u32 [#allocation10], 4
          %s429 = int_to_ptr.vmem [resolvable:$true] %s428
          %434 = dma.hbm_to_vmem [thread:$0]  %s3, 4096, %s429, [#allocation11], 128, 128, 8
        $region16: #{tpu_custom_call.1} parent=11 // pred_fallthru
          _
        // Predicated region
        $region17: #{tpu_custom_call.1} parent=11 // pred_check
          %p435 = pneg %p169
        $region18: #{tpu_custom_call.1} parent=11 // pred_check_branch
          %437 = sbr.rel (%p435) target = $region20
        $region19: #{tpu_custom_call.1} parent=11 // pred_region
          %s439 = ssub.s32 4096, 4096
          %440 = vsyncadd [#allocation11], %s439
          %s441 = sshll.u32 [#allocation12], 4
          %s442 = int_to_ptr.vmem [resolvable:$true] %s441
          %447 = dma.hbm_to_vmem [thread:$0]  %s4, 4096, %s442, [#allocation11], 128, 128, 8
        $region20: #{tpu_custom_call.1} parent=11 // pred_fallthru
          _
        // Predicated region
        $region21: #{tpu_custom_call.1} parent=11 // pred_check
          %p448 = pneg %p190
        $region22: #{tpu_custom_call.1} parent=11 // pred_check_branch
          %450 = sbr.rel (%p448) target = $region24
        $region23: #{tpu_custom_call.1} parent=11 // pred_region
          %s452 = ssub.s32 4096, 4096
          %453 = vsyncadd [#allocation14], %s452
          %s454 = sshll.u32 [#allocation13], 4
          %s455 = int_to_ptr.vmem [resolvable:$true] %s454
          %460 = dma.hbm_to_vmem [thread:$0]  %s5, 4096, %s455, [#allocation14], 128, 128, 8
        $region24: #{tpu_custom_call.1} parent=11 // pred_fallthru
          _
        // Predicated region
        $region25: #{tpu_custom_call.1} parent=11 // pred_check
          %p461 = pneg %p211
        $region26: #{tpu_custom_call.1} parent=11 // pred_check_branch
          %463 = sbr.rel (%p461) target = $region28
        $region27: #{tpu_custom_call.1} parent=11 // pred_region
          %s465 = ssub.s32 4096, 4096
          %466 = vsyncadd [#allocation14], %s465
          %s467 = sshll.u32 [#allocation15], 4
          %s468 = int_to_ptr.vmem [resolvable:$true] %s467
          %473 = dma.hbm_to_vmem [thread:$0]  %s6, 4096, %s468, [#allocation14], 128, 128, 8
        $region28: #{tpu_custom_call.1} parent=11 // pred_fallthru
          _
        // Predicated region
        $region29: #{tpu_custom_call.1} parent=11 // pred_check
          %p474 = pneg %p232
        $region30: #{tpu_custom_call.1} parent=11 // pred_check_branch
          %476 = sbr.rel (%p474) target = $region32
        $region31: #{tpu_custom_call.1} parent=11 // pred_region
          _
        $region32: #{tpu_custom_call.1} parent=11 // pred_fallthru
          _
        // Predicated region
        $region33: #{tpu_custom_call.1} parent=11 // pred_check
          %p477 = pneg %p253
        $region34: #{tpu_custom_call.1} parent=11 // pred_check_branch
          %479 = sbr.rel (%p477) target = $region36
        $region35: #{tpu_custom_call.1} parent=11 // pred_region
          _
        $region36: #{tpu_custom_call.1} parent=11 // pred_fallthru
          _
        // Predicated region
        $region37: #{tpu_custom_call.1} parent=11 // pred_check
          %p480 = pneg %p274
        $region38: #{tpu_custom_call.1} parent=11 // pred_check_branch
          %482 = sbr.rel (%p480) target = $region40
        $region39: #{tpu_custom_call.1} parent=11 // pred_region
          %s484 = ssub.s32 16384, 16384
          %485 = vsyncadd [#allocation17], %s484
          %s486 = sshll.u32 [#allocation16], 4
          %s487 = int_to_ptr.vmem [resolvable:$true] %s486
          %492 = dma.hbm_to_vmem [thread:$0]  %s9, 16384, %s487, [#allocation17], 512, 512, 32
        $region40: #{tpu_custom_call.1} parent=11 // pred_fallthru
          _
        // Predicated region
        $region41: #{tpu_custom_call.1} parent=11 // pred_check
          %p493 = pneg %p295
        $region42: #{tpu_custom_call.1} parent=11 // pred_check_branch
          %495 = sbr.rel (%p493) target = $region44
        $region43: #{tpu_custom_call.1} parent=11 // pred_region
          _
        $region44: #{tpu_custom_call.1} parent=11 // pred_fallthru
          _
        // Predicated region
        $region45: #{tpu_custom_call.1} parent=11 // pred_check
          %p496 = pneg %p316
        $region46: #{tpu_custom_call.1} parent=11 // pred_check_branch
          %498 = sbr.rel (%p496) target = $region48
        $region47: #{tpu_custom_call.1} parent=11 // pred_region
          %s500 = ssub.s32 16384, 16384
          %501 = vsyncadd [#allocation17], %s500
          %s502 = sshll.u32 [#allocation18], 4
          %s503 = int_to_ptr.vmem [resolvable:$true] %s502
          %508 = dma.hbm_to_vmem [thread:$0]  %s11, 16384, %s503, [#allocation17], 128, 128, 8
        $region48: #{tpu_custom_call.1} parent=11 // pred_fallthru
          _
        // Predicated region
        $region49: #{tpu_custom_call.1} parent=11 // pred_check
          %p509 = pneg %p337
        $region50: #{tpu_custom_call.1} parent=11 // pred_check_branch
          %511 = sbr.rel (%p509) target = $region52
        $region51: #{tpu_custom_call.1} parent=11 // pred_region
          _
        $region52: #{tpu_custom_call.1} parent=11 // pred_fallthru
          _
        // Predicated region
        $region53: #{tpu_custom_call.1} parent=11 // pred_check
          %p512 = pneg %p358
        $region54: #{tpu_custom_call.1} parent=11 // pred_check_branch
          %514 = sbr.rel (%p512) target = $region56
        $region55: #{tpu_custom_call.1} parent=11 // pred_region
          _
        $region56: #{tpu_custom_call.1} parent=11 // pred_fallthru
          _
        // Predicated region
        $region57: #{tpu_custom_call.1} parent=11 // pred_check
          %p515 = pneg %p379
        $region58: #{tpu_custom_call.1} parent=11 // pred_check_branch
          %517 = sbr.rel (%p515) target = $region60
        $region59: #{tpu_custom_call.1} parent=11 // pred_region
          _
        $region60: #{tpu_custom_call.1} parent=11 // pred_fallthru
          _
      $region12: #{tpu_custom_call.1} parent=5 // pred_fallthru
        _
      %p518 = scmp.lt.s32.totalorder %s33, 4
      // Predicated region
      $region61: #{tpu_custom_call.1} parent=5 // pred_check
        %p519 = pneg %p518
      $region62: #{tpu_custom_call.1} parent=5 // pred_check_branch
        %521 = sbr.rel (%p519) target = $region64
      $region63: #{tpu_custom_call.1} parent=5 // pred_region
        // Predicated region
        $region65: #{tpu_custom_call.1} parent=63 // pred_check
          %p522 = pneg %p67
        $region66: #{tpu_custom_call.1} parent=63 // pred_check_branch
          %524 = sbr.rel (%p522) target = $region68
        $region67: #{tpu_custom_call.1} parent=63 // pred_region
          %s525 = sand.u32 %s57, 1
          %s526 = scalar_lea.sflag [#allocation5], %s525
          %s527 = sand.u32 %s57, 1
          %s528 = smul.addr %s527, 128
          %s529 = scalar_lea.vmem [#allocation4], %s528
          %s530 = smul.u32 8, %s41
          %s532 = ssub.s32 2048, 2048
          %533 = vsyncadd %s526, %s532
          %s534 = smul.addr %s530, 2
          %s535 = smul.addr %s40, 32
          %s536 = sadd.s32 %s534, %s535
          %s537 = smul.addr %s536, 128
          %s538 = scalar_lea.hbm %s0, %s537
          %s539 = sshll.u32 %s529, 4
          %s540 = int_to_ptr.vmem [resolvable:$true] %s539
          %545 = dma.hbm_to_vmem [thread:$0]  %s538, 2048, %s540, %s526, 256, 256, 16
        $region68: #{tpu_custom_call.1} parent=63 // pred_fallthru
          _
        // Predicated region
        $region69: #{tpu_custom_call.1} parent=63 // pred_check
          %p546 = pneg %p93
        $region70: #{tpu_custom_call.1} parent=63 // pred_check_branch
          %548 = sbr.rel (%p546) target = $region72
        $region71: #{tpu_custom_call.1} parent=63 // pred_region
          %s549 = sand.u32 %s33, 1
          %s550 = scalar_lea.sflag [#allocation8], %s549
          %s551 = sand.u32 %s83, 1
          %s552 = smul.addr %s551, 128
          %s553 = scalar_lea.vmem [#allocation7], %s552
          %s555 = ssub.s32 2048, 2048
          %556 = vsyncadd %s550, %s555
          %s557 = smul.addr %s40, 32
          %s558 = smul.addr %s557, 64
          %s559 = scalar_lea.hbm %s1, %s558
          %s560 = sshll.u32 %s553, 4
          %s561 = int_to_ptr.vmem [resolvable:$true] %s560
          %566 = dma.hbm_to_vmem [thread:$0]  %s559, 2048, %s561, %s550, 128, 128, 8
        $region72: #{tpu_custom_call.1} parent=63 // pred_fallthru
          _
        // Predicated region
        $region73: #{tpu_custom_call.1} parent=63 // pred_check
          %p567 = pneg %p121
        $region74: #{tpu_custom_call.1} parent=63 // pred_check_branch
          %569 = sbr.rel (%p567) target = $region76
        $region75: #{tpu_custom_call.1} parent=63 // pred_region
          %s570 = sand.u32 %s33, 1
          %s571 = scalar_lea.sflag [#allocation8], %s570
          %s572 = sand.u32 %s111, 1
          %s573 = smul.addr %s572, 16
          %s574 = scalar_lea.vmem [#allocation9], %s573
          %s575 = smul.u32 2, %s41
          %s577 = ssub.s32 256, 256
          %578 = vsyncadd %s571, %s577
          %s579 = smul.addr %s40, 4
          %s580 = sadd.s32 %s575, %s579
          %s581 = smul.addr %s580, 128
          %s582 = scalar_lea.hbm %s2, %s581
          %s583 = sshll.u32 %s574, 4
          %s584 = int_to_ptr.vmem [resolvable:$true] %s583
          %589 = dma.hbm_to_vmem [thread:$0]  %s582, 256, %s584, %s571, 128, 128, 8
        $region76: #{tpu_custom_call.1} parent=63 // pred_fallthru
          _
      $region64: #{tpu_custom_call.1} parent=5 // pred_fallthru
        _
      %p590 = scmp.le.s32.totalorder 1, %s33
      %p591 = scmp.lt.s32.totalorder %s33, 5
      %p592 = pnand %p590, %p591
      %p593 = pneg %p592
      // Predicated region
      $region77: #{tpu_custom_call.1} parent=5 // pred_check
        _
      $region78: #{tpu_custom_call.1} parent=5 // pred_check_branch
        %595 = sbr.rel (%p592) target = $region80
      $region79: #{tpu_custom_call.1} parent=5 // pred_region
        %s596 = ssub.s32 %s33, 1
        %s597 = sand.u32 %s60, 1
        %s598 = scalar_lea.sflag [#allocation5], %s597
        %s599 = sand.u32 %s60, 1
        %s600 = smul.addr %s599, 128
        %s601 = scalar_lea.vmem [#allocation4], %s600
        // Predicated region
        $region81: #{tpu_custom_call.1} parent=79 // pred_check
          %p602 = pneg %p73
        $region82: #{tpu_custom_call.1} parent=79 // pred_check_branch
          %604 = sbr.rel (%p602) target = $region84
        $region83: #{tpu_custom_call.1} parent=79 // pred_region
          %605 = dma.done %s598, 2048
        $region84: #{tpu_custom_call.1} parent=79 // pred_fallthru
          _
        %s606 = sand.u32 %s38, 1
        %s607 = scalar_lea.sflag [#allocation8], %s606
        %s608 = sand.u32 %s86, 1
        %s609 = smul.addr %s608, 128
        %s610 = scalar_lea.vmem [#allocation7], %s609
        // Predicated region
        $region85: #{tpu_custom_call.1} parent=79 // pred_check
          %p611 = pneg %p99
        $region86: #{tpu_custom_call.1} parent=79 // pred_check_branch
          %613 = sbr.rel (%p611) target = $region88
        $region87: #{tpu_custom_call.1} parent=79 // pred_region
          %614 = dma.done %s607, 2048
        $region88: #{tpu_custom_call.1} parent=79 // pred_fallthru
          _
        %s615 = sand.u32 %s38, 1
        %s616 = scalar_lea.sflag [#allocation8], %s615
        %s617 = sand.u32 %s114, 1
        %s618 = smul.addr %s617, 16
        %s619 = scalar_lea.vmem [#allocation9], %s618
        // Predicated region
        $region89: #{tpu_custom_call.1} parent=79 // pred_check
          %p620 = pneg %p127
        $region90: #{tpu_custom_call.1} parent=79 // pred_check_branch
          %622 = sbr.rel (%p620) target = $region92
        $region91: #{tpu_custom_call.1} parent=79 // pred_region
          %623 = dma.done %s616, 256
        $region92: #{tpu_custom_call.1} parent=79 // pred_fallthru
          _
        // Predicated region
        $region93: #{tpu_custom_call.1} parent=79 // pred_check
          %p624 = pneg %p148
        $region94: #{tpu_custom_call.1} parent=79 // pred_check_branch
          %626 = sbr.rel (%p624) target = $region96
        $region95: #{tpu_custom_call.1} parent=79 // pred_region
          %627 = dma.done [#allocation11], 4096
        $region96: #{tpu_custom_call.1} parent=79 // pred_fallthru
          _
        // Predicated region
        $region97: #{tpu_custom_call.1} parent=79 // pred_check
          %p628 = pneg %p169
        $region98: #{tpu_custom_call.1} parent=79 // pred_check_branch
          %630 = sbr.rel (%p628) target = $region100
        $region99: #{tpu_custom_call.1} parent=79 // pred_region
          %631 = dma.done [#allocation11], 4096
        $region100: #{tpu_custom_call.1} parent=79 // pred_fallthru
          _
        // Predicated region
        $region101: #{tpu_custom_call.1} parent=79 // pred_check
          %p632 = pneg %p190
        $region102: #{tpu_custom_call.1} parent=79 // pred_check_branch
          %634 = sbr.rel (%p632) target = $region104
        $region103: #{tpu_custom_call.1} parent=79 // pred_region
          %635 = dma.done [#allocation14], 4096
        $region104: #{tpu_custom_call.1} parent=79 // pred_fallthru
          _
        // Predicated region
        $region105: #{tpu_custom_call.1} parent=79 // pred_check
          %p636 = pneg %p211
        $region106: #{tpu_custom_call.1} parent=79 // pred_check_branch
          %638 = sbr.rel (%p636) target = $region108
        $region107: #{tpu_custom_call.1} parent=79 // pred_region
          %639 = dma.done [#allocation14], 4096
        $region108: #{tpu_custom_call.1} parent=79 // pred_fallthru
          _
        // Predicated region
        $region109: #{tpu_custom_call.1} parent=79 // pred_check
          %p640 = pneg %p274
        $region110: #{tpu_custom_call.1} parent=79 // pred_check_branch
          %642 = sbr.rel (%p640) target = $region112
        $region111: #{tpu_custom_call.1} parent=79 // pred_region
          %643 = dma.done [#allocation17], 16384
        $region112: #{tpu_custom_call.1} parent=79 // pred_fallthru
          _
        // Predicated region
        $region113: #{tpu_custom_call.1} parent=79 // pred_check
          %p644 = pneg %p316
        $region114: #{tpu_custom_call.1} parent=79 // pred_check_branch
          %646 = sbr.rel (%p644) target = $region116
        $region115: #{tpu_custom_call.1} parent=79 // pred_region
          %647 = dma.done [#allocation17], 16384
        $region116: #{tpu_custom_call.1} parent=79 // pred_fallthru
          _
        %s648 = sand.u32 %s60, 1
        %s649 = scalar_lea.sflag [#allocation5], %s648
        %s650 = sand.u32 %s60, 1
        %s651 = smul.addr %s650, 128
        %s652 = scalar_lea.vmem [#allocation4], %s651
        %p653 = pneg %p73
        %p654 = pneg %p70
        %s655 = sand.u32 %s38, 1
        %s656 = scalar_lea.sflag [#allocation8], %s655
        %s657 = sand.u32 %s86, 1
        %s658 = smul.addr %s657, 128
        %s659 = scalar_lea.vmem [#allocation7], %s658
        %p660 = pneg %p99
        %p661 = pneg %p96
        %s662 = sand.u32 %s38, 1
        %s663 = scalar_lea.sflag [#allocation8], %s662
        %s664 = sand.u32 %s114, 1
        %s665 = smul.addr %s664, 16
        %s666 = scalar_lea.vmem [#allocation9], %s665
        %p667 = pneg %p127
        %p668 = pneg %p124
        %p669 = pneg %p148
        %p670 = pneg %p145
        %p671 = pneg %p169
        %p672 = pneg %p166
        %p673 = pneg %p190
        %p674 = pneg %p187
        %p675 = pneg %p211
        %p676 = pneg %p208
        %p677 = pneg %p232
        %p678 = pneg %p229
        %p679 = pneg %p253
        %p680 = pneg %p250
        %p681 = pneg %p274
        %p682 = pneg %p271
        %p683 = pneg %p295
        %p684 = pneg %p292
        %p685 = pneg %p316
        %p686 = pneg %p313
        %p687 = pneg %p337
        %p688 = pneg %p334
        %p689 = pneg %p358
        %p690 = pneg %p355
        %p691 = pneg %p379
        %p692 = pneg %p376
        %p693 = pneg %p407
        %p694 = pneg %p404
        %s695 = sand.u32 %s394, 1
        %s696 = scalar_lea.sflag [#allocation6], %s695
        %s697 = sand.u32 %s394, 1
        %s698 = smul.addr %s697, 128
        %s699 = scalar_lea.vmem [#allocation19], %s698
        %s700 = smul.u32 8, %s43
        %s701 = smul.u32 2, %s43
        %s702 = smul.u32 8, %s43
        %p704 = scmp.eq.s32.totalorder %s43, 0
        // Predicated region
        $region117: #{tpu_custom_call.1} parent=79 // pred_check
          %p705 = pneg %p704
        $region118: #{tpu_custom_call.1} parent=79 // pred_check_branch
          %707 = sbr.rel (%p705) target = $region120
        $region119: #{tpu_custom_call.1} parent=79 // pred_region
          %v708 = vld [vmem:[%s610] sm:$0xff]
          %v709 = vld [vmem:[%s610 + $0x8] sm:$0xff]
          %v710 = vld [vmem:[%s610 + $0x10] sm:$0xff]
          %v711 = vld [vmem:[%s610 + $0x18] sm:$0xff]
          %v712 = vld [vmem:[%s610 + $0x20] sm:$0xff]
          %v713 = vld [vmem:[%s610 + $0x28] sm:$0xff]
          %v714 = vld [vmem:[%s610 + $0x30] sm:$0xff]
          %v715 = vld [vmem:[%s610 + $0x38] sm:$0xff]
          %v716 = vld [vmem:[%s610 + $0x40] sm:$0xff]
          %v717 = vld [vmem:[%s610 + $0x48] sm:$0xff]
          %v718 = vld [vmem:[%s610 + $0x50] sm:$0xff]
          %v719 = vld [vmem:[%s610 + $0x58] sm:$0xff]
          %v720 = vld [vmem:[%s610 + $0x60] sm:$0xff]
          %v721 = vld [vmem:[%s610 + $0x68] sm:$0xff]
          %v722 = vld [vmem:[%s610 + $0x70] sm:$0xff]
          %v723 = vld [vmem:[%s610 + $0x78] sm:$0xff]
          %v724 = vld [vmem:[#allocation12] sm:$0xff]
          %v725 = vld [vmem:[#allocation12 + $0x8] sm:$0xff]
          %v726 = vld [vmem:[#allocation12 + $0x10] sm:$0xff]
          %v727 = vld [vmem:[#allocation12 + $0x18] sm:$0xff]
          %v728 = vld [vmem:[#allocation12 + $0x20] sm:$0xff]
          %v729 = vld [vmem:[#allocation12 + $0x28] sm:$0xff]
          %v730 = vld [vmem:[#allocation12 + $0x30] sm:$0xff]
          %v731 = vld [vmem:[#allocation12 + $0x38] sm:$0xff]
          %v732 = vld [vmem:[#allocation12 + $0x40] sm:$0xff]
          %v733 = vld [vmem:[#allocation12 + $0x48] sm:$0xff]
          %v734 = vld [vmem:[#allocation12 + $0x50] sm:$0xff]
          %v735 = vld [vmem:[#allocation12 + $0x58] sm:$0xff]
          %v736 = vld [vmem:[#allocation12 + $0x60] sm:$0xff]
          %v737 = vld [vmem:[#allocation12 + $0x68] sm:$0xff]
          %v738 = vld [vmem:[#allocation12 + $0x70] sm:$0xff]
          %v739 = vld [vmem:[#allocation12 + $0x78] sm:$0xff]
          %v740 = vld [vmem:[#allocation12 + $0x80] sm:$0xff]
          %v741 = vld [vmem:[#allocation12 + $0x88] sm:$0xff]
          %v742 = vld [vmem:[#allocation12 + $0x90] sm:$0xff]
          %v743 = vld [vmem:[#allocation12 + $0x98] sm:$0xff]
          %v744 = vld [vmem:[#allocation12 + $0xa0] sm:$0xff]
          %v745 = vld [vmem:[#allocation12 + $0xa8] sm:$0xff]
          %v746 = vld [vmem:[#allocation12 + $0xb0] sm:$0xff]
          %v747 = vld [vmem:[#allocation12 + $0xb8] sm:$0xff]
          %v748 = vld [vmem:[#allocation12 + $0xc0] sm:$0xff]
          %v749 = vld [vmem:[#allocation12 + $0xc8] sm:$0xff]
          %v750 = vld [vmem:[#allocation12 + $0xd0] sm:$0xff]
          %v751 = vld [vmem:[#allocation12 + $0xd8] sm:$0xff]
          %v752 = vld [vmem:[#allocation12 + $0xe0] sm:$0xff]
          %v753 = vld [vmem:[#allocation12 + $0xe8] sm:$0xff]
          %v754 = vld [vmem:[#allocation12 + $0xf0] sm:$0xff]
          %v755 = vld [vmem:[#allocation12 + $0xf8] sm:$0xff]
          %v772 = vunpack.c.l.b16 %v708
          %v773 = vunpack.c.h.b16 %v708
          %v774 = vunpack.c.l.b16 %v709
          %v775 = vunpack.c.h.b16 %v709
          %v776 = vunpack.c.l.b16 %v710
          %v777 = vunpack.c.h.b16 %v710
          %v778 = vunpack.c.l.b16 %v711
          %v779 = vunpack.c.h.b16 %v711
          %v780 = vunpack.c.l.b16 %v712
          %v781 = vunpack.c.h.b16 %v712
          %v782 = vunpack.c.l.b16 %v713
          %v783 = vunpack.c.h.b16 %v713
          %v784 = vunpack.c.l.b16 %v714
          %v785 = vunpack.c.h.b16 %v714
          %v786 = vunpack.c.l.b16 %v715
          %v787 = vunpack.c.h.b16 %v715
          %v788 = vunpack.c.l.b16 %v716
          %v789 = vunpack.c.h.b16 %v716
          %v790 = vunpack.c.l.b16 %v717
          %v791 = vunpack.c.h.b16 %v717
          %v792 = vunpack.c.l.b16 %v718
          %v793 = vunpack.c.h.b16 %v718
          %v794 = vunpack.c.l.b16 %v719
          %v795 = vunpack.c.h.b16 %v719
          %v796 = vunpack.c.l.b16 %v720
          %v797 = vunpack.c.h.b16 %v720
          %v798 = vunpack.c.l.b16 %v721
          %v799 = vunpack.c.h.b16 %v721
          %v800 = vunpack.c.l.b16 %v722
          %v801 = vunpack.c.h.b16 %v722
          %v802 = vunpack.c.l.b16 %v723
          %v803 = vunpack.c.h.b16 %v723
          %v804 = vpack.c.b16 %v774, %v772
          %v805 = vpack.c.b16 %v775, %v773
          %v806 = vpack.c.b16 %v778, %v776
          %v807 = vpack.c.b16 %v779, %v777
          %v808 = vpack.c.b16 %v782, %v780
          %v809 = vpack.c.b16 %v783, %v781
          %v810 = vpack.c.b16 %v786, %v784
          %v811 = vpack.c.b16 %v787, %v785
          %v812 = vpack.c.b16 %v790, %v788
          %v813 = vpack.c.b16 %v791, %v789
          %v814 = vpack.c.b16 %v794, %v792
          %v815 = vpack.c.b16 %v795, %v793
          %v816 = vpack.c.b16 %v798, %v796
          %v817 = vpack.c.b16 %v799, %v797
          %v818 = vpack.c.b16 %v802, %v800
          %v819 = vpack.c.b16 %v803, %v801
          %v868 = vunpack.c.l.b16 %v724
          %v869 = vunpack.c.h.b16 %v724
          %v870 = vunpack.c.l.b16 %v725
          %v871 = vunpack.c.h.b16 %v725
          %v872 = vunpack.c.l.b16 %v726
          %v873 = vunpack.c.h.b16 %v726
          %v874 = vunpack.c.l.b16 %v727
          %v875 = vunpack.c.h.b16 %v727
          %v876 = vunpack.c.l.b16 %v728
          %v877 = vunpack.c.h.b16 %v728
          %v878 = vunpack.c.l.b16 %v729
          %v879 = vunpack.c.h.b16 %v729
          %v880 = vunpack.c.l.b16 %v730
          %v881 = vunpack.c.h.b16 %v730
          %v882 = vunpack.c.l.b16 %v731
          %v883 = vunpack.c.h.b16 %v731
          %v884 = vunpack.c.l.b16 %v732
          %v885 = vunpack.c.h.b16 %v732
          %v886 = vunpack.c.l.b16 %v733
          %v887 = vunpack.c.h.b16 %v733
          %v888 = vunpack.c.l.b16 %v734
          %v889 = vunpack.c.h.b16 %v734
          %v890 = vunpack.c.l.b16 %v735
          %v891 = vunpack.c.h.b16 %v735
          %v892 = vunpack.c.l.b16 %v736
          %v893 = vunpack.c.h.b16 %v736
          %v894 = vunpack.c.l.b16 %v737
          %v895 = vunpack.c.h.b16 %v737
          %v896 = vunpack.c.l.b16 %v738
          %v897 = vunpack.c.h.b16 %v738
          %v898 = vunpack.c.l.b16 %v739
          %v899 = vunpack.c.h.b16 %v739
          %v900 = vunpack.c.l.b16 %v740
          %v901 = vunpack.c.h.b16 %v740
          %v902 = vunpack.c.l.b16 %v741
          %v903 = vunpack.c.h.b16 %v741
          %v904 = vunpack.c.l.b16 %v742
          %v905 = vunpack.c.h.b16 %v742
          %v906 = vunpack.c.l.b16 %v743
          %v907 = vunpack.c.h.b16 %v743
          %v908 = vunpack.c.l.b16 %v744
          %v909 = vunpack.c.h.b16 %v744
          %v910 = vunpack.c.l.b16 %v745
          %v911 = vunpack.c.h.b16 %v745
          %v912 = vunpack.c.l.b16 %v746
          %v913 = vunpack.c.h.b16 %v746
          %v914 = vunpack.c.l.b16 %v747
          %v915 = vunpack.c.h.b16 %v747
          %v916 = vunpack.c.l.b16 %v748
          %v917 = vunpack.c.h.b16 %v748
          %v918 = vunpack.c.l.b16 %v749
          %v919 = vunpack.c.h.b16 %v749
          %v920 = vunpack.c.l.b16 %v750
          %v921 = vunpack.c.h.b16 %v750
          %v922 = vunpack.c.l.b16 %v751
          %v923 = vunpack.c.h.b16 %v751
          %v924 = vunpack.c.l.b16 %v752
          %v925 = vunpack.c.h.b16 %v752
          %v926 = vunpack.c.l.b16 %v753
          %v927 = vunpack.c.h.b16 %v753
          %v928 = vunpack.c.l.b16 %v754
          %v929 = vunpack.c.h.b16 %v754
          %v930 = vunpack.c.l.b16 %v755
          %v931 = vunpack.c.h.b16 %v755
          %v932 = vpack.c.b16 %v870, %v868
          %v933 = vpack.c.b16 %v871, %v869
          %v934 = vpack.c.b16 %v874, %v872
          %v935 = vpack.c.b16 %v875, %v873
          %v936 = vpack.c.b16 %v878, %v876
          %v937 = vpack.c.b16 %v879, %v877
          %v938 = vpack.c.b16 %v882, %v880
          %v939 = vpack.c.b16 %v883, %v881
          %v940 = vpack.c.b16 %v886, %v884
          %v941 = vpack.c.b16 %v887, %v885
          %v942 = vpack.c.b16 %v890, %v888
          %v943 = vpack.c.b16 %v891, %v889
          %v944 = vpack.c.b16 %v894, %v892
          %v945 = vpack.c.b16 %v895, %v893
          %v946 = vpack.c.b16 %v898, %v896
          %v947 = vpack.c.b16 %v899, %v897
          %v948 = vpack.c.b16 %v902, %v900
          %v949 = vpack.c.b16 %v903, %v901
          %v950 = vpack.c.b16 %v906, %v904
          %v951 = vpack.c.b16 %v907, %v905
          %v952 = vpack.c.b16 %v910, %v908
          %v953 = vpack.c.b16 %v911, %v909
          %v954 = vpack.c.b16 %v914, %v912
          %v955 = vpack.c.b16 %v915, %v913
          %v956 = vpack.c.b16 %v918, %v916
          %v957 = vpack.c.b16 %v919, %v917
          %v958 = vpack.c.b16 %v922, %v920
          %v959 = vpack.c.b16 %v923, %v921
          %v960 = vpack.c.b16 %v926, %v924
          %v961 = vpack.c.b16 %v927, %v925
          %v962 = vpack.c.b16 %v930, %v928
          %v963 = vpack.c.b16 %v931, %v929
          %996 = vmatprep.subr.bf16.mxu0 %v933
          %997 = vmatpush1.bf16.msra.mxu0 %v932
          %998 = vmatprep.subr.bf16.mxu0 %v935
          %999 = vmatpush1.bf16.msra.mxu0 %v934
          %1000 = vmatprep.subr.bf16.mxu0 %v937
          %1001 = vmatpush1.bf16.msra.mxu0 %v936
          %1002 = vmatprep.subr.bf16.mxu0 %v939
          %1003 = vmatpush1.bf16.msra.mxu0 %v938
          %1004 = vmatprep.subr.bf16.mxu0 %v941
          %1005 = vmatpush1.bf16.msra.mxu0 %v940
          %1006 = vmatprep.subr.bf16.mxu0 %v943
          %1007 = vmatpush1.bf16.msra.mxu0 %v942
          %1008 = vmatprep.subr.bf16.mxu0 %v945
          %1009 = vmatpush1.bf16.msra.mxu0 %v944
          %1010 = vmatprep.subr.bf16.mxu0 %v947
          %1011 = vmatpush1.bf16.msra.mxu0 %v946
          %1012 = vmatprep.subr.bf16.mxu0 %v949
          %1013 = vmatpush1.bf16.msra.mxu0 %v948
          %1014 = vmatprep.subr.bf16.mxu0 %v951
          %1015 = vmatpush1.bf16.msra.mxu0 %v950
          %1016 = vmatprep.subr.bf16.mxu0 %v953
          %1017 = vmatpush1.bf16.msra.mxu0 %v952
          %1018 = vmatprep.subr.bf16.mxu0 %v955
          %1019 = vmatpush1.bf16.msra.mxu0 %v954
          %1020 = vmatprep.subr.bf16.mxu0 %v957
          %1021 = vmatpush1.bf16.msra.mxu0 %v956
          %1022 = vmatprep.subr.bf16.mxu0 %v959
          %1023 = vmatpush1.bf16.msra.mxu0 %v958
          %1024 = vmatprep.subr.bf16.mxu0 %v961
          %1025 = vmatpush1.bf16.msra.mxu0 %v960
          %1026 = vmatprep.subr.bf16.mxu0 %v963
          %1027 = vmatpush1.bf16.msra.mxu0 %v962
          %1028 = vmatprep.mubr.bf16.mxu0 %v805
          %1029 = vmatmul.mubr.bf16.gmra.mrb[0].mxu0 %v804
          %v1030 = vpop.f32.mrb[0].mxu0
          %v1031 = vadd.f32 0.0, %v1030
          %v1032 = vpop.f32.mrb[0].mxu0
          %v1033 = vadd.f32 0.0, %v1032
          %v1034 = vpop.f32.mrb[0].mxu0
          %v1035 = vadd.f32 0.0, %v1034
          %v1036 = vpop.f32.mrb[0].mxu0
          %v1037 = vadd.f32 0.0, %v1036
          %1038 = vmatprep.mubr.bf16.mxu0 %v807
          %1039 = vmatmul.mubr.bf16.gmra.mrb[0].mxu0 %v806
          %v1040 = vpop.f32.mrb[0].mxu0
          %v1041 = vadd.f32 0.0, %v1040
          %v1042 = vpop.f32.mrb[0].mxu0
          %v1043 = vadd.f32 0.0, %v1042
          %v1044 = vpop.f32.mrb[0].mxu0
          %v1045 = vadd.f32 0.0, %v1044
          %v1046 = vpop.f32.mrb[0].mxu0
          %v1047 = vadd.f32 0.0, %v1046
          %1048 = vmatprep.mubr.bf16.mxu0 %v809
          %1049 = vmatmul.mubr.bf16.gmra.mrb[0].mxu0 %v808
          %v1050 = vpop.f32.mrb[0].mxu0
          %v1051 = vadd.f32 0.0, %v1050
          %v1052 = vpop.f32.mrb[0].mxu0
          %v1053 = vadd.f32 0.0, %v1052
          %v1054 = vpop.f32.mrb[0].mxu0
          %v1055 = vadd.f32 0.0, %v1054
          %v1056 = vpop.f32.mrb[0].mxu0
          %v1057 = vadd.f32 0.0, %v1056
          %1058 = vmatprep.mubr.bf16.mxu0 %v811
          %1059 = vmatmul.mubr.bf16.gmra.mrb[0].mxu0 %v810
          %v1060 = vpop.f32.mrb[0].mxu0
          %v1061 = vadd.f32 0.0, %v1060
          %v1062 = vpop.f32.mrb[0].mxu0
          %v1063 = vadd.f32 0.0, %v1062
          %v1064 = vpop.f32.mrb[0].mxu0
          %v1065 = vadd.f32 0.0, %v1064
          %v1066 = vpop.f32.mrb[0].mxu0
          %v1067 = vadd.f32 0.0, %v1066
          %1068 = vmatprep.mubr.bf16.mxu0 %v813
          %1069 = vmatmul.mubr.bf16.gmra.mrb[0].mxu0 %v812
          %v1070 = vpop.f32.mrb[0].mxu0
          %v1071 = vadd.f32 0.0, %v1070
          %v1072 = vpop.f32.mrb[0].mxu0
          %v1073 = vadd.f32 0.0, %v1072
          %v1074 = vpop.f32.mrb[0].mxu0
          %v1075 = vadd.f32 0.0, %v1074
          %v1076 = vpop.f32.mrb[0].mxu0
          %v1077 = vadd.f32 0.0, %v1076
          %1078 = vmatprep.mubr.bf16.mxu0 %v815
          %1079 = vmatmul.mubr.bf16.gmra.mrb[0].mxu0 %v814
          %v1080 = vpop.f32.mrb[0].mxu0
          %v1081 = vadd.f32 0.0, %v1080
          %v1082 = vpop.f32.mrb[0].mxu0
          %v1083 = vadd.f32 0.0, %v1082
          %v1084 = vpop.f32.mrb[0].mxu0
          %v1085 = vadd.f32 0.0, %v1084
          %v1086 = vpop.f32.mrb[0].mxu0
          %v1087 = vadd.f32 0.0, %v1086
          %1088 = vmatprep.mubr.bf16.mxu0 %v817
          %1089 = vmatmul.mubr.bf16.gmra.mrb[0].mxu0 %v816
          %v1090 = vpop.f32.mrb[0].mxu0
          %v1091 = vadd.f32 0.0, %v1090
          %v1092 = vpop.f32.mrb[0].mxu0
          %v1093 = vadd.f32 0.0, %v1092
          %v1094 = vpop.f32.mrb[0].mxu0
          %v1095 = vadd.f32 0.0, %v1094
          %v1096 = vpop.f32.mrb[0].mxu0
          %v1097 = vadd.f32 0.0, %v1096
          %1098 = vmatprep.mubr.bf16.mxu0 %v819
          %1099 = vmatmul.mubr.bf16.gmra.mrb[0].mxu0 %v818
          %v1100 = vpop.f32.mrb[0].mxu0
          %v1101 = vadd.f32 0.0, %v1100
          %v1102 = vpop.f32.mrb[0].mxu0
          %v1103 = vadd.f32 0.0, %v1102
          %v1104 = vpop.f32.mrb[0].mxu0
          %v1105 = vadd.f32 0.0, %v1104
          %v1106 = vpop.f32.mrb[0].mxu0
          %v1107 = vadd.f32 0.0, %v1106
          %1108 = vdwg.mxu0
          %v1109 = vld [vmem:[#allocation13] sm:$0xff]
          %v1110 = vld [vmem:[#allocation13 + $0x8] sm:$0xff]
          %v1111 = vld [vmem:[#allocation13 + $0x10] sm:$0xff]
          %v1112 = vld [vmem:[#allocation13 + $0x18] sm:$0xff]
          %v1113 = vld [vmem:[#allocation13 + $0x20] sm:$0xff]
          %v1114 = vld [vmem:[#allocation13 + $0x28] sm:$0xff]
          %v1115 = vld [vmem:[#allocation13 + $0x30] sm:$0xff]
          %v1116 = vld [vmem:[#allocation13 + $0x38] sm:$0xff]
          %v1117 = vld [vmem:[#allocation13 + $0x40] sm:$0xff]
          %v1118 = vld [vmem:[#allocation13 + $0x48] sm:$0xff]
          %v1119 = vld [vmem:[#allocation13 + $0x50] sm:$0xff]
          %v1120 = vld [vmem:[#allocation13 + $0x58] sm:$0xff]
          %v1121 = vld [vmem:[#allocation13 + $0x60] sm:$0xff]
          %v1122 = vld [vmem:[#allocation13 + $0x68] sm:$0xff]
          %v1123 = vld [vmem:[#allocation13 + $0x70] sm:$0xff]
          %v1124 = vld [vmem:[#allocation13 + $0x78] sm:$0xff]
          %v1125 = vld [vmem:[#allocation13 + $0x80] sm:$0xff]
          %v1126 = vld [vmem:[#allocation13 + $0x88] sm:$0xff]
          %v1127 = vld [vmem:[#allocation13 + $0x90] sm:$0xff]
          %v1128 = vld [vmem:[#allocation13 + $0x98] sm:$0xff]
          %v1129 = vld [vmem:[#allocation13 + $0xa0] sm:$0xff]
          %v1130 = vld [vmem:[#allocation13 + $0xa8] sm:$0xff]
          %v1131 = vld [vmem:[#allocation13 + $0xb0] sm:$0xff]
          %v1132 = vld [vmem:[#allocation13 + $0xb8] sm:$0xff]
          %v1133 = vld [vmem:[#allocation13 + $0xc0] sm:$0xff]
          %v1134 = vld [vmem:[#allocation13 + $0xc8] sm:$0xff]
          %v1135 = vld [vmem:[#allocation13 + $0xd0] sm:$0xff]
          %v1136 = vld [vmem:[#allocation13 + $0xd8] sm:$0xff]
          %v1137 = vld [vmem:[#allocation13 + $0xe0] sm:$0xff]
          %v1138 = vld [vmem:[#allocation13 + $0xe8] sm:$0xff]
          %v1139 = vld [vmem:[#allocation13 + $0xf0] sm:$0xff]
          %v1140 = vld [vmem:[#allocation13 + $0xf8] sm:$0xff]
          %v1173 = vunpack.c.l.b16 %v1109
          %v1174 = vunpack.c.h.b16 %v1109
          %v1175 = vunpack.c.l.b16 %v1110
          %v1176 = vunpack.c.h.b16 %v1110
          %v1177 = vunpack.c.l.b16 %v1111
          %v1178 = vunpack.c.h.b16 %v1111
          %v1179 = vunpack.c.l.b16 %v1112
          %v1180 = vunpack.c.h.b16 %v1112
          %v1181 = vunpack.c.l.b16 %v1113
          %v1182 = vunpack.c.h.b16 %v1113
          %v1183 = vunpack.c.l.b16 %v1114
          %v1184 = vunpack.c.h.b16 %v1114
          %v1185 = vunpack.c.l.b16 %v1115
          %v1186 = vunpack.c.h.b16 %v1115
          %v1187 = vunpack.c.l.b16 %v1116
          %v1188 = vunpack.c.h.b16 %v1116
          %v1189 = vunpack.c.l.b16 %v1117
          %v1190 = vunpack.c.h.b16 %v1117
          %v1191 = vunpack.c.l.b16 %v1118
          %v1192 = vunpack.c.h.b16 %v1118
          %v1193 = vunpack.c.l.b16 %v1119
          %v1194 = vunpack.c.h.b16 %v1119
          %v1195 = vunpack.c.l.b16 %v1120
          %v1196 = vunpack.c.h.b16 %v1120
          %v1197 = vunpack.c.l.b16 %v1121
          %v1198 = vunpack.c.h.b16 %v1121
          %v1199 = vunpack.c.l.b16 %v1122
          %v1200 = vunpack.c.h.b16 %v1122
          %v1201 = vunpack.c.l.b16 %v1123
          %v1202 = vunpack.c.h.b16 %v1123
          %v1203 = vunpack.c.l.b16 %v1124
          %v1204 = vunpack.c.h.b16 %v1124
          %v1205 = vunpack.c.l.b16 %v1125
          %v1206 = vunpack.c.h.b16 %v1125
          %v1207 = vunpack.c.l.b16 %v1126
          %v1208 = vunpack.c.h.b16 %v1126
          %v1209 = vunpack.c.l.b16 %v1127
          %v1210 = vunpack.c.h.b16 %v1127
          %v1211 = vunpack.c.l.b16 %v1128
          %v1212 = vunpack.c.h.b16 %v1128
          %v1213 = vunpack.c.l.b16 %v1129
          %v1214 = vunpack.c.h.b16 %v1129
          %v1215 = vunpack.c.l.b16 %v1130
          %v1216 = vunpack.c.h.b16 %v1130
          %v1217 = vunpack.c.l.b16 %v1131
          %v1218 = vunpack.c.h.b16 %v1131
          %v1219 = vunpack.c.l.b16 %v1132
          %v1220 = vunpack.c.h.b16 %v1132
          %v1221 = vunpack.c.l.b16 %v1133
          %v1222 = vunpack.c.h.b16 %v1133
          %v1223 = vunpack.c.l.b16 %v1134
          %v1224 = vunpack.c.h.b16 %v1134
          %v1225 = vunpack.c.l.b16 %v1135
          %v1226 = vunpack.c.h.b16 %v1135
          %v1227 = vunpack.c.l.b16 %v1136
          %v1228 = vunpack.c.h.b16 %v1136
          %v1229 = vunpack.c.l.b16 %v1137
          %v1230 = vunpack.c.h.b16 %v1137
          %v1231 = vunpack.c.l.b16 %v1138
          %v1232 = vunpack.c.h.b16 %v1138
          %v1233 = vunpack.c.l.b16 %v1139
          %v1234 = vunpack.c.h.b16 %v1139
          %v1235 = vunpack.c.l.b16 %v1140
          %v1236 = vunpack.c.h.b16 %v1140
          %v1237 = vpack.c.b16 %v1175, %v1173
          %v1238 = vpack.c.b16 %v1176, %v1174
          %v1239 = vpack.c.b16 %v1179, %v1177
          %v1240 = vpack.c.b16 %v1180, %v1178
          %v1241 = vpack.c.b16 %v1183, %v1181
          %v1242 = vpack.c.b16 %v1184, %v1182
          %v1243 = vpack.c.b16 %v1187, %v1185
          %v1244 = vpack.c.b16 %v1188, %v1186
          %v1245 = vpack.c.b16 %v1191, %v1189
          %v1246 = vpack.c.b16 %v1192, %v1190
          %v1247 = vpack.c.b16 %v1195, %v1193
          %v1248 = vpack.c.b16 %v1196, %v1194
          %v1249 = vpack.c.b16 %v1199, %v1197
          %v1250 = vpack.c.b16 %v1200, %v1198
          %v1251 = vpack.c.b16 %v1203, %v1201
          %v1252 = vpack.c.b16 %v1204, %v1202
          %v1253 = vpack.c.b16 %v1207, %v1205
          %v1254 = vpack.c.b16 %v1208, %v1206
          %v1255 = vpack.c.b16 %v1211, %v1209
          %v1256 = vpack.c.b16 %v1212, %v1210
          %v1257 = vpack.c.b16 %v1215, %v1213
          %v1258 = vpack.c.b16 %v1216, %v1214
          %v1259 = vpack.c.b16 %v1219, %v1217
          %v1260 = vpack.c.b16 %v1220, %v1218
          %v1261 = vpack.c.b16 %v1223, %v1221
          %v1262 = vpack.c.b16 %v1224, %v1222
          %v1263 = vpack.c.b16 %v1227, %v1225
          %v1264 = vpack.c.b16 %v1228, %v1226
          %v1265 = vpack.c.b16 %v1231, %v1229
          %v1266 = vpack.c.b16 %v1232, %v1230
          %v1267 = vpack.c.b16 %v1235, %v1233
          %v1268 = vpack.c.b16 %v1236, %v1234
          %1301 = vmatprep.subr.bf16.mxu0 %v1238
          %1302 = vmatpush1.bf16.msra.mxu0 %v1237
          %1303 = vmatprep.subr.bf16.mxu0 %v1240
          %1304 = vmatpush1.bf16.msra.mxu0 %v1239
          %1305 = vmatprep.subr.bf16.mxu0 %v1242
          %1306 = vmatpush1.bf16.msra.mxu0 %v1241
          %1307 = vmatprep.subr.bf16.mxu0 %v1244
          %1308 = vmatpush1.bf16.msra.mxu0 %v1243
          %1309 = vmatprep.subr.bf16.mxu0 %v1246
          %1310 = vmatpush1.bf16.msra.mxu0 %v1245
          %1311 = vmatprep.subr.bf16.mxu0 %v1248
          %1312 = vmatpush1.bf16.msra.mxu0 %v1247
          %1313 = vmatprep.subr.bf16.mxu0 %v1250
          %1314 = vmatpush1.bf16.msra.mxu0 %v1249
          %1315 = vmatprep.subr.bf16.mxu0 %v1252
          %1316 = vmatpush1.bf16.msra.mxu0 %v1251
          %1317 = vmatprep.subr.bf16.mxu0 %v1254
          %1318 = vmatpush1.bf16.msra.mxu0 %v1253
          %1319 = vmatprep.subr.bf16.mxu0 %v1256
          %1320 = vmatpush1.bf16.msra.mxu0 %v1255
          %1321 = vmatprep.subr.bf16.mxu0 %v1258
          %1322 = vmatpush1.bf16.msra.mxu0 %v1257
          %1323 = vmatprep.subr.bf16.mxu0 %v1260
          %1324 = vmatpush1.bf16.msra.mxu0 %v1259
          %1325 = vmatprep.subr.bf16.mxu0 %v1262
          %1326 = vmatpush1.bf16.msra.mxu0 %v1261
          %1327 = vmatprep.subr.bf16.mxu0 %v1264
          %1328 = vmatpush1.bf16.msra.mxu0 %v1263
          %1329 = vmatprep.subr.bf16.mxu0 %v1266
          %1330 = vmatpush1.bf16.msra.mxu0 %v1265
          %1331 = vmatprep.subr.bf16.mxu0 %v1268
          %1332 = vmatpush1.bf16.msra.mxu0 %v1267
          %1333 = vmatprep.mubr.bf16.mxu0 %v805
          %1334 = vmatmul.mubr.bf16.gmra.mrb[0].mxu0 %v804
          %v1335 = vpop.f32.mrb[0].mxu0
          %v1336 = vadd.f32 0.0, %v1335
          %v1337 = vpop.f32.mrb[0].mxu0
          %v1338 = vadd.f32 0.0, %v1337
          %v1339 = vpop.f32.mrb[0].mxu0
          %v1340 = vadd.f32 0.0, %v1339
          %v1341 = vpop.f32.mrb[0].mxu0
          %v1342 = vadd.f32 0.0, %v1341
          %1343 = vmatprep.mubr.bf16.mxu0 %v807
          %1344 = vmatmul.mubr.bf16.gmra.mrb[0].mxu0 %v806
          %v1345 = vpop.f32.mrb[0].mxu0
          %v1346 = vadd.f32 0.0, %v1345
          %v1347 = vpop.f32.mrb[0].mxu0
          %v1348 = vadd.f32 0.0, %v1347
          %v1349 = vpop.f32.mrb[0].mxu0
          %v1350 = vadd.f32 0.0, %v1349
          %v1351 = vpop.f32.mrb[0].mxu0
          %v1352 = vadd.f32 0.0, %v1351
          %1353 = vmatprep.mubr.bf16.mxu0 %v809
          %1354 = vmatmul.mubr.bf16.gmra.mrb[0].mxu0 %v808
          %v1355 = vpop.f32.mrb[0].mxu0
          %v1356 = vadd.f32 0.0, %v1355
          %v1357 = vpop.f32.mrb[0].mxu0
          %v1358 = vadd.f32 0.0, %v1357
          %v1359 = vpop.f32.mrb[0].mxu0
          %v1360 = vadd.f32 0.0, %v1359
          %v1361 = vpop.f32.mrb[0].mxu0
          %v1362 = vadd.f32 0.0, %v1361
          %1363 = vmatprep.mubr.bf16.mxu0 %v811
          %1364 = vmatmul.mubr.bf16.gmra.mrb[0].mxu0 %v810
          %v1365 = vpop.f32.mrb[0].mxu0
          %v1366 = vadd.f32 0.0, %v1365
          %v1367 = vpop.f32.mrb[0].mxu0
          %v1368 = vadd.f32 0.0, %v1367
          %v1369 = vpop.f32.mrb[0].mxu0
          %v1370 = vadd.f32 0.0, %v1369
          %v1371 = vpop.f32.mrb[0].mxu0
          %v1372 = vadd.f32 0.0, %v1371
          %1373 = vmatprep.mubr.bf16.mxu0 %v813
          %1374 = vmatmul.mubr.bf16.gmra.mrb[0].mxu0 %v812
          %v1375 = vpop.f32.mrb[0].mxu0
          %v1376 = vadd.f32 0.0, %v1375
          %v1377 = vpop.f32.mrb[0].mxu0
          %v1378 = vadd.f32 0.0, %v1377
          %v1379 = vpop.f32.mrb[0].mxu0
          %v1380 = vadd.f32 0.0, %v1379
          %v1381 = vpop.f32.mrb[0].mxu0
          %v1382 = vadd.f32 0.0, %v1381
          %1383 = vmatprep.mubr.bf16.mxu0 %v815
          %1384 = vmatmul.mubr.bf16.gmra.mrb[0].mxu0 %v814
          %v1385 = vpop.f32.mrb[0].mxu0
          %v1386 = vadd.f32 0.0, %v1385
          %v1387 = vpop.f32.mrb[0].mxu0
          %v1388 = vadd.f32 0.0, %v1387
          %v1389 = vpop.f32.mrb[0].mxu0
          %v1390 = vadd.f32 0.0, %v1389
          %v1391 = vpop.f32.mrb[0].mxu0
          %v1392 = vadd.f32 0.0, %v1391
          %1393 = vmatprep.mubr.bf16.mxu0 %v817
          %1394 = vmatmul.mubr.bf16.gmra.mrb[0].mxu0 %v816
          %v1395 = vpop.f32.mrb[0].mxu0
          %v1396 = vadd.f32 0.0, %v1395
          %v1397 = vpop.f32.mrb[0].mxu0
          %v1398 = vadd.f32 0.0, %v1397
          %v1399 = vpop.f32.mrb[0].mxu0
          %v1400 = vadd.f32 0.0, %v1399
          %v1401 = vpop.f32.mrb[0].mxu0
          %v1402 = vadd.f32 0.0, %v1401
          %1403 = vmatprep.mubr.bf16.mxu0 %v819
          %1404 = vmatmul.mubr.bf16.gmra.mrb[0].mxu0 %v818
          %v1405 = vpop.f32.mrb[0].mxu0
          %v1406 = vadd.f32 0.0, %v1405
          %v1407 = vpop.f32.mrb[0].mxu0
          %v1408 = vadd.f32 0.0, %v1407
          %v1409 = vpop.f32.mrb[0].mxu0
          %v1410 = vadd.f32 0.0, %v1409
          %v1411 = vpop.f32.mrb[0].mxu0
          %v1412 = vadd.f32 0.0, %v1411
          %1413 = vdwg.mxu0
          %v1414 = vcombine.high %v1031, 0.0
          %v1416 = vunpack.c.l.s4 1983009808
          %v1417 = vunpack.c.0.s8 %v1416
          %v1418 = vlaneseq
          %v1419 = vshrl.u32 %v1418, 7
          %v1420 = vsub.s32 %v1417, %v1419
          %v1421 = vrot.slane %v1031, %v1420
          %v1423 = vunpack.c.l.s4 1983009808
          %v1424 = vunpack.c.0.s8 %v1423
          %v1425 = vlaneseq
          %v1426 = vshrl.u32 %v1425, 7
          %v1427 = vsub.s32 %v1424, %v1426
          %v1428 = vrot.slane %v1414, %v1427
          %v1429 = vcombine.high %v1033, 0.0
          %v1431 = vunpack.c.l.s4 1983009808
          %v1432 = vunpack.c.0.s8 %v1431
          %v1433 = vlaneseq
          %v1434 = vshrl.u32 %v1433, 7
          %v1435 = vsub.s32 %v1432, %v1434
          %v1436 = vrot.slane %v1033, %v1435
          %v1438 = vunpack.c.l.s4 1983009808
          %v1439 = vunpack.c.0.s8 %v1438
          %v1440 = vlaneseq
          %v1441 = vshrl.u32 %v1440, 7
          %v1442 = vsub.s32 %v1439, %v1441
          %v1443 = vrot.slane %v1429, %v1442
          %v1444 = vcombine.low %v1421, %v1436
          %v1445 = vcombine.high %v1421, %v1436
          %v1447 = vunpack.c.l.s4 1934713408
          %v1448 = vunpack.c.0.s8 %v1447
          %v1449 = vlaneseq
          %v1450 = vshrl.u32 %v1449, 7
          %v1451 = vsub.s32 %v1448, %v1450
          %v1452 = vrot.slane %v1444, %v1451
          %v1454 = vunpack.c.l.s4 1934713408
          %v1455 = vunpack.c.0.s8 %v1454
          %v1456 = vlaneseq
          %v1457 = vshrl.u32 %v1456, 7
          %v1458 = vsub.s32 %v1455, %v1457
          %v1459 = vrot.slane %v1445, %v1458
          %v1460 = vcombine.low %v1428, %v1443
          %v1461 = vcombine.high %v1428, %v1443
          %v1463 = vunpack.c.l.s4 1934713408
          %v1464 = vunpack.c.0.s8 %v1463
          %v1465 = vlaneseq
          %v1466 = vshrl.u32 %v1465, 7
          %v1467 = vsub.s32 %v1464, %v1466
          %v1468 = vrot.slane %v1460, %v1467
          %v1470 = vunpack.c.l.s4 1934713408
          %v1471 = vunpack.c.0.s8 %v1470
          %v1472 = vlaneseq
          %v1473 = vshrl.u32 %v1472, 7
          %v1474 = vsub.s32 %v1471, %v1473
          %v1475 = vrot.slane %v1461, %v1474
          %v1476 = vcombine.high %v1452, 0.0
          %v1477 = vcombine.high %v1459, 0.0
          %v1478 = vcombine.high %v1468, 0.0
          %v1479 = vcombine.high %v1475, 0.0
          %v1480 = vcombine.high %v1035, 0.0
          %v1482 = vunpack.c.l.s4 1983009808
          %v1483 = vunpack.c.0.s8 %v1482
          %v1484 = vlaneseq
          %v1485 = vshrl.u32 %v1484, 7
          %v1486 = vsub.s32 %v1483, %v1485
          %v1487 = vrot.slane %v1035, %v1486
          %v1489 = vunpack.c.l.s4 1983009808
          %v1490 = vunpack.c.0.s8 %v1489
          %v1491 = vlaneseq
          %v1492 = vshrl.u32 %v1491, 7
          %v1493 = vsub.s32 %v1490, %v1492
          %v1494 = vrot.slane %v1480, %v1493
          %v1495 = vcombine.high %v1037, 0.0
          %v1497 = vunpack.c.l.s4 1983009808
          %v1498 = vunpack.c.0.s8 %v1497
          %v1499 = vlaneseq
          %v1500 = vshrl.u32 %v1499, 7
          %v1501 = vsub.s32 %v1498, %v1500
          %v1502 = vrot.slane %v1037, %v1501
          %v1504 = vunpack.c.l.s4 1983009808
          %v1505 = vunpack.c.0.s8 %v1504
          %v1506 = vlaneseq
          %v1507 = vshrl.u32 %v1506, 7
          %v1508 = vsub.s32 %v1505, %v1507
          %v1509 = vrot.slane %v1495, %v1508
          %v1510 = vcombine.low %v1487, %v1502
          %v1511 = vcombine.high %v1487, %v1502
          %v1513 = vunpack.c.l.s4 1934713408
          %v1514 = vunpack.c.0.s8 %v1513
          %v1515 = vlaneseq
          %v1516 = vshrl.u32 %v1515, 7
          %v1517 = vsub.s32 %v1514, %v1516
          %v1518 = vrot.slane %v1510, %v1517
          %v1520 = vunpack.c.l.s4 1934713408
          %v1521 = vunpack.c.0.s8 %v1520
          %v1522 = vlaneseq
          %v1523 = vshrl.u32 %v1522, 7
          %v1524 = vsub.s32 %v1521, %v1523
          %v1525 = vrot.slane %v1511, %v1524
          %v1526 = vcombine.low %v1494, %v1509
          %v1527 = vcombine.high %v1494, %v1509
          %v1529 = vunpack.c.l.s4 1934713408
          %v1530 = vunpack.c.0.s8 %v1529
          %v1531 = vlaneseq
          %v1532 = vshrl.u32 %v1531, 7
          %v1533 = vsub.s32 %v1530, %v1532
          %v1534 = vrot.slane %v1526, %v1533
          %v1536 = vunpack.c.l.s4 1934713408
          %v1537 = vunpack.c.0.s8 %v1536
          %v1538 = vlaneseq
          %v1539 = vshrl.u32 %v1538, 7
          %v1540 = vsub.s32 %v1537, %v1539
          %v1541 = vrot.slane %v1527, %v1540
          %v1542 = vcombine.high %v1518, 0.0
          %v1543 = vcombine.high %v1525, 0.0
          %v1544 = vcombine.high %v1534, 0.0
          %v1545 = vcombine.high %v1541, 0.0
          %v1546 = vcombine.high %v1041, 0.0
          %v1548 = vunpack.c.l.s4 1983009808
          %v1549 = vunpack.c.0.s8 %v1548
          %v1550 = vlaneseq
          %v1551 = vshrl.u32 %v1550, 7
          %v1552 = vsub.s32 %v1549, %v1551
          %v1553 = vrot.slane %v1041, %v1552
          %v1555 = vunpack.c.l.s4 1983009808
          %v1556 = vunpack.c.0.s8 %v1555
          %v1557 = vlaneseq
          %v1558 = vshrl.u32 %v1557, 7
          %v1559 = vsub.s32 %v1556, %v1558
          %v1560 = vrot.slane %v1546, %v1559
          %v1561 = vcombine.high %v1043, 0.0
          %v1563 = vunpack.c.l.s4 1983009808
          %v1564 = vunpack.c.0.s8 %v1563
          %v1565 = vlaneseq
          %v1566 = vshrl.u32 %v1565, 7
          %v1567 = vsub.s32 %v1564, %v1566
          %v1568 = vrot.slane %v1043, %v1567
          %v1570 = vunpack.c.l.s4 1983009808
          %v1571 = vunpack.c.0.s8 %v1570
          %v1572 = vlaneseq
          %v1573 = vshrl.u32 %v1572, 7
          %v1574 = vsub.s32 %v1571, %v1573
          %v1575 = vrot.slane %v1561, %v1574
          %v1576 = vcombine.low %v1553, %v1568
          %v1577 = vcombine.high %v1553, %v1568
          %v1579 = vunpack.c.l.s4 1934713408
          %v1580 = vunpack.c.0.s8 %v1579
          %v1581 = vlaneseq
          %v1582 = vshrl.u32 %v1581, 7
          %v1583 = vsub.s32 %v1580, %v1582
          %v1584 = vrot.slane %v1576, %v1583
          %v1586 = vunpack.c.l.s4 1934713408
          %v1587 = vunpack.c.0.s8 %v1586
          %v1588 = vlaneseq
          %v1589 = vshrl.u32 %v1588, 7
          %v1590 = vsub.s32 %v1587, %v1589
          %v1591 = vrot.slane %v1577, %v1590
          %v1592 = vcombine.low %v1560, %v1575
          %v1593 = vcombine.high %v1560, %v1575
          %v1595 = vunpack.c.l.s4 1934713408
          %v1596 = vunpack.c.0.s8 %v1595
          %v1597 = vlaneseq
          %v1598 = vshrl.u32 %v1597, 7
          %v1599 = vsub.s32 %v1596, %v1598
          %v1600 = vrot.slane %v1592, %v1599
          %v1602 = vunpack.c.l.s4 1934713408
          %v1603 = vunpack.c.0.s8 %v1602
          %v1604 = vlaneseq
          %v1605 = vshrl.u32 %v1604, 7
          %v1606 = vsub.s32 %v1603, %v1605
          %v1607 = vrot.slane %v1593, %v1606
          %v1608 = vcombine.high %v1584, 0.0
          %v1609 = vcombine.high %v1591, 0.0
          %v1610 = vcombine.high %v1600, 0.0
          %v1611 = vcombine.high %v1607, 0.0
          %v1612 = vcombine.high %v1045, 0.0
          %v1614 = vunpack.c.l.s4 1983009808
          %v1615 = vunpack.c.0.s8 %v1614
          %v1616 = vlaneseq
          %v1617 = vshrl.u32 %v1616, 7
          %v1618 = vsub.s32 %v1615, %v1617
          %v1619 = vrot.slane %v1045, %v1618
          %v1621 = vunpack.c.l.s4 1983009808
          %v1622 = vunpack.c.0.s8 %v1621
          %v1623 = vlaneseq
          %v1624 = vshrl.u32 %v1623, 7
          %v1625 = vsub.s32 %v1622, %v1624
          %v1626 = vrot.slane %v1612, %v1625
          %v1627 = vcombine.high %v1047, 0.0
          %v1629 = vunpack.c.l.s4 1983009808
          %v1630 = vunpack.c.0.s8 %v1629
          %v1631 = vlaneseq
          %v1632 = vshrl.u32 %v1631, 7
          %v1633 = vsub.s32 %v1630, %v1632
          %v1634 = vrot.slane %v1047, %v1633
          %v1636 = vunpack.c.l.s4 1983009808
          %v1637 = vunpack.c.0.s8 %v1636
          %v1638 = vlaneseq
          %v1639 = vshrl.u32 %v1638, 7
          %v1640 = vsub.s32 %v1637, %v1639
          %v1641 = vrot.slane %v1627, %v1640
          %v1642 = vcombine.low %v1619, %v1634
          %v1643 = vcombine.high %v1619, %v1634
          %v1645 = vunpack.c.l.s4 1934713408
          %v1646 = vunpack.c.0.s8 %v1645
          %v1647 = vlaneseq
          %v1648 = vshrl.u32 %v1647, 7
          %v1649 = vsub.s32 %v1646, %v1648
          %v1650 = vrot.slane %v1642, %v1649
          %v1652 = vunpack.c.l.s4 1934713408
          %v1653 = vunpack.c.0.s8 %v1652
          %v1654 = vlaneseq
          %v1655 = vshrl.u32 %v1654, 7
          %v1656 = vsub.s32 %v1653, %v1655
          %v1657 = vrot.slane %v1643, %v1656
          %v1658 = vcombine.low %v1626, %v1641
          %v1659 = vcombine.high %v1626, %v1641
          %v1661 = vunpack.c.l.s4 1934713408
          %v1662 = vunpack.c.0.s8 %v1661
          %v1663 = vlaneseq
          %v1664 = vshrl.u32 %v1663, 7
          %v1665 = vsub.s32 %v1662, %v1664
          %v1666 = vrot.slane %v1658, %v1665
          %v1668 = vunpack.c.l.s4 1934713408
          %v1669 = vunpack.c.0.s8 %v1668
          %v1670 = vlaneseq
          %v1671 = vshrl.u32 %v1670, 7
          %v1672 = vsub.s32 %v1669, %v1671
          %v1673 = vrot.slane %v1659, %v1672
          %v1674 = vcombine.high %v1650, 0.0
          %v1675 = vcombine.high %v1657, 0.0
          %v1676 = vcombine.high %v1666, 0.0
          %v1677 = vcombine.high %v1673, 0.0
          %v1678 = vcombine.high %v1051, 0.0
          %v1680 = vunpack.c.l.s4 1983009808
          %v1681 = vunpack.c.0.s8 %v1680
          %v1682 = vlaneseq
          %v1683 = vshrl.u32 %v1682, 7
          %v1684 = vsub.s32 %v1681, %v1683
          %v1685 = vrot.slane %v1051, %v1684
          %v1687 = vunpack.c.l.s4 1983009808
          %v1688 = vunpack.c.0.s8 %v1687
          %v1689 = vlaneseq
          %v1690 = vshrl.u32 %v1689, 7
          %v1691 = vsub.s32 %v1688, %v1690
          %v1692 = vrot.slane %v1678, %v1691
          %v1693 = vcombine.high %v1053, 0.0
          %v1695 = vunpack.c.l.s4 1983009808
          %v1696 = vunpack.c.0.s8 %v1695
          %v1697 = vlaneseq
          %v1698 = vshrl.u32 %v1697, 7
          %v1699 = vsub.s32 %v1696, %v1698
          %v1700 = vrot.slane %v1053, %v1699
          %v1702 = vunpack.c.l.s4 1983009808
          %v1703 = vunpack.c.0.s8 %v1702
          %v1704 = vlaneseq
          %v1705 = vshrl.u32 %v1704, 7
          %v1706 = vsub.s32 %v1703, %v1705
          %v1707 = vrot.slane %v1693, %v1706
          %v1708 = vcombine.low %v1685, %v1700
          %v1709 = vcombine.high %v1685, %v1700
          %v1711 = vunpack.c.l.s4 1934713408
          %v1712 = vunpack.c.0.s8 %v1711
          %v1713 = vlaneseq
          %v1714 = vshrl.u32 %v1713, 7
          %v1715 = vsub.s32 %v1712, %v1714
          %v1716 = vrot.slane %v1708, %v1715
          %v1718 = vunpack.c.l.s4 1934713408
          %v1719 = vunpack.c.0.s8 %v1718
          %v1720 = vlaneseq
          %v1721 = vshrl.u32 %v1720, 7
          %v1722 = vsub.s32 %v1719, %v1721
          %v1723 = vrot.slane %v1709, %v1722
          %v1724 = vcombine.low %v1692, %v1707
          %v1725 = vcombine.high %v1692, %v1707
          %v1727 = vunpack.c.l.s4 1934713408
          %v1728 = vunpack.c.0.s8 %v1727
          %v1729 = vlaneseq
          %v1730 = vshrl.u32 %v1729, 7
          %v1731 = vsub.s32 %v1728, %v1730
          %v1732 = vrot.slane %v1724, %v1731
          %v1734 = vunpack.c.l.s4 1934713408
          %v1735 = vunpack.c.0.s8 %v1734
          %v1736 = vlaneseq
          %v1737 = vshrl.u32 %v1736, 7
          %v1738 = vsub.s32 %v1735, %v1737
          %v1739 = vrot.slane %v1725, %v1738
          %v1740 = vcombine.high %v1716, 0.0
          %v1741 = vcombine.high %v1723, 0.0
          %v1742 = vcombine.high %v1732, 0.0
          %v1743 = vcombine.high %v1739, 0.0
          %v1744 = vcombine.high %v1055, 0.0
          %v1746 = vunpack.c.l.s4 1983009808
          %v1747 = vunpack.c.0.s8 %v1746
          %v1748 = vlaneseq
          %v1749 = vshrl.u32 %v1748, 7
          %v1750 = vsub.s32 %v1747, %v1749
          %v1751 = vrot.slane %v1055, %v1750
          %v1753 = vunpack.c.l.s4 1983009808
          %v1754 = vunpack.c.0.s8 %v1753
          %v1755 = vlaneseq
          %v1756 = vshrl.u32 %v1755, 7
          %v1757 = vsub.s32 %v1754, %v1756
          %v1758 = vrot.slane %v1744, %v1757
          %v1759 = vcombine.high %v1057, 0.0
          %v1761 = vunpack.c.l.s4 1983009808
          %v1762 = vunpack.c.0.s8 %v1761
          %v1763 = vlaneseq
          %v1764 = vshrl.u32 %v1763, 7
          %v1765 = vsub.s32 %v1762, %v1764
          %v1766 = vrot.slane %v1057, %v1765
          %v1768 = vunpack.c.l.s4 1983009808
          %v1769 = vunpack.c.0.s8 %v1768
          %v1770 = vlaneseq
          %v1771 = vshrl.u32 %v1770, 7
          %v1772 = vsub.s32 %v1769, %v1771
          %v1773 = vrot.slane %v1759, %v1772
          %v1774 = vcombine.low %v1751, %v1766
          %v1775 = vcombine.high %v1751, %v1766
          %v1777 = vunpack.c.l.s4 1934713408
          %v1778 = vunpack.c.0.s8 %v1777
          %v1779 = vlaneseq
          %v1780 = vshrl.u32 %v1779, 7
          %v1781 = vsub.s32 %v1778, %v1780
          %v1782 = vrot.slane %v1774, %v1781
          %v1784 = vunpack.c.l.s4 1934713408
          %v1785 = vunpack.c.0.s8 %v1784
          %v1786 = vlaneseq
          %v1787 = vshrl.u32 %v1786, 7
          %v1788 = vsub.s32 %v1785, %v1787
          %v1789 = vrot.slane %v1775, %v1788
          %v1790 = vcombine.low %v1758, %v1773
          %v1791 = vcombine.high %v1758, %v1773
          %v1793 = vunpack.c.l.s4 1934713408
          %v1794 = vunpack.c.0.s8 %v1793
          %v1795 = vlaneseq
          %v1796 = vshrl.u32 %v1795, 7
          %v1797 = vsub.s32 %v1794, %v1796
          %v1798 = vrot.slane %v1790, %v1797
          %v1800 = vunpack.c.l.s4 1934713408
          %v1801 = vunpack.c.0.s8 %v1800
          %v1802 = vlaneseq
          %v1803 = vshrl.u32 %v1802, 7
          %v1804 = vsub.s32 %v1801, %v1803
          %v1805 = vrot.slane %v1791, %v1804
          %v1806 = vcombine.high %v1782, 0.0
          %v1807 = vcombine.high %v1789, 0.0
          %v1808 = vcombine.high %v1798, 0.0
          %v1809 = vcombine.high %v1805, 0.0
          %v1810 = vcombine.high %v1061, 0.0
          %v1812 = vunpack.c.l.s4 1983009808
          %v1813 = vunpack.c.0.s8 %v1812
          %v1814 = vlaneseq
          %v1815 = vshrl.u32 %v1814, 7
          %v1816 = vsub.s32 %v1813, %v1815
          %v1817 = vrot.slane %v1061, %v1816
          %v1819 = vunpack.c.l.s4 1983009808
          %v1820 = vunpack.c.0.s8 %v1819
          %v1821 = vlaneseq
          %v1822 = vshrl.u32 %v1821, 7
          %v1823 = vsub.s32 %v1820, %v1822
          %v1824 = vrot.slane %v1810, %v1823
          %v1825 = vcombine.high %v1063, 0.0
          %v1827 = vunpack.c.l.s4 1983009808
          %v1828 = vunpack.c.0.s8 %v1827
          %v1829 = vlaneseq
          %v1830 = vshrl.u32 %v1829, 7
          %v1831 = vsub.s32 %v1828, %v1830
          %v1832 = vrot.slane %v1063, %v1831
          %v1834 = vunpack.c.l.s4 1983009808
          %v1835 = vunpack.c.0.s8 %v1834
          %v1836 = vlaneseq
          %v1837 = vshrl.u32 %v1836, 7
          %v1838 = vsub.s32 %v1835, %v1837
          %v1839 = vrot.slane %v1825, %v1838
          %v1840 = vcombine.low %v1817, %v1832
          %v1841 = vcombine.high %v1817, %v1832
          %v1843 = vunpack.c.l.s4 1934713408
          %v1844 = vunpack.c.0.s8 %v1843
          %v1845 = vlaneseq
          %v1846 = vshrl.u32 %v1845, 7
          %v1847 = vsub.s32 %v1844, %v1846
          %v1848 = vrot.slane %v1840, %v1847
          %v1850 = vunpack.c.l.s4 1934713408
          %v1851 = vunpack.c.0.s8 %v1850
          %v1852 = vlaneseq
          %v1853 = vshrl.u32 %v1852, 7
          %v1854 = vsub.s32 %v1851, %v1853
          %v1855 = vrot.slane %v1841, %v1854
          %v1856 = vcombine.low %v1824, %v1839
          %v1857 = vcombine.high %v1824, %v1839
          %v1859 = vunpack.c.l.s4 1934713408
          %v1860 = vunpack.c.0.s8 %v1859
          %v1861 = vlaneseq
          %v1862 = vshrl.u32 %v1861, 7
          %v1863 = vsub.s32 %v1860, %v1862
          %v1864 = vrot.slane %v1856, %v1863
          %v1866 = vunpack.c.l.s4 1934713408
          %v1867 = vunpack.c.0.s8 %v1866
          %v1868 = vlaneseq
          %v1869 = vshrl.u32 %v1868, 7
          %v1870 = vsub.s32 %v1867, %v1869
          %v1871 = vrot.slane %v1857, %v1870
          %v1872 = vcombine.high %v1848, 0.0
          %v1873 = vcombine.high %v1855, 0.0
          %v1874 = vcombine.high %v1864, 0.0
          %v1875 = vcombine.high %v1871, 0.0
          %v1876 = vcombine.high %v1065, 0.0
          %v1878 = vunpack.c.l.s4 1983009808
          %v1879 = vunpack.c.0.s8 %v1878
          %v1880 = vlaneseq
          %v1881 = vshrl.u32 %v1880, 7
          %v1882 = vsub.s32 %v1879, %v1881
          %v1883 = vrot.slane %v1065, %v1882
          %v1885 = vunpack.c.l.s4 1983009808
          %v1886 = vunpack.c.0.s8 %v1885
          %v1887 = vlaneseq
          %v1888 = vshrl.u32 %v1887, 7
          %v1889 = vsub.s32 %v1886, %v1888
          %v1890 = vrot.slane %v1876, %v1889
          %v1891 = vcombine.high %v1067, 0.0
          %v1893 = vunpack.c.l.s4 1983009808
          %v1894 = vunpack.c.0.s8 %v1893
          %v1895 = vlaneseq
          %v1896 = vshrl.u32 %v1895, 7
          %v1897 = vsub.s32 %v1894, %v1896
          %v1898 = vrot.slane %v1067, %v1897
          %v1900 = vunpack.c.l.s4 1983009808
          %v1901 = vunpack.c.0.s8 %v1900
          %v1902 = vlaneseq
          %v1903 = vshrl.u32 %v1902, 7
          %v1904 = vsub.s32 %v1901, %v1903
          %v1905 = vrot.slane %v1891, %v1904
          %v1906 = vcombine.low %v1883, %v1898
          %v1907 = vcombine.high %v1883, %v1898
          %v1909 = vunpack.c.l.s4 1934713408
          %v1910 = vunpack.c.0.s8 %v1909
          %v1911 = vlaneseq
          %v1912 = vshrl.u32 %v1911, 7
          %v1913 = vsub.s32 %v1910, %v1912
          %v1914 = vrot.slane %v1906, %v1913
          %v1916 = vunpack.c.l.s4 1934713408
          %v1917 = vunpack.c.0.s8 %v1916
          %v1918 = vlaneseq
          %v1919 = vshrl.u32 %v1918, 7
          %v1920 = vsub.s32 %v1917, %v1919
          %v1921 = vrot.slane %v1907, %v1920
          %v1922 = vcombine.low %v1890, %v1905
          %v1923 = vcombine.high %v1890, %v1905
          %v1925 = vunpack.c.l.s4 1934713408
          %v1926 = vunpack.c.0.s8 %v1925
          %v1927 = vlaneseq
          %v1928 = vshrl.u32 %v1927, 7
          %v1929 = vsub.s32 %v1926, %v1928
          %v1930 = vrot.slane %v1922, %v1929
          %v1932 = vunpack.c.l.s4 1934713408
          %v1933 = vunpack.c.0.s8 %v1932
          %v1934 = vlaneseq
          %v1935 = vshrl.u32 %v1934, 7
          %v1936 = vsub.s32 %v1933, %v1935
          %v1937 = vrot.slane %v1923, %v1936
          %v1938 = vcombine.high %v1914, 0.0
          %v1939 = vcombine.high %v1921, 0.0
          %v1940 = vcombine.high %v1930, 0.0
          %v1941 = vcombine.high %v1937, 0.0
          %v1942 = vcombine.high %v1071, 0.0
          %v1944 = vunpack.c.l.s4 1983009808
          %v1945 = vunpack.c.0.s8 %v1944
          %v1946 = vlaneseq
          %v1947 = vshrl.u32 %v1946, 7
          %v1948 = vsub.s32 %v1945, %v1947
          %v1949 = vrot.slane %v1071, %v1948
          %v1951 = vunpack.c.l.s4 1983009808
          %v1952 = vunpack.c.0.s8 %v1951
          %v1953 = vlaneseq
          %v1954 = vshrl.u32 %v1953, 7
          %v1955 = vsub.s32 %v1952, %v1954
          %v1956 = vrot.slane %v1942, %v1955
          %v1957 = vcombine.high %v1073, 0.0
          %v1959 = vunpack.c.l.s4 1983009808
          %v1960 = vunpack.c.0.s8 %v1959
          %v1961 = vlaneseq
          %v1962 = vshrl.u32 %v1961, 7
          %v1963 = vsub.s32 %v1960, %v1962
          %v1964 = vrot.slane %v1073, %v1963
          %v1966 = vunpack.c.l.s4 1983009808
          %v1967 = vunpack.c.0.s8 %v1966
          %v1968 = vlaneseq
          %v1969 = vshrl.u32 %v1968, 7
          %v1970 = vsub.s32 %v1967, %v1969
          %v1971 = vrot.slane %v1957, %v1970
          %v1972 = vcombine.low %v1949, %v1964
          %v1973 = vcombine.high %v1949, %v1964
          %v1975 = vunpack.c.l.s4 1934713408
          %v1976 = vunpack.c.0.s8 %v1975
          %v1977 = vlaneseq
          %v1978 = vshrl.u32 %v1977, 7
          %v1979 = vsub.s32 %v1976, %v1978
          %v1980 = vrot.slane %v1972, %v1979
          %v1982 = vunpack.c.l.s4 1934713408
          %v1983 = vunpack.c.0.s8 %v1982
          %v1984 = vlaneseq
          %v1985 = vshrl.u32 %v1984, 7
          %v1986 = vsub.s32 %v1983, %v1985
          %v1987 = vrot.slane %v1973, %v1986
          %v1988 = vcombine.low %v1956, %v1971
          %v1989 = vcombine.high %v1956, %v1971
          %v1991 = vunpack.c.l.s4 1934713408
          %v1992 = vunpack.c.0.s8 %v1991
          %v1993 = vlaneseq
          %v1994 = vshrl.u32 %v1993, 7
          %v1995 = vsub.s32 %v1992, %v1994
          %v1996 = vrot.slane %v1988, %v1995
          %v1998 = vunpack.c.l.s4 1934713408
          %v1999 = vunpack.c.0.s8 %v1998
          %v2000 = vlaneseq
          %v2001 = vshrl.u32 %v2000, 7
          %v2002 = vsub.s32 %v1999, %v2001
          %v2003 = vrot.slane %v1989, %v2002
          %v2004 = vcombine.high %v1980, 0.0
          %v2005 = vcombine.high %v1987, 0.0
          %v2006 = vcombine.high %v1996, 0.0
          %v2007 = vcombine.high %v2003, 0.0
          %v2008 = vcombine.high %v1075, 0.0
          %v2010 = vunpack.c.l.s4 1983009808
          %v2011 = vunpack.c.0.s8 %v2010
          %v2012 = vlaneseq
          %v2013 = vshrl.u32 %v2012, 7
          %v2014 = vsub.s32 %v2011, %v2013
          %v2015 = vrot.slane %v1075, %v2014
          %v2017 = vunpack.c.l.s4 1983009808
          %v2018 = vunpack.c.0.s8 %v2017
          %v2019 = vlaneseq
          %v2020 = vshrl.u32 %v2019, 7
          %v2021 = vsub.s32 %v2018, %v2020
          %v2022 = vrot.slane %v2008, %v2021
          %v2023 = vcombine.high %v1077, 0.0
          %v2025 = vunpack.c.l.s4 1983009808
          %v2026 = vunpack.c.0.s8 %v2025
          %v2027 = vlaneseq
          %v2028 = vshrl.u32 %v2027, 7
          %v2029 = vsub.s32 %v2026, %v2028
          %v2030 = vrot.slane %v1077, %v2029
          %v2032 = vunpack.c.l.s4 1983009808
          %v2033 = vunpack.c.0.s8 %v2032
          %v2034 = vlaneseq
          %v2035 = vshrl.u32 %v2034, 7
          %v2036 = vsub.s32 %v2033, %v2035
          %v2037 = vrot.slane %v2023, %v2036
          %v2038 = vcombine.low %v2015, %v2030
          %v2039 = vcombine.high %v2015, %v2030
          %v2041 = vunpack.c.l.s4 1934713408
          %v2042 = vunpack.c.0.s8 %v2041
          %v2043 = vlaneseq
          %v2044 = vshrl.u32 %v2043, 7
          %v2045 = vsub.s32 %v2042, %v2044
          %v2046 = vrot.slane %v2038, %v2045
          %v2048 = vunpack.c.l.s4 1934713408
          %v2049 = vunpack.c.0.s8 %v2048
          %v2050 = vlaneseq
          %v2051 = vshrl.u32 %v2050, 7
          %v2052 = vsub.s32 %v2049, %v2051
          %v2053 = vrot.slane %v2039, %v2052
          %v2054 = vcombine.low %v2022, %v2037
          %v2055 = vcombine.high %v2022, %v2037
          %v2057 = vunpack.c.l.s4 1934713408
          %v2058 = vunpack.c.0.s8 %v2057
          %v2059 = vlaneseq
          %v2060 = vshrl.u32 %v2059, 7
          %v2061 = vsub.s32 %v2058, %v2060
          %v2062 = vrot.slane %v2054, %v2061
          %v2064 = vunpack.c.l.s4 1934713408
          %v2065 = vunpack.c.0.s8 %v2064
          %v2066 = vlaneseq
          %v2067 = vshrl.u32 %v2066, 7
          %v2068 = vsub.s32 %v2065, %v2067
          %v2069 = vrot.slane %v2055, %v2068
          %v2070 = vcombine.high %v2046, 0.0
          %v2071 = vcombine.high %v2053, 0.0
          %v2072 = vcombine.high %v2062, 0.0
          %v2073 = vcombine.high %v2069, 0.0
          %v2074 = vcombine.high %v1081, 0.0
          %v2076 = vunpack.c.l.s4 1983009808
          %v2077 = vunpack.c.0.s8 %v2076
          %v2078 = vlaneseq
          %v2079 = vshrl.u32 %v2078, 7
          %v2080 = vsub.s32 %v2077, %v2079
          %v2081 = vrot.slane %v1081, %v2080
          %v2083 = vunpack.c.l.s4 1983009808
          %v2084 = vunpack.c.0.s8 %v2083
          %v2085 = vlaneseq
          %v2086 = vshrl.u32 %v2085, 7
          %v2087 = vsub.s32 %v2084, %v2086
          %v2088 = vrot.slane %v2074, %v2087
          %v2089 = vcombine.high %v1083, 0.0
          %v2091 = vunpack.c.l.s4 1983009808
          %v2092 = vunpack.c.0.s8 %v2091
          %v2093 = vlaneseq
          %v2094 = vshrl.u32 %v2093, 7
          %v2095 = vsub.s32 %v2092, %v2094
          %v2096 = vrot.slane %v1083, %v2095
          %v2098 = vunpack.c.l.s4 1983009808
          %v2099 = vunpack.c.0.s8 %v2098
          %v2100 = vlaneseq
          %v2101 = vshrl.u32 %v2100, 7
          %v2102 = vsub.s32 %v2099, %v2101
          %v2103 = vrot.slane %v2089, %v2102
          %v2104 = vcombine.low %v2081, %v2096
          %v2105 = vcombine.high %v2081, %v2096
          %v2107 = vunpack.c.l.s4 1934713408
          %v2108 = vunpack.c.0.s8 %v2107
          %v2109 = vlaneseq
          %v2110 = vshrl.u32 %v2109, 7
          %v2111 = vsub.s32 %v2108, %v2110
          %v2112 = vrot.slane %v2104, %v2111
          %v2114 = vunpack.c.l.s4 1934713408
          %v2115 = vunpack.c.0.s8 %v2114
          %v2116 = vlaneseq
          %v2117 = vshrl.u32 %v2116, 7
          %v2118 = vsub.s32 %v2115, %v2117
          %v2119 = vrot.slane %v2105, %v2118
          %v2120 = vcombine.low %v2088, %v2103
          %v2121 = vcombine.high %v2088, %v2103
          %v2123 = vunpack.c.l.s4 1934713408
          %v2124 = vunpack.c.0.s8 %v2123
          %v2125 = vlaneseq
          %v2126 = vshrl.u32 %v2125, 7
          %v2127 = vsub.s32 %v2124, %v2126
          %v2128 = vrot.slane %v2120, %v2127
          %v2130 = vunpack.c.l.s4 1934713408
          %v2131 = vunpack.c.0.s8 %v2130
          %v2132 = vlaneseq
          %v2133 = vshrl.u32 %v2132, 7
          %v2134 = vsub.s32 %v2131, %v2133
          %v2135 = vrot.slane %v2121, %v2134
          %v2136 = vcombine.high %v2112, 0.0
          %v2137 = vcombine.high %v2119, 0.0
          %v2138 = vcombine.high %v2128, 0.0
          %v2139 = vcombine.high %v2135, 0.0
          %v2140 = vcombine.high %v1085, 0.0
          %v2142 = vunpack.c.l.s4 1983009808
          %v2143 = vunpack.c.0.s8 %v2142
          %v2144 = vlaneseq
          %v2145 = vshrl.u32 %v2144, 7
          %v2146 = vsub.s32 %v2143, %v2145
          %v2147 = vrot.slane %v1085, %v2146
          %v2149 = vunpack.c.l.s4 1983009808
          %v2150 = vunpack.c.0.s8 %v2149
          %v2151 = vlaneseq
          %v2152 = vshrl.u32 %v2151, 7
          %v2153 = vsub.s32 %v2150, %v2152
          %v2154 = vrot.slane %v2140, %v2153
          %v2155 = vcombine.high %v1087, 0.0
          %v2157 = vunpack.c.l.s4 1983009808
          %v2158 = vunpack.c.0.s8 %v2157
          %v2159 = vlaneseq
          %v2160 = vshrl.u32 %v2159, 7
          %v2161 = vsub.s32 %v2158, %v2160
          %v2162 = vrot.slane %v1087, %v2161
          %v2164 = vunpack.c.l.s4 1983009808
          %v2165 = vunpack.c.0.s8 %v2164
          %v2166 = vlaneseq
          %v2167 = vshrl.u32 %v2166, 7
          %v2168 = vsub.s32 %v2165, %v2167
          %v2169 = vrot.slane %v2155, %v2168
          %v2170 = vcombine.low %v2147, %v2162
          %v2171 = vcombine.high %v2147, %v2162
          %v2173 = vunpack.c.l.s4 1934713408
          %v2174 = vunpack.c.0.s8 %v2173
          %v2175 = vlaneseq
          %v2176 = vshrl.u32 %v2175, 7
          %v2177 = vsub.s32 %v2174, %v2176
          %v2178 = vrot.slane %v2170, %v2177
          %v2180 = vunpack.c.l.s4 1934713408
          %v2181 = vunpack.c.0.s8 %v2180
          %v2182 = vlaneseq
          %v2183 = vshrl.u32 %v2182, 7
          %v2184 = vsub.s32 %v2181, %v2183
          %v2185 = vrot.slane %v2171, %v2184
          %v2186 = vcombine.low %v2154, %v2169
          %v2187 = vcombine.high %v2154, %v2169
          %v2189 = vunpack.c.l.s4 1934713408
          %v2190 = vunpack.c.0.s8 %v2189
          %v2191 = vlaneseq
          %v2192 = vshrl.u32 %v2191, 7
          %v2193 = vsub.s32 %v2190, %v2192
          %v2194 = vrot.slane %v2186, %v2193
          %v2196 = vunpack.c.l.s4 1934713408
          %v2197 = vunpack.c.0.s8 %v2196
          %v2198 = vlaneseq
          %v2199 = vshrl.u32 %v2198, 7
          %v2200 = vsub.s32 %v2197, %v2199
          %v2201 = vrot.slane %v2187, %v2200
          %v2202 = vcombine.high %v2178, 0.0
          %v2203 = vcombine.high %v2185, 0.0
          %v2204 = vcombine.high %v2194, 0.0
          %v2205 = vcombine.high %v2201, 0.0
          %v2206 = vcombine.high %v1091, 0.0
          %v2208 = vunpack.c.l.s4 1983009808
          %v2209 = vunpack.c.0.s8 %v2208
          %v2210 = vlaneseq
          %v2211 = vshrl.u32 %v2210, 7
          %v2212 = vsub.s32 %v2209, %v2211
          %v2213 = vrot.slane %v1091, %v2212
          %v2215 = vunpack.c.l.s4 1983009808
          %v2216 = vunpack.c.0.s8 %v2215
          %v2217 = vlaneseq
          %v2218 = vshrl.u32 %v2217, 7
          %v2219 = vsub.s32 %v2216, %v2218
          %v2220 = vrot.slane %v2206, %v2219
          %v2221 = vcombine.high %v1093, 0.0
          %v2223 = vunpack.c.l.s4 1983009808
          %v2224 = vunpack.c.0.s8 %v2223
          %v2225 = vlaneseq
          %v2226 = vshrl.u32 %v2225, 7
          %v2227 = vsub.s32 %v2224, %v2226
          %v2228 = vrot.slane %v1093, %v2227
          %v2230 = vunpack.c.l.s4 1983009808
          %v2231 = vunpack.c.0.s8 %v2230
          %v2232 = vlaneseq
          %v2233 = vshrl.u32 %v2232, 7
          %v2234 = vsub.s32 %v2231, %v2233
          %v2235 = vrot.slane %v2221, %v2234
          %v2236 = vcombine.low %v2213, %v2228
          %v2237 = vcombine.high %v2213, %v2228
          %v2239 = vunpack.c.l.s4 1934713408
          %v2240 = vunpack.c.0.s8 %v2239
          %v2241 = vlaneseq
          %v2242 = vshrl.u32 %v2241, 7
          %v2243 = vsub.s32 %v2240, %v2242
          %v2244 = vrot.slane %v2236, %v2243
          %v2246 = vunpack.c.l.s4 1934713408
          %v2247 = vunpack.c.0.s8 %v2246
          %v2248 = vlaneseq
          %v2249 = vshrl.u32 %v2248, 7
          %v2250 = vsub.s32 %v2247, %v2249
          %v2251 = vrot.slane %v2237, %v2250
          %v2252 = vcombine.low %v2220, %v2235
          %v2253 = vcombine.high %v2220, %v2235
          %v2255 = vunpack.c.l.s4 1934713408
          %v2256 = vunpack.c.0.s8 %v2255
          %v2257 = vlaneseq
          %v2258 = vshrl.u32 %v2257, 7
          %v2259 = vsub.s32 %v2256, %v2258
          %v2260 = vrot.slane %v2252, %v2259
          %v2262 = vunpack.c.l.s4 1934713408
          %v2263 = vunpack.c.0.s8 %v2262
          %v2264 = vlaneseq
          %v2265 = vshrl.u32 %v2264, 7
          %v2266 = vsub.s32 %v2263, %v2265
          %v2267 = vrot.slane %v2253, %v2266
          %v2268 = vcombine.high %v2244, 0.0
          %v2269 = vcombine.high %v2251, 0.0
          %v2270 = vcombine.high %v2260, 0.0
          %v2271 = vcombine.high %v2267, 0.0
          %v2272 = vcombine.high %v1095, 0.0
          %v2274 = vunpack.c.l.s4 1983009808
          %v2275 = vunpack.c.0.s8 %v2274
          %v2276 = vlaneseq
          %v2277 = vshrl.u32 %v2276, 7
          %v2278 = vsub.s32 %v2275, %v2277
          %v2279 = vrot.slane %v1095, %v2278
          %v2281 = vunpack.c.l.s4 1983009808
          %v2282 = vunpack.c.0.s8 %v2281
          %v2283 = vlaneseq
          %v2284 = vshrl.u32 %v2283, 7
          %v2285 = vsub.s32 %v2282, %v2284
          %v2286 = vrot.slane %v2272, %v2285
          %v2287 = vcombine.high %v1097, 0.0
          %v2289 = vunpack.c.l.s4 1983009808
          %v2290 = vunpack.c.0.s8 %v2289
          %v2291 = vlaneseq
          %v2292 = vshrl.u32 %v2291, 7
          %v2293 = vsub.s32 %v2290, %v2292
          %v2294 = vrot.slane %v1097, %v2293
          %v2296 = vunpack.c.l.s4 1983009808
          %v2297 = vunpack.c.0.s8 %v2296
          %v2298 = vlaneseq
          %v2299 = vshrl.u32 %v2298, 7
          %v2300 = vsub.s32 %v2297, %v2299
          %v2301 = vrot.slane %v2287, %v2300
          %v2302 = vcombine.low %v2279, %v2294
          %v2303 = vcombine.high %v2279, %v2294
          %v2305 = vunpack.c.l.s4 1934713408
          %v2306 = vunpack.c.0.s8 %v2305
          %v2307 = vlaneseq
          %v2308 = vshrl.u32 %v2307, 7
          %v2309 = vsub.s32 %v2306, %v2308
          %v2310 = vrot.slane %v2302, %v2309
          %v2312 = vunpack.c.l.s4 1934713408
          %v2313 = vunpack.c.0.s8 %v2312
          %v2314 = vlaneseq
          %v2315 = vshrl.u32 %v2314, 7
          %v2316 = vsub.s32 %v2313, %v2315
          %v2317 = vrot.slane %v2303, %v2316
          %v2318 = vcombine.low %v2286, %v2301
          %v2319 = vcombine.high %v2286, %v2301
          %v2321 = vunpack.c.l.s4 1934713408
          %v2322 = vunpack.c.0.s8 %v2321
          %v2323 = vlaneseq
          %v2324 = vshrl.u32 %v2323, 7
          %v2325 = vsub.s32 %v2322, %v2324
          %v2326 = vrot.slane %v2318, %v2325
          %v2328 = vunpack.c.l.s4 1934713408
          %v2329 = vunpack.c.0.s8 %v2328
          %v2330 = vlaneseq
          %v2331 = vshrl.u32 %v2330, 7
          %v2332 = vsub.s32 %v2329, %v2331
          %v2333 = vrot.slane %v2319, %v2332
          %v2334 = vcombine.high %v2310, 0.0
          %v2335 = vcombine.high %v2317, 0.0
          %v2336 = vcombine.high %v2326, 0.0
          %v2337 = vcombine.high %v2333, 0.0
          %v2338 = vcombine.high %v1101, 0.0
          %v2340 = vunpack.c.l.s4 1983009808
          %v2341 = vunpack.c.0.s8 %v2340
          %v2342 = vlaneseq
          %v2343 = vshrl.u32 %v2342, 7
          %v2344 = vsub.s32 %v2341, %v2343
          %v2345 = vrot.slane %v1101, %v2344
          %v2347 = vunpack.c.l.s4 1983009808
          %v2348 = vunpack.c.0.s8 %v2347
          %v2349 = vlaneseq
          %v2350 = vshrl.u32 %v2349, 7
          %v2351 = vsub.s32 %v2348, %v2350
          %v2352 = vrot.slane %v2338, %v2351
          %v2353 = vcombine.high %v1103, 0.0
          %v2355 = vunpack.c.l.s4 1983009808
          %v2356 = vunpack.c.0.s8 %v2355
          %v2357 = vlaneseq
          %v2358 = vshrl.u32 %v2357, 7
          %v2359 = vsub.s32 %v2356, %v2358
          %v2360 = vrot.slane %v1103, %v2359
          %v2362 = vunpack.c.l.s4 1983009808
          %v2363 = vunpack.c.0.s8 %v2362
          %v2364 = vlaneseq
          %v2365 = vshrl.u32 %v2364, 7
          %v2366 = vsub.s32 %v2363, %v2365
          %v2367 = vrot.slane %v2353, %v2366
          %v2368 = vcombine.low %v2345, %v2360
          %v2369 = vcombine.high %v2345, %v2360
          %v2371 = vunpack.c.l.s4 1934713408
          %v2372 = vunpack.c.0.s8 %v2371
          %v2373 = vlaneseq
          %v2374 = vshrl.u32 %v2373, 7
          %v2375 = vsub.s32 %v2372, %v2374
          %v2376 = vrot.slane %v2368, %v2375
          %v2378 = vunpack.c.l.s4 1934713408
          %v2379 = vunpack.c.0.s8 %v2378
          %v2380 = vlaneseq
          %v2381 = vshrl.u32 %v2380, 7
          %v2382 = vsub.s32 %v2379, %v2381
          %v2383 = vrot.slane %v2369, %v2382
          %v2384 = vcombine.low %v2352, %v2367
          %v2385 = vcombine.high %v2352, %v2367
          %v2387 = vunpack.c.l.s4 1934713408
          %v2388 = vunpack.c.0.s8 %v2387
          %v2389 = vlaneseq
          %v2390 = vshrl.u32 %v2389, 7
          %v2391 = vsub.s32 %v2388, %v2390
          %v2392 = vrot.slane %v2384, %v2391
          %v2394 = vunpack.c.l.s4 1934713408
          %v2395 = vunpack.c.0.s8 %v2394
          %v2396 = vlaneseq
          %v2397 = vshrl.u32 %v2396, 7
          %v2398 = vsub.s32 %v2395, %v2397
          %v2399 = vrot.slane %v2385, %v2398
          %v2400 = vcombine.high %v2376, 0.0
          %v2401 = vcombine.high %v2383, 0.0
          %v2402 = vcombine.high %v2392, 0.0
          %v2403 = vcombine.high %v2399, 0.0
          %v2404 = vcombine.high %v1105, 0.0
          %v2406 = vunpack.c.l.s4 1983009808
          %v2407 = vunpack.c.0.s8 %v2406
          %v2408 = vlaneseq
          %v2409 = vshrl.u32 %v2408, 7
          %v2410 = vsub.s32 %v2407, %v2409
          %v2411 = vrot.slane %v1105, %v2410
          %v2413 = vunpack.c.l.s4 1983009808
          %v2414 = vunpack.c.0.s8 %v2413
          %v2415 = vlaneseq
          %v2416 = vshrl.u32 %v2415, 7
          %v2417 = vsub.s32 %v2414, %v2416
          %v2418 = vrot.slane %v2404, %v2417
          %v2419 = vcombine.high %v1107, 0.0
          %v2421 = vunpack.c.l.s4 1983009808
          %v2422 = vunpack.c.0.s8 %v2421
          %v2423 = vlaneseq
          %v2424 = vshrl.u32 %v2423, 7
          %v2425 = vsub.s32 %v2422, %v2424
          %v2426 = vrot.slane %v1107, %v2425
          %v2428 = vunpack.c.l.s4 1983009808
          %v2429 = vunpack.c.0.s8 %v2428
          %v2430 = vlaneseq
          %v2431 = vshrl.u32 %v2430, 7
          %v2432 = vsub.s32 %v2429, %v2431
          %v2433 = vrot.slane %v2419, %v2432
          %v2434 = vcombine.low %v2411, %v2426
          %v2435 = vcombine.high %v2411, %v2426
          %v2437 = vunpack.c.l.s4 1934713408
          %v2438 = vunpack.c.0.s8 %v2437
          %v2439 = vlaneseq
          %v2440 = vshrl.u32 %v2439, 7
          %v2441 = vsub.s32 %v2438, %v2440
          %v2442 = vrot.slane %v2434, %v2441
          %v2444 = vunpack.c.l.s4 1934713408
          %v2445 = vunpack.c.0.s8 %v2444
          %v2446 = vlaneseq
          %v2447 = vshrl.u32 %v2446, 7
          %v2448 = vsub.s32 %v2445, %v2447
          %v2449 = vrot.slane %v2435, %v2448
          %v2450 = vcombine.low %v2418, %v2433
          %v2451 = vcombine.high %v2418, %v2433
          %v2453 = vunpack.c.l.s4 1934713408
          %v2454 = vunpack.c.0.s8 %v2453
          %v2455 = vlaneseq
          %v2456 = vshrl.u32 %v2455, 7
          %v2457 = vsub.s32 %v2454, %v2456
          %v2458 = vrot.slane %v2450, %v2457
          %v2460 = vunpack.c.l.s4 1934713408
          %v2461 = vunpack.c.0.s8 %v2460
          %v2462 = vlaneseq
          %v2463 = vshrl.u32 %v2462, 7
          %v2464 = vsub.s32 %v2461, %v2463
          %v2465 = vrot.slane %v2451, %v2464
          %v2466 = vcombine.high %v2442, 0.0
          %v2467 = vcombine.high %v2449, 0.0
          %v2468 = vcombine.high %v2458, 0.0
          %v2469 = vcombine.high %v2465, 0.0
          %v2470 = vcombine.low %v1452, %v1459
          %v2472 = vunpack.c.l.s4 1983009808
          %v2473 = vunpack.c.0.s8 %v2472
          %v2474 = vlaneseq
          %v2475 = vshrl.u32 %v2474, 7
          %v2476 = vsub.s32 %v2473, %v2475
          %v2477 = vrot.slane %v2470, %v2476
          %v2478 = vcombine.low %v1476, %v1477
          %v2480 = vunpack.c.l.s4 1983009808
          %v2481 = vunpack.c.0.s8 %v2480
          %v2482 = vlaneseq
          %v2483 = vshrl.u32 %v2482, 7
          %v2484 = vsub.s32 %v2481, %v2483
          %v2485 = vrot.slane %v2478, %v2484
          %v2486 = vcombine.low %v1468, %v1475
          %v2488 = vunpack.c.l.s4 1983009808
          %v2489 = vunpack.c.0.s8 %v2488
          %v2490 = vlaneseq
          %v2491 = vshrl.u32 %v2490, 7
          %v2492 = vsub.s32 %v2489, %v2491
          %v2493 = vrot.slane %v2486, %v2492
          %v2494 = vcombine.low %v1478, %v1479
          %v2496 = vunpack.c.l.s4 1983009808
          %v2497 = vunpack.c.0.s8 %v2496
          %v2498 = vlaneseq
          %v2499 = vshrl.u32 %v2498, 7
          %v2500 = vsub.s32 %v2497, %v2499
          %v2501 = vrot.slane %v2494, %v2500
          %v2502 = vcombine.low %v2477, %v2485
          %v2504 = vunpack.c.l.s4 1934713408
          %v2505 = vunpack.c.0.s8 %v2504
          %v2506 = vlaneseq
          %v2507 = vshrl.u32 %v2506, 7
          %v2508 = vsub.s32 %v2505, %v2507
          %v2509 = vrot.slane %v2502, %v2508
          %v2510 = vcombine.low %v2493, %v2501
          %v2512 = vunpack.c.l.s4 1934713408
          %v2513 = vunpack.c.0.s8 %v2512
          %v2514 = vlaneseq
          %v2515 = vshrl.u32 %v2514, 7
          %v2516 = vsub.s32 %v2513, %v2515
          %v2517 = vrot.slane %v2510, %v2516
          %v2518 = vcombine.low %v2509, %v2517
          %v2519 = vcombine.high %v2509, %v2517
          %v2520 = vcombine.low %v1518, %v1525
          %v2522 = vunpack.c.l.s4 1983009808
          %v2523 = vunpack.c.0.s8 %v2522
          %v2524 = vlaneseq
          %v2525 = vshrl.u32 %v2524, 7
          %v2526 = vsub.s32 %v2523, %v2525
          %v2527 = vrot.slane %v2520, %v2526
          %v2528 = vcombine.low %v1542, %v1543
          %v2530 = vunpack.c.l.s4 1983009808
          %v2531 = vunpack.c.0.s8 %v2530
          %v2532 = vlaneseq
          %v2533 = vshrl.u32 %v2532, 7
          %v2534 = vsub.s32 %v2531, %v2533
          %v2535 = vrot.slane %v2528, %v2534
          %v2536 = vcombine.low %v1534, %v1541
          %v2538 = vunpack.c.l.s4 1983009808
          %v2539 = vunpack.c.0.s8 %v2538
          %v2540 = vlaneseq
          %v2541 = vshrl.u32 %v2540, 7
          %v2542 = vsub.s32 %v2539, %v2541
          %v2543 = vrot.slane %v2536, %v2542
          %v2544 = vcombine.low %v1544, %v1545
          %v2546 = vunpack.c.l.s4 1983009808
          %v2547 = vunpack.c.0.s8 %v2546
          %v2548 = vlaneseq
          %v2549 = vshrl.u32 %v2548, 7
          %v2550 = vsub.s32 %v2547, %v2549
          %v2551 = vrot.slane %v2544, %v2550
          %v2552 = vcombine.low %v2527, %v2535
          %v2554 = vunpack.c.l.s4 1934713408
          %v2555 = vunpack.c.0.s8 %v2554
          %v2556 = vlaneseq
          %v2557 = vshrl.u32 %v2556, 7
          %v2558 = vsub.s32 %v2555, %v2557
          %v2559 = vrot.slane %v2552, %v2558
          %v2560 = vcombine.low %v2543, %v2551
          %v2562 = vunpack.c.l.s4 1934713408
          %v2563 = vunpack.c.0.s8 %v2562
          %v2564 = vlaneseq
          %v2565 = vshrl.u32 %v2564, 7
          %v2566 = vsub.s32 %v2563, %v2565
          %v2567 = vrot.slane %v2560, %v2566
          %v2568 = vcombine.low %v2559, %v2567
          %v2569 = vcombine.high %v2559, %v2567
          %v2570 = vcombine.low %v1584, %v1591
          %v2572 = vunpack.c.l.s4 1983009808
          %v2573 = vunpack.c.0.s8 %v2572
          %v2574 = vlaneseq
          %v2575 = vshrl.u32 %v2574, 7
          %v2576 = vsub.s32 %v2573, %v2575
          %v2577 = vrot.slane %v2570, %v2576
          %v2578 = vcombine.low %v1608, %v1609
          %v2580 = vunpack.c.l.s4 1983009808
          %v2581 = vunpack.c.0.s8 %v2580
          %v2582 = vlaneseq
          %v2583 = vshrl.u32 %v2582, 7
          %v2584 = vsub.s32 %v2581, %v2583
          %v2585 = vrot.slane %v2578, %v2584
          %v2586 = vcombine.low %v1600, %v1607
          %v2588 = vunpack.c.l.s4 1983009808
          %v2589 = vunpack.c.0.s8 %v2588
          %v2590 = vlaneseq
          %v2591 = vshrl.u32 %v2590, 7
          %v2592 = vsub.s32 %v2589, %v2591
          %v2593 = vrot.slane %v2586, %v2592
          %v2594 = vcombine.low %v1610, %v1611
          %v2596 = vunpack.c.l.s4 1983009808
          %v2597 = vunpack.c.0.s8 %v2596
          %v2598 = vlaneseq
          %v2599 = vshrl.u32 %v2598, 7
          %v2600 = vsub.s32 %v2597, %v2599
          %v2601 = vrot.slane %v2594, %v2600
          %v2602 = vcombine.low %v2577, %v2585
          %v2604 = vunpack.c.l.s4 1934713408
          %v2605 = vunpack.c.0.s8 %v2604
          %v2606 = vlaneseq
          %v2607 = vshrl.u32 %v2606, 7
          %v2608 = vsub.s32 %v2605, %v2607
          %v2609 = vrot.slane %v2602, %v2608
          %v2610 = vcombine.low %v2593, %v2601
          %v2612 = vunpack.c.l.s4 1934713408
          %v2613 = vunpack.c.0.s8 %v2612
          %v2614 = vlaneseq
          %v2615 = vshrl.u32 %v2614, 7
          %v2616 = vsub.s32 %v2613, %v2615
          %v2617 = vrot.slane %v2610, %v2616
          %v2618 = vcombine.low %v2609, %v2617
          %v2619 = vcombine.high %v2609, %v2617
          %v2620 = vcombine.low %v1650, %v1657
          %v2622 = vunpack.c.l.s4 1983009808
          %v2623 = vunpack.c.0.s8 %v2622
          %v2624 = vlaneseq
          %v2625 = vshrl.u32 %v2624, 7
          %v2626 = vsub.s32 %v2623, %v2625
          %v2627 = vrot.slane %v2620, %v2626
          %v2628 = vcombine.low %v1674, %v1675
          %v2630 = vunpack.c.l.s4 1983009808
          %v2631 = vunpack.c.0.s8 %v2630
          %v2632 = vlaneseq
          %v2633 = vshrl.u32 %v2632, 7
          %v2634 = vsub.s32 %v2631, %v2633
          %v2635 = vrot.slane %v2628, %v2634
          %v2636 = vcombine.low %v1666, %v1673
          %v2638 = vunpack.c.l.s4 1983009808
          %v2639 = vunpack.c.0.s8 %v2638
          %v2640 = vlaneseq
          %v2641 = vshrl.u32 %v2640, 7
          %v2642 = vsub.s32 %v2639, %v2641
          %v2643 = vrot.slane %v2636, %v2642
          %v2644 = vcombine.low %v1676, %v1677
          %v2646 = vunpack.c.l.s4 1983009808
          %v2647 = vunpack.c.0.s8 %v2646
          %v2648 = vlaneseq
          %v2649 = vshrl.u32 %v2648, 7
          %v2650 = vsub.s32 %v2647, %v2649
          %v2651 = vrot.slane %v2644, %v2650
          %v2652 = vcombine.low %v2627, %v2635
          %v2654 = vunpack.c.l.s4 1934713408
          %v2655 = vunpack.c.0.s8 %v2654
          %v2656 = vlaneseq
          %v2657 = vshrl.u32 %v2656, 7
          %v2658 = vsub.s32 %v2655, %v2657
          %v2659 = vrot.slane %v2652, %v2658
          %v2660 = vcombine.low %v2643, %v2651
          %v2662 = vunpack.c.l.s4 1934713408
          %v2663 = vunpack.c.0.s8 %v2662
          %v2664 = vlaneseq
          %v2665 = vshrl.u32 %v2664, 7
          %v2666 = vsub.s32 %v2663, %v2665
          %v2667 = vrot.slane %v2660, %v2666
          %v2668 = vcombine.low %v2659, %v2667
          %v2669 = vcombine.high %v2659, %v2667
          %v2670 = vcombine.low %v1716, %v1723
          %v2672 = vunpack.c.l.s4 1983009808
          %v2673 = vunpack.c.0.s8 %v2672
          %v2674 = vlaneseq
          %v2675 = vshrl.u32 %v2674, 7
          %v2676 = vsub.s32 %v2673, %v2675
          %v2677 = vrot.slane %v2670, %v2676
          %v2678 = vcombine.low %v1740, %v1741
          %v2680 = vunpack.c.l.s4 1983009808
          %v2681 = vunpack.c.0.s8 %v2680
          %v2682 = vlaneseq
          %v2683 = vshrl.u32 %v2682, 7
          %v2684 = vsub.s32 %v2681, %v2683
          %v2685 = vrot.slane %v2678, %v2684
          %v2686 = vcombine.low %v1732, %v1739
          %v2688 = vunpack.c.l.s4 1983009808
          %v2689 = vunpack.c.0.s8 %v2688
          %v2690 = vlaneseq
          %v2691 = vshrl.u32 %v2690, 7
          %v2692 = vsub.s32 %v2689, %v2691
          %v2693 = vrot.slane %v2686, %v2692
          %v2694 = vcombine.low %v1742, %v1743
          %v2696 = vunpack.c.l.s4 1983009808
          %v2697 = vunpack.c.0.s8 %v2696
          %v2698 = vlaneseq
          %v2699 = vshrl.u32 %v2698, 7
          %v2700 = vsub.s32 %v2697, %v2699
          %v2701 = vrot.slane %v2694, %v2700
          %v2702 = vcombine.low %v2677, %v2685
          %v2704 = vunpack.c.l.s4 1934713408
          %v2705 = vunpack.c.0.s8 %v2704
          %v2706 = vlaneseq
          %v2707 = vshrl.u32 %v2706, 7
          %v2708 = vsub.s32 %v2705, %v2707
          %v2709 = vrot.slane %v2702, %v2708
          %v2710 = vcombine.low %v2693, %v2701
          %v2712 = vunpack.c.l.s4 1934713408
          %v2713 = vunpack.c.0.s8 %v2712
          %v2714 = vlaneseq
          %v2715 = vshrl.u32 %v2714, 7
          %v2716 = vsub.s32 %v2713, %v2715
          %v2717 = vrot.slane %v2710, %v2716
          %v2718 = vcombine.low %v2709, %v2717
          %v2719 = vcombine.high %v2709, %v2717
          %v2720 = vcombine.low %v1782, %v1789
          %v2722 = vunpack.c.l.s4 1983009808
          %v2723 = vunpack.c.0.s8 %v2722
          %v2724 = vlaneseq
          %v2725 = vshrl.u32 %v2724, 7
          %v2726 = vsub.s32 %v2723, %v2725
          %v2727 = vrot.slane %v2720, %v2726
          %v2728 = vcombine.low %v1806, %v1807
          %v2730 = vunpack.c.l.s4 1983009808
          %v2731 = vunpack.c.0.s8 %v2730
          %v2732 = vlaneseq
          %v2733 = vshrl.u32 %v2732, 7
          %v2734 = vsub.s32 %v2731, %v2733
          %v2735 = vrot.slane %v2728, %v2734
          %v2736 = vcombine.low %v1798, %v1805
          %v2738 = vunpack.c.l.s4 1983009808
          %v2739 = vunpack.c.0.s8 %v2738
          %v2740 = vlaneseq
          %v2741 = vshrl.u32 %v2740, 7
          %v2742 = vsub.s32 %v2739, %v2741
          %v2743 = vrot.slane %v2736, %v2742
          %v2744 = vcombine.low %v1808, %v1809
          %v2746 = vunpack.c.l.s4 1983009808
          %v2747 = vunpack.c.0.s8 %v2746
          %v2748 = vlaneseq
          %v2749 = vshrl.u32 %v2748, 7
          %v2750 = vsub.s32 %v2747, %v2749
          %v2751 = vrot.slane %v2744, %v2750
          %v2752 = vcombine.low %v2727, %v2735
          %v2754 = vunpack.c.l.s4 1934713408
          %v2755 = vunpack.c.0.s8 %v2754
          %v2756 = vlaneseq
          %v2757 = vshrl.u32 %v2756, 7
          %v2758 = vsub.s32 %v2755, %v2757
          %v2759 = vrot.slane %v2752, %v2758
          %v2760 = vcombine.low %v2743, %v2751
          %v2762 = vunpack.c.l.s4 1934713408
          %v2763 = vunpack.c.0.s8 %v2762
          %v2764 = vlaneseq
          %v2765 = vshrl.u32 %v2764, 7
          %v2766 = vsub.s32 %v2763, %v2765
          %v2767 = vrot.slane %v2760, %v2766
          %v2768 = vcombine.low %v2759, %v2767
          %v2769 = vcombine.high %v2759, %v2767
          %v2770 = vcombine.low %v1848, %v1855
          %v2772 = vunpack.c.l.s4 1983009808
          %v2773 = vunpack.c.0.s8 %v2772
          %v2774 = vlaneseq
          %v2775 = vshrl.u32 %v2774, 7
          %v2776 = vsub.s32 %v2773, %v2775
          %v2777 = vrot.slane %v2770, %v2776
          %v2778 = vcombine.low %v1872, %v1873
          %v2780 = vunpack.c.l.s4 1983009808
          %v2781 = vunpack.c.0.s8 %v2780
          %v2782 = vlaneseq
          %v2783 = vshrl.u32 %v2782, 7
          %v2784 = vsub.s32 %v2781, %v2783
          %v2785 = vrot.slane %v2778, %v2784
          %v2786 = vcombine.low %v1864, %v1871
          %v2788 = vunpack.c.l.s4 1983009808
          %v2789 = vunpack.c.0.s8 %v2788
          %v2790 = vlaneseq
          %v2791 = vshrl.u32 %v2790, 7
          %v2792 = vsub.s32 %v2789, %v2791
          %v2793 = vrot.slane %v2786, %v2792
          %v2794 = vcombine.low %v1874, %v1875
          %v2796 = vunpack.c.l.s4 1983009808
          %v2797 = vunpack.c.0.s8 %v2796
          %v2798 = vlaneseq
          %v2799 = vshrl.u32 %v2798, 7
          %v2800 = vsub.s32 %v2797, %v2799
          %v2801 = vrot.slane %v2794, %v2800
          %v2802 = vcombine.low %v2777, %v2785
          %v2804 = vunpack.c.l.s4 1934713408
          %v2805 = vunpack.c.0.s8 %v2804
          %v2806 = vlaneseq
          %v2807 = vshrl.u32 %v2806, 7
          %v2808 = vsub.s32 %v2805, %v2807
          %v2809 = vrot.slane %v2802, %v2808
          %v2810 = vcombine.low %v2793, %v2801
          %v2812 = vunpack.c.l.s4 1934713408
          %v2813 = vunpack.c.0.s8 %v2812
          %v2814 = vlaneseq
          %v2815 = vshrl.u32 %v2814, 7
          %v2816 = vsub.s32 %v2813, %v2815
          %v2817 = vrot.slane %v2810, %v2816
          %v2818 = vcombine.low %v2809, %v2817
          %v2819 = vcombine.high %v2809, %v2817
          %v2820 = vcombine.low %v1914, %v1921
          %v2822 = vunpack.c.l.s4 1983009808
          %v2823 = vunpack.c.0.s8 %v2822
          %v2824 = vlaneseq
          %v2825 = vshrl.u32 %v2824, 7
          %v2826 = vsub.s32 %v2823, %v2825
          %v2827 = vrot.slane %v2820, %v2826
          %v2828 = vcombine.low %v1938, %v1939
          %v2830 = vunpack.c.l.s4 1983009808
          %v2831 = vunpack.c.0.s8 %v2830
          %v2832 = vlaneseq
          %v2833 = vshrl.u32 %v2832, 7
          %v2834 = vsub.s32 %v2831, %v2833
          %v2835 = vrot.slane %v2828, %v2834
          %v2836 = vcombine.low %v1930, %v1937
          %v2838 = vunpack.c.l.s4 1983009808
          %v2839 = vunpack.c.0.s8 %v2838
          %v2840 = vlaneseq
          %v2841 = vshrl.u32 %v2840, 7
          %v2842 = vsub.s32 %v2839, %v2841
          %v2843 = vrot.slane %v2836, %v2842
          %v2844 = vcombine.low %v1940, %v1941
          %v2846 = vunpack.c.l.s4 1983009808
          %v2847 = vunpack.c.0.s8 %v2846
          %v2848 = vlaneseq
          %v2849 = vshrl.u32 %v2848, 7
          %v2850 = vsub.s32 %v2847, %v2849
          %v2851 = vrot.slane %v2844, %v2850
          %v2852 = vcombine.low %v2827, %v2835
          %v2854 = vunpack.c.l.s4 1934713408
          %v2855 = vunpack.c.0.s8 %v2854
          %v2856 = vlaneseq
          %v2857 = vshrl.u32 %v2856, 7
          %v2858 = vsub.s32 %v2855, %v2857
          %v2859 = vrot.slane %v2852, %v2858
          %v2860 = vcombine.low %v2843, %v2851
          %v2862 = vunpack.c.l.s4 1934713408
          %v2863 = vunpack.c.0.s8 %v2862
          %v2864 = vlaneseq
          %v2865 = vshrl.u32 %v2864, 7
          %v2866 = vsub.s32 %v2863, %v2865
          %v2867 = vrot.slane %v2860, %v2866
          %v2868 = vcombine.low %v2859, %v2867
          %v2869 = vcombine.high %v2859, %v2867
          %v2870 = vcombine.low %v1980, %v1987
          %v2872 = vunpack.c.l.s4 1983009808
          %v2873 = vunpack.c.0.s8 %v2872
          %v2874 = vlaneseq
          %v2875 = vshrl.u32 %v2874, 7
          %v2876 = vsub.s32 %v2873, %v2875
          %v2877 = vrot.slane %v2870, %v2876
          %v2878 = vcombine.low %v2004, %v2005
          %v2880 = vunpack.c.l.s4 1983009808
          %v2881 = vunpack.c.0.s8 %v2880
          %v2882 = vlaneseq
          %v2883 = vshrl.u32 %v2882, 7
          %v2884 = vsub.s32 %v2881, %v2883
          %v2885 = vrot.slane %v2878, %v2884
          %v2886 = vcombine.low %v1996, %v2003
          %v2888 = vunpack.c.l.s4 1983009808
          %v2889 = vunpack.c.0.s8 %v2888
          %v2890 = vlaneseq
          %v2891 = vshrl.u32 %v2890, 7
          %v2892 = vsub.s32 %v2889, %v2891
          %v2893 = vrot.slane %v2886, %v2892
          %v2894 = vcombine.low %v2006, %v2007
          %v2896 = vunpack.c.l.s4 1983009808
          %v2897 = vunpack.c.0.s8 %v2896
          %v2898 = vlaneseq
          %v2899 = vshrl.u32 %v2898, 7
          %v2900 = vsub.s32 %v2897, %v2899
          %v2901 = vrot.slane %v2894, %v2900
          %v2902 = vcombine.low %v2877, %v2885
          %v2904 = vunpack.c.l.s4 1934713408
          %v2905 = vunpack.c.0.s8 %v2904
          %v2906 = vlaneseq
          %v2907 = vshrl.u32 %v2906, 7
          %v2908 = vsub.s32 %v2905, %v2907
          %v2909 = vrot.slane %v2902, %v2908
          %v2910 = vcombine.low %v2893, %v2901
          %v2912 = vunpack.c.l.s4 1934713408
          %v2913 = vunpack.c.0.s8 %v2912
          %v2914 = vlaneseq
          %v2915 = vshrl.u32 %v2914, 7
          %v2916 = vsub.s32 %v2913, %v2915
          %v2917 = vrot.slane %v2910, %v2916
          %v2918 = vcombine.low %v2909, %v2917
          %v2919 = vcombine.high %v2909, %v2917
          %v2920 = vcombine.low %v2046, %v2053
          %v2922 = vunpack.c.l.s4 1983009808
          %v2923 = vunpack.c.0.s8 %v2922
          %v2924 = vlaneseq
          %v2925 = vshrl.u32 %v2924, 7
          %v2926 = vsub.s32 %v2923, %v2925
          %v2927 = vrot.slane %v2920, %v2926
          %v2928 = vcombine.low %v2070, %v2071
          %v2930 = vunpack.c.l.s4 1983009808
          %v2931 = vunpack.c.0.s8 %v2930
          %v2932 = vlaneseq
          %v2933 = vshrl.u32 %v2932, 7
          %v2934 = vsub.s32 %v2931, %v2933
          %v2935 = vrot.slane %v2928, %v2934
          %v2936 = vcombine.low %v2062, %v2069
          %v2938 = vunpack.c.l.s4 1983009808
          %v2939 = vunpack.c.0.s8 %v2938
          %v2940 = vlaneseq
          %v2941 = vshrl.u32 %v2940, 7
          %v2942 = vsub.s32 %v2939, %v2941
          %v2943 = vrot.slane %v2936, %v2942
          %v2944 = vcombine.low %v2072, %v2073
          %v2946 = vunpack.c.l.s4 1983009808
          %v2947 = vunpack.c.0.s8 %v2946
          %v2948 = vlaneseq
          %v2949 = vshrl.u32 %v2948, 7
          %v2950 = vsub.s32 %v2947, %v2949
          %v2951 = vrot.slane %v2944, %v2950
          %v2952 = vcombine.low %v2927, %v2935
          %v2954 = vunpack.c.l.s4 1934713408
          %v2955 = vunpack.c.0.s8 %v2954
          %v2956 = vlaneseq
          %v2957 = vshrl.u32 %v2956, 7
          %v2958 = vsub.s32 %v2955, %v2957
          %v2959 = vrot.slane %v2952, %v2958
          %v2960 = vcombine.low %v2943, %v2951
          %v2962 = vunpack.c.l.s4 1934713408
          %v2963 = vunpack.c.0.s8 %v2962
          %v2964 = vlaneseq
          %v2965 = vshrl.u32 %v2964, 7
          %v2966 = vsub.s32 %v2963, %v2965
          %v2967 = vrot.slane %v2960, %v2966
          %v2968 = vcombine.low %v2959, %v2967
          %v2969 = vcombine.high %v2959, %v2967
          %v2970 = vcombine.low %v2112, %v2119
          %v2972 = vunpack.c.l.s4 1983009808
          %v2973 = vunpack.c.0.s8 %v2972
          %v2974 = vlaneseq
          %v2975 = vshrl.u32 %v2974, 7
          %v2976 = vsub.s32 %v2973, %v2975
          %v2977 = vrot.slane %v2970, %v2976
          %v2978 = vcombine.low %v2136, %v2137
          %v2980 = vunpack.c.l.s4 1983009808
          %v2981 = vunpack.c.0.s8 %v2980
          %v2982 = vlaneseq
          %v2983 = vshrl.u32 %v2982, 7
          %v2984 = vsub.s32 %v2981, %v2983
          %v2985 = vrot.slane %v2978, %v2984
          %v2986 = vcombine.low %v2128, %v2135
          %v2988 = vunpack.c.l.s4 1983009808
          %v2989 = vunpack.c.0.s8 %v2988
          %v2990 = vlaneseq
          %v2991 = vshrl.u32 %v2990, 7
          %v2992 = vsub.s32 %v2989, %v2991
          %v2993 = vrot.slane %v2986, %v2992
          %v2994 = vcombine.low %v2138, %v2139
          %v2996 = vunpack.c.l.s4 1983009808
          %v2997 = vunpack.c.0.s8 %v2996
          %v2998 = vlaneseq
          %v2999 = vshrl.u32 %v2998, 7
          %v3000 = vsub.s32 %v2997, %v2999
          %v3001 = vrot.slane %v2994, %v3000
          %v3002 = vcombine.low %v2977, %v2985
          %v3004 = vunpack.c.l.s4 1934713408
          %v3005 = vunpack.c.0.s8 %v3004
          %v3006 = vlaneseq
          %v3007 = vshrl.u32 %v3006, 7
          %v3008 = vsub.s32 %v3005, %v3007
          %v3009 = vrot.slane %v3002, %v3008
          %v3010 = vcombine.low %v2993, %v3001
          %v3012 = vunpack.c.l.s4 1934713408
          %v3013 = vunpack.c.0.s8 %v3012
          %v3014 = vlaneseq
          %v3015 = vshrl.u32 %v3014, 7
          %v3016 = vsub.s32 %v3013, %v3015
          %v3017 = vrot.slane %v3010, %v3016
          %v3018 = vcombine.low %v3009, %v3017
          %v3019 = vcombine.high %v3009, %v3017
          %v3020 = vcombine.low %v2178, %v2185
          %v3022 = vunpack.c.l.s4 1983009808
          %v3023 = vunpack.c.0.s8 %v3022
          %v3024 = vlaneseq
          %v3025 = vshrl.u32 %v3024, 7
          %v3026 = vsub.s32 %v3023, %v3025
          %v3027 = vrot.slane %v3020, %v3026
          %v3028 = vcombine.low %v2202, %v2203
          %v3030 = vunpack.c.l.s4 1983009808
          %v3031 = vunpack.c.0.s8 %v3030
          %v3032 = vlaneseq
          %v3033 = vshrl.u32 %v3032, 7
          %v3034 = vsub.s32 %v3031, %v3033
          %v3035 = vrot.slane %v3028, %v3034
          %v3036 = vcombine.low %v2194, %v2201
          %v3038 = vunpack.c.l.s4 1983009808
          %v3039 = vunpack.c.0.s8 %v3038
          %v3040 = vlaneseq
          %v3041 = vshrl.u32 %v3040, 7
          %v3042 = vsub.s32 %v3039, %v3041
          %v3043 = vrot.slane %v3036, %v3042
          %v3044 = vcombine.low %v2204, %v2205
          %v3046 = vunpack.c.l.s4 1983009808
          %v3047 = vunpack.c.0.s8 %v3046
          %v3048 = vlaneseq
          %v3049 = vshrl.u32 %v3048, 7
          %v3050 = vsub.s32 %v3047, %v3049
          %v3051 = vrot.slane %v3044, %v3050
          %v3052 = vcombine.low %v3027, %v3035
          %v3054 = vunpack.c.l.s4 1934713408
          %v3055 = vunpack.c.0.s8 %v3054
          %v3056 = vlaneseq
          %v3057 = vshrl.u32 %v3056, 7
          %v3058 = vsub.s32 %v3055, %v3057
          %v3059 = vrot.slane %v3052, %v3058
          %v3060 = vcombine.low %v3043, %v3051
          %v3062 = vunpack.c.l.s4 1934713408
          %v3063 = vunpack.c.0.s8 %v3062
          %v3064 = vlaneseq
          %v3065 = vshrl.u32 %v3064, 7
          %v3066 = vsub.s32 %v3063, %v3065
          %v3067 = vrot.slane %v3060, %v3066
          %v3068 = vcombine.low %v3059, %v3067
          %v3069 = vcombine.high %v3059, %v3067
          %v3070 = vcombine.low %v2244, %v2251
          %v3072 = vunpack.c.l.s4 1983009808
          %v3073 = vunpack.c.0.s8 %v3072
          %v3074 = vlaneseq
          %v3075 = vshrl.u32 %v3074, 7
          %v3076 = vsub.s32 %v3073, %v3075
          %v3077 = vrot.slane %v3070, %v3076
          %v3078 = vcombine.low %v2268, %v2269
          %v3080 = vunpack.c.l.s4 1983009808
          %v3081 = vunpack.c.0.s8 %v3080
          %v3082 = vlaneseq
          %v3083 = vshrl.u32 %v3082, 7
          %v3084 = vsub.s32 %v3081, %v3083
          %v3085 = vrot.slane %v3078, %v3084
          %v3086 = vcombine.low %v2260, %v2267
          %v3088 = vunpack.c.l.s4 1983009808
          %v3089 = vunpack.c.0.s8 %v3088
          %v3090 = vlaneseq
          %v3091 = vshrl.u32 %v3090, 7
          %v3092 = vsub.s32 %v3089, %v3091
          %v3093 = vrot.slane %v3086, %v3092
          %v3094 = vcombine.low %v2270, %v2271
          %v3096 = vunpack.c.l.s4 1983009808
          %v3097 = vunpack.c.0.s8 %v3096
          %v3098 = vlaneseq
          %v3099 = vshrl.u32 %v3098, 7
          %v3100 = vsub.s32 %v3097, %v3099
          %v3101 = vrot.slane %v3094, %v3100
          %v3102 = vcombine.low %v3077, %v3085
          %v3104 = vunpack.c.l.s4 1934713408
          %v3105 = vunpack.c.0.s8 %v3104
          %v3106 = vlaneseq
          %v3107 = vshrl.u32 %v3106, 7
          %v3108 = vsub.s32 %v3105, %v3107
          %v3109 = vrot.slane %v3102, %v3108
          %v3110 = vcombine.low %v3093, %v3101
          %v3112 = vunpack.c.l.s4 1934713408
          %v3113 = vunpack.c.0.s8 %v3112
          %v3114 = vlaneseq
          %v3115 = vshrl.u32 %v3114, 7
          %v3116 = vsub.s32 %v3113, %v3115
          %v3117 = vrot.slane %v3110, %v3116
          %v3118 = vcombine.low %v3109, %v3117
          %v3119 = vcombine.high %v3109, %v3117
          %v3120 = vcombine.low %v2310, %v2317
          %v3122 = vunpack.c.l.s4 1983009808
          %v3123 = vunpack.c.0.s8 %v3122
          %v3124 = vlaneseq
          %v3125 = vshrl.u32 %v3124, 7
          %v3126 = vsub.s32 %v3123, %v3125
          %v3127 = vrot.slane %v3120, %v3126
          %v3128 = vcombine.low %v2334, %v2335
          %v3130 = vunpack.c.l.s4 1983009808
          %v3131 = vunpack.c.0.s8 %v3130
          %v3132 = vlaneseq
          %v3133 = vshrl.u32 %v3132, 7
          %v3134 = vsub.s32 %v3131, %v3133
          %v3135 = vrot.slane %v3128, %v3134
          %v3136 = vcombine.low %v2326, %v2333
          %v3138 = vunpack.c.l.s4 1983009808
          %v3139 = vunpack.c.0.s8 %v3138
          %v3140 = vlaneseq
          %v3141 = vshrl.u32 %v3140, 7
          %v3142 = vsub.s32 %v3139, %v3141
          %v3143 = vrot.slane %v3136, %v3142
          %v3144 = vcombine.low %v2336, %v2337
          %v3146 = vunpack.c.l.s4 1983009808
          %v3147 = vunpack.c.0.s8 %v3146
          %v3148 = vlaneseq
          %v3149 = vshrl.u32 %v3148, 7
          %v3150 = vsub.s32 %v3147, %v3149
          %v3151 = vrot.slane %v3144, %v3150
          %v3152 = vcombine.low %v3127, %v3135
          %v3154 = vunpack.c.l.s4 1934713408
          %v3155 = vunpack.c.0.s8 %v3154
          %v3156 = vlaneseq
          %v3157 = vshrl.u32 %v3156, 7
          %v3158 = vsub.s32 %v3155, %v3157
          %v3159 = vrot.slane %v3152, %v3158
          %v3160 = vcombine.low %v3143, %v3151
          %v3162 = vunpack.c.l.s4 1934713408
          %v3163 = vunpack.c.0.s8 %v3162
          %v3164 = vlaneseq
          %v3165 = vshrl.u32 %v3164, 7
          %v3166 = vsub.s32 %v3163, %v3165
          %v3167 = vrot.slane %v3160, %v3166
          %v3168 = vcombine.low %v3159, %v3167
          %v3169 = vcombine.high %v3159, %v3167
          %v3170 = vcombine.low %v2376, %v2383
          %v3172 = vunpack.c.l.s4 1983009808
          %v3173 = vunpack.c.0.s8 %v3172
          %v3174 = vlaneseq
          %v3175 = vshrl.u32 %v3174, 7
          %v3176 = vsub.s32 %v3173, %v3175
          %v3177 = vrot.slane %v3170, %v3176
          %v3178 = vcombine.low %v2400, %v2401
          %v3180 = vunpack.c.l.s4 1983009808
          %v3181 = vunpack.c.0.s8 %v3180
          %v3182 = vlaneseq
          %v3183 = vshrl.u32 %v3182, 7
          %v3184 = vsub.s32 %v3181, %v3183
          %v3185 = vrot.slane %v3178, %v3184
          %v3186 = vcombine.low %v2392, %v2399
          %v3188 = vunpack.c.l.s4 1983009808
          %v3189 = vunpack.c.0.s8 %v3188
          %v3190 = vlaneseq
          %v3191 = vshrl.u32 %v3190, 7
          %v3192 = vsub.s32 %v3189, %v3191
          %v3193 = vrot.slane %v3186, %v3192
          %v3194 = vcombine.low %v2402, %v2403
          %v3196 = vunpack.c.l.s4 1983009808
          %v3197 = vunpack.c.0.s8 %v3196
          %v3198 = vlaneseq
          %v3199 = vshrl.u32 %v3198, 7
          %v3200 = vsub.s32 %v3197, %v3199
          %v3201 = vrot.slane %v3194, %v3200
          %v3202 = vcombine.low %v3177, %v3185
          %v3204 = vunpack.c.l.s4 1934713408
          %v3205 = vunpack.c.0.s8 %v3204
          %v3206 = vlaneseq
          %v3207 = vshrl.u32 %v3206, 7
          %v3208 = vsub.s32 %v3205, %v3207
          %v3209 = vrot.slane %v3202, %v3208
          %v3210 = vcombine.low %v3193, %v3201
          %v3212 = vunpack.c.l.s4 1934713408
          %v3213 = vunpack.c.0.s8 %v3212
          %v3214 = vlaneseq
          %v3215 = vshrl.u32 %v3214, 7
          %v3216 = vsub.s32 %v3213, %v3215
          %v3217 = vrot.slane %v3210, %v3216
          %v3218 = vcombine.low %v3209, %v3217
          %v3219 = vcombine.high %v3209, %v3217
          %v3220 = vcombine.low %v2442, %v2449
          %v3222 = vunpack.c.l.s4 1983009808
          %v3223 = vunpack.c.0.s8 %v3222
          %v3224 = vlaneseq
          %v3225 = vshrl.u32 %v3224, 7
          %v3226 = vsub.s32 %v3223, %v3225
          %v3227 = vrot.slane %v3220, %v3226
          %v3228 = vcombine.low %v2466, %v2467
          %v3230 = vunpack.c.l.s4 1983009808
          %v3231 = vunpack.c.0.s8 %v3230
          %v3232 = vlaneseq
          %v3233 = vshrl.u32 %v3232, 7
          %v3234 = vsub.s32 %v3231, %v3233
          %v3235 = vrot.slane %v3228, %v3234
          %v3236 = vcombine.low %v2458, %v2465
          %v3238 = vunpack.c.l.s4 1983009808
          %v3239 = vunpack.c.0.s8 %v3238
          %v3240 = vlaneseq
          %v3241 = vshrl.u32 %v3240, 7
          %v3242 = vsub.s32 %v3239, %v3241
          %v3243 = vrot.slane %v3236, %v3242
          %v3244 = vcombine.low %v2468, %v2469
          %v3246 = vunpack.c.l.s4 1983009808
          %v3247 = vunpack.c.0.s8 %v3246
          %v3248 = vlaneseq
          %v3249 = vshrl.u32 %v3248, 7
          %v3250 = vsub.s32 %v3247, %v3249
          %v3251 = vrot.slane %v3244, %v3250
          %v3252 = vcombine.low %v3227, %v3235
          %v3254 = vunpack.c.l.s4 1934713408
          %v3255 = vunpack.c.0.s8 %v3254
          %v3256 = vlaneseq
          %v3257 = vshrl.u32 %v3256, 7
          %v3258 = vsub.s32 %v3255, %v3257
          %v3259 = vrot.slane %v3252, %v3258
          %v3260 = vcombine.low %v3243, %v3251
          %v3262 = vunpack.c.l.s4 1934713408
          %v3263 = vunpack.c.0.s8 %v3262
          %v3264 = vlaneseq
          %v3265 = vshrl.u32 %v3264, 7
          %v3266 = vsub.s32 %v3263, %v3265
          %v3267 = vrot.slane %v3260, %v3266
          %v3268 = vcombine.low %v3259, %v3267
          %v3269 = vcombine.high %v3259, %v3267
          %v3270 = vpack.c.bf16 %v2568, %v2518
          %v3271 = vpack.c.bf16 %v2668, %v2618
          %v3272 = vpack.c.bf16 %v2768, %v2718
          %v3273 = vpack.c.bf16 %v2868, %v2818
          %v3274 = vpack.c.bf16 %v2968, %v2918
          %v3275 = vpack.c.bf16 %v3068, %v3018
          %v3276 = vpack.c.bf16 %v3168, %v3118
          %v3277 = vpack.c.bf16 %v3268, %v3218
          %v3278 = vpack.c.bf16 %v2569, %v2519
          %v3279 = vpack.c.bf16 %v2669, %v2619
          %v3280 = vpack.c.bf16 %v2769, %v2719
          %v3281 = vpack.c.bf16 %v2869, %v2819
          %v3282 = vpack.c.bf16 %v2969, %v2919
          %v3283 = vpack.c.bf16 %v3069, %v3019
          %v3284 = vpack.c.bf16 %v3169, %v3119
          %v3285 = vpack.c.bf16 %v3269, %v3219
          %3286 = vst [vmem:[#allocation2] sm:$0xff] %v3270
          %3287 = vst [vmem:[#allocation2 + $0x8] sm:$0xff] %v3271
          %3288 = vst [vmem:[#allocation2 + $0x10] sm:$0xff] %v3272
          %3289 = vst [vmem:[#allocation2 + $0x18] sm:$0xff] %v3273
          %3290 = vst [vmem:[#allocation2 + $0x20] sm:$0xff] %v3274
          %3291 = vst [vmem:[#allocation2 + $0x28] sm:$0xff] %v3275
          %3292 = vst [vmem:[#allocation2 + $0x30] sm:$0xff] %v3276
          %3293 = vst [vmem:[#allocation2 + $0x38] sm:$0xff] %v3277
          %3294 = vst [vmem:[#allocation2 + $0x40] sm:$0xff] %v3278
          %3295 = vst [vmem:[#allocation2 + $0x48] sm:$0xff] %v3279
          %3296 = vst [vmem:[#allocation2 + $0x50] sm:$0xff] %v3280
          %3297 = vst [vmem:[#allocation2 + $0x58] sm:$0xff] %v3281
          %3298 = vst [vmem:[#allocation2 + $0x60] sm:$0xff] %v3282
          %3299 = vst [vmem:[#allocation2 + $0x68] sm:$0xff] %v3283
          %3300 = vst [vmem:[#allocation2 + $0x70] sm:$0xff] %v3284
          %3301 = vst [vmem:[#allocation2 + $0x78] sm:$0xff] %v3285
          %v3302 = vcombine.high %v1336, 0.0
          %v3304 = vunpack.c.l.s4 1983009808
          %v3305 = vunpack.c.0.s8 %v3304
          %v3306 = vlaneseq
          %v3307 = vshrl.u32 %v3306, 7
          %v3308 = vsub.s32 %v3305, %v3307
          %v3309 = vrot.slane %v1336, %v3308
          %v3311 = vunpack.c.l.s4 1983009808
          %v3312 = vunpack.c.0.s8 %v3311
          %v3313 = vlaneseq
          %v3314 = vshrl.u32 %v3313, 7
          %v3315 = vsub.s32 %v3312, %v3314
          %v3316 = vrot.slane %v3302, %v3315
          %v3317 = vcombine.high %v1338, 0.0
          %v3319 = vunpack.c.l.s4 1983009808
          %v3320 = vunpack.c.0.s8 %v3319
          %v3321 = vlaneseq
          %v3322 = vshrl.u32 %v3321, 7
          %v3323 = vsub.s32 %v3320, %v3322
          %v3324 = vrot.slane %v1338, %v3323
          %v3326 = vunpack.c.l.s4 1983009808
          %v3327 = vunpack.c.0.s8 %v3326
          %v3328 = vlaneseq
          %v3329 = vshrl.u32 %v3328, 7
          %v3330 = vsub.s32 %v3327, %v3329
          %v3331 = vrot.slane %v3317, %v3330
          %v3332 = vcombine.low %v3309, %v3324
          %v3333 = vcombine.high %v3309, %v3324
          %v3335 = vunpack.c.l.s4 1934713408
          %v3336 = vunpack.c.0.s8 %v3335
          %v3337 = vlaneseq
          %v3338 = vshrl.u32 %v3337, 7
          %v3339 = vsub.s32 %v3336, %v3338
          %v3340 = vrot.slane %v3332, %v3339
          %v3342 = vunpack.c.l.s4 1934713408
          %v3343 = vunpack.c.0.s8 %v3342
          %v3344 = vlaneseq
          %v3345 = vshrl.u32 %v3344, 7
          %v3346 = vsub.s32 %v3343, %v3345
          %v3347 = vrot.slane %v3333, %v3346
          %v3348 = vcombine.low %v3316, %v3331
          %v3349 = vcombine.high %v3316, %v3331
          %v3351 = vunpack.c.l.s4 1934713408
          %v3352 = vunpack.c.0.s8 %v3351
          %v3353 = vlaneseq
          %v3354 = vshrl.u32 %v3353, 7
          %v3355 = vsub.s32 %v3352, %v3354
          %v3356 = vrot.slane %v3348, %v3355
          %v3358 = vunpack.c.l.s4 1934713408
          %v3359 = vunpack.c.0.s8 %v3358
          %v3360 = vlaneseq
          %v3361 = vshrl.u32 %v3360, 7
          %v3362 = vsub.s32 %v3359, %v3361
          %v3363 = vrot.slane %v3349, %v3362
          %v3364 = vcombine.high %v3340, 0.0
          %v3365 = vcombine.high %v3347, 0.0
          %v3366 = vcombine.high %v3356, 0.0
          %v3367 = vcombine.high %v3363, 0.0
          %v3368 = vcombine.high %v1340, 0.0
          %v3370 = vunpack.c.l.s4 1983009808
          %v3371 = vunpack.c.0.s8 %v3370
          %v3372 = vlaneseq
          %v3373 = vshrl.u32 %v3372, 7
          %v3374 = vsub.s32 %v3371, %v3373
          %v3375 = vrot.slane %v1340, %v3374
          %v3377 = vunpack.c.l.s4 1983009808
          %v3378 = vunpack.c.0.s8 %v3377
          %v3379 = vlaneseq
          %v3380 = vshrl.u32 %v3379, 7
          %v3381 = vsub.s32 %v3378, %v3380
          %v3382 = vrot.slane %v3368, %v3381
          %v3383 = vcombine.high %v1342, 0.0
          %v3385 = vunpack.c.l.s4 1983009808
          %v3386 = vunpack.c.0.s8 %v3385
          %v3387 = vlaneseq
          %v3388 = vshrl.u32 %v3387, 7
          %v3389 = vsub.s32 %v3386, %v3388
          %v3390 = vrot.slane %v1342, %v3389
          %v3392 = vunpack.c.l.s4 1983009808
          %v3393 = vunpack.c.0.s8 %v3392
          %v3394 = vlaneseq
          %v3395 = vshrl.u32 %v3394, 7
          %v3396 = vsub.s32 %v3393, %v3395
          %v3397 = vrot.slane %v3383, %v3396
          %v3398 = vcombine.low %v3375, %v3390
          %v3399 = vcombine.high %v3375, %v3390
          %v3401 = vunpack.c.l.s4 1934713408
          %v3402 = vunpack.c.0.s8 %v3401
          %v3403 = vlaneseq
          %v3404 = vshrl.u32 %v3403, 7
          %v3405 = vsub.s32 %v3402, %v3404
          %v3406 = vrot.slane %v3398, %v3405
          %v3408 = vunpack.c.l.s4 1934713408
          %v3409 = vunpack.c.0.s8 %v3408
          %v3410 = vlaneseq
          %v3411 = vshrl.u32 %v3410, 7
          %v3412 = vsub.s32 %v3409, %v3411
          %v3413 = vrot.slane %v3399, %v3412
          %v3414 = vcombine.low %v3382, %v3397
          %v3415 = vcombine.high %v3382, %v3397
          %v3417 = vunpack.c.l.s4 1934713408
          %v3418 = vunpack.c.0.s8 %v3417
          %v3419 = vlaneseq
          %v3420 = vshrl.u32 %v3419, 7
          %v3421 = vsub.s32 %v3418, %v3420
          %v3422 = vrot.slane %v3414, %v3421
          %v3424 = vunpack.c.l.s4 1934713408
          %v3425 = vunpack.c.0.s8 %v3424
          %v3426 = vlaneseq
          %v3427 = vshrl.u32 %v3426, 7
          %v3428 = vsub.s32 %v3425, %v3427
          %v3429 = vrot.slane %v3415, %v3428
          %v3430 = vcombine.high %v3406, 0.0
          %v3431 = vcombine.high %v3413, 0.0
          %v3432 = vcombine.high %v3422, 0.0
          %v3433 = vcombine.high %v3429, 0.0
          %v3434 = vcombine.high %v1346, 0.0
          %v3436 = vunpack.c.l.s4 1983009808
          %v3437 = vunpack.c.0.s8 %v3436
          %v3438 = vlaneseq
          %v3439 = vshrl.u32 %v3438, 7
          %v3440 = vsub.s32 %v3437, %v3439
          %v3441 = vrot.slane %v1346, %v3440
          %v3443 = vunpack.c.l.s4 1983009808
          %v3444 = vunpack.c.0.s8 %v3443
          %v3445 = vlaneseq
          %v3446 = vshrl.u32 %v3445, 7
          %v3447 = vsub.s32 %v3444, %v3446
          %v3448 = vrot.slane %v3434, %v3447
          %v3449 = vcombine.high %v1348, 0.0
          %v3451 = vunpack.c.l.s4 1983009808
          %v3452 = vunpack.c.0.s8 %v3451
          %v3453 = vlaneseq
          %v3454 = vshrl.u32 %v3453, 7
          %v3455 = vsub.s32 %v3452, %v3454
          %v3456 = vrot.slane %v1348, %v3455
          %v3458 = vunpack.c.l.s4 1983009808
          %v3459 = vunpack.c.0.s8 %v3458
          %v3460 = vlaneseq
          %v3461 = vshrl.u32 %v3460, 7
          %v3462 = vsub.s32 %v3459, %v3461
          %v3463 = vrot.slane %v3449, %v3462
          %v3464 = vcombine.low %v3441, %v3456
          %v3465 = vcombine.high %v3441, %v3456
          %v3467 = vunpack.c.l.s4 1934713408
          %v3468 = vunpack.c.0.s8 %v3467
          %v3469 = vlaneseq
          %v3470 = vshrl.u32 %v3469, 7
          %v3471 = vsub.s32 %v3468, %v3470
          %v3472 = vrot.slane %v3464, %v3471
          %v3474 = vunpack.c.l.s4 1934713408
          %v3475 = vunpack.c.0.s8 %v3474
          %v3476 = vlaneseq
          %v3477 = vshrl.u32 %v3476, 7
          %v3478 = vsub.s32 %v3475, %v3477
          %v3479 = vrot.slane %v3465, %v3478
          %v3480 = vcombine.low %v3448, %v3463
          %v3481 = vcombine.high %v3448, %v3463
          %v3483 = vunpack.c.l.s4 1934713408
          %v3484 = vunpack.c.0.s8 %v3483
          %v3485 = vlaneseq
          %v3486 = vshrl.u32 %v3485, 7
          %v3487 = vsub.s32 %v3484, %v3486
          %v3488 = vrot.slane %v3480, %v3487
          %v3490 = vunpack.c.l.s4 1934713408
          %v3491 = vunpack.c.0.s8 %v3490
          %v3492 = vlaneseq
          %v3493 = vshrl.u32 %v3492, 7
          %v3494 = vsub.s32 %v3491, %v3493
          %v3495 = vrot.slane %v3481, %v3494
          %v3496 = vcombine.high %v3472, 0.0
          %v3497 = vcombine.high %v3479, 0.0
          %v3498 = vcombine.high %v3488, 0.0
          %v3499 = vcombine.high %v3495, 0.0
          %v3500 = vcombine.high %v1350, 0.0
          %v3502 = vunpack.c.l.s4 1983009808
          %v3503 = vunpack.c.0.s8 %v3502
          %v3504 = vlaneseq
          %v3505 = vshrl.u32 %v3504, 7
          %v3506 = vsub.s32 %v3503, %v3505
          %v3507 = vrot.slane %v1350, %v3506
          %v3509 = vunpack.c.l.s4 1983009808
          %v3510 = vunpack.c.0.s8 %v3509
          %v3511 = vlaneseq
          %v3512 = vshrl.u32 %v3511, 7
          %v3513 = vsub.s32 %v3510, %v3512
          %v3514 = vrot.slane %v3500, %v3513
          %v3515 = vcombine.high %v1352, 0.0
          %v3517 = vunpack.c.l.s4 1983009808
          %v3518 = vunpack.c.0.s8 %v3517
          %v3519 = vlaneseq
          %v3520 = vshrl.u32 %v3519, 7
          %v3521 = vsub.s32 %v3518, %v3520
          %v3522 = vrot.slane %v1352, %v3521
          %v3524 = vunpack.c.l.s4 1983009808
          %v3525 = vunpack.c.0.s8 %v3524
          %v3526 = vlaneseq
          %v3527 = vshrl.u32 %v3526, 7
          %v3528 = vsub.s32 %v3525, %v3527
          %v3529 = vrot.slane %v3515, %v3528
          %v3530 = vcombine.low %v3507, %v3522
          %v3531 = vcombine.high %v3507, %v3522
          %v3533 = vunpack.c.l.s4 1934713408
          %v3534 = vunpack.c.0.s8 %v3533
          %v3535 = vlaneseq
          %v3536 = vshrl.u32 %v3535, 7
          %v3537 = vsub.s32 %v3534, %v3536
          %v3538 = vrot.slane %v3530, %v3537
          %v3540 = vunpack.c.l.s4 1934713408
          %v3541 = vunpack.c.0.s8 %v3540
          %v3542 = vlaneseq
          %v3543 = vshrl.u32 %v3542, 7
          %v3544 = vsub.s32 %v3541, %v3543
          %v3545 = vrot.slane %v3531, %v3544
          %v3546 = vcombine.low %v3514, %v3529
          %v3547 = vcombine.high %v3514, %v3529
          %v3549 = vunpack.c.l.s4 1934713408
          %v3550 = vunpack.c.0.s8 %v3549
          %v3551 = vlaneseq
          %v3552 = vshrl.u32 %v3551, 7
          %v3553 = vsub.s32 %v3550, %v3552
          %v3554 = vrot.slane %v3546, %v3553
          %v3556 = vunpack.c.l.s4 1934713408
          %v3557 = vunpack.c.0.s8 %v3556
          %v3558 = vlaneseq
          %v3559 = vshrl.u32 %v3558, 7
          %v3560 = vsub.s32 %v3557, %v3559
          %v3561 = vrot.slane %v3547, %v3560
          %v3562 = vcombine.high %v3538, 0.0
          %v3563 = vcombine.high %v3545, 0.0
          %v3564 = vcombine.high %v3554, 0.0
          %v3565 = vcombine.high %v3561, 0.0
          %v3566 = vcombine.high %v1356, 0.0
          %v3568 = vunpack.c.l.s4 1983009808
          %v3569 = vunpack.c.0.s8 %v3568
          %v3570 = vlaneseq
          %v3571 = vshrl.u32 %v3570, 7
          %v3572 = vsub.s32 %v3569, %v3571
          %v3573 = vrot.slane %v1356, %v3572
          %v3575 = vunpack.c.l.s4 1983009808
          %v3576 = vunpack.c.0.s8 %v3575
          %v3577 = vlaneseq
          %v3578 = vshrl.u32 %v3577, 7
          %v3579 = vsub.s32 %v3576, %v3578
          %v3580 = vrot.slane %v3566, %v3579
          %v3581 = vcombine.high %v1358, 0.0
          %v3583 = vunpack.c.l.s4 1983009808
          %v3584 = vunpack.c.0.s8 %v3583
          %v3585 = vlaneseq
          %v3586 = vshrl.u32 %v3585, 7
          %v3587 = vsub.s32 %v3584, %v3586
          %v3588 = vrot.slane %v1358, %v3587
          %v3590 = vunpack.c.l.s4 1983009808
          %v3591 = vunpack.c.0.s8 %v3590
          %v3592 = vlaneseq
          %v3593 = vshrl.u32 %v3592, 7
          %v3594 = vsub.s32 %v3591, %v3593
          %v3595 = vrot.slane %v3581, %v3594
          %v3596 = vcombine.low %v3573, %v3588
          %v3597 = vcombine.high %v3573, %v3588
          %v3599 = vunpack.c.l.s4 1934713408
          %v3600 = vunpack.c.0.s8 %v3599
          %v3601 = vlaneseq
          %v3602 = vshrl.u32 %v3601, 7
          %v3603 = vsub.s32 %v3600, %v3602
          %v3604 = vrot.slane %v3596, %v3603
          %v3606 = vunpack.c.l.s4 1934713408
          %v3607 = vunpack.c.0.s8 %v3606
          %v3608 = vlaneseq
          %v3609 = vshrl.u32 %v3608, 7
          %v3610 = vsub.s32 %v3607, %v3609
          %v3611 = vrot.slane %v3597, %v3610
          %v3612 = vcombine.low %v3580, %v3595
          %v3613 = vcombine.high %v3580, %v3595
          %v3615 = vunpack.c.l.s4 1934713408
          %v3616 = vunpack.c.0.s8 %v3615
          %v3617 = vlaneseq
          %v3618 = vshrl.u32 %v3617, 7
          %v3619 = vsub.s32 %v3616, %v3618
          %v3620 = vrot.slane %v3612, %v3619
          %v3622 = vunpack.c.l.s4 1934713408
          %v3623 = vunpack.c.0.s8 %v3622
          %v3624 = vlaneseq
          %v3625 = vshrl.u32 %v3624, 7
          %v3626 = vsub.s32 %v3623, %v3625
          %v3627 = vrot.slane %v3613, %v3626
          %v3628 = vcombine.high %v3604, 0.0
          %v3629 = vcombine.high %v3611, 0.0
          %v3630 = vcombine.high %v3620, 0.0
          %v3631 = vcombine.high %v3627, 0.0
          %v3632 = vcombine.high %v1360, 0.0
          %v3634 = vunpack.c.l.s4 1983009808
          %v3635 = vunpack.c.0.s8 %v3634
          %v3636 = vlaneseq
          %v3637 = vshrl.u32 %v3636, 7
          %v3638 = vsub.s32 %v3635, %v3637
          %v3639 = vrot.slane %v1360, %v3638
          %v3641 = vunpack.c.l.s4 1983009808
          %v3642 = vunpack.c.0.s8 %v3641
          %v3643 = vlaneseq
          %v3644 = vshrl.u32 %v3643, 7
          %v3645 = vsub.s32 %v3642, %v3644
          %v3646 = vrot.slane %v3632, %v3645
          %v3647 = vcombine.high %v1362, 0.0
          %v3649 = vunpack.c.l.s4 1983009808
          %v3650 = vunpack.c.0.s8 %v3649
          %v3651 = vlaneseq
          %v3652 = vshrl.u32 %v3651, 7
          %v3653 = vsub.s32 %v3650, %v3652
          %v3654 = vrot.slane %v1362, %v3653
          %v3656 = vunpack.c.l.s4 1983009808
          %v3657 = vunpack.c.0.s8 %v3656
          %v3658 = vlaneseq
          %v3659 = vshrl.u32 %v3658, 7
          %v3660 = vsub.s32 %v3657, %v3659
          %v3661 = vrot.slane %v3647, %v3660
          %v3662 = vcombine.low %v3639, %v3654
          %v3663 = vcombine.high %v3639, %v3654
          %v3665 = vunpack.c.l.s4 1934713408
          %v3666 = vunpack.c.0.s8 %v3665
          %v3667 = vlaneseq
          %v3668 = vshrl.u32 %v3667, 7
          %v3669 = vsub.s32 %v3666, %v3668
          %v3670 = vrot.slane %v3662, %v3669
          %v3672 = vunpack.c.l.s4 1934713408
          %v3673 = vunpack.c.0.s8 %v3672
          %v3674 = vlaneseq
          %v3675 = vshrl.u32 %v3674, 7
          %v3676 = vsub.s32 %v3673, %v3675
          %v3677 = vrot.slane %v3663, %v3676
          %v3678 = vcombine.low %v3646, %v3661
          %v3679 = vcombine.high %v3646, %v3661
          %v3681 = vunpack.c.l.s4 1934713408
          %v3682 = vunpack.c.0.s8 %v3681
          %v3683 = vlaneseq
          %v3684 = vshrl.u32 %v3683, 7
          %v3685 = vsub.s32 %v3682, %v3684
          %v3686 = vrot.slane %v3678, %v3685
          %v3688 = vunpack.c.l.s4 1934713408
          %v3689 = vunpack.c.0.s8 %v3688
          %v3690 = vlaneseq
          %v3691 = vshrl.u32 %v3690, 7
          %v3692 = vsub.s32 %v3689, %v3691
          %v3693 = vrot.slane %v3679, %v3692
          %v3694 = vcombine.high %v3670, 0.0
          %v3695 = vcombine.high %v3677, 0.0
          %v3696 = vcombine.high %v3686, 0.0
          %v3697 = vcombine.high %v3693, 0.0
          %v3698 = vcombine.high %v1366, 0.0
          %v3700 = vunpack.c.l.s4 1983009808
          %v3701 = vunpack.c.0.s8 %v3700
          %v3702 = vlaneseq
          %v3703 = vshrl.u32 %v3702, 7
          %v3704 = vsub.s32 %v3701, %v3703
          %v3705 = vrot.slane %v1366, %v3704
          %v3707 = vunpack.c.l.s4 1983009808
          %v3708 = vunpack.c.0.s8 %v3707
          %v3709 = vlaneseq
          %v3710 = vshrl.u32 %v3709, 7
          %v3711 = vsub.s32 %v3708, %v3710
          %v3712 = vrot.slane %v3698, %v3711
          %v3713 = vcombine.high %v1368, 0.0
          %v3715 = vunpack.c.l.s4 1983009808
          %v3716 = vunpack.c.0.s8 %v3715
          %v3717 = vlaneseq
          %v3718 = vshrl.u32 %v3717, 7
          %v3719 = vsub.s32 %v3716, %v3718
          %v3720 = vrot.slane %v1368, %v3719
          %v3722 = vunpack.c.l.s4 1983009808
          %v3723 = vunpack.c.0.s8 %v3722
          %v3724 = vlaneseq
          %v3725 = vshrl.u32 %v3724, 7
          %v3726 = vsub.s32 %v3723, %v3725
          %v3727 = vrot.slane %v3713, %v3726
          %v3728 = vcombine.low %v3705, %v3720
          %v3729 = vcombine.high %v3705, %v3720
          %v3731 = vunpack.c.l.s4 1934713408
          %v3732 = vunpack.c.0.s8 %v3731
          %v3733 = vlaneseq
          %v3734 = vshrl.u32 %v3733, 7
          %v3735 = vsub.s32 %v3732, %v3734
          %v3736 = vrot.slane %v3728, %v3735
          %v3738 = vunpack.c.l.s4 1934713408
          %v3739 = vunpack.c.0.s8 %v3738
          %v3740 = vlaneseq
          %v3741 = vshrl.u32 %v3740, 7
          %v3742 = vsub.s32 %v3739, %v3741
          %v3743 = vrot.slane %v3729, %v3742
          %v3744 = vcombine.low %v3712, %v3727
          %v3745 = vcombine.high %v3712, %v3727
          %v3747 = vunpack.c.l.s4 1934713408
          %v3748 = vunpack.c.0.s8 %v3747
          %v3749 = vlaneseq
          %v3750 = vshrl.u32 %v3749, 7
          %v3751 = vsub.s32 %v3748, %v3750
          %v3752 = vrot.slane %v3744, %v3751
          %v3754 = vunpack.c.l.s4 1934713408
          %v3755 = vunpack.c.0.s8 %v3754
          %v3756 = vlaneseq
          %v3757 = vshrl.u32 %v3756, 7
          %v3758 = vsub.s32 %v3755, %v3757
          %v3759 = vrot.slane %v3745, %v3758
          %v3760 = vcombine.high %v3736, 0.0
          %v3761 = vcombine.high %v3743, 0.0
          %v3762 = vcombine.high %v3752, 0.0
          %v3763 = vcombine.high %v3759, 0.0
          %v3764 = vcombine.high %v1370, 0.0
          %v3766 = vunpack.c.l.s4 1983009808
          %v3767 = vunpack.c.0.s8 %v3766
          %v3768 = vlaneseq
          %v3769 = vshrl.u32 %v3768, 7
          %v3770 = vsub.s32 %v3767, %v3769
          %v3771 = vrot.slane %v1370, %v3770
          %v3773 = vunpack.c.l.s4 1983009808
          %v3774 = vunpack.c.0.s8 %v3773
          %v3775 = vlaneseq
          %v3776 = vshrl.u32 %v3775, 7
          %v3777 = vsub.s32 %v3774, %v3776
          %v3778 = vrot.slane %v3764, %v3777
          %v3779 = vcombine.high %v1372, 0.0
          %v3781 = vunpack.c.l.s4 1983009808
          %v3782 = vunpack.c.0.s8 %v3781
          %v3783 = vlaneseq
          %v3784 = vshrl.u32 %v3783, 7
          %v3785 = vsub.s32 %v3782, %v3784
          %v3786 = vrot.slane %v1372, %v3785
          %v3788 = vunpack.c.l.s4 1983009808
          %v3789 = vunpack.c.0.s8 %v3788
          %v3790 = vlaneseq
          %v3791 = vshrl.u32 %v3790, 7
          %v3792 = vsub.s32 %v3789, %v3791
          %v3793 = vrot.slane %v3779, %v3792
          %v3794 = vcombine.low %v3771, %v3786
          %v3795 = vcombine.high %v3771, %v3786
          %v3797 = vunpack.c.l.s4 1934713408
          %v3798 = vunpack.c.0.s8 %v3797
          %v3799 = vlaneseq
          %v3800 = vshrl.u32 %v3799, 7
          %v3801 = vsub.s32 %v3798, %v3800
          %v3802 = vrot.slane %v3794, %v3801
          %v3804 = vunpack.c.l.s4 1934713408
          %v3805 = vunpack.c.0.s8 %v3804
          %v3806 = vlaneseq
          %v3807 = vshrl.u32 %v3806, 7
          %v3808 = vsub.s32 %v3805, %v3807
          %v3809 = vrot.slane %v3795, %v3808
          %v3810 = vcombine.low %v3778, %v3793
          %v3811 = vcombine.high %v3778, %v3793
          %v3813 = vunpack.c.l.s4 1934713408
          %v3814 = vunpack.c.0.s8 %v3813
          %v3815 = vlaneseq
          %v3816 = vshrl.u32 %v3815, 7
          %v3817 = vsub.s32 %v3814, %v3816
          %v3818 = vrot.slane %v3810, %v3817
          %v3820 = vunpack.c.l.s4 1934713408
          %v3821 = vunpack.c.0.s8 %v3820
          %v3822 = vlaneseq
          %v3823 = vshrl.u32 %v3822, 7
          %v3824 = vsub.s32 %v3821, %v3823
          %v3825 = vrot.slane %v3811, %v3824
          %v3826 = vcombine.high %v3802, 0.0
          %v3827 = vcombine.high %v3809, 0.0
          %v3828 = vcombine.high %v3818, 0.0
          %v3829 = vcombine.high %v3825, 0.0
          %v3830 = vcombine.high %v1376, 0.0
          %v3832 = vunpack.c.l.s4 1983009808
          %v3833 = vunpack.c.0.s8 %v3832
          %v3834 = vlaneseq
          %v3835 = vshrl.u32 %v3834, 7
          %v3836 = vsub.s32 %v3833, %v3835
          %v3837 = vrot.slane %v1376, %v3836
          %v3839 = vunpack.c.l.s4 1983009808
          %v3840 = vunpack.c.0.s8 %v3839
          %v3841 = vlaneseq
          %v3842 = vshrl.u32 %v3841, 7
          %v3843 = vsub.s32 %v3840, %v3842
          %v3844 = vrot.slane %v3830, %v3843
          %v3845 = vcombine.high %v1378, 0.0
          %v3847 = vunpack.c.l.s4 1983009808
          %v3848 = vunpack.c.0.s8 %v3847
          %v3849 = vlaneseq
          %v3850 = vshrl.u32 %v3849, 7
          %v3851 = vsub.s32 %v3848, %v3850
          %v3852 = vrot.slane %v1378, %v3851
          %v3854 = vunpack.c.l.s4 1983009808
          %v3855 = vunpack.c.0.s8 %v3854
          %v3856 = vlaneseq
          %v3857 = vshrl.u32 %v3856, 7
          %v3858 = vsub.s32 %v3855, %v3857
          %v3859 = vrot.slane %v3845, %v3858
          %v3860 = vcombine.low %v3837, %v3852
          %v3861 = vcombine.high %v3837, %v3852
          %v3863 = vunpack.c.l.s4 1934713408
          %v3864 = vunpack.c.0.s8 %v3863
          %v3865 = vlaneseq
          %v3866 = vshrl.u32 %v3865, 7
          %v3867 = vsub.s32 %v3864, %v3866
          %v3868 = vrot.slane %v3860, %v3867
          %v3870 = vunpack.c.l.s4 1934713408
          %v3871 = vunpack.c.0.s8 %v3870
          %v3872 = vlaneseq
          %v3873 = vshrl.u32 %v3872, 7
          %v3874 = vsub.s32 %v3871, %v3873
          %v3875 = vrot.slane %v3861, %v3874
          %v3876 = vcombine.low %v3844, %v3859
          %v3877 = vcombine.high %v3844, %v3859
          %v3879 = vunpack.c.l.s4 1934713408
          %v3880 = vunpack.c.0.s8 %v3879
          %v3881 = vlaneseq
          %v3882 = vshrl.u32 %v3881, 7
          %v3883 = vsub.s32 %v3880, %v3882
          %v3884 = vrot.slane %v3876, %v3883
          %v3886 = vunpack.c.l.s4 1934713408
          %v3887 = vunpack.c.0.s8 %v3886
          %v3888 = vlaneseq
          %v3889 = vshrl.u32 %v3888, 7
          %v3890 = vsub.s32 %v3887, %v3889
          %v3891 = vrot.slane %v3877, %v3890
          %v3892 = vcombine.high %v3868, 0.0
          %v3893 = vcombine.high %v3875, 0.0
          %v3894 = vcombine.high %v3884, 0.0
          %v3895 = vcombine.high %v3891, 0.0
          %v3896 = vcombine.high %v1380, 0.0
          %v3898 = vunpack.c.l.s4 1983009808
          %v3899 = vunpack.c.0.s8 %v3898
          %v3900 = vlaneseq
          %v3901 = vshrl.u32 %v3900, 7
          %v3902 = vsub.s32 %v3899, %v3901
          %v3903 = vrot.slane %v1380, %v3902
          %v3905 = vunpack.c.l.s4 1983009808
          %v3906 = vunpack.c.0.s8 %v3905
          %v3907 = vlaneseq
          %v3908 = vshrl.u32 %v3907, 7
          %v3909 = vsub.s32 %v3906, %v3908
          %v3910 = vrot.slane %v3896, %v3909
          %v3911 = vcombine.high %v1382, 0.0
          %v3913 = vunpack.c.l.s4 1983009808
          %v3914 = vunpack.c.0.s8 %v3913
          %v3915 = vlaneseq
          %v3916 = vshrl.u32 %v3915, 7
          %v3917 = vsub.s32 %v3914, %v3916
          %v3918 = vrot.slane %v1382, %v3917
          %v3920 = vunpack.c.l.s4 1983009808
          %v3921 = vunpack.c.0.s8 %v3920
          %v3922 = vlaneseq
          %v3923 = vshrl.u32 %v3922, 7
          %v3924 = vsub.s32 %v3921, %v3923
          %v3925 = vrot.slane %v3911, %v3924
          %v3926 = vcombine.low %v3903, %v3918
          %v3927 = vcombine.high %v3903, %v3918
          %v3929 = vunpack.c.l.s4 1934713408
          %v3930 = vunpack.c.0.s8 %v3929
          %v3931 = vlaneseq
          %v3932 = vshrl.u32 %v3931, 7
          %v3933 = vsub.s32 %v3930, %v3932
          %v3934 = vrot.slane %v3926, %v3933
          %v3936 = vunpack.c.l.s4 1934713408
          %v3937 = vunpack.c.0.s8 %v3936
          %v3938 = vlaneseq
          %v3939 = vshrl.u32 %v3938, 7
          %v3940 = vsub.s32 %v3937, %v3939
          %v3941 = vrot.slane %v3927, %v3940
          %v3942 = vcombine.low %v3910, %v3925
          %v3943 = vcombine.high %v3910, %v3925
          %v3945 = vunpack.c.l.s4 1934713408
          %v3946 = vunpack.c.0.s8 %v3945
          %v3947 = vlaneseq
          %v3948 = vshrl.u32 %v3947, 7
          %v3949 = vsub.s32 %v3946, %v3948
          %v3950 = vrot.slane %v3942, %v3949
          %v3952 = vunpack.c.l.s4 1934713408
          %v3953 = vunpack.c.0.s8 %v3952
          %v3954 = vlaneseq
          %v3955 = vshrl.u32 %v3954, 7
          %v3956 = vsub.s32 %v3953, %v3955
          %v3957 = vrot.slane %v3943, %v3956
          %v3958 = vcombine.high %v3934, 0.0
          %v3959 = vcombine.high %v3941, 0.0
          %v3960 = vcombine.high %v3950, 0.0
          %v3961 = vcombine.high %v3957, 0.0
          %v3962 = vcombine.high %v1386, 0.0
          %v3964 = vunpack.c.l.s4 1983009808
          %v3965 = vunpack.c.0.s8 %v3964
          %v3966 = vlaneseq
          %v3967 = vshrl.u32 %v3966, 7
          %v3968 = vsub.s32 %v3965, %v3967
          %v3969 = vrot.slane %v1386, %v3968
          %v3971 = vunpack.c.l.s4 1983009808
          %v3972 = vunpack.c.0.s8 %v3971
          %v3973 = vlaneseq
          %v3974 = vshrl.u32 %v3973, 7
          %v3975 = vsub.s32 %v3972, %v3974
          %v3976 = vrot.slane %v3962, %v3975
          %v3977 = vcombine.high %v1388, 0.0
          %v3979 = vunpack.c.l.s4 1983009808
          %v3980 = vunpack.c.0.s8 %v3979
          %v3981 = vlaneseq
          %v3982 = vshrl.u32 %v3981, 7
          %v3983 = vsub.s32 %v3980, %v3982
          %v3984 = vrot.slane %v1388, %v3983
          %v3986 = vunpack.c.l.s4 1983009808
          %v3987 = vunpack.c.0.s8 %v3986
          %v3988 = vlaneseq
          %v3989 = vshrl.u32 %v3988, 7
          %v3990 = vsub.s32 %v3987, %v3989
          %v3991 = vrot.slane %v3977, %v3990
          %v3992 = vcombine.low %v3969, %v3984
          %v3993 = vcombine.high %v3969, %v3984
          %v3995 = vunpack.c.l.s4 1934713408
          %v3996 = vunpack.c.0.s8 %v3995
          %v3997 = vlaneseq
          %v3998 = vshrl.u32 %v3997, 7
          %v3999 = vsub.s32 %v3996, %v3998
          %v4000 = vrot.slane %v3992, %v3999
          %v4002 = vunpack.c.l.s4 1934713408
          %v4003 = vunpack.c.0.s8 %v4002
          %v4004 = vlaneseq
          %v4005 = vshrl.u32 %v4004, 7
          %v4006 = vsub.s32 %v4003, %v4005
          %v4007 = vrot.slane %v3993, %v4006
          %v4008 = vcombine.low %v3976, %v3991
          %v4009 = vcombine.high %v3976, %v3991
          %v4011 = vunpack.c.l.s4 1934713408
          %v4012 = vunpack.c.0.s8 %v4011
          %v4013 = vlaneseq
          %v4014 = vshrl.u32 %v4013, 7
          %v4015 = vsub.s32 %v4012, %v4014
          %v4016 = vrot.slane %v4008, %v4015
          %v4018 = vunpack.c.l.s4 1934713408
          %v4019 = vunpack.c.0.s8 %v4018
          %v4020 = vlaneseq
          %v4021 = vshrl.u32 %v4020, 7
          %v4022 = vsub.s32 %v4019, %v4021
          %v4023 = vrot.slane %v4009, %v4022
          %v4024 = vcombine.high %v4000, 0.0
          %v4025 = vcombine.high %v4007, 0.0
          %v4026 = vcombine.high %v4016, 0.0
          %v4027 = vcombine.high %v4023, 0.0
          %v4028 = vcombine.high %v1390, 0.0
          %v4030 = vunpack.c.l.s4 1983009808
          %v4031 = vunpack.c.0.s8 %v4030
          %v4032 = vlaneseq
          %v4033 = vshrl.u32 %v4032, 7
          %v4034 = vsub.s32 %v4031, %v4033
          %v4035 = vrot.slane %v1390, %v4034
          %v4037 = vunpack.c.l.s4 1983009808
          %v4038 = vunpack.c.0.s8 %v4037
          %v4039 = vlaneseq
          %v4040 = vshrl.u32 %v4039, 7
          %v4041 = vsub.s32 %v4038, %v4040
          %v4042 = vrot.slane %v4028, %v4041
          %v4043 = vcombine.high %v1392, 0.0
          %v4045 = vunpack.c.l.s4 1983009808
          %v4046 = vunpack.c.0.s8 %v4045
          %v4047 = vlaneseq
          %v4048 = vshrl.u32 %v4047, 7
          %v4049 = vsub.s32 %v4046, %v4048
          %v4050 = vrot.slane %v1392, %v4049
          %v4052 = vunpack.c.l.s4 1983009808
          %v4053 = vunpack.c.0.s8 %v4052
          %v4054 = vlaneseq
          %v4055 = vshrl.u32 %v4054, 7
          %v4056 = vsub.s32 %v4053, %v4055
          %v4057 = vrot.slane %v4043, %v4056
          %v4058 = vcombine.low %v4035, %v4050
          %v4059 = vcombine.high %v4035, %v4050
          %v4061 = vunpack.c.l.s4 1934713408
          %v4062 = vunpack.c.0.s8 %v4061
          %v4063 = vlaneseq
          %v4064 = vshrl.u32 %v4063, 7
          %v4065 = vsub.s32 %v4062, %v4064
          %v4066 = vrot.slane %v4058, %v4065
          %v4068 = vunpack.c.l.s4 1934713408
          %v4069 = vunpack.c.0.s8 %v4068
          %v4070 = vlaneseq
          %v4071 = vshrl.u32 %v4070, 7
          %v4072 = vsub.s32 %v4069, %v4071
          %v4073 = vrot.slane %v4059, %v4072
          %v4074 = vcombine.low %v4042, %v4057
          %v4075 = vcombine.high %v4042, %v4057
          %v4077 = vunpack.c.l.s4 1934713408
          %v4078 = vunpack.c.0.s8 %v4077
          %v4079 = vlaneseq
          %v4080 = vshrl.u32 %v4079, 7
          %v4081 = vsub.s32 %v4078, %v4080
          %v4082 = vrot.slane %v4074, %v4081
          %v4084 = vunpack.c.l.s4 1934713408
          %v4085 = vunpack.c.0.s8 %v4084
          %v4086 = vlaneseq
          %v4087 = vshrl.u32 %v4086, 7
          %v4088 = vsub.s32 %v4085, %v4087
          %v4089 = vrot.slane %v4075, %v4088
          %v4090 = vcombine.high %v4066, 0.0
          %v4091 = vcombine.high %v4073, 0.0
          %v4092 = vcombine.high %v4082, 0.0
          %v4093 = vcombine.high %v4089, 0.0
          %v4094 = vcombine.high %v1396, 0.0
          %v4096 = vunpack.c.l.s4 1983009808
          %v4097 = vunpack.c.0.s8 %v4096
          %v4098 = vlaneseq
          %v4099 = vshrl.u32 %v4098, 7
          %v4100 = vsub.s32 %v4097, %v4099
          %v4101 = vrot.slane %v1396, %v4100
          %v4103 = vunpack.c.l.s4 1983009808
          %v4104 = vunpack.c.0.s8 %v4103
          %v4105 = vlaneseq
          %v4106 = vshrl.u32 %v4105, 7
          %v4107 = vsub.s32 %v4104, %v4106
          %v4108 = vrot.slane %v4094, %v4107
          %v4109 = vcombine.high %v1398, 0.0
          %v4111 = vunpack.c.l.s4 1983009808
          %v4112 = vunpack.c.0.s8 %v4111
          %v4113 = vlaneseq
          %v4114 = vshrl.u32 %v4113, 7
          %v4115 = vsub.s32 %v4112, %v4114
          %v4116 = vrot.slane %v1398, %v4115
          %v4118 = vunpack.c.l.s4 1983009808
          %v4119 = vunpack.c.0.s8 %v4118
          %v4120 = vlaneseq
          %v4121 = vshrl.u32 %v4120, 7
          %v4122 = vsub.s32 %v4119, %v4121
          %v4123 = vrot.slane %v4109, %v4122
          %v4124 = vcombine.low %v4101, %v4116
          %v4125 = vcombine.high %v4101, %v4116
          %v4127 = vunpack.c.l.s4 1934713408
          %v4128 = vunpack.c.0.s8 %v4127
          %v4129 = vlaneseq
          %v4130 = vshrl.u32 %v4129, 7
          %v4131 = vsub.s32 %v4128, %v4130
          %v4132 = vrot.slane %v4124, %v4131
          %v4134 = vunpack.c.l.s4 1934713408
          %v4135 = vunpack.c.0.s8 %v4134
          %v4136 = vlaneseq
          %v4137 = vshrl.u32 %v4136, 7
          %v4138 = vsub.s32 %v4135, %v4137
          %v4139 = vrot.slane %v4125, %v4138
          %v4140 = vcombine.low %v4108, %v4123
          %v4141 = vcombine.high %v4108, %v4123
          %v4143 = vunpack.c.l.s4 1934713408
          %v4144 = vunpack.c.0.s8 %v4143
          %v4145 = vlaneseq
          %v4146 = vshrl.u32 %v4145, 7
          %v4147 = vsub.s32 %v4144, %v4146
          %v4148 = vrot.slane %v4140, %v4147
          %v4150 = vunpack.c.l.s4 1934713408
          %v4151 = vunpack.c.0.s8 %v4150
          %v4152 = vlaneseq
          %v4153 = vshrl.u32 %v4152, 7
          %v4154 = vsub.s32 %v4151, %v4153
          %v4155 = vrot.slane %v4141, %v4154
          %v4156 = vcombine.high %v4132, 0.0
          %v4157 = vcombine.high %v4139, 0.0
          %v4158 = vcombine.high %v4148, 0.0
          %v4159 = vcombine.high %v4155, 0.0
          %v4160 = vcombine.high %v1400, 0.0
          %v4162 = vunpack.c.l.s4 1983009808
          %v4163 = vunpack.c.0.s8 %v4162
          %v4164 = vlaneseq
          %v4165 = vshrl.u32 %v4164, 7
          %v4166 = vsub.s32 %v4163, %v4165
          %v4167 = vrot.slane %v1400, %v4166
          %v4169 = vunpack.c.l.s4 1983009808
          %v4170 = vunpack.c.0.s8 %v4169
          %v4171 = vlaneseq
          %v4172 = vshrl.u32 %v4171, 7
          %v4173 = vsub.s32 %v4170, %v4172
          %v4174 = vrot.slane %v4160, %v4173
          %v4175 = vcombine.high %v1402, 0.0
          %v4177 = vunpack.c.l.s4 1983009808
          %v4178 = vunpack.c.0.s8 %v4177
          %v4179 = vlaneseq
          %v4180 = vshrl.u32 %v4179, 7
          %v4181 = vsub.s32 %v4178, %v4180
          %v4182 = vrot.slane %v1402, %v4181
          %v4184 = vunpack.c.l.s4 1983009808
          %v4185 = vunpack.c.0.s8 %v4184
          %v4186 = vlaneseq
          %v4187 = vshrl.u32 %v4186, 7
          %v4188 = vsub.s32 %v4185, %v4187
          %v4189 = vrot.slane %v4175, %v4188
          %v4190 = vcombine.low %v4167, %v4182
          %v4191 = vcombine.high %v4167, %v4182
          %v4193 = vunpack.c.l.s4 1934713408
          %v4194 = vunpack.c.0.s8 %v4193
          %v4195 = vlaneseq
          %v4196 = vshrl.u32 %v4195, 7
          %v4197 = vsub.s32 %v4194, %v4196
          %v4198 = vrot.slane %v4190, %v4197
          %v4200 = vunpack.c.l.s4 1934713408
          %v4201 = vunpack.c.0.s8 %v4200
          %v4202 = vlaneseq
          %v4203 = vshrl.u32 %v4202, 7
          %v4204 = vsub.s32 %v4201, %v4203
          %v4205 = vrot.slane %v4191, %v4204
          %v4206 = vcombine.low %v4174, %v4189
          %v4207 = vcombine.high %v4174, %v4189
          %v4209 = vunpack.c.l.s4 1934713408
          %v4210 = vunpack.c.0.s8 %v4209
          %v4211 = vlaneseq
          %v4212 = vshrl.u32 %v4211, 7
          %v4213 = vsub.s32 %v4210, %v4212
          %v4214 = vrot.slane %v4206, %v4213
          %v4216 = vunpack.c.l.s4 1934713408
          %v4217 = vunpack.c.0.s8 %v4216
          %v4218 = vlaneseq
          %v4219 = vshrl.u32 %v4218, 7
          %v4220 = vsub.s32 %v4217, %v4219
          %v4221 = vrot.slane %v4207, %v4220
          %v4222 = vcombine.high %v4198, 0.0
          %v4223 = vcombine.high %v4205, 0.0
          %v4224 = vcombine.high %v4214, 0.0
          %v4225 = vcombine.high %v4221, 0.0
          %v4226 = vcombine.high %v1406, 0.0
          %v4228 = vunpack.c.l.s4 1983009808
          %v4229 = vunpack.c.0.s8 %v4228
          %v4230 = vlaneseq
          %v4231 = vshrl.u32 %v4230, 7
          %v4232 = vsub.s32 %v4229, %v4231
          %v4233 = vrot.slane %v1406, %v4232
          %v4235 = vunpack.c.l.s4 1983009808
          %v4236 = vunpack.c.0.s8 %v4235
          %v4237 = vlaneseq
          %v4238 = vshrl.u32 %v4237, 7
          %v4239 = vsub.s32 %v4236, %v4238
          %v4240 = vrot.slane %v4226, %v4239
          %v4241 = vcombine.high %v1408, 0.0
          %v4243 = vunpack.c.l.s4 1983009808
          %v4244 = vunpack.c.0.s8 %v4243
          %v4245 = vlaneseq
          %v4246 = vshrl.u32 %v4245, 7
          %v4247 = vsub.s32 %v4244, %v4246
          %v4248 = vrot.slane %v1408, %v4247
          %v4250 = vunpack.c.l.s4 1983009808
          %v4251 = vunpack.c.0.s8 %v4250
          %v4252 = vlaneseq
          %v4253 = vshrl.u32 %v4252, 7
          %v4254 = vsub.s32 %v4251, %v4253
          %v4255 = vrot.slane %v4241, %v4254
          %v4256 = vcombine.low %v4233, %v4248
          %v4257 = vcombine.high %v4233, %v4248
          %v4259 = vunpack.c.l.s4 1934713408
          %v4260 = vunpack.c.0.s8 %v4259
          %v4261 = vlaneseq
          %v4262 = vshrl.u32 %v4261, 7
          %v4263 = vsub.s32 %v4260, %v4262
          %v4264 = vrot.slane %v4256, %v4263
          %v4266 = vunpack.c.l.s4 1934713408
          %v4267 = vunpack.c.0.s8 %v4266
          %v4268 = vlaneseq
          %v4269 = vshrl.u32 %v4268, 7
          %v4270 = vsub.s32 %v4267, %v4269
          %v4271 = vrot.slane %v4257, %v4270
          %v4272 = vcombine.low %v4240, %v4255
          %v4273 = vcombine.high %v4240, %v4255
          %v4275 = vunpack.c.l.s4 1934713408
          %v4276 = vunpack.c.0.s8 %v4275
          %v4277 = vlaneseq
          %v4278 = vshrl.u32 %v4277, 7
          %v4279 = vsub.s32 %v4276, %v4278
          %v4280 = vrot.slane %v4272, %v4279
          %v4282 = vunpack.c.l.s4 1934713408
          %v4283 = vunpack.c.0.s8 %v4282
          %v4284 = vlaneseq
          %v4285 = vshrl.u32 %v4284, 7
          %v4286 = vsub.s32 %v4283, %v4285
          %v4287 = vrot.slane %v4273, %v4286
          %v4288 = vcombine.high %v4264, 0.0
          %v4289 = vcombine.high %v4271, 0.0
          %v4290 = vcombine.high %v4280, 0.0
          %v4291 = vcombine.high %v4287, 0.0
          %v4292 = vcombine.high %v1410, 0.0
          %v4294 = vunpack.c.l.s4 1983009808
          %v4295 = vunpack.c.0.s8 %v4294
          %v4296 = vlaneseq
          %v4297 = vshrl.u32 %v4296, 7
          %v4298 = vsub.s32 %v4295, %v4297
          %v4299 = vrot.slane %v1410, %v4298
          %v4301 = vunpack.c.l.s4 1983009808
          %v4302 = vunpack.c.0.s8 %v4301
          %v4303 = vlaneseq
          %v4304 = vshrl.u32 %v4303, 7
          %v4305 = vsub.s32 %v4302, %v4304
          %v4306 = vrot.slane %v4292, %v4305
          %v4307 = vcombine.high %v1412, 0.0
          %v4309 = vunpack.c.l.s4 1983009808
          %v4310 = vunpack.c.0.s8 %v4309
          %v4311 = vlaneseq
          %v4312 = vshrl.u32 %v4311, 7
          %v4313 = vsub.s32 %v4310, %v4312
          %v4314 = vrot.slane %v1412, %v4313
          %v4316 = vunpack.c.l.s4 1983009808
          %v4317 = vunpack.c.0.s8 %v4316
          %v4318 = vlaneseq
          %v4319 = vshrl.u32 %v4318, 7
          %v4320 = vsub.s32 %v4317, %v4319
          %v4321 = vrot.slane %v4307, %v4320
          %v4322 = vcombine.low %v4299, %v4314
          %v4323 = vcombine.high %v4299, %v4314
          %v4325 = vunpack.c.l.s4 1934713408
          %v4326 = vunpack.c.0.s8 %v4325
          %v4327 = vlaneseq
          %v4328 = vshrl.u32 %v4327, 7
          %v4329 = vsub.s32 %v4326, %v4328
          %v4330 = vrot.slane %v4322, %v4329
          %v4332 = vunpack.c.l.s4 1934713408
          %v4333 = vunpack.c.0.s8 %v4332
          %v4334 = vlaneseq
          %v4335 = vshrl.u32 %v4334, 7
          %v4336 = vsub.s32 %v4333, %v4335
          %v4337 = vrot.slane %v4323, %v4336
          %v4338 = vcombine.low %v4306, %v4321
          %v4339 = vcombine.high %v4306, %v4321
          %v4341 = vunpack.c.l.s4 1934713408
          %v4342 = vunpack.c.0.s8 %v4341
          %v4343 = vlaneseq
          %v4344 = vshrl.u32 %v4343, 7
          %v4345 = vsub.s32 %v4342, %v4344
          %v4346 = vrot.slane %v4338, %v4345
          %v4348 = vunpack.c.l.s4 1934713408
          %v4349 = vunpack.c.0.s8 %v4348
          %v4350 = vlaneseq
          %v4351 = vshrl.u32 %v4350, 7
          %v4352 = vsub.s32 %v4349, %v4351
          %v4353 = vrot.slane %v4339, %v4352
          %v4354 = vcombine.high %v4330, 0.0
          %v4355 = vcombine.high %v4337, 0.0
          %v4356 = vcombine.high %v4346, 0.0
          %v4357 = vcombine.high %v4353, 0.0
          %v4358 = vcombine.low %v3340, %v3347
          %v4360 = vunpack.c.l.s4 1983009808
          %v4361 = vunpack.c.0.s8 %v4360
          %v4362 = vlaneseq
          %v4363 = vshrl.u32 %v4362, 7
          %v4364 = vsub.s32 %v4361, %v4363
          %v4365 = vrot.slane %v4358, %v4364
          %v4366 = vcombine.low %v3364, %v3365
          %v4368 = vunpack.c.l.s4 1983009808
          %v4369 = vunpack.c.0.s8 %v4368
          %v4370 = vlaneseq
          %v4371 = vshrl.u32 %v4370, 7
          %v4372 = vsub.s32 %v4369, %v4371
          %v4373 = vrot.slane %v4366, %v4372
          %v4374 = vcombine.low %v3356, %v3363
          %v4376 = vunpack.c.l.s4 1983009808
          %v4377 = vunpack.c.0.s8 %v4376
          %v4378 = vlaneseq
          %v4379 = vshrl.u32 %v4378, 7
          %v4380 = vsub.s32 %v4377, %v4379
          %v4381 = vrot.slane %v4374, %v4380
          %v4382 = vcombine.low %v3366, %v3367
          %v4384 = vunpack.c.l.s4 1983009808
          %v4385 = vunpack.c.0.s8 %v4384
          %v4386 = vlaneseq
          %v4387 = vshrl.u32 %v4386, 7
          %v4388 = vsub.s32 %v4385, %v4387
          %v4389 = vrot.slane %v4382, %v4388
          %v4390 = vcombine.low %v4365, %v4373
          %v4392 = vunpack.c.l.s4 1934713408
          %v4393 = vunpack.c.0.s8 %v4392
          %v4394 = vlaneseq
          %v4395 = vshrl.u32 %v4394, 7
          %v4396 = vsub.s32 %v4393, %v4395
          %v4397 = vrot.slane %v4390, %v4396
          %v4398 = vcombine.low %v4381, %v4389
          %v4400 = vunpack.c.l.s4 1934713408
          %v4401 = vunpack.c.0.s8 %v4400
          %v4402 = vlaneseq
          %v4403 = vshrl.u32 %v4402, 7
          %v4404 = vsub.s32 %v4401, %v4403
          %v4405 = vrot.slane %v4398, %v4404
          %v4406 = vcombine.low %v4397, %v4405
          %v4407 = vcombine.high %v4397, %v4405
          %v4408 = vcombine.low %v3406, %v3413
          %v4410 = vunpack.c.l.s4 1983009808
          %v4411 = vunpack.c.0.s8 %v4410
          %v4412 = vlaneseq
          %v4413 = vshrl.u32 %v4412, 7
          %v4414 = vsub.s32 %v4411, %v4413
          %v4415 = vrot.slane %v4408, %v4414
          %v4416 = vcombine.low %v3430, %v3431
          %v4418 = vunpack.c.l.s4 1983009808
          %v4419 = vunpack.c.0.s8 %v4418
          %v4420 = vlaneseq
          %v4421 = vshrl.u32 %v4420, 7
          %v4422 = vsub.s32 %v4419, %v4421
          %v4423 = vrot.slane %v4416, %v4422
          %v4424 = vcombine.low %v3422, %v3429
          %v4426 = vunpack.c.l.s4 1983009808
          %v4427 = vunpack.c.0.s8 %v4426
          %v4428 = vlaneseq
          %v4429 = vshrl.u32 %v4428, 7
          %v4430 = vsub.s32 %v4427, %v4429
          %v4431 = vrot.slane %v4424, %v4430
          %v4432 = vcombine.low %v3432, %v3433
          %v4434 = vunpack.c.l.s4 1983009808
          %v4435 = vunpack.c.0.s8 %v4434
          %v4436 = vlaneseq
          %v4437 = vshrl.u32 %v4436, 7
          %v4438 = vsub.s32 %v4435, %v4437
          %v4439 = vrot.slane %v4432, %v4438
          %v4440 = vcombine.low %v4415, %v4423
          %v4442 = vunpack.c.l.s4 1934713408
          %v4443 = vunpack.c.0.s8 %v4442
          %v4444 = vlaneseq
          %v4445 = vshrl.u32 %v4444, 7
          %v4446 = vsub.s32 %v4443, %v4445
          %v4447 = vrot.slane %v4440, %v4446
          %v4448 = vcombine.low %v4431, %v4439
          %v4450 = vunpack.c.l.s4 1934713408
          %v4451 = vunpack.c.0.s8 %v4450
          %v4452 = vlaneseq
          %v4453 = vshrl.u32 %v4452, 7
          %v4454 = vsub.s32 %v4451, %v4453
          %v4455 = vrot.slane %v4448, %v4454
          %v4456 = vcombine.low %v4447, %v4455
          %v4457 = vcombine.high %v4447, %v4455
          %v4458 = vcombine.low %v3472, %v3479
          %v4460 = vunpack.c.l.s4 1983009808
          %v4461 = vunpack.c.0.s8 %v4460
          %v4462 = vlaneseq
          %v4463 = vshrl.u32 %v4462, 7
          %v4464 = vsub.s32 %v4461, %v4463
          %v4465 = vrot.slane %v4458, %v4464
          %v4466 = vcombine.low %v3496, %v3497
          %v4468 = vunpack.c.l.s4 1983009808
          %v4469 = vunpack.c.0.s8 %v4468
          %v4470 = vlaneseq
          %v4471 = vshrl.u32 %v4470, 7
          %v4472 = vsub.s32 %v4469, %v4471
          %v4473 = vrot.slane %v4466, %v4472
          %v4474 = vcombine.low %v3488, %v3495
          %v4476 = vunpack.c.l.s4 1983009808
          %v4477 = vunpack.c.0.s8 %v4476
          %v4478 = vlaneseq
          %v4479 = vshrl.u32 %v4478, 7
          %v4480 = vsub.s32 %v4477, %v4479
          %v4481 = vrot.slane %v4474, %v4480
          %v4482 = vcombine.low %v3498, %v3499
          %v4484 = vunpack.c.l.s4 1983009808
          %v4485 = vunpack.c.0.s8 %v4484
          %v4486 = vlaneseq
          %v4487 = vshrl.u32 %v4486, 7
          %v4488 = vsub.s32 %v4485, %v4487
          %v4489 = vrot.slane %v4482, %v4488
          %v4490 = vcombine.low %v4465, %v4473
          %v4492 = vunpack.c.l.s4 1934713408
          %v4493 = vunpack.c.0.s8 %v4492
          %v4494 = vlaneseq
          %v4495 = vshrl.u32 %v4494, 7
          %v4496 = vsub.s32 %v4493, %v4495
          %v4497 = vrot.slane %v4490, %v4496
          %v4498 = vcombine.low %v4481, %v4489
          %v4500 = vunpack.c.l.s4 1934713408
          %v4501 = vunpack.c.0.s8 %v4500
          %v4502 = vlaneseq
          %v4503 = vshrl.u32 %v4502, 7
          %v4504 = vsub.s32 %v4501, %v4503
          %v4505 = vrot.slane %v4498, %v4504
          %v4506 = vcombine.low %v4497, %v4505
          %v4507 = vcombine.high %v4497, %v4505
          %v4508 = vcombine.low %v3538, %v3545
          %v4510 = vunpack.c.l.s4 1983009808
          %v4511 = vunpack.c.0.s8 %v4510
          %v4512 = vlaneseq
          %v4513 = vshrl.u32 %v4512, 7
          %v4514 = vsub.s32 %v4511, %v4513
          %v4515 = vrot.slane %v4508, %v4514
          %v4516 = vcombine.low %v3562, %v3563
          %v4518 = vunpack.c.l.s4 1983009808
          %v4519 = vunpack.c.0.s8 %v4518
          %v4520 = vlaneseq
          %v4521 = vshrl.u32 %v4520, 7
          %v4522 = vsub.s32 %v4519, %v4521
          %v4523 = vrot.slane %v4516, %v4522
          %v4524 = vcombine.low %v3554, %v3561
          %v4526 = vunpack.c.l.s4 1983009808
          %v4527 = vunpack.c.0.s8 %v4526
          %v4528 = vlaneseq
          %v4529 = vshrl.u32 %v4528, 7
          %v4530 = vsub.s32 %v4527, %v4529
          %v4531 = vrot.slane %v4524, %v4530
          %v4532 = vcombine.low %v3564, %v3565
          %v4534 = vunpack.c.l.s4 1983009808
          %v4535 = vunpack.c.0.s8 %v4534
          %v4536 = vlaneseq
          %v4537 = vshrl.u32 %v4536, 7
          %v4538 = vsub.s32 %v4535, %v4537
          %v4539 = vrot.slane %v4532, %v4538
          %v4540 = vcombine.low %v4515, %v4523
          %v4542 = vunpack.c.l.s4 1934713408
          %v4543 = vunpack.c.0.s8 %v4542
          %v4544 = vlaneseq
          %v4545 = vshrl.u32 %v4544, 7
          %v4546 = vsub.s32 %v4543, %v4545
          %v4547 = vrot.slane %v4540, %v4546
          %v4548 = vcombine.low %v4531, %v4539
          %v4550 = vunpack.c.l.s4 1934713408
          %v4551 = vunpack.c.0.s8 %v4550
          %v4552 = vlaneseq
          %v4553 = vshrl.u32 %v4552, 7
          %v4554 = vsub.s32 %v4551, %v4553
          %v4555 = vrot.slane %v4548, %v4554
          %v4556 = vcombine.low %v4547, %v4555
          %v4557 = vcombine.high %v4547, %v4555
          %v4558 = vcombine.low %v3604, %v3611
          %v4560 = vunpack.c.l.s4 1983009808
          %v4561 = vunpack.c.0.s8 %v4560
          %v4562 = vlaneseq
          %v4563 = vshrl.u32 %v4562, 7
          %v4564 = vsub.s32 %v4561, %v4563
          %v4565 = vrot.slane %v4558, %v4564
          %v4566 = vcombine.low %v3628, %v3629
          %v4568 = vunpack.c.l.s4 1983009808
          %v4569 = vunpack.c.0.s8 %v4568
          %v4570 = vlaneseq
          %v4571 = vshrl.u32 %v4570, 7
          %v4572 = vsub.s32 %v4569, %v4571
          %v4573 = vrot.slane %v4566, %v4572
          %v4574 = vcombine.low %v3620, %v3627
          %v4576 = vunpack.c.l.s4 1983009808
          %v4577 = vunpack.c.0.s8 %v4576
          %v4578 = vlaneseq
          %v4579 = vshrl.u32 %v4578, 7
          %v4580 = vsub.s32 %v4577, %v4579
          %v4581 = vrot.slane %v4574, %v4580
          %v4582 = vcombine.low %v3630, %v3631
          %v4584 = vunpack.c.l.s4 1983009808
          %v4585 = vunpack.c.0.s8 %v4584
          %v4586 = vlaneseq
          %v4587 = vshrl.u32 %v4586, 7
          %v4588 = vsub.s32 %v4585, %v4587
          %v4589 = vrot.slane %v4582, %v4588
          %v4590 = vcombine.low %v4565, %v4573
          %v4592 = vunpack.c.l.s4 1934713408
          %v4593 = vunpack.c.0.s8 %v4592
          %v4594 = vlaneseq
          %v4595 = vshrl.u32 %v4594, 7
          %v4596 = vsub.s32 %v4593, %v4595
          %v4597 = vrot.slane %v4590, %v4596
          %v4598 = vcombine.low %v4581, %v4589
          %v4600 = vunpack.c.l.s4 1934713408
          %v4601 = vunpack.c.0.s8 %v4600
          %v4602 = vlaneseq
          %v4603 = vshrl.u32 %v4602, 7
          %v4604 = vsub.s32 %v4601, %v4603
          %v4605 = vrot.slane %v4598, %v4604
          %v4606 = vcombine.low %v4597, %v4605
          %v4607 = vcombine.high %v4597, %v4605
          %v4608 = vcombine.low %v3670, %v3677
          %v4610 = vunpack.c.l.s4 1983009808
          %v4611 = vunpack.c.0.s8 %v4610
          %v4612 = vlaneseq
          %v4613 = vshrl.u32 %v4612, 7
          %v4614 = vsub.s32 %v4611, %v4613
          %v4615 = vrot.slane %v4608, %v4614
          %v4616 = vcombine.low %v3694, %v3695
          %v4618 = vunpack.c.l.s4 1983009808
          %v4619 = vunpack.c.0.s8 %v4618
          %v4620 = vlaneseq
          %v4621 = vshrl.u32 %v4620, 7
          %v4622 = vsub.s32 %v4619, %v4621
          %v4623 = vrot.slane %v4616, %v4622
          %v4624 = vcombine.low %v3686, %v3693
          %v4626 = vunpack.c.l.s4 1983009808
          %v4627 = vunpack.c.0.s8 %v4626
          %v4628 = vlaneseq
          %v4629 = vshrl.u32 %v4628, 7
          %v4630 = vsub.s32 %v4627, %v4629
          %v4631 = vrot.slane %v4624, %v4630
          %v4632 = vcombine.low %v3696, %v3697
          %v4634 = vunpack.c.l.s4 1983009808
          %v4635 = vunpack.c.0.s8 %v4634
          %v4636 = vlaneseq
          %v4637 = vshrl.u32 %v4636, 7
          %v4638 = vsub.s32 %v4635, %v4637
          %v4639 = vrot.slane %v4632, %v4638
          %v4640 = vcombine.low %v4615, %v4623
          %v4642 = vunpack.c.l.s4 1934713408
          %v4643 = vunpack.c.0.s8 %v4642
          %v4644 = vlaneseq
          %v4645 = vshrl.u32 %v4644, 7
          %v4646 = vsub.s32 %v4643, %v4645
          %v4647 = vrot.slane %v4640, %v4646
          %v4648 = vcombine.low %v4631, %v4639
          %v4650 = vunpack.c.l.s4 1934713408
          %v4651 = vunpack.c.0.s8 %v4650
          %v4652 = vlaneseq
          %v4653 = vshrl.u32 %v4652, 7
          %v4654 = vsub.s32 %v4651, %v4653
          %v4655 = vrot.slane %v4648, %v4654
          %v4656 = vcombine.low %v4647, %v4655
          %v4657 = vcombine.high %v4647, %v4655
          %v4658 = vcombine.low %v3736, %v3743
          %v4660 = vunpack.c.l.s4 1983009808
          %v4661 = vunpack.c.0.s8 %v4660
          %v4662 = vlaneseq
          %v4663 = vshrl.u32 %v4662, 7
          %v4664 = vsub.s32 %v4661, %v4663
          %v4665 = vrot.slane %v4658, %v4664
          %v4666 = vcombine.low %v3760, %v3761
          %v4668 = vunpack.c.l.s4 1983009808
          %v4669 = vunpack.c.0.s8 %v4668
          %v4670 = vlaneseq
          %v4671 = vshrl.u32 %v4670, 7
          %v4672 = vsub.s32 %v4669, %v4671
          %v4673 = vrot.slane %v4666, %v4672
          %v4674 = vcombine.low %v3752, %v3759
          %v4676 = vunpack.c.l.s4 1983009808
          %v4677 = vunpack.c.0.s8 %v4676
          %v4678 = vlaneseq
          %v4679 = vshrl.u32 %v4678, 7
          %v4680 = vsub.s32 %v4677, %v4679
          %v4681 = vrot.slane %v4674, %v4680
          %v4682 = vcombine.low %v3762, %v3763
          %v4684 = vunpack.c.l.s4 1983009808
          %v4685 = vunpack.c.0.s8 %v4684
          %v4686 = vlaneseq
          %v4687 = vshrl.u32 %v4686, 7
          %v4688 = vsub.s32 %v4685, %v4687
          %v4689 = vrot.slane %v4682, %v4688
          %v4690 = vcombine.low %v4665, %v4673
          %v4692 = vunpack.c.l.s4 1934713408
          %v4693 = vunpack.c.0.s8 %v4692
          %v4694 = vlaneseq
          %v4695 = vshrl.u32 %v4694, 7
          %v4696 = vsub.s32 %v4693, %v4695
          %v4697 = vrot.slane %v4690, %v4696
          %v4698 = vcombine.low %v4681, %v4689
          %v4700 = vunpack.c.l.s4 1934713408
          %v4701 = vunpack.c.0.s8 %v4700
          %v4702 = vlaneseq
          %v4703 = vshrl.u32 %v4702, 7
          %v4704 = vsub.s32 %v4701, %v4703
          %v4705 = vrot.slane %v4698, %v4704
          %v4706 = vcombine.low %v4697, %v4705
          %v4707 = vcombine.high %v4697, %v4705
          %v4708 = vcombine.low %v3802, %v3809
          %v4710 = vunpack.c.l.s4 1983009808
          %v4711 = vunpack.c.0.s8 %v4710
          %v4712 = vlaneseq
          %v4713 = vshrl.u32 %v4712, 7
          %v4714 = vsub.s32 %v4711, %v4713
          %v4715 = vrot.slane %v4708, %v4714
          %v4716 = vcombine.low %v3826, %v3827
          %v4718 = vunpack.c.l.s4 1983009808
          %v4719 = vunpack.c.0.s8 %v4718
          %v4720 = vlaneseq
          %v4721 = vshrl.u32 %v4720, 7
          %v4722 = vsub.s32 %v4719, %v4721
          %v4723 = vrot.slane %v4716, %v4722
          %v4724 = vcombine.low %v3818, %v3825
          %v4726 = vunpack.c.l.s4 1983009808
          %v4727 = vunpack.c.0.s8 %v4726
          %v4728 = vlaneseq
          %v4729 = vshrl.u32 %v4728, 7
          %v4730 = vsub.s32 %v4727, %v4729
          %v4731 = vrot.slane %v4724, %v4730
          %v4732 = vcombine.low %v3828, %v3829
          %v4734 = vunpack.c.l.s4 1983009808
          %v4735 = vunpack.c.0.s8 %v4734
          %v4736 = vlaneseq
          %v4737 = vshrl.u32 %v4736, 7
          %v4738 = vsub.s32 %v4735, %v4737
          %v4739 = vrot.slane %v4732, %v4738
          %v4740 = vcombine.low %v4715, %v4723
          %v4742 = vunpack.c.l.s4 1934713408
          %v4743 = vunpack.c.0.s8 %v4742
          %v4744 = vlaneseq
          %v4745 = vshrl.u32 %v4744, 7
          %v4746 = vsub.s32 %v4743, %v4745
          %v4747 = vrot.slane %v4740, %v4746
          %v4748 = vcombine.low %v4731, %v4739
          %v4750 = vunpack.c.l.s4 1934713408
          %v4751 = vunpack.c.0.s8 %v4750
          %v4752 = vlaneseq
          %v4753 = vshrl.u32 %v4752, 7
          %v4754 = vsub.s32 %v4751, %v4753
          %v4755 = vrot.slane %v4748, %v4754
          %v4756 = vcombine.low %v4747, %v4755
          %v4757 = vcombine.high %v4747, %v4755
          %v4758 = vcombine.low %v3868, %v3875
          %v4760 = vunpack.c.l.s4 1983009808
          %v4761 = vunpack.c.0.s8 %v4760
          %v4762 = vlaneseq
          %v4763 = vshrl.u32 %v4762, 7
          %v4764 = vsub.s32 %v4761, %v4763
          %v4765 = vrot.slane %v4758, %v4764
          %v4766 = vcombine.low %v3892, %v3893
          %v4768 = vunpack.c.l.s4 1983009808
          %v4769 = vunpack.c.0.s8 %v4768
          %v4770 = vlaneseq
          %v4771 = vshrl.u32 %v4770, 7
          %v4772 = vsub.s32 %v4769, %v4771
          %v4773 = vrot.slane %v4766, %v4772
          %v4774 = vcombine.low %v3884, %v3891
          %v4776 = vunpack.c.l.s4 1983009808
          %v4777 = vunpack.c.0.s8 %v4776
          %v4778 = vlaneseq
          %v4779 = vshrl.u32 %v4778, 7
          %v4780 = vsub.s32 %v4777, %v4779
          %v4781 = vrot.slane %v4774, %v4780
          %v4782 = vcombine.low %v3894, %v3895
          %v4784 = vunpack.c.l.s4 1983009808
          %v4785 = vunpack.c.0.s8 %v4784
          %v4786 = vlaneseq
          %v4787 = vshrl.u32 %v4786, 7
          %v4788 = vsub.s32 %v4785, %v4787
          %v4789 = vrot.slane %v4782, %v4788
          %v4790 = vcombine.low %v4765, %v4773
          %v4792 = vunpack.c.l.s4 1934713408
          %v4793 = vunpack.c.0.s8 %v4792
          %v4794 = vlaneseq
          %v4795 = vshrl.u32 %v4794, 7
          %v4796 = vsub.s32 %v4793, %v4795
          %v4797 = vrot.slane %v4790, %v4796
          %v4798 = vcombine.low %v4781, %v4789
          %v4800 = vunpack.c.l.s4 1934713408
          %v4801 = vunpack.c.0.s8 %v4800
          %v4802 = vlaneseq
          %v4803 = vshrl.u32 %v4802, 7
          %v4804 = vsub.s32 %v4801, %v4803
          %v4805 = vrot.slane %v4798, %v4804
          %v4806 = vcombine.low %v4797, %v4805
          %v4807 = vcombine.high %v4797, %v4805
          %v4808 = vcombine.low %v3934, %v3941
          %v4810 = vunpack.c.l.s4 1983009808
          %v4811 = vunpack.c.0.s8 %v4810
          %v4812 = vlaneseq
          %v4813 = vshrl.u32 %v4812, 7
          %v4814 = vsub.s32 %v4811, %v4813
          %v4815 = vrot.slane %v4808, %v4814
          %v4816 = vcombine.low %v3958, %v3959
          %v4818 = vunpack.c.l.s4 1983009808
          %v4819 = vunpack.c.0.s8 %v4818
          %v4820 = vlaneseq
          %v4821 = vshrl.u32 %v4820, 7
          %v4822 = vsub.s32 %v4819, %v4821
          %v4823 = vrot.slane %v4816, %v4822
          %v4824 = vcombine.low %v3950, %v3957
          %v4826 = vunpack.c.l.s4 1983009808
          %v4827 = vunpack.c.0.s8 %v4826
          %v4828 = vlaneseq
          %v4829 = vshrl.u32 %v4828, 7
          %v4830 = vsub.s32 %v4827, %v4829
          %v4831 = vrot.slane %v4824, %v4830
          %v4832 = vcombine.low %v3960, %v3961
          %v4834 = vunpack.c.l.s4 1983009808
          %v4835 = vunpack.c.0.s8 %v4834
          %v4836 = vlaneseq
          %v4837 = vshrl.u32 %v4836, 7
          %v4838 = vsub.s32 %v4835, %v4837
          %v4839 = vrot.slane %v4832, %v4838
          %v4840 = vcombine.low %v4815, %v4823
          %v4842 = vunpack.c.l.s4 1934713408
          %v4843 = vunpack.c.0.s8 %v4842
          %v4844 = vlaneseq
          %v4845 = vshrl.u32 %v4844, 7
          %v4846 = vsub.s32 %v4843, %v4845
          %v4847 = vrot.slane %v4840, %v4846
          %v4848 = vcombine.low %v4831, %v4839
          %v4850 = vunpack.c.l.s4 1934713408
          %v4851 = vunpack.c.0.s8 %v4850
          %v4852 = vlaneseq
          %v4853 = vshrl.u32 %v4852, 7
          %v4854 = vsub.s32 %v4851, %v4853
          %v4855 = vrot.slane %v4848, %v4854
          %v4856 = vcombine.low %v4847, %v4855
          %v4857 = vcombine.high %v4847, %v4855
          %v4858 = vcombine.low %v4000, %v4007
          %v4860 = vunpack.c.l.s4 1983009808
          %v4861 = vunpack.c.0.s8 %v4860
          %v4862 = vlaneseq
          %v4863 = vshrl.u32 %v4862, 7
          %v4864 = vsub.s32 %v4861, %v4863
          %v4865 = vrot.slane %v4858, %v4864
          %v4866 = vcombine.low %v4024, %v4025
          %v4868 = vunpack.c.l.s4 1983009808
          %v4869 = vunpack.c.0.s8 %v4868
          %v4870 = vlaneseq
          %v4871 = vshrl.u32 %v4870, 7
          %v4872 = vsub.s32 %v4869, %v4871
          %v4873 = vrot.slane %v4866, %v4872
          %v4874 = vcombine.low %v4016, %v4023
          %v4876 = vunpack.c.l.s4 1983009808
          %v4877 = vunpack.c.0.s8 %v4876
          %v4878 = vlaneseq
          %v4879 = vshrl.u32 %v4878, 7
          %v4880 = vsub.s32 %v4877, %v4879
          %v4881 = vrot.slane %v4874, %v4880
          %v4882 = vcombine.low %v4026, %v4027
          %v4884 = vunpack.c.l.s4 1983009808
          %v4885 = vunpack.c.0.s8 %v4884
          %v4886 = vlaneseq
          %v4887 = vshrl.u32 %v4886, 7
          %v4888 = vsub.s32 %v4885, %v4887
          %v4889 = vrot.slane %v4882, %v4888
          %v4890 = vcombine.low %v4865, %v4873
          %v4892 = vunpack.c.l.s4 1934713408
          %v4893 = vunpack.c.0.s8 %v4892
          %v4894 = vlaneseq
          %v4895 = vshrl.u32 %v4894, 7
          %v4896 = vsub.s32 %v4893, %v4895
          %v4897 = vrot.slane %v4890, %v4896
          %v4898 = vcombine.low %v4881, %v4889
          %v4900 = vunpack.c.l.s4 1934713408
          %v4901 = vunpack.c.0.s8 %v4900
          %v4902 = vlaneseq
          %v4903 = vshrl.u32 %v4902, 7
          %v4904 = vsub.s32 %v4901, %v4903
          %v4905 = vrot.slane %v4898, %v4904
          %v4906 = vcombine.low %v4897, %v4905
          %v4907 = vcombine.high %v4897, %v4905
          %v4908 = vcombine.low %v4066, %v4073
          %v4910 = vunpack.c.l.s4 1983009808
          %v4911 = vunpack.c.0.s8 %v4910
          %v4912 = vlaneseq
          %v4913 = vshrl.u32 %v4912, 7
          %v4914 = vsub.s32 %v4911, %v4913
          %v4915 = vrot.slane %v4908, %v4914
          %v4916 = vcombine.low %v4090, %v4091
          %v4918 = vunpack.c.l.s4 1983009808
          %v4919 = vunpack.c.0.s8 %v4918
          %v4920 = vlaneseq
          %v4921 = vshrl.u32 %v4920, 7
          %v4922 = vsub.s32 %v4919, %v4921
          %v4923 = vrot.slane %v4916, %v4922
          %v4924 = vcombine.low %v4082, %v4089
          %v4926 = vunpack.c.l.s4 1983009808
          %v4927 = vunpack.c.0.s8 %v4926
          %v4928 = vlaneseq
          %v4929 = vshrl.u32 %v4928, 7
          %v4930 = vsub.s32 %v4927, %v4929
          %v4931 = vrot.slane %v4924, %v4930
          %v4932 = vcombine.low %v4092, %v4093
          %v4934 = vunpack.c.l.s4 1983009808
          %v4935 = vunpack.c.0.s8 %v4934
          %v4936 = vlaneseq
          %v4937 = vshrl.u32 %v4936, 7
          %v4938 = vsub.s32 %v4935, %v4937
          %v4939 = vrot.slane %v4932, %v4938
          %v4940 = vcombine.low %v4915, %v4923
          %v4942 = vunpack.c.l.s4 1934713408
          %v4943 = vunpack.c.0.s8 %v4942
          %v4944 = vlaneseq
          %v4945 = vshrl.u32 %v4944, 7
          %v4946 = vsub.s32 %v4943, %v4945
          %v4947 = vrot.slane %v4940, %v4946
          %v4948 = vcombine.low %v4931, %v4939
          %v4950 = vunpack.c.l.s4 1934713408
          %v4951 = vunpack.c.0.s8 %v4950
          %v4952 = vlaneseq
          %v4953 = vshrl.u32 %v4952, 7
          %v4954 = vsub.s32 %v4951, %v4953
          %v4955 = vrot.slane %v4948, %v4954
          %v4956 = vcombine.low %v4947, %v4955
          %v4957 = vcombine.high %v4947, %v4955
          %v4958 = vcombine.low %v4132, %v4139
          %v4960 = vunpack.c.l.s4 1983009808
          %v4961 = vunpack.c.0.s8 %v4960
          %v4962 = vlaneseq
          %v4963 = vshrl.u32 %v4962, 7
          %v4964 = vsub.s32 %v4961, %v4963
          %v4965 = vrot.slane %v4958, %v4964
          %v4966 = vcombine.low %v4156, %v4157
          %v4968 = vunpack.c.l.s4 1983009808
          %v4969 = vunpack.c.0.s8 %v4968
          %v4970 = vlaneseq
          %v4971 = vshrl.u32 %v4970, 7
          %v4972 = vsub.s32 %v4969, %v4971
          %v4973 = vrot.slane %v4966, %v4972
          %v4974 = vcombine.low %v4148, %v4155
          %v4976 = vunpack.c.l.s4 1983009808
          %v4977 = vunpack.c.0.s8 %v4976
          %v4978 = vlaneseq
          %v4979 = vshrl.u32 %v4978, 7
          %v4980 = vsub.s32 %v4977, %v4979
          %v4981 = vrot.slane %v4974, %v4980
          %v4982 = vcombine.low %v4158, %v4159
          %v4984 = vunpack.c.l.s4 1983009808
          %v4985 = vunpack.c.0.s8 %v4984
          %v4986 = vlaneseq
          %v4987 = vshrl.u32 %v4986, 7
          %v4988 = vsub.s32 %v4985, %v4987
          %v4989 = vrot.slane %v4982, %v4988
          %v4990 = vcombine.low %v4965, %v4973
          %v4992 = vunpack.c.l.s4 1934713408
          %v4993 = vunpack.c.0.s8 %v4992
          %v4994 = vlaneseq
          %v4995 = vshrl.u32 %v4994, 7
          %v4996 = vsub.s32 %v4993, %v4995
          %v4997 = vrot.slane %v4990, %v4996
          %v4998 = vcombine.low %v4981, %v4989
          %v5000 = vunpack.c.l.s4 1934713408
          %v5001 = vunpack.c.0.s8 %v5000
          %v5002 = vlaneseq
          %v5003 = vshrl.u32 %v5002, 7
          %v5004 = vsub.s32 %v5001, %v5003
          %v5005 = vrot.slane %v4998, %v5004
          %v5006 = vcombine.low %v4997, %v5005
          %v5007 = vcombine.high %v4997, %v5005
          %v5008 = vcombine.low %v4198, %v4205
          %v5010 = vunpack.c.l.s4 1983009808
          %v5011 = vunpack.c.0.s8 %v5010
          %v5012 = vlaneseq
          %v5013 = vshrl.u32 %v5012, 7
          %v5014 = vsub.s32 %v5011, %v5013
          %v5015 = vrot.slane %v5008, %v5014
          %v5016 = vcombine.low %v4222, %v4223
          %v5018 = vunpack.c.l.s4 1983009808
          %v5019 = vunpack.c.0.s8 %v5018
          %v5020 = vlaneseq
          %v5021 = vshrl.u32 %v5020, 7
          %v5022 = vsub.s32 %v5019, %v5021
          %v5023 = vrot.slane %v5016, %v5022
          %v5024 = vcombine.low %v4214, %v4221
          %v5026 = vunpack.c.l.s4 1983009808
          %v5027 = vunpack.c.0.s8 %v5026
          %v5028 = vlaneseq
          %v5029 = vshrl.u32 %v5028, 7
          %v5030 = vsub.s32 %v5027, %v5029
          %v5031 = vrot.slane %v5024, %v5030
          %v5032 = vcombine.low %v4224, %v4225
          %v5034 = vunpack.c.l.s4 1983009808
          %v5035 = vunpack.c.0.s8 %v5034
          %v5036 = vlaneseq
          %v5037 = vshrl.u32 %v5036, 7
          %v5038 = vsub.s32 %v5035, %v5037
          %v5039 = vrot.slane %v5032, %v5038
          %v5040 = vcombine.low %v5015, %v5023
          %v5042 = vunpack.c.l.s4 1934713408
          %v5043 = vunpack.c.0.s8 %v5042
          %v5044 = vlaneseq
          %v5045 = vshrl.u32 %v5044, 7
          %v5046 = vsub.s32 %v5043, %v5045
          %v5047 = vrot.slane %v5040, %v5046
          %v5048 = vcombine.low %v5031, %v5039
          %v5050 = vunpack.c.l.s4 1934713408
          %v5051 = vunpack.c.0.s8 %v5050
          %v5052 = vlaneseq
          %v5053 = vshrl.u32 %v5052, 7
          %v5054 = vsub.s32 %v5051, %v5053
          %v5055 = vrot.slane %v5048, %v5054
          %v5056 = vcombine.low %v5047, %v5055
          %v5057 = vcombine.high %v5047, %v5055
          %v5058 = vcombine.low %v4264, %v4271
          %v5060 = vunpack.c.l.s4 1983009808
          %v5061 = vunpack.c.0.s8 %v5060
          %v5062 = vlaneseq
          %v5063 = vshrl.u32 %v5062, 7
          %v5064 = vsub.s32 %v5061, %v5063
          %v5065 = vrot.slane %v5058, %v5064
          %v5066 = vcombine.low %v4288, %v4289
          %v5068 = vunpack.c.l.s4 1983009808
          %v5069 = vunpack.c.0.s8 %v5068
          %v5070 = vlaneseq
          %v5071 = vshrl.u32 %v5070, 7
          %v5072 = vsub.s32 %v5069, %v5071
          %v5073 = vrot.slane %v5066, %v5072
          %v5074 = vcombine.low %v4280, %v4287
          %v5076 = vunpack.c.l.s4 1983009808
          %v5077 = vunpack.c.0.s8 %v5076
          %v5078 = vlaneseq
          %v5079 = vshrl.u32 %v5078, 7
          %v5080 = vsub.s32 %v5077, %v5079
          %v5081 = vrot.slane %v5074, %v5080
          %v5082 = vcombine.low %v4290, %v4291
          %v5084 = vunpack.c.l.s4 1983009808
          %v5085 = vunpack.c.0.s8 %v5084
          %v5086 = vlaneseq
          %v5087 = vshrl.u32 %v5086, 7
          %v5088 = vsub.s32 %v5085, %v5087
          %v5089 = vrot.slane %v5082, %v5088
          %v5090 = vcombine.low %v5065, %v5073
          %v5092 = vunpack.c.l.s4 1934713408
          %v5093 = vunpack.c.0.s8 %v5092
          %v5094 = vlaneseq
          %v5095 = vshrl.u32 %v5094, 7
          %v5096 = vsub.s32 %v5093, %v5095
          %v5097 = vrot.slane %v5090, %v5096
          %v5098 = vcombine.low %v5081, %v5089
          %v5100 = vunpack.c.l.s4 1934713408
          %v5101 = vunpack.c.0.s8 %v5100
          %v5102 = vlaneseq
          %v5103 = vshrl.u32 %v5102, 7
          %v5104 = vsub.s32 %v5101, %v5103
          %v5105 = vrot.slane %v5098, %v5104
          %v5106 = vcombine.low %v5097, %v5105
          %v5107 = vcombine.high %v5097, %v5105
          %v5108 = vcombine.low %v4330, %v4337
          %v5110 = vunpack.c.l.s4 1983009808
          %v5111 = vunpack.c.0.s8 %v5110
          %v5112 = vlaneseq
          %v5113 = vshrl.u32 %v5112, 7
          %v5114 = vsub.s32 %v5111, %v5113
          %v5115 = vrot.slane %v5108, %v5114
          %v5116 = vcombine.low %v4354, %v4355
          %v5118 = vunpack.c.l.s4 1983009808
          %v5119 = vunpack.c.0.s8 %v5118
          %v5120 = vlaneseq
          %v5121 = vshrl.u32 %v5120, 7
          %v5122 = vsub.s32 %v5119, %v5121
          %v5123 = vrot.slane %v5116, %v5122
          %v5124 = vcombine.low %v4346, %v4353
          %v5126 = vunpack.c.l.s4 1983009808
          %v5127 = vunpack.c.0.s8 %v5126
          %v5128 = vlaneseq
          %v5129 = vshrl.u32 %v5128, 7
          %v5130 = vsub.s32 %v5127, %v5129
          %v5131 = vrot.slane %v5124, %v5130
          %v5132 = vcombine.low %v4356, %v4357
          %v5134 = vunpack.c.l.s4 1983009808
          %v5135 = vunpack.c.0.s8 %v5134
          %v5136 = vlaneseq
          %v5137 = vshrl.u32 %v5136, 7
          %v5138 = vsub.s32 %v5135, %v5137
          %v5139 = vrot.slane %v5132, %v5138
          %v5140 = vcombine.low %v5115, %v5123
          %v5142 = vunpack.c.l.s4 1934713408
          %v5143 = vunpack.c.0.s8 %v5142
          %v5144 = vlaneseq
          %v5145 = vshrl.u32 %v5144, 7
          %v5146 = vsub.s32 %v5143, %v5145
          %v5147 = vrot.slane %v5140, %v5146
          %v5148 = vcombine.low %v5131, %v5139
          %v5150 = vunpack.c.l.s4 1934713408
          %v5151 = vunpack.c.0.s8 %v5150
          %v5152 = vlaneseq
          %v5153 = vshrl.u32 %v5152, 7
          %v5154 = vsub.s32 %v5151, %v5153
          %v5155 = vrot.slane %v5148, %v5154
          %v5156 = vcombine.low %v5147, %v5155
          %v5157 = vcombine.high %v5147, %v5155
          %v5158 = vpack.c.bf16 %v4456, %v4406
          %v5159 = vpack.c.bf16 %v4556, %v4506
          %v5160 = vpack.c.bf16 %v4656, %v4606
          %v5161 = vpack.c.bf16 %v4756, %v4706
          %v5162 = vpack.c.bf16 %v4856, %v4806
          %v5163 = vpack.c.bf16 %v4956, %v4906
          %v5164 = vpack.c.bf16 %v5056, %v5006
          %v5165 = vpack.c.bf16 %v5156, %v5106
          %v5166 = vpack.c.bf16 %v4457, %v4407
          %v5167 = vpack.c.bf16 %v4557, %v4507
          %v5168 = vpack.c.bf16 %v4657, %v4607
          %v5169 = vpack.c.bf16 %v4757, %v4707
          %v5170 = vpack.c.bf16 %v4857, %v4807
          %v5171 = vpack.c.bf16 %v4957, %v4907
          %v5172 = vpack.c.bf16 %v5057, %v5007
          %v5173 = vpack.c.bf16 %v5157, %v5107
          %5174 = vst [vmem:[#allocation3] sm:$0xff] %v5158
          %5175 = vst [vmem:[#allocation3 + $0x8] sm:$0xff] %v5159
          %5176 = vst [vmem:[#allocation3 + $0x10] sm:$0xff] %v5160
          %5177 = vst [vmem:[#allocation3 + $0x18] sm:$0xff] %v5161
          %5178 = vst [vmem:[#allocation3 + $0x20] sm:$0xff] %v5162
          %5179 = vst [vmem:[#allocation3 + $0x28] sm:$0xff] %v5163
          %5180 = vst [vmem:[#allocation3 + $0x30] sm:$0xff] %v5164
          %5181 = vst [vmem:[#allocation3 + $0x38] sm:$0xff] %v5165
          %5182 = vst [vmem:[#allocation3 + $0x40] sm:$0xff] %v5166
          %5183 = vst [vmem:[#allocation3 + $0x48] sm:$0xff] %v5167
          %5184 = vst [vmem:[#allocation3 + $0x50] sm:$0xff] %v5168
          %5185 = vst [vmem:[#allocation3 + $0x58] sm:$0xff] %v5169
          %5186 = vst [vmem:[#allocation3 + $0x60] sm:$0xff] %v5170
          %5187 = vst [vmem:[#allocation3 + $0x68] sm:$0xff] %v5171
          %5188 = vst [vmem:[#allocation3 + $0x70] sm:$0xff] %v5172
          %5189 = vst [vmem:[#allocation3 + $0x78] sm:$0xff] %v5173
        $region120: #{tpu_custom_call.1} parent=79 // pred_fallthru
          _
        %v5190 = vld [vmem:[%s601] sm:$0xff]
        %v5191 = vld [vmem:[%s601 + $0x8] sm:$0xff]
        %v5192 = vld [vmem:[%s601 + $0x10] sm:$0xff]
        %v5193 = vld [vmem:[%s601 + $0x18] sm:$0xff]
        %v5194 = vld [vmem:[%s601 + $0x20] sm:$0xff]
        %v5195 = vld [vmem:[%s601 + $0x28] sm:$0xff]
        %v5196 = vld [vmem:[%s601 + $0x30] sm:$0xff]
        %v5197 = vld [vmem:[%s601 + $0x38] sm:$0xff]
        %v5198 = vld [vmem:[%s601 + $0x40] sm:$0xff]
        %v5199 = vld [vmem:[%s601 + $0x48] sm:$0xff]
        %v5200 = vld [vmem:[%s601 + $0x50] sm:$0xff]
        %v5201 = vld [vmem:[%s601 + $0x58] sm:$0xff]
        %v5202 = vld [vmem:[%s601 + $0x60] sm:$0xff]
        %v5203 = vld [vmem:[%s601 + $0x68] sm:$0xff]
        %v5204 = vld [vmem:[%s601 + $0x70] sm:$0xff]
        %v5205 = vld [vmem:[%s601 + $0x78] sm:$0xff]
        %v5206 = vpack.c.bf16 %v5192, %v5190
        %v5207 = vpack.c.bf16 %v5193, %v5191
        %v5208 = vpack.c.bf16 %v5196, %v5194
        %v5209 = vpack.c.bf16 %v5197, %v5195
        %v5210 = vpack.c.bf16 %v5200, %v5198
        %v5211 = vpack.c.bf16 %v5201, %v5199
        %v5212 = vpack.c.bf16 %v5204, %v5202
        %v5213 = vpack.c.bf16 %v5205, %v5203
        %v5214 = vld [vmem:[#allocation10] sm:$0xff]
        %v5215 = vld [vmem:[#allocation10 + $0x8] sm:$0xff]
        %v5216 = vld [vmem:[#allocation10 + $0x10] sm:$0xff]
        %v5217 = vld [vmem:[#allocation10 + $0x18] sm:$0xff]
        %v5218 = vld [vmem:[#allocation10 + $0x20] sm:$0xff]
        %v5219 = vld [vmem:[#allocation10 + $0x28] sm:$0xff]
        %v5220 = vld [vmem:[#allocation10 + $0x30] sm:$0xff]
        %v5221 = vld [vmem:[#allocation10 + $0x38] sm:$0xff]
        %v5222 = vld [vmem:[#allocation10 + $0x40] sm:$0xff]
        %v5223 = vld [vmem:[#allocation10 + $0x48] sm:$0xff]
        %v5224 = vld [vmem:[#allocation10 + $0x50] sm:$0xff]
        %v5225 = vld [vmem:[#allocation10 + $0x58] sm:$0xff]
        %v5226 = vld [vmem:[#allocation10 + $0x60] sm:$0xff]
        %v5227 = vld [vmem:[#allocation10 + $0x68] sm:$0xff]
        %v5228 = vld [vmem:[#allocation10 + $0x70] sm:$0xff]
        %v5229 = vld [vmem:[#allocation10 + $0x78] sm:$0xff]
        %v5230 = vld [vmem:[#allocation10 + $0x80] sm:$0xff]
        %v5231 = vld [vmem:[#allocation10 + $0x88] sm:$0xff]
        %v5232 = vld [vmem:[#allocation10 + $0x90] sm:$0xff]
        %v5233 = vld [vmem:[#allocation10 + $0x98] sm:$0xff]
        %v5234 = vld [vmem:[#allocation10 + $0xa0] sm:$0xff]
        %v5235 = vld [vmem:[#allocation10 + $0xa8] sm:$0xff]
        %v5236 = vld [vmem:[#allocation10 + $0xb0] sm:$0xff]
        %v5237 = vld [vmem:[#allocation10 + $0xb8] sm:$0xff]
        %v5238 = vld [vmem:[#allocation10 + $0xc0] sm:$0xff]
        %v5239 = vld [vmem:[#allocation10 + $0xc8] sm:$0xff]
        %v5240 = vld [vmem:[#allocation10 + $0xd0] sm:$0xff]
        %v5241 = vld [vmem:[#allocation10 + $0xd8] sm:$0xff]
        %v5242 = vld [vmem:[#allocation10 + $0xe0] sm:$0xff]
        %v5243 = vld [vmem:[#allocation10 + $0xe8] sm:$0xff]
        %v5244 = vld [vmem:[#allocation10 + $0xf0] sm:$0xff]
        %v5245 = vld [vmem:[#allocation10 + $0xf8] sm:$0xff]
        %v5278 = vunpack.c.l.b16 %v5214
        %v5279 = vunpack.c.h.b16 %v5214
        %v5280 = vunpack.c.l.b16 %v5215
        %v5281 = vunpack.c.h.b16 %v5215
        %v5282 = vunpack.c.l.b16 %v5216
        %v5283 = vunpack.c.h.b16 %v5216
        %v5284 = vunpack.c.l.b16 %v5217
        %v5285 = vunpack.c.h.b16 %v5217
        %v5286 = vunpack.c.l.b16 %v5218
        %v5287 = vunpack.c.h.b16 %v5218
        %v5288 = vunpack.c.l.b16 %v5219
        %v5289 = vunpack.c.h.b16 %v5219
        %v5290 = vunpack.c.l.b16 %v5220
        %v5291 = vunpack.c.h.b16 %v5220
        %v5292 = vunpack.c.l.b16 %v5221
        %v5293 = vunpack.c.h.b16 %v5221
        %v5294 = vunpack.c.l.b16 %v5222
        %v5295 = vunpack.c.h.b16 %v5222
        %v5296 = vunpack.c.l.b16 %v5223
        %v5297 = vunpack.c.h.b16 %v5223
        %v5298 = vunpack.c.l.b16 %v5224
        %v5299 = vunpack.c.h.b16 %v5224
        %v5300 = vunpack.c.l.b16 %v5225
        %v5301 = vunpack.c.h.b16 %v5225
        %v5302 = vunpack.c.l.b16 %v5226
        %v5303 = vunpack.c.h.b16 %v5226
        %v5304 = vunpack.c.l.b16 %v5227
        %v5305 = vunpack.c.h.b16 %v5227
        %v5306 = vunpack.c.l.b16 %v5228
        %v5307 = vunpack.c.h.b16 %v5228
        %v5308 = vunpack.c.l.b16 %v5229
        %v5309 = vunpack.c.h.b16 %v5229
        %v5310 = vunpack.c.l.b16 %v5230
        %v5311 = vunpack.c.h.b16 %v5230
        %v5312 = vunpack.c.l.b16 %v5231
        %v5313 = vunpack.c.h.b16 %v5231
        %v5314 = vunpack.c.l.b16 %v5232
        %v5315 = vunpack.c.h.b16 %v5232
        %v5316 = vunpack.c.l.b16 %v5233
        %v5317 = vunpack.c.h.b16 %v5233
        %v5318 = vunpack.c.l.b16 %v5234
        %v5319 = vunpack.c.h.b16 %v5234
        %v5320 = vunpack.c.l.b16 %v5235
        %v5321 = vunpack.c.h.b16 %v5235
        %v5322 = vunpack.c.l.b16 %v5236
        %v5323 = vunpack.c.h.b16 %v5236
        %v5324 = vunpack.c.l.b16 %v5237
        %v5325 = vunpack.c.h.b16 %v5237
        %v5326 = vunpack.c.l.b16 %v5238
        %v5327 = vunpack.c.h.b16 %v5238
        %v5328 = vunpack.c.l.b16 %v5239
        %v5329 = vunpack.c.h.b16 %v5239
        %v5330 = vunpack.c.l.b16 %v5240
        %v5331 = vunpack.c.h.b16 %v5240
        %v5332 = vunpack.c.l.b16 %v5241
        %v5333 = vunpack.c.h.b16 %v5241
        %v5334 = vunpack.c.l.b16 %v5242
        %v5335 = vunpack.c.h.b16 %v5242
        %v5336 = vunpack.c.l.b16 %v5243
        %v5337 = vunpack.c.h.b16 %v5243
        %v5338 = vunpack.c.l.b16 %v5244
        %v5339 = vunpack.c.h.b16 %v5244
        %v5340 = vunpack.c.l.b16 %v5245
        %v5341 = vunpack.c.h.b16 %v5245
        %v5342 = vpack.c.b16 %v5280, %v5278
        %v5343 = vpack.c.b16 %v5281, %v5279
        %v5344 = vpack.c.b16 %v5284, %v5282
        %v5345 = vpack.c.b16 %v5285, %v5283
        %v5346 = vpack.c.b16 %v5288, %v5286
        %v5347 = vpack.c.b16 %v5289, %v5287
        %v5348 = vpack.c.b16 %v5292, %v5290
        %v5349 = vpack.c.b16 %v5293, %v5291
        %v5350 = vpack.c.b16 %v5296, %v5294
        %v5351 = vpack.c.b16 %v5297, %v5295
        %v5352 = vpack.c.b16 %v5300, %v5298
        %v5353 = vpack.c.b16 %v5301, %v5299
        %v5354 = vpack.c.b16 %v5304, %v5302
        %v5355 = vpack.c.b16 %v5305, %v5303
        %v5356 = vpack.c.b16 %v5308, %v5306
        %v5357 = vpack.c.b16 %v5309, %v5307
        %v5358 = vpack.c.b16 %v5312, %v5310
        %v5359 = vpack.c.b16 %v5313, %v5311
        %v5360 = vpack.c.b16 %v5316, %v5314
        %v5361 = vpack.c.b16 %v5317, %v5315
        %v5362 = vpack.c.b16 %v5320, %v5318
        %v5363 = vpack.c.b16 %v5321, %v5319
        %v5364 = vpack.c.b16 %v5324, %v5322
        %v5365 = vpack.c.b16 %v5325, %v5323
        %v5366 = vpack.c.b16 %v5328, %v5326
        %v5367 = vpack.c.b16 %v5329, %v5327
        %v5368 = vpack.c.b16 %v5332, %v5330
        %v5369 = vpack.c.b16 %v5333, %v5331
        %v5370 = vpack.c.b16 %v5336, %v5334
        %v5371 = vpack.c.b16 %v5337, %v5335
        %v5372 = vpack.c.b16 %v5340, %v5338
        %v5373 = vpack.c.b16 %v5341, %v5339
        %5406 = vmatprep.subr.bf16.mxu0 %v5343
        %5407 = vmatpush1.bf16.msra.mxu0 %v5342
        %5408 = vmatprep.subr.bf16.mxu0 %v5345
        %5409 = vmatpush1.bf16.msra.mxu0 %v5344
        %5410 = vmatprep.subr.bf16.mxu0 %v5347
        %5411 = vmatpush1.bf16.msra.mxu0 %v5346
        %5412 = vmatprep.subr.bf16.mxu0 %v5349
        %5413 = vmatpush1.bf16.msra.mxu0 %v5348
        %5414 = vmatprep.subr.bf16.mxu0 %v5351
        %5415 = vmatpush1.bf16.msra.mxu0 %v5350
        %5416 = vmatprep.subr.bf16.mxu0 %v5353
        %5417 = vmatpush1.bf16.msra.mxu0 %v5352
        %5418 = vmatprep.subr.bf16.mxu0 %v5355
        %5419 = vmatpush1.bf16.msra.mxu0 %v5354
        %5420 = vmatprep.subr.bf16.mxu0 %v5357
        %5421 = vmatpush1.bf16.msra.mxu0 %v5356
        %5422 = vmatprep.subr.bf16.mxu0 %v5359
        %5423 = vmatpush1.bf16.msra.mxu0 %v5358
        %5424 = vmatprep.subr.bf16.mxu0 %v5361
        %5425 = vmatpush1.bf16.msra.mxu0 %v5360
        %5426 = vmatprep.subr.bf16.mxu0 %v5363
        %5427 = vmatpush1.bf16.msra.mxu0 %v5362
        %5428 = vmatprep.subr.bf16.mxu0 %v5365
        %5429 = vmatpush1.bf16.msra.mxu0 %v5364
        %5430 = vmatprep.subr.bf16.mxu0 %v5367
        %5431 = vmatpush1.bf16.msra.mxu0 %v5366
        %5432 = vmatprep.subr.bf16.mxu0 %v5369
        %5433 = vmatpush1.bf16.msra.mxu0 %v5368
        %5434 = vmatprep.subr.bf16.mxu0 %v5371
        %5435 = vmatpush1.bf16.msra.mxu0 %v5370
        %5436 = vmatprep.subr.bf16.mxu0 %v5373
        %5437 = vmatpush1.bf16.msra.mxu0 %v5372
        %5438 = vmatprep.mubr.bf16.mxu0 %v5207
        %5439 = vmatmul.mubr.bf16.gmra.mrb[0].mxu0 %v5206
        %v5440 = vpop.f32.mrb[0].mxu0
        %v5441 = vadd.f32 0.0, %v5440
        %v5442 = vpop.f32.mrb[0].mxu0
        %v5443 = vadd.f32 0.0, %v5442
        %v5444 = vpop.f32.mrb[0].mxu0
        %v5445 = vadd.f32 0.0, %v5444
        %v5446 = vpop.f32.mrb[0].mxu0
        %v5447 = vadd.f32 0.0, %v5446
        %5448 = vmatprep.mubr.bf16.mxu0 %v5209
        %5449 = vmatmul.mubr.bf16.gmra.mrb[0].mxu0 %v5208
        %v5450 = vpop.f32.mrb[0].mxu0
        %v5451 = vadd.f32 0.0, %v5450
        %v5452 = vpop.f32.mrb[0].mxu0
        %v5453 = vadd.f32 0.0, %v5452
        %v5454 = vpop.f32.mrb[0].mxu0
        %v5455 = vadd.f32 0.0, %v5454
        %v5456 = vpop.f32.mrb[0].mxu0
        %v5457 = vadd.f32 0.0, %v5456
        %5458 = vmatprep.mubr.bf16.mxu0 %v5211
        %5459 = vmatmul.mubr.bf16.gmra.mrb[0].mxu0 %v5210
        %v5460 = vpop.f32.mrb[0].mxu0
        %v5461 = vadd.f32 0.0, %v5460
        %v5462 = vpop.f32.mrb[0].mxu0
        %v5463 = vadd.f32 0.0, %v5462
        %v5464 = vpop.f32.mrb[0].mxu0
        %v5465 = vadd.f32 0.0, %v5464
        %v5466 = vpop.f32.mrb[0].mxu0
        %v5467 = vadd.f32 0.0, %v5466
        %5468 = vmatprep.mubr.bf16.mxu0 %v5213
        %5469 = vmatmul.mubr.bf16.gmra.mrb[0].mxu0 %v5212
        %v5470 = vpop.f32.mrb[0].mxu0
        %v5471 = vadd.f32 0.0, %v5470
        %v5472 = vpop.f32.mrb[0].mxu0
        %v5473 = vadd.f32 0.0, %v5472
        %v5474 = vpop.f32.mrb[0].mxu0
        %v5475 = vadd.f32 0.0, %v5474
        %v5476 = vpop.f32.mrb[0].mxu0
        %v5477 = vadd.f32 0.0, %v5476
        %5478 = vdwg.mxu0
        %v5479 = vmul.f32 %v5441, 0.0625
        %v5480 = vmul.f32 %v5443, 0.0625
        %v5481 = vmul.f32 %v5445, 0.0625
        %v5482 = vmul.f32 %v5447, 0.0625
        %v5483 = vmul.f32 %v5451, 0.0625
        %v5484 = vmul.f32 %v5453, 0.0625
        %v5485 = vmul.f32 %v5455, 0.0625
        %v5486 = vmul.f32 %v5457, 0.0625
        %v5487 = vmul.f32 %v5461, 0.0625
        %v5488 = vmul.f32 %v5463, 0.0625
        %v5489 = vmul.f32 %v5465, 0.0625
        %v5490 = vmul.f32 %v5467, 0.0625
        %v5491 = vmul.f32 %v5471, 0.0625
        %v5492 = vmul.f32 %v5473, 0.0625
        %v5493 = vmul.f32 %v5475, 0.0625
        %v5494 = vmul.f32 %v5477, 0.0625
        %v5495 = vcombine.high %v5479, 0.0
        %v5497 = vunpack.c.l.s4 1983009808
        %v5498 = vunpack.c.0.s8 %v5497
        %v5499 = vlaneseq
        %v5500 = vshrl.u32 %v5499, 7
        %v5501 = vsub.s32 %v5498, %v5500
        %v5502 = vrot.slane %v5479, %v5501
        %v5504 = vunpack.c.l.s4 1983009808
        %v5505 = vunpack.c.0.s8 %v5504
        %v5506 = vlaneseq
        %v5507 = vshrl.u32 %v5506, 7
        %v5508 = vsub.s32 %v5505, %v5507
        %v5509 = vrot.slane %v5495, %v5508
        %v5510 = vcombine.high %v5480, 0.0
        %v5512 = vunpack.c.l.s4 1983009808
        %v5513 = vunpack.c.0.s8 %v5512
        %v5514 = vlaneseq
        %v5515 = vshrl.u32 %v5514, 7
        %v5516 = vsub.s32 %v5513, %v5515
        %v5517 = vrot.slane %v5480, %v5516
        %v5519 = vunpack.c.l.s4 1983009808
        %v5520 = vunpack.c.0.s8 %v5519
        %v5521 = vlaneseq
        %v5522 = vshrl.u32 %v5521, 7
        %v5523 = vsub.s32 %v5520, %v5522
        %v5524 = vrot.slane %v5510, %v5523
        %v5525 = vcombine.low %v5502, %v5517
        %v5526 = vcombine.high %v5502, %v5517
        %v5528 = vunpack.c.l.s4 1934713408
        %v5529 = vunpack.c.0.s8 %v5528
        %v5530 = vlaneseq
        %v5531 = vshrl.u32 %v5530, 7
        %v5532 = vsub.s32 %v5529, %v5531
        %v5533 = vrot.slane %v5525, %v5532
        %v5535 = vunpack.c.l.s4 1934713408
        %v5536 = vunpack.c.0.s8 %v5535
        %v5537 = vlaneseq
        %v5538 = vshrl.u32 %v5537, 7
        %v5539 = vsub.s32 %v5536, %v5538
        %v5540 = vrot.slane %v5526, %v5539
        %v5541 = vcombine.low %v5509, %v5524
        %v5542 = vcombine.high %v5509, %v5524
        %v5544 = vunpack.c.l.s4 1934713408
        %v5545 = vunpack.c.0.s8 %v5544
        %v5546 = vlaneseq
        %v5547 = vshrl.u32 %v5546, 7
        %v5548 = vsub.s32 %v5545, %v5547
        %v5549 = vrot.slane %v5541, %v5548
        %v5551 = vunpack.c.l.s4 1934713408
        %v5552 = vunpack.c.0.s8 %v5551
        %v5553 = vlaneseq
        %v5554 = vshrl.u32 %v5553, 7
        %v5555 = vsub.s32 %v5552, %v5554
        %v5556 = vrot.slane %v5542, %v5555
        %v5557 = vcombine.high %v5533, 0.0
        %v5558 = vcombine.high %v5540, 0.0
        %v5559 = vcombine.high %v5549, 0.0
        %v5560 = vcombine.high %v5556, 0.0
        %v5561 = vcombine.high %v5481, 0.0
        %v5563 = vunpack.c.l.s4 1983009808
        %v5564 = vunpack.c.0.s8 %v5563
        %v5565 = vlaneseq
        %v5566 = vshrl.u32 %v5565, 7
        %v5567 = vsub.s32 %v5564, %v5566
        %v5568 = vrot.slane %v5481, %v5567
        %v5570 = vunpack.c.l.s4 1983009808
        %v5571 = vunpack.c.0.s8 %v5570
        %v5572 = vlaneseq
        %v5573 = vshrl.u32 %v5572, 7
        %v5574 = vsub.s32 %v5571, %v5573
        %v5575 = vrot.slane %v5561, %v5574
        %v5576 = vcombine.high %v5482, 0.0
        %v5578 = vunpack.c.l.s4 1983009808
        %v5579 = vunpack.c.0.s8 %v5578
        %v5580 = vlaneseq
        %v5581 = vshrl.u32 %v5580, 7
        %v5582 = vsub.s32 %v5579, %v5581
        %v5583 = vrot.slane %v5482, %v5582
        %v5585 = vunpack.c.l.s4 1983009808
        %v5586 = vunpack.c.0.s8 %v5585
        %v5587 = vlaneseq
        %v5588 = vshrl.u32 %v5587, 7
        %v5589 = vsub.s32 %v5586, %v5588
        %v5590 = vrot.slane %v5576, %v5589
        %v5591 = vcombine.low %v5568, %v5583
        %v5592 = vcombine.high %v5568, %v5583
        %v5594 = vunpack.c.l.s4 1934713408
        %v5595 = vunpack.c.0.s8 %v5594
        %v5596 = vlaneseq
        %v5597 = vshrl.u32 %v5596, 7
        %v5598 = vsub.s32 %v5595, %v5597
        %v5599 = vrot.slane %v5591, %v5598
        %v5601 = vunpack.c.l.s4 1934713408
        %v5602 = vunpack.c.0.s8 %v5601
        %v5603 = vlaneseq
        %v5604 = vshrl.u32 %v5603, 7
        %v5605 = vsub.s32 %v5602, %v5604
        %v5606 = vrot.slane %v5592, %v5605
        %v5607 = vcombine.low %v5575, %v5590
        %v5608 = vcombine.high %v5575, %v5590
        %v5610 = vunpack.c.l.s4 1934713408
        %v5611 = vunpack.c.0.s8 %v5610
        %v5612 = vlaneseq
        %v5613 = vshrl.u32 %v5612, 7
        %v5614 = vsub.s32 %v5611, %v5613
        %v5615 = vrot.slane %v5607, %v5614
        %v5617 = vunpack.c.l.s4 1934713408
        %v5618 = vunpack.c.0.s8 %v5617
        %v5619 = vlaneseq
        %v5620 = vshrl.u32 %v5619, 7
        %v5621 = vsub.s32 %v5618, %v5620
        %v5622 = vrot.slane %v5608, %v5621
        %v5623 = vcombine.high %v5599, 0.0
        %v5624 = vcombine.high %v5606, 0.0
        %v5625 = vcombine.high %v5615, 0.0
        %v5626 = vcombine.high %v5622, 0.0
        %v5627 = vcombine.high %v5483, 0.0
        %v5629 = vunpack.c.l.s4 1983009808
        %v5630 = vunpack.c.0.s8 %v5629
        %v5631 = vlaneseq
        %v5632 = vshrl.u32 %v5631, 7
        %v5633 = vsub.s32 %v5630, %v5632
        %v5634 = vrot.slane %v5483, %v5633
        %v5636 = vunpack.c.l.s4 1983009808
        %v5637 = vunpack.c.0.s8 %v5636
        %v5638 = vlaneseq
        %v5639 = vshrl.u32 %v5638, 7
        %v5640 = vsub.s32 %v5637, %v5639
        %v5641 = vrot.slane %v5627, %v5640
        %v5642 = vcombine.high %v5484, 0.0
        %v5644 = vunpack.c.l.s4 1983009808
        %v5645 = vunpack.c.0.s8 %v5644
        %v5646 = vlaneseq
        %v5647 = vshrl.u32 %v5646, 7
        %v5648 = vsub.s32 %v5645, %v5647
        %v5649 = vrot.slane %v5484, %v5648
        %v5651 = vunpack.c.l.s4 1983009808
        %v5652 = vunpack.c.0.s8 %v5651
        %v5653 = vlaneseq
        %v5654 = vshrl.u32 %v5653, 7
        %v5655 = vsub.s32 %v5652, %v5654
        %v5656 = vrot.slane %v5642, %v5655
        %v5657 = vcombine.low %v5634, %v5649
        %v5658 = vcombine.high %v5634, %v5649
        %v5660 = vunpack.c.l.s4 1934713408
        %v5661 = vunpack.c.0.s8 %v5660
        %v5662 = vlaneseq
        %v5663 = vshrl.u32 %v5662, 7
        %v5664 = vsub.s32 %v5661, %v5663
        %v5665 = vrot.slane %v5657, %v5664
        %v5667 = vunpack.c.l.s4 1934713408
        %v5668 = vunpack.c.0.s8 %v5667
        %v5669 = vlaneseq
        %v5670 = vshrl.u32 %v5669, 7
        %v5671 = vsub.s32 %v5668, %v5670
        %v5672 = vrot.slane %v5658, %v5671
        %v5673 = vcombine.low %v5641, %v5656
        %v5674 = vcombine.high %v5641, %v5656
        %v5676 = vunpack.c.l.s4 1934713408
        %v5677 = vunpack.c.0.s8 %v5676
        %v5678 = vlaneseq
        %v5679 = vshrl.u32 %v5678, 7
        %v5680 = vsub.s32 %v5677, %v5679
        %v5681 = vrot.slane %v5673, %v5680
        %v5683 = vunpack.c.l.s4 1934713408
        %v5684 = vunpack.c.0.s8 %v5683
        %v5685 = vlaneseq
        %v5686 = vshrl.u32 %v5685, 7
        %v5687 = vsub.s32 %v5684, %v5686
        %v5688 = vrot.slane %v5674, %v5687
        %v5689 = vcombine.high %v5665, 0.0
        %v5690 = vcombine.high %v5672, 0.0
        %v5691 = vcombine.high %v5681, 0.0
        %v5692 = vcombine.high %v5688, 0.0
        %v5693 = vcombine.high %v5485, 0.0
        %v5695 = vunpack.c.l.s4 1983009808
        %v5696 = vunpack.c.0.s8 %v5695
        %v5697 = vlaneseq
        %v5698 = vshrl.u32 %v5697, 7
        %v5699 = vsub.s32 %v5696, %v5698
        %v5700 = vrot.slane %v5485, %v5699
        %v5702 = vunpack.c.l.s4 1983009808
        %v5703 = vunpack.c.0.s8 %v5702
        %v5704 = vlaneseq
        %v5705 = vshrl.u32 %v5704, 7
        %v5706 = vsub.s32 %v5703, %v5705
        %v5707 = vrot.slane %v5693, %v5706
        %v5708 = vcombine.high %v5486, 0.0
        %v5710 = vunpack.c.l.s4 1983009808
        %v5711 = vunpack.c.0.s8 %v5710
        %v5712 = vlaneseq
        %v5713 = vshrl.u32 %v5712, 7
        %v5714 = vsub.s32 %v5711, %v5713
        %v5715 = vrot.slane %v5486, %v5714
        %v5717 = vunpack.c.l.s4 1983009808
        %v5718 = vunpack.c.0.s8 %v5717
        %v5719 = vlaneseq
        %v5720 = vshrl.u32 %v5719, 7
        %v5721 = vsub.s32 %v5718, %v5720
        %v5722 = vrot.slane %v5708, %v5721
        %v5723 = vcombine.low %v5700, %v5715
        %v5724 = vcombine.high %v5700, %v5715
        %v5726 = vunpack.c.l.s4 1934713408
        %v5727 = vunpack.c.0.s8 %v5726
        %v5728 = vlaneseq
        %v5729 = vshrl.u32 %v5728, 7
        %v5730 = vsub.s32 %v5727, %v5729
        %v5731 = vrot.slane %v5723, %v5730
        %v5733 = vunpack.c.l.s4 1934713408
        %v5734 = vunpack.c.0.s8 %v5733
        %v5735 = vlaneseq
        %v5736 = vshrl.u32 %v5735, 7
        %v5737 = vsub.s32 %v5734, %v5736
        %v5738 = vrot.slane %v5724, %v5737
        %v5739 = vcombine.low %v5707, %v5722
        %v5740 = vcombine.high %v5707, %v5722
        %v5742 = vunpack.c.l.s4 1934713408
        %v5743 = vunpack.c.0.s8 %v5742
        %v5744 = vlaneseq
        %v5745 = vshrl.u32 %v5744, 7
        %v5746 = vsub.s32 %v5743, %v5745
        %v5747 = vrot.slane %v5739, %v5746
        %v5749 = vunpack.c.l.s4 1934713408
        %v5750 = vunpack.c.0.s8 %v5749
        %v5751 = vlaneseq
        %v5752 = vshrl.u32 %v5751, 7
        %v5753 = vsub.s32 %v5750, %v5752
        %v5754 = vrot.slane %v5740, %v5753
        %v5755 = vcombine.high %v5731, 0.0
        %v5756 = vcombine.high %v5738, 0.0
        %v5757 = vcombine.high %v5747, 0.0
        %v5758 = vcombine.high %v5754, 0.0
        %v5759 = vcombine.high %v5487, 0.0
        %v5761 = vunpack.c.l.s4 1983009808
        %v5762 = vunpack.c.0.s8 %v5761
        %v5763 = vlaneseq
        %v5764 = vshrl.u32 %v5763, 7
        %v5765 = vsub.s32 %v5762, %v5764
        %v5766 = vrot.slane %v5487, %v5765
        %v5768 = vunpack.c.l.s4 1983009808
        %v5769 = vunpack.c.0.s8 %v5768
        %v5770 = vlaneseq
        %v5771 = vshrl.u32 %v5770, 7
        %v5772 = vsub.s32 %v5769, %v5771
        %v5773 = vrot.slane %v5759, %v5772
        %v5774 = vcombine.high %v5488, 0.0
        %v5776 = vunpack.c.l.s4 1983009808
        %v5777 = vunpack.c.0.s8 %v5776
        %v5778 = vlaneseq
        %v5779 = vshrl.u32 %v5778, 7
        %v5780 = vsub.s32 %v5777, %v5779
        %v5781 = vrot.slane %v5488, %v5780
        %v5783 = vunpack.c.l.s4 1983009808
        %v5784 = vunpack.c.0.s8 %v5783
        %v5785 = vlaneseq
        %v5786 = vshrl.u32 %v5785, 7
        %v5787 = vsub.s32 %v5784, %v5786
        %v5788 = vrot.slane %v5774, %v5787
        %v5789 = vcombine.low %v5766, %v5781
        %v5790 = vcombine.high %v5766, %v5781
        %v5792 = vunpack.c.l.s4 1934713408
        %v5793 = vunpack.c.0.s8 %v5792
        %v5794 = vlaneseq
        %v5795 = vshrl.u32 %v5794, 7
        %v5796 = vsub.s32 %v5793, %v5795
        %v5797 = vrot.slane %v5789, %v5796
        %v5799 = vunpack.c.l.s4 1934713408
        %v5800 = vunpack.c.0.s8 %v5799
        %v5801 = vlaneseq
        %v5802 = vshrl.u32 %v5801, 7
        %v5803 = vsub.s32 %v5800, %v5802
        %v5804 = vrot.slane %v5790, %v5803
        %v5805 = vcombine.low %v5773, %v5788
        %v5806 = vcombine.high %v5773, %v5788
        %v5808 = vunpack.c.l.s4 1934713408
        %v5809 = vunpack.c.0.s8 %v5808
        %v5810 = vlaneseq
        %v5811 = vshrl.u32 %v5810, 7
        %v5812 = vsub.s32 %v5809, %v5811
        %v5813 = vrot.slane %v5805, %v5812
        %v5815 = vunpack.c.l.s4 1934713408
        %v5816 = vunpack.c.0.s8 %v5815
        %v5817 = vlaneseq
        %v5818 = vshrl.u32 %v5817, 7
        %v5819 = vsub.s32 %v5816, %v5818
        %v5820 = vrot.slane %v5806, %v5819
        %v5821 = vcombine.high %v5797, 0.0
        %v5822 = vcombine.high %v5804, 0.0
        %v5823 = vcombine.high %v5813, 0.0
        %v5824 = vcombine.high %v5820, 0.0
        %v5825 = vcombine.high %v5489, 0.0
        %v5827 = vunpack.c.l.s4 1983009808
        %v5828 = vunpack.c.0.s8 %v5827
        %v5829 = vlaneseq
        %v5830 = vshrl.u32 %v5829, 7
        %v5831 = vsub.s32 %v5828, %v5830
        %v5832 = vrot.slane %v5489, %v5831
        %v5834 = vunpack.c.l.s4 1983009808
        %v5835 = vunpack.c.0.s8 %v5834
        %v5836 = vlaneseq
        %v5837 = vshrl.u32 %v5836, 7
        %v5838 = vsub.s32 %v5835, %v5837
        %v5839 = vrot.slane %v5825, %v5838
        %v5840 = vcombine.high %v5490, 0.0
        %v5842 = vunpack.c.l.s4 1983009808
        %v5843 = vunpack.c.0.s8 %v5842
        %v5844 = vlaneseq
        %v5845 = vshrl.u32 %v5844, 7
        %v5846 = vsub.s32 %v5843, %v5845
        %v5847 = vrot.slane %v5490, %v5846
        %v5849 = vunpack.c.l.s4 1983009808
        %v5850 = vunpack.c.0.s8 %v5849
        %v5851 = vlaneseq
        %v5852 = vshrl.u32 %v5851, 7
        %v5853 = vsub.s32 %v5850, %v5852
        %v5854 = vrot.slane %v5840, %v5853
        %v5855 = vcombine.low %v5832, %v5847
        %v5856 = vcombine.high %v5832, %v5847
        %v5858 = vunpack.c.l.s4 1934713408
        %v5859 = vunpack.c.0.s8 %v5858
        %v5860 = vlaneseq
        %v5861 = vshrl.u32 %v5860, 7
        %v5862 = vsub.s32 %v5859, %v5861
        %v5863 = vrot.slane %v5855, %v5862
        %v5865 = vunpack.c.l.s4 1934713408
        %v5866 = vunpack.c.0.s8 %v5865
        %v5867 = vlaneseq
        %v5868 = vshrl.u32 %v5867, 7
        %v5869 = vsub.s32 %v5866, %v5868
        %v5870 = vrot.slane %v5856, %v5869
        %v5871 = vcombine.low %v5839, %v5854
        %v5872 = vcombine.high %v5839, %v5854
        %v5874 = vunpack.c.l.s4 1934713408
        %v5875 = vunpack.c.0.s8 %v5874
        %v5876 = vlaneseq
        %v5877 = vshrl.u32 %v5876, 7
        %v5878 = vsub.s32 %v5875, %v5877
        %v5879 = vrot.slane %v5871, %v5878
        %v5881 = vunpack.c.l.s4 1934713408
        %v5882 = vunpack.c.0.s8 %v5881
        %v5883 = vlaneseq
        %v5884 = vshrl.u32 %v5883, 7
        %v5885 = vsub.s32 %v5882, %v5884
        %v5886 = vrot.slane %v5872, %v5885
        %v5887 = vcombine.high %v5863, 0.0
        %v5888 = vcombine.high %v5870, 0.0
        %v5889 = vcombine.high %v5879, 0.0
        %v5890 = vcombine.high %v5886, 0.0
        %v5891 = vcombine.high %v5491, 0.0
        %v5893 = vunpack.c.l.s4 1983009808
        %v5894 = vunpack.c.0.s8 %v5893
        %v5895 = vlaneseq
        %v5896 = vshrl.u32 %v5895, 7
        %v5897 = vsub.s32 %v5894, %v5896
        %v5898 = vrot.slane %v5491, %v5897
        %v5900 = vunpack.c.l.s4 1983009808
        %v5901 = vunpack.c.0.s8 %v5900
        %v5902 = vlaneseq
        %v5903 = vshrl.u32 %v5902, 7
        %v5904 = vsub.s32 %v5901, %v5903
        %v5905 = vrot.slane %v5891, %v5904
        %v5906 = vcombine.high %v5492, 0.0
        %v5908 = vunpack.c.l.s4 1983009808
        %v5909 = vunpack.c.0.s8 %v5908
        %v5910 = vlaneseq
        %v5911 = vshrl.u32 %v5910, 7
        %v5912 = vsub.s32 %v5909, %v5911
        %v5913 = vrot.slane %v5492, %v5912
        %v5915 = vunpack.c.l.s4 1983009808
        %v5916 = vunpack.c.0.s8 %v5915
        %v5917 = vlaneseq
        %v5918 = vshrl.u32 %v5917, 7
        %v5919 = vsub.s32 %v5916, %v5918
        %v5920 = vrot.slane %v5906, %v5919
        %v5921 = vcombine.low %v5898, %v5913
        %v5922 = vcombine.high %v5898, %v5913
        %v5924 = vunpack.c.l.s4 1934713408
        %v5925 = vunpack.c.0.s8 %v5924
        %v5926 = vlaneseq
        %v5927 = vshrl.u32 %v5926, 7
        %v5928 = vsub.s32 %v5925, %v5927
        %v5929 = vrot.slane %v5921, %v5928
        %v5931 = vunpack.c.l.s4 1934713408
        %v5932 = vunpack.c.0.s8 %v5931
        %v5933 = vlaneseq
        %v5934 = vshrl.u32 %v5933, 7
        %v5935 = vsub.s32 %v5932, %v5934
        %v5936 = vrot.slane %v5922, %v5935
        %v5937 = vcombine.low %v5905, %v5920
        %v5938 = vcombine.high %v5905, %v5920
        %v5940 = vunpack.c.l.s4 1934713408
        %v5941 = vunpack.c.0.s8 %v5940
        %v5942 = vlaneseq
        %v5943 = vshrl.u32 %v5942, 7
        %v5944 = vsub.s32 %v5941, %v5943
        %v5945 = vrot.slane %v5937, %v5944
        %v5947 = vunpack.c.l.s4 1934713408
        %v5948 = vunpack.c.0.s8 %v5947
        %v5949 = vlaneseq
        %v5950 = vshrl.u32 %v5949, 7
        %v5951 = vsub.s32 %v5948, %v5950
        %v5952 = vrot.slane %v5938, %v5951
        %v5953 = vcombine.high %v5929, 0.0
        %v5954 = vcombine.high %v5936, 0.0
        %v5955 = vcombine.high %v5945, 0.0
        %v5956 = vcombine.high %v5952, 0.0
        %v5957 = vcombine.high %v5493, 0.0
        %v5959 = vunpack.c.l.s4 1983009808
        %v5960 = vunpack.c.0.s8 %v5959
        %v5961 = vlaneseq
        %v5962 = vshrl.u32 %v5961, 7
        %v5963 = vsub.s32 %v5960, %v5962
        %v5964 = vrot.slane %v5493, %v5963
        %v5966 = vunpack.c.l.s4 1983009808
        %v5967 = vunpack.c.0.s8 %v5966
        %v5968 = vlaneseq
        %v5969 = vshrl.u32 %v5968, 7
        %v5970 = vsub.s32 %v5967, %v5969
        %v5971 = vrot.slane %v5957, %v5970
        %v5972 = vcombine.high %v5494, 0.0
        %v5974 = vunpack.c.l.s4 1983009808
        %v5975 = vunpack.c.0.s8 %v5974
        %v5976 = vlaneseq
        %v5977 = vshrl.u32 %v5976, 7
        %v5978 = vsub.s32 %v5975, %v5977
        %v5979 = vrot.slane %v5494, %v5978
        %v5981 = vunpack.c.l.s4 1983009808
        %v5982 = vunpack.c.0.s8 %v5981
        %v5983 = vlaneseq
        %v5984 = vshrl.u32 %v5983, 7
        %v5985 = vsub.s32 %v5982, %v5984
        %v5986 = vrot.slane %v5972, %v5985
        %v5987 = vcombine.low %v5964, %v5979
        %v5988 = vcombine.high %v5964, %v5979
        %v5990 = vunpack.c.l.s4 1934713408
        %v5991 = vunpack.c.0.s8 %v5990
        %v5992 = vlaneseq
        %v5993 = vshrl.u32 %v5992, 7
        %v5994 = vsub.s32 %v5991, %v5993
        %v5995 = vrot.slane %v5987, %v5994
        %v5997 = vunpack.c.l.s4 1934713408
        %v5998 = vunpack.c.0.s8 %v5997
        %v5999 = vlaneseq
        %v6000 = vshrl.u32 %v5999, 7
        %v6001 = vsub.s32 %v5998, %v6000
        %v6002 = vrot.slane %v5988, %v6001
        %v6003 = vcombine.low %v5971, %v5986
        %v6004 = vcombine.high %v5971, %v5986
        %v6006 = vunpack.c.l.s4 1934713408
        %v6007 = vunpack.c.0.s8 %v6006
        %v6008 = vlaneseq
        %v6009 = vshrl.u32 %v6008, 7
        %v6010 = vsub.s32 %v6007, %v6009
        %v6011 = vrot.slane %v6003, %v6010
        %v6013 = vunpack.c.l.s4 1934713408
        %v6014 = vunpack.c.0.s8 %v6013
        %v6015 = vlaneseq
        %v6016 = vshrl.u32 %v6015, 7
        %v6017 = vsub.s32 %v6014, %v6016
        %v6018 = vrot.slane %v6004, %v6017
        %v6019 = vcombine.high %v5995, 0.0
        %v6020 = vcombine.high %v6002, 0.0
        %v6021 = vcombine.high %v6011, 0.0
        %v6022 = vcombine.high %v6018, 0.0
        %v6023 = vcombine.low %v5533, %v5540
        %v6025 = vunpack.c.l.s4 1983009808
        %v6026 = vunpack.c.0.s8 %v6025
        %v6027 = vlaneseq
        %v6028 = vshrl.u32 %v6027, 7
        %v6029 = vsub.s32 %v6026, %v6028
        %v6030 = vrot.slane %v6023, %v6029
        %v6031 = vcombine.low %v5557, %v5558
        %v6033 = vunpack.c.l.s4 1983009808
        %v6034 = vunpack.c.0.s8 %v6033
        %v6035 = vlaneseq
        %v6036 = vshrl.u32 %v6035, 7
        %v6037 = vsub.s32 %v6034, %v6036
        %v6038 = vrot.slane %v6031, %v6037
        %v6039 = vcombine.low %v5549, %v5556
        %v6041 = vunpack.c.l.s4 1983009808
        %v6042 = vunpack.c.0.s8 %v6041
        %v6043 = vlaneseq
        %v6044 = vshrl.u32 %v6043, 7
        %v6045 = vsub.s32 %v6042, %v6044
        %v6046 = vrot.slane %v6039, %v6045
        %v6047 = vcombine.low %v5559, %v5560
        %v6049 = vunpack.c.l.s4 1983009808
        %v6050 = vunpack.c.0.s8 %v6049
        %v6051 = vlaneseq
        %v6052 = vshrl.u32 %v6051, 7
        %v6053 = vsub.s32 %v6050, %v6052
        %v6054 = vrot.slane %v6047, %v6053
        %v6055 = vcombine.low %v6030, %v6038
        %v6057 = vunpack.c.l.s4 1934713408
        %v6058 = vunpack.c.0.s8 %v6057
        %v6059 = vlaneseq
        %v6060 = vshrl.u32 %v6059, 7
        %v6061 = vsub.s32 %v6058, %v6060
        %v6062 = vrot.slane %v6055, %v6061
        %v6063 = vcombine.low %v6046, %v6054
        %v6065 = vunpack.c.l.s4 1934713408
        %v6066 = vunpack.c.0.s8 %v6065
        %v6067 = vlaneseq
        %v6068 = vshrl.u32 %v6067, 7
        %v6069 = vsub.s32 %v6066, %v6068
        %v6070 = vrot.slane %v6063, %v6069
        %v6071 = vcombine.low %v6062, %v6070
        %v6072 = vcombine.high %v6062, %v6070
        %v6073 = vcombine.low %v5599, %v5606
        %v6075 = vunpack.c.l.s4 1983009808
        %v6076 = vunpack.c.0.s8 %v6075
        %v6077 = vlaneseq
        %v6078 = vshrl.u32 %v6077, 7
        %v6079 = vsub.s32 %v6076, %v6078
        %v6080 = vrot.slane %v6073, %v6079
        %v6081 = vcombine.low %v5623, %v5624
        %v6083 = vunpack.c.l.s4 1983009808
        %v6084 = vunpack.c.0.s8 %v6083
        %v6085 = vlaneseq
        %v6086 = vshrl.u32 %v6085, 7
        %v6087 = vsub.s32 %v6084, %v6086
        %v6088 = vrot.slane %v6081, %v6087
        %v6089 = vcombine.low %v5615, %v5622
        %v6091 = vunpack.c.l.s4 1983009808
        %v6092 = vunpack.c.0.s8 %v6091
        %v6093 = vlaneseq
        %v6094 = vshrl.u32 %v6093, 7
        %v6095 = vsub.s32 %v6092, %v6094
        %v6096 = vrot.slane %v6089, %v6095
        %v6097 = vcombine.low %v5625, %v5626
        %v6099 = vunpack.c.l.s4 1983009808
        %v6100 = vunpack.c.0.s8 %v6099
        %v6101 = vlaneseq
        %v6102 = vshrl.u32 %v6101, 7
        %v6103 = vsub.s32 %v6100, %v6102
        %v6104 = vrot.slane %v6097, %v6103
        %v6105 = vcombine.low %v6080, %v6088
        %v6107 = vunpack.c.l.s4 1934713408
        %v6108 = vunpack.c.0.s8 %v6107
        %v6109 = vlaneseq
        %v6110 = vshrl.u32 %v6109, 7
        %v6111 = vsub.s32 %v6108, %v6110
        %v6112 = vrot.slane %v6105, %v6111
        %v6113 = vcombine.low %v6096, %v6104
        %v6115 = vunpack.c.l.s4 1934713408
        %v6116 = vunpack.c.0.s8 %v6115
        %v6117 = vlaneseq
        %v6118 = vshrl.u32 %v6117, 7
        %v6119 = vsub.s32 %v6116, %v6118
        %v6120 = vrot.slane %v6113, %v6119
        %v6121 = vcombine.low %v6112, %v6120
        %v6122 = vcombine.high %v6112, %v6120
        %v6123 = vcombine.low %v5665, %v5672
        %v6125 = vunpack.c.l.s4 1983009808
        %v6126 = vunpack.c.0.s8 %v6125
        %v6127 = vlaneseq
        %v6128 = vshrl.u32 %v6127, 7
        %v6129 = vsub.s32 %v6126, %v6128
        %v6130 = vrot.slane %v6123, %v6129
        %v6131 = vcombine.low %v5689, %v5690
        %v6133 = vunpack.c.l.s4 1983009808
        %v6134 = vunpack.c.0.s8 %v6133
        %v6135 = vlaneseq
        %v6136 = vshrl.u32 %v6135, 7
        %v6137 = vsub.s32 %v6134, %v6136
        %v6138 = vrot.slane %v6131, %v6137
        %v6139 = vcombine.low %v5681, %v5688
        %v6141 = vunpack.c.l.s4 1983009808
        %v6142 = vunpack.c.0.s8 %v6141
        %v6143 = vlaneseq
        %v6144 = vshrl.u32 %v6143, 7
        %v6145 = vsub.s32 %v6142, %v6144
        %v6146 = vrot.slane %v6139, %v6145
        %v6147 = vcombine.low %v5691, %v5692
        %v6149 = vunpack.c.l.s4 1983009808
        %v6150 = vunpack.c.0.s8 %v6149
        %v6151 = vlaneseq
        %v6152 = vshrl.u32 %v6151, 7
        %v6153 = vsub.s32 %v6150, %v6152
        %v6154 = vrot.slane %v6147, %v6153
        %v6155 = vcombine.low %v6130, %v6138
        %v6157 = vunpack.c.l.s4 1934713408
        %v6158 = vunpack.c.0.s8 %v6157
        %v6159 = vlaneseq
        %v6160 = vshrl.u32 %v6159, 7
        %v6161 = vsub.s32 %v6158, %v6160
        %v6162 = vrot.slane %v6155, %v6161
        %v6163 = vcombine.low %v6146, %v6154
        %v6165 = vunpack.c.l.s4 1934713408
        %v6166 = vunpack.c.0.s8 %v6165
        %v6167 = vlaneseq
        %v6168 = vshrl.u32 %v6167, 7
        %v6169 = vsub.s32 %v6166, %v6168
        %v6170 = vrot.slane %v6163, %v6169
        %v6171 = vcombine.low %v6162, %v6170
        %v6172 = vcombine.high %v6162, %v6170
        %v6173 = vcombine.low %v5731, %v5738
        %v6175 = vunpack.c.l.s4 1983009808
        %v6176 = vunpack.c.0.s8 %v6175
        %v6177 = vlaneseq
        %v6178 = vshrl.u32 %v6177, 7
        %v6179 = vsub.s32 %v6176, %v6178
        %v6180 = vrot.slane %v6173, %v6179
        %v6181 = vcombine.low %v5755, %v5756
        %v6183 = vunpack.c.l.s4 1983009808
        %v6184 = vunpack.c.0.s8 %v6183
        %v6185 = vlaneseq
        %v6186 = vshrl.u32 %v6185, 7
        %v6187 = vsub.s32 %v6184, %v6186
        %v6188 = vrot.slane %v6181, %v6187
        %v6189 = vcombine.low %v5747, %v5754
        %v6191 = vunpack.c.l.s4 1983009808
        %v6192 = vunpack.c.0.s8 %v6191
        %v6193 = vlaneseq
        %v6194 = vshrl.u32 %v6193, 7
        %v6195 = vsub.s32 %v6192, %v6194
        %v6196 = vrot.slane %v6189, %v6195
        %v6197 = vcombine.low %v5757, %v5758
        %v6199 = vunpack.c.l.s4 1983009808
        %v6200 = vunpack.c.0.s8 %v6199
        %v6201 = vlaneseq
        %v6202 = vshrl.u32 %v6201, 7
        %v6203 = vsub.s32 %v6200, %v6202
        %v6204 = vrot.slane %v6197, %v6203
        %v6205 = vcombine.low %v6180, %v6188
        %v6207 = vunpack.c.l.s4 1934713408
        %v6208 = vunpack.c.0.s8 %v6207
        %v6209 = vlaneseq
        %v6210 = vshrl.u32 %v6209, 7
        %v6211 = vsub.s32 %v6208, %v6210
        %v6212 = vrot.slane %v6205, %v6211
        %v6213 = vcombine.low %v6196, %v6204
        %v6215 = vunpack.c.l.s4 1934713408
        %v6216 = vunpack.c.0.s8 %v6215
        %v6217 = vlaneseq
        %v6218 = vshrl.u32 %v6217, 7
        %v6219 = vsub.s32 %v6216, %v6218
        %v6220 = vrot.slane %v6213, %v6219
        %v6221 = vcombine.low %v6212, %v6220
        %v6222 = vcombine.high %v6212, %v6220
        %v6223 = vcombine.low %v5797, %v5804
        %v6225 = vunpack.c.l.s4 1983009808
        %v6226 = vunpack.c.0.s8 %v6225
        %v6227 = vlaneseq
        %v6228 = vshrl.u32 %v6227, 7
        %v6229 = vsub.s32 %v6226, %v6228
        %v6230 = vrot.slane %v6223, %v6229
        %v6231 = vcombine.low %v5821, %v5822
        %v6233 = vunpack.c.l.s4 1983009808
        %v6234 = vunpack.c.0.s8 %v6233
        %v6235 = vlaneseq
        %v6236 = vshrl.u32 %v6235, 7
        %v6237 = vsub.s32 %v6234, %v6236
        %v6238 = vrot.slane %v6231, %v6237
        %v6239 = vcombine.low %v5813, %v5820
        %v6241 = vunpack.c.l.s4 1983009808
        %v6242 = vunpack.c.0.s8 %v6241
        %v6243 = vlaneseq
        %v6244 = vshrl.u32 %v6243, 7
        %v6245 = vsub.s32 %v6242, %v6244
        %v6246 = vrot.slane %v6239, %v6245
        %v6247 = vcombine.low %v5823, %v5824
        %v6249 = vunpack.c.l.s4 1983009808
        %v6250 = vunpack.c.0.s8 %v6249
        %v6251 = vlaneseq
        %v6252 = vshrl.u32 %v6251, 7
        %v6253 = vsub.s32 %v6250, %v6252
        %v6254 = vrot.slane %v6247, %v6253
        %v6255 = vcombine.low %v6230, %v6238
        %v6257 = vunpack.c.l.s4 1934713408
        %v6258 = vunpack.c.0.s8 %v6257
        %v6259 = vlaneseq
        %v6260 = vshrl.u32 %v6259, 7
        %v6261 = vsub.s32 %v6258, %v6260
        %v6262 = vrot.slane %v6255, %v6261
        %v6263 = vcombine.low %v6246, %v6254
        %v6265 = vunpack.c.l.s4 1934713408
        %v6266 = vunpack.c.0.s8 %v6265
        %v6267 = vlaneseq
        %v6268 = vshrl.u32 %v6267, 7
        %v6269 = vsub.s32 %v6266, %v6268
        %v6270 = vrot.slane %v6263, %v6269
        %v6271 = vcombine.low %v6262, %v6270
        %v6272 = vcombine.high %v6262, %v6270
        %v6273 = vcombine.low %v5863, %v5870
        %v6275 = vunpack.c.l.s4 1983009808
        %v6276 = vunpack.c.0.s8 %v6275
        %v6277 = vlaneseq
        %v6278 = vshrl.u32 %v6277, 7
        %v6279 = vsub.s32 %v6276, %v6278
        %v6280 = vrot.slane %v6273, %v6279
        %v6281 = vcombine.low %v5887, %v5888
        %v6283 = vunpack.c.l.s4 1983009808
        %v6284 = vunpack.c.0.s8 %v6283
        %v6285 = vlaneseq
        %v6286 = vshrl.u32 %v6285, 7
        %v6287 = vsub.s32 %v6284, %v6286
        %v6288 = vrot.slane %v6281, %v6287
        %v6289 = vcombine.low %v5879, %v5886
        %v6291 = vunpack.c.l.s4 1983009808
        %v6292 = vunpack.c.0.s8 %v6291
        %v6293 = vlaneseq
        %v6294 = vshrl.u32 %v6293, 7
        %v6295 = vsub.s32 %v6292, %v6294
        %v6296 = vrot.slane %v6289, %v6295
        %v6297 = vcombine.low %v5889, %v5890
        %v6299 = vunpack.c.l.s4 1983009808
        %v6300 = vunpack.c.0.s8 %v6299
        %v6301 = vlaneseq
        %v6302 = vshrl.u32 %v6301, 7
        %v6303 = vsub.s32 %v6300, %v6302
        %v6304 = vrot.slane %v6297, %v6303
        %v6305 = vcombine.low %v6280, %v6288
        %v6307 = vunpack.c.l.s4 1934713408
        %v6308 = vunpack.c.0.s8 %v6307
        %v6309 = vlaneseq
        %v6310 = vshrl.u32 %v6309, 7
        %v6311 = vsub.s32 %v6308, %v6310
        %v6312 = vrot.slane %v6305, %v6311
        %v6313 = vcombine.low %v6296, %v6304
        %v6315 = vunpack.c.l.s4 1934713408
        %v6316 = vunpack.c.0.s8 %v6315
        %v6317 = vlaneseq
        %v6318 = vshrl.u32 %v6317, 7
        %v6319 = vsub.s32 %v6316, %v6318
        %v6320 = vrot.slane %v6313, %v6319
        %v6321 = vcombine.low %v6312, %v6320
        %v6322 = vcombine.high %v6312, %v6320
        %v6323 = vcombine.low %v5929, %v5936
        %v6325 = vunpack.c.l.s4 1983009808
        %v6326 = vunpack.c.0.s8 %v6325
        %v6327 = vlaneseq
        %v6328 = vshrl.u32 %v6327, 7
        %v6329 = vsub.s32 %v6326, %v6328
        %v6330 = vrot.slane %v6323, %v6329
        %v6331 = vcombine.low %v5953, %v5954
        %v6333 = vunpack.c.l.s4 1983009808
        %v6334 = vunpack.c.0.s8 %v6333
        %v6335 = vlaneseq
        %v6336 = vshrl.u32 %v6335, 7
        %v6337 = vsub.s32 %v6334, %v6336
        %v6338 = vrot.slane %v6331, %v6337
        %v6339 = vcombine.low %v5945, %v5952
        %v6341 = vunpack.c.l.s4 1983009808
        %v6342 = vunpack.c.0.s8 %v6341
        %v6343 = vlaneseq
        %v6344 = vshrl.u32 %v6343, 7
        %v6345 = vsub.s32 %v6342, %v6344
        %v6346 = vrot.slane %v6339, %v6345
        %v6347 = vcombine.low %v5955, %v5956
        %v6349 = vunpack.c.l.s4 1983009808
        %v6350 = vunpack.c.0.s8 %v6349
        %v6351 = vlaneseq
        %v6352 = vshrl.u32 %v6351, 7
        %v6353 = vsub.s32 %v6350, %v6352
        %v6354 = vrot.slane %v6347, %v6353
        %v6355 = vcombine.low %v6330, %v6338
        %v6357 = vunpack.c.l.s4 1934713408
        %v6358 = vunpack.c.0.s8 %v6357
        %v6359 = vlaneseq
        %v6360 = vshrl.u32 %v6359, 7
        %v6361 = vsub.s32 %v6358, %v6360
        %v6362 = vrot.slane %v6355, %v6361
        %v6363 = vcombine.low %v6346, %v6354
        %v6365 = vunpack.c.l.s4 1934713408
        %v6366 = vunpack.c.0.s8 %v6365
        %v6367 = vlaneseq
        %v6368 = vshrl.u32 %v6367, 7
        %v6369 = vsub.s32 %v6366, %v6368
        %v6370 = vrot.slane %v6363, %v6369
        %v6371 = vcombine.low %v6362, %v6370
        %v6372 = vcombine.high %v6362, %v6370
        %v6373 = vcombine.low %v5995, %v6002
        %v6375 = vunpack.c.l.s4 1983009808
        %v6376 = vunpack.c.0.s8 %v6375
        %v6377 = vlaneseq
        %v6378 = vshrl.u32 %v6377, 7
        %v6379 = vsub.s32 %v6376, %v6378
        %v6380 = vrot.slane %v6373, %v6379
        %v6381 = vcombine.low %v6019, %v6020
        %v6383 = vunpack.c.l.s4 1983009808
        %v6384 = vunpack.c.0.s8 %v6383
        %v6385 = vlaneseq
        %v6386 = vshrl.u32 %v6385, 7
        %v6387 = vsub.s32 %v6384, %v6386
        %v6388 = vrot.slane %v6381, %v6387
        %v6389 = vcombine.low %v6011, %v6018
        %v6391 = vunpack.c.l.s4 1983009808
        %v6392 = vunpack.c.0.s8 %v6391
        %v6393 = vlaneseq
        %v6394 = vshrl.u32 %v6393, 7
        %v6395 = vsub.s32 %v6392, %v6394
        %v6396 = vrot.slane %v6389, %v6395
        %v6397 = vcombine.low %v6021, %v6022
        %v6399 = vunpack.c.l.s4 1983009808
        %v6400 = vunpack.c.0.s8 %v6399
        %v6401 = vlaneseq
        %v6402 = vshrl.u32 %v6401, 7
        %v6403 = vsub.s32 %v6400, %v6402
        %v6404 = vrot.slane %v6397, %v6403
        %v6405 = vcombine.low %v6380, %v6388
        %v6407 = vunpack.c.l.s4 1934713408
        %v6408 = vunpack.c.0.s8 %v6407
        %v6409 = vlaneseq
        %v6410 = vshrl.u32 %v6409, 7
        %v6411 = vsub.s32 %v6408, %v6410
        %v6412 = vrot.slane %v6405, %v6411
        %v6413 = vcombine.low %v6396, %v6404
        %v6415 = vunpack.c.l.s4 1934713408
        %v6416 = vunpack.c.0.s8 %v6415
        %v6417 = vlaneseq
        %v6418 = vshrl.u32 %v6417, 7
        %v6419 = vsub.s32 %v6416, %v6418
        %v6420 = vrot.slane %v6413, %v6419
        %v6421 = vcombine.low %v6412, %v6420
        %v6422 = vcombine.high %v6412, %v6420
        %v6423 = vpack.c.bf16 %v6121, %v6071
        %v6424 = vpack.c.bf16 %v6221, %v6171
        %v6425 = vpack.c.bf16 %v6321, %v6271
        %v6426 = vpack.c.bf16 %v6421, %v6371
        %v6427 = vpack.c.bf16 %v6122, %v6072
        %v6428 = vpack.c.bf16 %v6222, %v6172
        %v6429 = vpack.c.bf16 %v6322, %v6272
        %v6430 = vpack.c.bf16 %v6422, %v6372
        %v6431 = vld [vmem:[#allocation2] sm:$0xff]
        %v6432 = vld [vmem:[#allocation2 + $0x8] sm:$0xff]
        %v6433 = vld [vmem:[#allocation2 + $0x10] sm:$0xff]
        %v6434 = vld [vmem:[#allocation2 + $0x18] sm:$0xff]
        %v6435 = vld [vmem:[#allocation2 + $0x20] sm:$0xff]
        %v6436 = vld [vmem:[#allocation2 + $0x28] sm:$0xff]
        %v6437 = vld [vmem:[#allocation2 + $0x30] sm:$0xff]
        %v6438 = vld [vmem:[#allocation2 + $0x38] sm:$0xff]
        %v6439 = vld [vmem:[#allocation2 + $0x40] sm:$0xff]
        %v6440 = vld [vmem:[#allocation2 + $0x48] sm:$0xff]
        %v6441 = vld [vmem:[#allocation2 + $0x50] sm:$0xff]
        %v6442 = vld [vmem:[#allocation2 + $0x58] sm:$0xff]
        %v6443 = vld [vmem:[#allocation2 + $0x60] sm:$0xff]
        %v6444 = vld [vmem:[#allocation2 + $0x68] sm:$0xff]
        %v6445 = vld [vmem:[#allocation2 + $0x70] sm:$0xff]
        %v6446 = vld [vmem:[#allocation2 + $0x78] sm:$0xff]
        %v6447 = vld [vmem:[#allocation3] sm:$0xff]
        %v6448 = vld [vmem:[#allocation3 + $0x8] sm:$0xff]
        %v6449 = vld [vmem:[#allocation3 + $0x10] sm:$0xff]
        %v6450 = vld [vmem:[#allocation3 + $0x18] sm:$0xff]
        %v6451 = vld [vmem:[#allocation3 + $0x20] sm:$0xff]
        %v6452 = vld [vmem:[#allocation3 + $0x28] sm:$0xff]
        %v6453 = vld [vmem:[#allocation3 + $0x30] sm:$0xff]
        %v6454 = vld [vmem:[#allocation3 + $0x38] sm:$0xff]
        %v6455 = vld [vmem:[#allocation3 + $0x40] sm:$0xff]
        %v6456 = vld [vmem:[#allocation3 + $0x48] sm:$0xff]
        %v6457 = vld [vmem:[#allocation3 + $0x50] sm:$0xff]
        %v6458 = vld [vmem:[#allocation3 + $0x58] sm:$0xff]
        %v6459 = vld [vmem:[#allocation3 + $0x60] sm:$0xff]
        %v6460 = vld [vmem:[#allocation3 + $0x68] sm:$0xff]
        %v6461 = vld [vmem:[#allocation3 + $0x70] sm:$0xff]
        %v6462 = vld [vmem:[#allocation3 + $0x78] sm:$0xff]
        %v6463 = vld [vmem:[%s619] sm:$0xff]
        %v6464 = vld [vmem:[%s619 + $0x8] sm:$0xff]
        %v6465 = vunpack.c.0.s8 %v6463
        %v6466 = vunpack.c.1.s8 %v6463
        %v6467 = vunpack.c.2.s8 %v6463
        %v6468 = vunpack.c.3.s8 %v6463
        %v6469 = vunpack.c.0.s8 %v6464
        %v6470 = vunpack.c.1.s8 %v6464
        %v6471 = vunpack.c.2.s8 %v6464
        %v6472 = vunpack.c.3.s8 %v6464
        %v6473 = vcvt.s32.f32 %v6465
        %v6474 = vcvt.s32.f32 %v6466
        %v6475 = vcvt.s32.f32 %v6467
        %v6476 = vcvt.s32.f32 %v6468
        %v6477 = vcvt.s32.f32 %v6469
        %v6478 = vcvt.s32.f32 %v6470
        %v6479 = vcvt.s32.f32 %v6471
        %v6480 = vcvt.s32.f32 %v6472
        %vm6481 = vcmp.eq.f32.partialorder %v6473, 0.0
        %vm6482 = vcmp.eq.f32.partialorder %v6474, 0.0
        %vm6483 = vcmp.eq.f32.partialorder %v6475, 0.0
        %vm6484 = vcmp.eq.f32.partialorder %v6476, 0.0
        %vm6485 = vcmp.eq.f32.partialorder %v6477, 0.0
        %vm6486 = vcmp.eq.f32.partialorder %v6478, 0.0
        %vm6487 = vcmp.eq.f32.partialorder %v6479, 0.0
        %vm6488 = vcmp.eq.f32.partialorder %v6480, 0.0
        %v6489 = vsel %vm6481, -1e+30, 0.0
        %v6490 = vsel %vm6482, -1e+30, 0.0
        %v6491 = vsel %vm6483, -1e+30, 0.0
        %v6492 = vsel %vm6484, -1e+30, 0.0
        %v6493 = vsel %vm6485, -1e+30, 0.0
        %v6494 = vsel %vm6486, -1e+30, 0.0
        %v6495 = vsel %vm6487, -1e+30, 0.0
        %v6496 = vsel %vm6488, -1e+30, 0.0
        %6497 = vmatprep.subr.bf16.mxu0 0
        %6498 = vmatpush1.bf16.xpose.msra.mxu0 %v6431
        %6499 = vmatprep.subr.bf16.mxu0 0
        %6500 = vmatpush1.bf16.xpose.msra.mxu0 %v6432
        %6501 = vmatprep.subr.bf16.mxu0 0
        %6502 = vmatpush1.bf16.xpose.msra.mxu0 %v6433
        %6503 = vmatprep.subr.bf16.mxu0 0
        %6504 = vmatpush1.bf16.xpose.msra.mxu0 %v6434
        %6505 = vmatprep.subr.bf16.mxu0 0
        %6506 = vmatpush1.bf16.xpose.msra.mxu0 %v6435
        %6507 = vmatprep.subr.bf16.mxu0 0
        %6508 = vmatpush1.bf16.xpose.msra.mxu0 %v6436
        %6509 = vmatprep.subr.bf16.mxu0 0
        %6510 = vmatpush1.bf16.xpose.msra.mxu0 %v6437
        %6511 = vmatprep.subr.bf16.mxu0 0
        %6512 = vmatpush1.bf16.xpose.msra.mxu0 %v6438
        %6513 = vmatprep.subr.bf16.mxu0 0
        %6514 = vmatpush1.bf16.xpose.msra.mxu0 0
        %6515 = vmatprep.subr.bf16.mxu0 0
        %6516 = vmatpush1.bf16.xpose.msra.mxu0 0
        %6517 = vmatprep.subr.bf16.mxu0 0
        %6518 = vmatpush1.bf16.xpose.msra.mxu0 0
        %6519 = vmatprep.subr.bf16.mxu0 0
        %6520 = vmatpush1.bf16.xpose.msra.mxu0 0
        %6521 = vmatprep.subr.bf16.mxu0 0
        %6522 = vmatpush1.bf16.xpose.msra.mxu0 0
        %6523 = vmatprep.subr.bf16.mxu0 0
        %6524 = vmatpush1.bf16.xpose.msra.mxu0 0
        %6525 = vmatprep.subr.bf16.mxu0 0
        %6526 = vmatpush1.bf16.xpose.msra.mxu0 0
        %6527 = vmatprep.subr.bf16.mxu0 0
        %6528 = vmatpush1.bf16.xpose.msra.mxu0 0
        %6529 = vmatprep.mubr.bf16.mxu0 0
        %6530 = vmatmul.mubr.bf16.gmra.mrb[0].mxu0 %v6423
        %v6531 = vpop.f32.mrb[0].mxu0
        %v6532 = vadd.f32 %v6489, %v6531
        %v6533 = vpop.f32.mrb[0].mxu0
        %v6534 = vpop.f32.mrb[0].mxu0
        %v6535 = vadd.f32 %v6490, %v6534
        %v6536 = vpop.f32.mrb[0].mxu0
        %6537 = vmatprep.mubr.bf16.mxu0 0
        %6538 = vmatmul.mubr.bf16.gmra.mrb[0].mxu0 %v6424
        %v6539 = vpop.f32.mrb[0].mxu0
        %v6540 = vadd.f32 %v6491, %v6539
        %v6541 = vpop.f32.mrb[0].mxu0
        %v6542 = vpop.f32.mrb[0].mxu0
        %v6543 = vadd.f32 %v6492, %v6542
        %v6544 = vpop.f32.mrb[0].mxu0
        %6545 = vmatprep.mubr.bf16.mxu0 0
        %6546 = vmatmul.mubr.bf16.gmra.mrb[0].mxu0 %v6425
        %v6547 = vpop.f32.mrb[0].mxu0
        %v6548 = vadd.f32 %v6493, %v6547
        %v6549 = vpop.f32.mrb[0].mxu0
        %v6550 = vpop.f32.mrb[0].mxu0
        %v6551 = vadd.f32 %v6494, %v6550
        %v6552 = vpop.f32.mrb[0].mxu0
        %6553 = vmatprep.mubr.bf16.mxu0 0
        %6554 = vmatmul.mubr.bf16.gmra.mrb[0].mxu0 %v6426
        %v6555 = vpop.f32.mrb[0].mxu0
        %v6556 = vadd.f32 %v6495, %v6555
        %v6557 = vpop.f32.mrb[0].mxu0
        %v6558 = vpop.f32.mrb[0].mxu0
        %v6559 = vadd.f32 %v6496, %v6558
        %v6560 = vpop.f32.mrb[0].mxu0
        %6561 = vdwg.mxu0
        %6562 = vmatprep.subr.bf16.mxu0 0
        %6563 = vmatpush1.bf16.xpose.msra.mxu0 %v6439
        %6564 = vmatprep.subr.bf16.mxu0 0
        %6565 = vmatpush1.bf16.xpose.msra.mxu0 %v6440
        %6566 = vmatprep.subr.bf16.mxu0 0
        %6567 = vmatpush1.bf16.xpose.msra.mxu0 %v6441
        %6568 = vmatprep.subr.bf16.mxu0 0
        %6569 = vmatpush1.bf16.xpose.msra.mxu0 %v6442
        %6570 = vmatprep.subr.bf16.mxu0 0
        %6571 = vmatpush1.bf16.xpose.msra.mxu0 %v6443
        %6572 = vmatprep.subr.bf16.mxu0 0
        %6573 = vmatpush1.bf16.xpose.msra.mxu0 %v6444
        %6574 = vmatprep.subr.bf16.mxu0 0
        %6575 = vmatpush1.bf16.xpose.msra.mxu0 %v6445
        %6576 = vmatprep.subr.bf16.mxu0 0
        %6577 = vmatpush1.bf16.xpose.msra.mxu0 %v6446
        %6578 = vmatprep.subr.bf16.mxu0 0
        %6579 = vmatpush1.bf16.xpose.msra.mxu0 0
        %6580 = vmatprep.subr.bf16.mxu0 0
        %6581 = vmatpush1.bf16.xpose.msra.mxu0 0
        %6582 = vmatprep.subr.bf16.mxu0 0
        %6583 = vmatpush1.bf16.xpose.msra.mxu0 0
        %6584 = vmatprep.subr.bf16.mxu0 0
        %6585 = vmatpush1.bf16.xpose.msra.mxu0 0
        %6586 = vmatprep.subr.bf16.mxu0 0
        %6587 = vmatpush1.bf16.xpose.msra.mxu0 0
        %6588 = vmatprep.subr.bf16.mxu0 0
        %6589 = vmatpush1.bf16.xpose.msra.mxu0 0
        %6590 = vmatprep.subr.bf16.mxu0 0
        %6591 = vmatpush1.bf16.xpose.msra.mxu0 0
        %6592 = vmatprep.subr.bf16.mxu0 0
        %6593 = vmatpush1.bf16.xpose.msra.mxu0 0
        %6594 = vmatprep.mubr.bf16.mxu0 0
        %6595 = vmatmul.mubr.bf16.gmra.mrb[0].mxu0 %v6427
        %v6596 = vpop.f32.mrb[0].mxu0
        %v6597 = vadd.f32 %v6489, %v6596
        %v6598 = vpop.f32.mrb[0].mxu0
        %v6599 = vpop.f32.mrb[0].mxu0
        %v6600 = vadd.f32 %v6490, %v6599
        %v6601 = vpop.f32.mrb[0].mxu0
        %6602 = vmatprep.mubr.bf16.mxu0 0
        %6603 = vmatmul.mubr.bf16.gmra.mrb[0].mxu0 %v6428
        %v6604 = vpop.f32.mrb[0].mxu0
        %v6605 = vadd.f32 %v6491, %v6604
        %v6606 = vpop.f32.mrb[0].mxu0
        %v6607 = vpop.f32.mrb[0].mxu0
        %v6608 = vadd.f32 %v6492, %v6607
        %v6609 = vpop.f32.mrb[0].mxu0
        %6610 = vmatprep.mubr.bf16.mxu0 0
        %6611 = vmatmul.mubr.bf16.gmra.mrb[0].mxu0 %v6429
        %v6612 = vpop.f32.mrb[0].mxu0
        %v6613 = vadd.f32 %v6493, %v6612
        %v6614 = vpop.f32.mrb[0].mxu0
        %v6615 = vpop.f32.mrb[0].mxu0
        %v6616 = vadd.f32 %v6494, %v6615
        %v6617 = vpop.f32.mrb[0].mxu0
        %6618 = vmatprep.mubr.bf16.mxu0 0
        %6619 = vmatmul.mubr.bf16.gmra.mrb[0].mxu0 %v6430
        %v6620 = vpop.f32.mrb[0].mxu0
        %v6621 = vadd.f32 %v6495, %v6620
        %v6622 = vpop.f32.mrb[0].mxu0
        %v6623 = vpop.f32.mrb[0].mxu0
        %v6624 = vadd.f32 %v6496, %v6623
        %v6625 = vpop.f32.mrb[0].mxu0
        %6626 = vdwg.mxu0
        %6627 = vmax.xlane.f32.xlu0 %v6532
        %v6628 = vpop.xlane.xlu0 %6627
        %6629 = vmax.xlane.f32.xlu0 %v6535
        %v6630 = vpop.xlane.xlu0 %6629
        %6631 = vmax.xlane.f32.xlu0 %v6540
        %v6632 = vpop.xlane.xlu0 %6631
        %6633 = vmax.xlane.f32.xlu0 %v6543
        %v6634 = vpop.xlane.xlu0 %6633
        %6635 = vmax.xlane.f32.xlu0 %v6548
        %v6636 = vpop.xlane.xlu0 %6635
        %6637 = vmax.xlane.f32.xlu0 %v6551
        %v6638 = vpop.xlane.xlu0 %6637
        %6639 = vmax.xlane.f32.xlu0 %v6556
        %v6640 = vpop.xlane.xlu0 %6639
        %6641 = vmax.xlane.f32.xlu0 %v6559
        %v6642 = vpop.xlane.xlu0 %6641
        %6643 = vmax.xlane.f32.xlu0 %v6597
        %v6644 = vpop.xlane.xlu0 %6643
        %6645 = vmax.xlane.f32.xlu0 %v6600
        %v6646 = vpop.xlane.xlu0 %6645
        %6647 = vmax.xlane.f32.xlu0 %v6605
        %v6648 = vpop.xlane.xlu0 %6647
        %6649 = vmax.xlane.f32.xlu0 %v6608
        %v6650 = vpop.xlane.xlu0 %6649
        %6651 = vmax.xlane.f32.xlu0 %v6613
        %v6652 = vpop.xlane.xlu0 %6651
        %6653 = vmax.xlane.f32.xlu0 %v6616
        %v6654 = vpop.xlane.xlu0 %6653
        %6655 = vmax.xlane.f32.xlu0 %v6621
        %v6656 = vpop.xlane.xlu0 %6655
        %6657 = vmax.xlane.f32.xlu0 %v6624
        %v6658 = vpop.xlane.xlu0 %6657
        %v6659 = vsub.f32 %v6532, %v6628
        %v6660 = vsub.f32 %v6535, %v6630
        %v6661 = vsub.f32 %v6540, %v6632
        %v6662 = vsub.f32 %v6543, %v6634
        %v6663 = vsub.f32 %v6548, %v6636
        %v6664 = vsub.f32 %v6551, %v6638
        %v6665 = vsub.f32 %v6556, %v6640
        %v6666 = vsub.f32 %v6559, %v6642
        %v6667 = vsub.f32 %v6597, %v6644
        %v6668 = vsub.f32 %v6600, %v6646
        %v6669 = vsub.f32 %v6605, %v6648
        %v6670 = vsub.f32 %v6608, %v6650
        %v6671 = vsub.f32 %v6613, %v6652
        %v6672 = vsub.f32 %v6616, %v6654
        %v6673 = vsub.f32 %v6621, %v6656
        %v6674 = vsub.f32 %v6624, %v6658
        %v6675 = vmul.f32 %v6659, 1.442695
        %v6676 = vpow.pop %v6675
        %v6677 = vmul.f32 %v6660, 1.442695
        %v6678 = vpow.pop %v6677
        %v6679 = vmul.f32 %v6661, 1.442695
        %v6680 = vpow.pop %v6679
        %v6681 = vmul.f32 %v6662, 1.442695
        %v6682 = vpow.pop %v6681
        %v6683 = vmul.f32 %v6663, 1.442695
        %v6684 = vpow.pop %v6683
        %v6685 = vmul.f32 %v6664, 1.442695
        %v6686 = vpow.pop %v6685
        %v6687 = vmul.f32 %v6665, 1.442695
        %v6688 = vpow.pop %v6687
        %v6689 = vmul.f32 %v6666, 1.442695
        %v6690 = vpow.pop %v6689
        %v6691 = vmul.f32 %v6667, 1.442695
        %v6692 = vpow.pop %v6691
        %v6693 = vmul.f32 %v6668, 1.442695
        %v6694 = vpow.pop %v6693
        %v6695 = vmul.f32 %v6669, 1.442695
        %v6696 = vpow.pop %v6695
        %v6697 = vmul.f32 %v6670, 1.442695
        %v6698 = vpow.pop %v6697
        %v6699 = vmul.f32 %v6671, 1.442695
        %v6700 = vpow.pop %v6699
        %v6701 = vmul.f32 %v6672, 1.442695
        %v6702 = vpow.pop %v6701
        %v6703 = vmul.f32 %v6673, 1.442695
        %v6704 = vpow.pop %v6703
        %v6705 = vmul.f32 %v6674, 1.442695
        %v6706 = vpow.pop %v6705
        %6707 = vadd.xlane.f32.xlu0 %v6676
        %v6708 = vpop.xlane.xlu0 %6707
        %6709 = vadd.xlane.f32.xlu0 %v6678
        %v6710 = vpop.xlane.xlu0 %6709
        %6711 = vadd.xlane.f32.xlu0 %v6680
        %v6712 = vpop.xlane.xlu0 %6711
        %6713 = vadd.xlane.f32.xlu0 %v6682
        %v6714 = vpop.xlane.xlu0 %6713
        %6715 = vadd.xlane.f32.xlu0 %v6684
        %v6716 = vpop.xlane.xlu0 %6715
        %6717 = vadd.xlane.f32.xlu0 %v6686
        %v6718 = vpop.xlane.xlu0 %6717
        %6719 = vadd.xlane.f32.xlu0 %v6688
        %v6720 = vpop.xlane.xlu0 %6719
        %6721 = vadd.xlane.f32.xlu0 %v6690
        %v6722 = vpop.xlane.xlu0 %6721
        %6723 = vadd.xlane.f32.xlu0 %v6692
        %v6724 = vpop.xlane.xlu0 %6723
        %6725 = vadd.xlane.f32.xlu0 %v6694
        %v6726 = vpop.xlane.xlu0 %6725
        %6727 = vadd.xlane.f32.xlu0 %v6696
        %v6728 = vpop.xlane.xlu0 %6727
        %6729 = vadd.xlane.f32.xlu0 %v6698
        %v6730 = vpop.xlane.xlu0 %6729
        %6731 = vadd.xlane.f32.xlu0 %v6700
        %v6732 = vpop.xlane.xlu0 %6731
        %6733 = vadd.xlane.f32.xlu0 %v6702
        %v6734 = vpop.xlane.xlu0 %6733
        %6735 = vadd.xlane.f32.xlu0 %v6704
        %v6736 = vpop.xlane.xlu0 %6735
        %6737 = vadd.xlane.f32.xlu0 %v6706
        %v6738 = vpop.xlane.xlu0 %6737
        %v6739 = vrcp.pop %v6708
        %v6740 = vrcp.pop %v6710
        %v6741 = vrcp.pop %v6712
        %v6742 = vrcp.pop %v6714
        %v6743 = vrcp.pop %v6716
        %v6744 = vrcp.pop %v6718
        %v6745 = vrcp.pop %v6720
        %v6746 = vrcp.pop %v6722
        %v6747 = vrcp.pop %v6724
        %v6748 = vrcp.pop %v6726
        %v6749 = vrcp.pop %v6728
        %v6750 = vrcp.pop %v6730
        %v6751 = vrcp.pop %v6732
        %v6752 = vrcp.pop %v6734
        %v6753 = vrcp.pop %v6736
        %v6754 = vrcp.pop %v6738
        %v6755 = vmul.f32 %v6676, %v6739
        %v6756 = vmul.f32 %v6678, %v6740
        %v6757 = vmul.f32 %v6680, %v6741
        %v6758 = vmul.f32 %v6682, %v6742
        %v6759 = vmul.f32 %v6684, %v6743
        %v6760 = vmul.f32 %v6686, %v6744
        %v6761 = vmul.f32 %v6688, %v6745
        %v6762 = vmul.f32 %v6690, %v6746
        %v6763 = vmul.f32 %v6692, %v6747
        %v6764 = vmul.f32 %v6694, %v6748
        %v6765 = vmul.f32 %v6696, %v6749
        %v6766 = vmul.f32 %v6698, %v6750
        %v6767 = vmul.f32 %v6700, %v6751
        %v6768 = vmul.f32 %v6702, %v6752
        %v6769 = vmul.f32 %v6704, %v6753
        %v6770 = vmul.f32 %v6706, %v6754
        %v6771 = vpack.c.bf16 %v6756, %v6755
        %v6772 = vpack.c.bf16 %v6758, %v6757
        %v6773 = vpack.c.bf16 %v6760, %v6759
        %v6774 = vpack.c.bf16 %v6762, %v6761
        %v6775 = vpack.c.bf16 %v6764, %v6763
        %v6776 = vpack.c.bf16 %v6766, %v6765
        %v6777 = vpack.c.bf16 %v6768, %v6767
        %v6778 = vpack.c.bf16 %v6770, %v6769
        %6779 = vmatprep.subr.bf16.mxu0 0
        %6780 = vmatpush1.bf16.msra.mxu0 %v6447
        %6781 = vmatprep.subr.bf16.mxu0 0
        %6782 = vmatpush1.bf16.msra.mxu0 %v6448
        %6783 = vmatprep.subr.bf16.mxu0 0
        %6784 = vmatpush1.bf16.msra.mxu0 %v6449
        %6785 = vmatprep.subr.bf16.mxu0 0
        %6786 = vmatpush1.bf16.msra.mxu0 %v6450
        %6787 = vmatprep.subr.bf16.mxu0 0
        %6788 = vmatpush1.bf16.msra.mxu0 %v6451
        %6789 = vmatprep.subr.bf16.mxu0 0
        %6790 = vmatpush1.bf16.msra.mxu0 %v6452
        %6791 = vmatprep.subr.bf16.mxu0 0
        %6792 = vmatpush1.bf16.msra.mxu0 %v6453
        %6793 = vmatprep.subr.bf16.mxu0 0
        %6794 = vmatpush1.bf16.msra.mxu0 %v6454
        %6795 = vmatprep.subr.bf16.mxu0 0
        %6796 = vmatpush1.bf16.msra.mxu0 0
        %6797 = vmatprep.subr.bf16.mxu0 0
        %6798 = vmatpush1.bf16.msra.mxu0 0
        %6799 = vmatprep.subr.bf16.mxu0 0
        %6800 = vmatpush1.bf16.msra.mxu0 0
        %6801 = vmatprep.subr.bf16.mxu0 0
        %6802 = vmatpush1.bf16.msra.mxu0 0
        %6803 = vmatprep.subr.bf16.mxu0 0
        %6804 = vmatpush1.bf16.msra.mxu0 0
        %6805 = vmatprep.subr.bf16.mxu0 0
        %6806 = vmatpush1.bf16.msra.mxu0 0
        %6807 = vmatprep.subr.bf16.mxu0 0
        %6808 = vmatpush1.bf16.msra.mxu0 0
        %6809 = vmatprep.subr.bf16.mxu0 0
        %6810 = vmatpush1.bf16.msra.mxu0 0
        %6811 = vmatprep.mubr.bf16.mxu0 0
        %6812 = vmatmul.mubr.bf16.gmra.mrb[0].mxu0 %v6771
        %v6813 = vpop.f32.mrb[0].mxu0
        %v6814 = vadd.f32 0.0, %v6813
        %v6815 = vpop.f32.mrb[0].mxu0
        %v6816 = vpop.f32.mrb[0].mxu0
        %v6817 = vadd.f32 0.0, %v6816
        %v6818 = vpop.f32.mrb[0].mxu0
        %6819 = vmatprep.mubr.bf16.mxu0 0
        %6820 = vmatmul.mubr.bf16.gmra.mrb[0].mxu0 %v6772
        %v6821 = vpop.f32.mrb[0].mxu0
        %v6822 = vadd.f32 0.0, %v6821
        %v6823 = vpop.f32.mrb[0].mxu0
        %v6824 = vpop.f32.mrb[0].mxu0
        %v6825 = vadd.f32 0.0, %v6824
        %v6826 = vpop.f32.mrb[0].mxu0
        %6827 = vmatprep.mubr.bf16.mxu0 0
        %6828 = vmatmul.mubr.bf16.gmra.mrb[0].mxu0 %v6773
        %v6829 = vpop.f32.mrb[0].mxu0
        %v6830 = vadd.f32 0.0, %v6829
        %v6831 = vpop.f32.mrb[0].mxu0
        %v6832 = vpop.f32.mrb[0].mxu0
        %v6833 = vadd.f32 0.0, %v6832
        %v6834 = vpop.f32.mrb[0].mxu0
        %6835 = vmatprep.mubr.bf16.mxu0 0
        %6836 = vmatmul.mubr.bf16.gmra.mrb[0].mxu0 %v6774
        %v6837 = vpop.f32.mrb[0].mxu0
        %v6838 = vadd.f32 0.0, %v6837
        %v6839 = vpop.f32.mrb[0].mxu0
        %v6840 = vpop.f32.mrb[0].mxu0
        %v6841 = vadd.f32 0.0, %v6840
        %v6842 = vpop.f32.mrb[0].mxu0
        %6843 = vdwg.mxu0
        %6844 = vmatprep.subr.bf16.mxu0 0
        %6845 = vmatpush1.bf16.msra.mxu0 %v6455
        %6846 = vmatprep.subr.bf16.mxu0 0
        %6847 = vmatpush1.bf16.msra.mxu0 %v6456
        %6848 = vmatprep.subr.bf16.mxu0 0
        %6849 = vmatpush1.bf16.msra.mxu0 %v6457
        %6850 = vmatprep.subr.bf16.mxu0 0
        %6851 = vmatpush1.bf16.msra.mxu0 %v6458
        %6852 = vmatprep.subr.bf16.mxu0 0
        %6853 = vmatpush1.bf16.msra.mxu0 %v6459
        %6854 = vmatprep.subr.bf16.mxu0 0
        %6855 = vmatpush1.bf16.msra.mxu0 %v6460
        %6856 = vmatprep.subr.bf16.mxu0 0
        %6857 = vmatpush1.bf16.msra.mxu0 %v6461
        %6858 = vmatprep.subr.bf16.mxu0 0
        %6859 = vmatpush1.bf16.msra.mxu0 %v6462
        %6860 = vmatprep.subr.bf16.mxu0 0
        %6861 = vmatpush1.bf16.msra.mxu0 0
        %6862 = vmatprep.subr.bf16.mxu0 0
        %6863 = vmatpush1.bf16.msra.mxu0 0
        %6864 = vmatprep.subr.bf16.mxu0 0
        %6865 = vmatpush1.bf16.msra.mxu0 0
        %6866 = vmatprep.subr.bf16.mxu0 0
        %6867 = vmatpush1.bf16.msra.mxu0 0
        %6868 = vmatprep.subr.bf16.mxu0 0
        %6869 = vmatpush1.bf16.msra.mxu0 0
        %6870 = vmatprep.subr.bf16.mxu0 0
        %6871 = vmatpush1.bf16.msra.mxu0 0
        %6872 = vmatprep.subr.bf16.mxu0 0
        %6873 = vmatpush1.bf16.msra.mxu0 0
        %6874 = vmatprep.subr.bf16.mxu0 0
        %6875 = vmatpush1.bf16.msra.mxu0 0
        %6876 = vmatprep.mubr.bf16.mxu0 0
        %6877 = vmatmul.mubr.bf16.gmra.mrb[0].mxu0 %v6775
        %v6878 = vpop.f32.mrb[0].mxu0
        %v6879 = vadd.f32 0.0, %v6878
        %v6880 = vpop.f32.mrb[0].mxu0
        %v6881 = vpop.f32.mrb[0].mxu0
        %v6882 = vadd.f32 0.0, %v6881
        %v6883 = vpop.f32.mrb[0].mxu0
        %6884 = vmatprep.mubr.bf16.mxu0 0
        %6885 = vmatmul.mubr.bf16.gmra.mrb[0].mxu0 %v6776
        %v6886 = vpop.f32.mrb[0].mxu0
        %v6887 = vadd.f32 0.0, %v6886
        %v6888 = vpop.f32.mrb[0].mxu0
        %v6889 = vpop.f32.mrb[0].mxu0
        %v6890 = vadd.f32 0.0, %v6889
        %v6891 = vpop.f32.mrb[0].mxu0
        %6892 = vmatprep.mubr.bf16.mxu0 0
        %6893 = vmatmul.mubr.bf16.gmra.mrb[0].mxu0 %v6777
        %v6894 = vpop.f32.mrb[0].mxu0
        %v6895 = vadd.f32 0.0, %v6894
        %v6896 = vpop.f32.mrb[0].mxu0
        %v6897 = vpop.f32.mrb[0].mxu0
        %v6898 = vadd.f32 0.0, %v6897
        %v6899 = vpop.f32.mrb[0].mxu0
        %6900 = vmatprep.mubr.bf16.mxu0 0
        %6901 = vmatmul.mubr.bf16.gmra.mrb[0].mxu0 %v6778
        %v6902 = vpop.f32.mrb[0].mxu0
        %v6903 = vadd.f32 0.0, %v6902
        %v6904 = vpop.f32.mrb[0].mxu0
        %v6905 = vpop.f32.mrb[0].mxu0
        %v6906 = vadd.f32 0.0, %v6905
        %v6907 = vpop.f32.mrb[0].mxu0
        %6908 = vdwg.mxu0
        %v6909 = vcombine.high %v6814, 0.0
        %v6911 = vunpack.c.l.s4 1983009808
        %v6912 = vunpack.c.0.s8 %v6911
        %v6913 = vlaneseq
        %v6914 = vshrl.u32 %v6913, 7
        %v6915 = vsub.s32 %v6912, %v6914
        %v6916 = vrot.slane %v6814, %v6915
        %v6918 = vunpack.c.l.s4 1983009808
        %v6919 = vunpack.c.0.s8 %v6918
        %v6920 = vlaneseq
        %v6921 = vshrl.u32 %v6920, 7
        %v6922 = vsub.s32 %v6919, %v6921
        %v6923 = vrot.slane %v6909, %v6922
        %v6924 = vcombine.high %v6879, 0.0
        %v6926 = vunpack.c.l.s4 1983009808
        %v6927 = vunpack.c.0.s8 %v6926
        %v6928 = vlaneseq
        %v6929 = vshrl.u32 %v6928, 7
        %v6930 = vsub.s32 %v6927, %v6929
        %v6931 = vrot.slane %v6879, %v6930
        %v6933 = vunpack.c.l.s4 1983009808
        %v6934 = vunpack.c.0.s8 %v6933
        %v6935 = vlaneseq
        %v6936 = vshrl.u32 %v6935, 7
        %v6937 = vsub.s32 %v6934, %v6936
        %v6938 = vrot.slane %v6924, %v6937
        %v6939 = vcombine.low %v6916, %v6931
        %v6940 = vcombine.high %v6916, %v6931
        %v6942 = vunpack.c.l.s4 1934713408
        %v6943 = vunpack.c.0.s8 %v6942
        %v6944 = vlaneseq
        %v6945 = vshrl.u32 %v6944, 7
        %v6946 = vsub.s32 %v6943, %v6945
        %v6947 = vrot.slane %v6939, %v6946
        %v6949 = vunpack.c.l.s4 1934713408
        %v6950 = vunpack.c.0.s8 %v6949
        %v6951 = vlaneseq
        %v6952 = vshrl.u32 %v6951, 7
        %v6953 = vsub.s32 %v6950, %v6952
        %v6954 = vrot.slane %v6940, %v6953
        %v6955 = vcombine.low %v6923, %v6938
        %v6956 = vcombine.high %v6923, %v6938
        %v6958 = vunpack.c.l.s4 1934713408
        %v6959 = vunpack.c.0.s8 %v6958
        %v6960 = vlaneseq
        %v6961 = vshrl.u32 %v6960, 7
        %v6962 = vsub.s32 %v6959, %v6961
        %v6963 = vrot.slane %v6955, %v6962
        %v6965 = vunpack.c.l.s4 1934713408
        %v6966 = vunpack.c.0.s8 %v6965
        %v6967 = vlaneseq
        %v6968 = vshrl.u32 %v6967, 7
        %v6969 = vsub.s32 %v6966, %v6968
        %v6970 = vrot.slane %v6956, %v6969
        %v6971 = vcombine.high %v6947, 0.0
        %v6972 = vcombine.high %v6954, 0.0
        %v6973 = vcombine.high %v6963, 0.0
        %v6974 = vcombine.high %v6970, 0.0
        %v6975 = vcombine.high %v6817, 0.0
        %v6977 = vunpack.c.l.s4 1983009808
        %v6978 = vunpack.c.0.s8 %v6977
        %v6979 = vlaneseq
        %v6980 = vshrl.u32 %v6979, 7
        %v6981 = vsub.s32 %v6978, %v6980
        %v6982 = vrot.slane %v6817, %v6981
        %v6984 = vunpack.c.l.s4 1983009808
        %v6985 = vunpack.c.0.s8 %v6984
        %v6986 = vlaneseq
        %v6987 = vshrl.u32 %v6986, 7
        %v6988 = vsub.s32 %v6985, %v6987
        %v6989 = vrot.slane %v6975, %v6988
        %v6990 = vcombine.high %v6882, 0.0
        %v6992 = vunpack.c.l.s4 1983009808
        %v6993 = vunpack.c.0.s8 %v6992
        %v6994 = vlaneseq
        %v6995 = vshrl.u32 %v6994, 7
        %v6996 = vsub.s32 %v6993, %v6995
        %v6997 = vrot.slane %v6882, %v6996
        %v6999 = vunpack.c.l.s4 1983009808
        %v7000 = vunpack.c.0.s8 %v6999
        %v7001 = vlaneseq
        %v7002 = vshrl.u32 %v7001, 7
        %v7003 = vsub.s32 %v7000, %v7002
        %v7004 = vrot.slane %v6990, %v7003
        %v7005 = vcombine.low %v6982, %v6997
        %v7006 = vcombine.high %v6982, %v6997
        %v7008 = vunpack.c.l.s4 1934713408
        %v7009 = vunpack.c.0.s8 %v7008
        %v7010 = vlaneseq
        %v7011 = vshrl.u32 %v7010, 7
        %v7012 = vsub.s32 %v7009, %v7011
        %v7013 = vrot.slane %v7005, %v7012
        %v7015 = vunpack.c.l.s4 1934713408
        %v7016 = vunpack.c.0.s8 %v7015
        %v7017 = vlaneseq
        %v7018 = vshrl.u32 %v7017, 7
        %v7019 = vsub.s32 %v7016, %v7018
        %v7020 = vrot.slane %v7006, %v7019
        %v7021 = vcombine.low %v6989, %v7004
        %v7022 = vcombine.high %v6989, %v7004
        %v7024 = vunpack.c.l.s4 1934713408
        %v7025 = vunpack.c.0.s8 %v7024
        %v7026 = vlaneseq
        %v7027 = vshrl.u32 %v7026, 7
        %v7028 = vsub.s32 %v7025, %v7027
        %v7029 = vrot.slane %v7021, %v7028
        %v7031 = vunpack.c.l.s4 1934713408
        %v7032 = vunpack.c.0.s8 %v7031
        %v7033 = vlaneseq
        %v7034 = vshrl.u32 %v7033, 7
        %v7035 = vsub.s32 %v7032, %v7034
        %v7036 = vrot.slane %v7022, %v7035
        %v7037 = vcombine.high %v7013, 0.0
        %v7038 = vcombine.high %v7020, 0.0
        %v7039 = vcombine.high %v7029, 0.0
        %v7040 = vcombine.high %v7036, 0.0
        %v7041 = vcombine.high %v6822, 0.0
        %v7043 = vunpack.c.l.s4 1983009808
        %v7044 = vunpack.c.0.s8 %v7043
        %v7045 = vlaneseq
        %v7046 = vshrl.u32 %v7045, 7
        %v7047 = vsub.s32 %v7044, %v7046
        %v7048 = vrot.slane %v6822, %v7047
        %v7050 = vunpack.c.l.s4 1983009808
        %v7051 = vunpack.c.0.s8 %v7050
        %v7052 = vlaneseq
        %v7053 = vshrl.u32 %v7052, 7
        %v7054 = vsub.s32 %v7051, %v7053
        %v7055 = vrot.slane %v7041, %v7054
        %v7056 = vcombine.high %v6887, 0.0
        %v7058 = vunpack.c.l.s4 1983009808
        %v7059 = vunpack.c.0.s8 %v7058
        %v7060 = vlaneseq
        %v7061 = vshrl.u32 %v7060, 7
        %v7062 = vsub.s32 %v7059, %v7061
        %v7063 = vrot.slane %v6887, %v7062
        %v7065 = vunpack.c.l.s4 1983009808
        %v7066 = vunpack.c.0.s8 %v7065
        %v7067 = vlaneseq
        %v7068 = vshrl.u32 %v7067, 7
        %v7069 = vsub.s32 %v7066, %v7068
        %v7070 = vrot.slane %v7056, %v7069
        %v7071 = vcombine.low %v7048, %v7063
        %v7072 = vcombine.high %v7048, %v7063
        %v7074 = vunpack.c.l.s4 1934713408
        %v7075 = vunpack.c.0.s8 %v7074
        %v7076 = vlaneseq
        %v7077 = vshrl.u32 %v7076, 7
        %v7078 = vsub.s32 %v7075, %v7077
        %v7079 = vrot.slane %v7071, %v7078
        %v7081 = vunpack.c.l.s4 1934713408
        %v7082 = vunpack.c.0.s8 %v7081
        %v7083 = vlaneseq
        %v7084 = vshrl.u32 %v7083, 7
        %v7085 = vsub.s32 %v7082, %v7084
        %v7086 = vrot.slane %v7072, %v7085
        %v7087 = vcombine.low %v7055, %v7070
        %v7088 = vcombine.high %v7055, %v7070
        %v7090 = vunpack.c.l.s4 1934713408
        %v7091 = vunpack.c.0.s8 %v7090
        %v7092 = vlaneseq
        %v7093 = vshrl.u32 %v7092, 7
        %v7094 = vsub.s32 %v7091, %v7093
        %v7095 = vrot.slane %v7087, %v7094
        %v7097 = vunpack.c.l.s4 1934713408
        %v7098 = vunpack.c.0.s8 %v7097
        %v7099 = vlaneseq
        %v7100 = vshrl.u32 %v7099, 7
        %v7101 = vsub.s32 %v7098, %v7100
        %v7102 = vrot.slane %v7088, %v7101
        %v7103 = vcombine.high %v7079, 0.0
        %v7104 = vcombine.high %v7086, 0.0
        %v7105 = vcombine.high %v7095, 0.0
        %v7106 = vcombine.high %v7102, 0.0
        %v7107 = vcombine.high %v6825, 0.0
        %v7109 = vunpack.c.l.s4 1983009808
        %v7110 = vunpack.c.0.s8 %v7109
        %v7111 = vlaneseq
        %v7112 = vshrl.u32 %v7111, 7
        %v7113 = vsub.s32 %v7110, %v7112
        %v7114 = vrot.slane %v6825, %v7113
        %v7116 = vunpack.c.l.s4 1983009808
        %v7117 = vunpack.c.0.s8 %v7116
        %v7118 = vlaneseq
        %v7119 = vshrl.u32 %v7118, 7
        %v7120 = vsub.s32 %v7117, %v7119
        %v7121 = vrot.slane %v7107, %v7120
        %v7122 = vcombine.high %v6890, 0.0
        %v7124 = vunpack.c.l.s4 1983009808
        %v7125 = vunpack.c.0.s8 %v7124
        %v7126 = vlaneseq
        %v7127 = vshrl.u32 %v7126, 7
        %v7128 = vsub.s32 %v7125, %v7127
        %v7129 = vrot.slane %v6890, %v7128
        %v7131 = vunpack.c.l.s4 1983009808
        %v7132 = vunpack.c.0.s8 %v7131
        %v7133 = vlaneseq
        %v7134 = vshrl.u32 %v7133, 7
        %v7135 = vsub.s32 %v7132, %v7134
        %v7136 = vrot.slane %v7122, %v7135
        %v7137 = vcombine.low %v7114, %v7129
        %v7138 = vcombine.high %v7114, %v7129
        %v7140 = vunpack.c.l.s4 1934713408
        %v7141 = vunpack.c.0.s8 %v7140
        %v7142 = vlaneseq
        %v7143 = vshrl.u32 %v7142, 7
        %v7144 = vsub.s32 %v7141, %v7143
        %v7145 = vrot.slane %v7137, %v7144
        %v7147 = vunpack.c.l.s4 1934713408
        %v7148 = vunpack.c.0.s8 %v7147
        %v7149 = vlaneseq
        %v7150 = vshrl.u32 %v7149, 7
        %v7151 = vsub.s32 %v7148, %v7150
        %v7152 = vrot.slane %v7138, %v7151
        %v7153 = vcombine.low %v7121, %v7136
        %v7154 = vcombine.high %v7121, %v7136
        %v7156 = vunpack.c.l.s4 1934713408
        %v7157 = vunpack.c.0.s8 %v7156
        %v7158 = vlaneseq
        %v7159 = vshrl.u32 %v7158, 7
        %v7160 = vsub.s32 %v7157, %v7159
        %v7161 = vrot.slane %v7153, %v7160
        %v7163 = vunpack.c.l.s4 1934713408
        %v7164 = vunpack.c.0.s8 %v7163
        %v7165 = vlaneseq
        %v7166 = vshrl.u32 %v7165, 7
        %v7167 = vsub.s32 %v7164, %v7166
        %v7168 = vrot.slane %v7154, %v7167
        %v7169 = vcombine.high %v7145, 0.0
        %v7170 = vcombine.high %v7152, 0.0
        %v7171 = vcombine.high %v7161, 0.0
        %v7172 = vcombine.high %v7168, 0.0
        %v7173 = vcombine.high %v6830, 0.0
        %v7175 = vunpack.c.l.s4 1983009808
        %v7176 = vunpack.c.0.s8 %v7175
        %v7177 = vlaneseq
        %v7178 = vshrl.u32 %v7177, 7
        %v7179 = vsub.s32 %v7176, %v7178
        %v7180 = vrot.slane %v6830, %v7179
        %v7182 = vunpack.c.l.s4 1983009808
        %v7183 = vunpack.c.0.s8 %v7182
        %v7184 = vlaneseq
        %v7185 = vshrl.u32 %v7184, 7
        %v7186 = vsub.s32 %v7183, %v7185
        %v7187 = vrot.slane %v7173, %v7186
        %v7188 = vcombine.high %v6895, 0.0
        %v7190 = vunpack.c.l.s4 1983009808
        %v7191 = vunpack.c.0.s8 %v7190
        %v7192 = vlaneseq
        %v7193 = vshrl.u32 %v7192, 7
        %v7194 = vsub.s32 %v7191, %v7193
        %v7195 = vrot.slane %v6895, %v7194
        %v7197 = vunpack.c.l.s4 1983009808
        %v7198 = vunpack.c.0.s8 %v7197
        %v7199 = vlaneseq
        %v7200 = vshrl.u32 %v7199, 7
        %v7201 = vsub.s32 %v7198, %v7200
        %v7202 = vrot.slane %v7188, %v7201
        %v7203 = vcombine.low %v7180, %v7195
        %v7204 = vcombine.high %v7180, %v7195
        %v7206 = vunpack.c.l.s4 1934713408
        %v7207 = vunpack.c.0.s8 %v7206
        %v7208 = vlaneseq
        %v7209 = vshrl.u32 %v7208, 7
        %v7210 = vsub.s32 %v7207, %v7209
        %v7211 = vrot.slane %v7203, %v7210
        %v7213 = vunpack.c.l.s4 1934713408
        %v7214 = vunpack.c.0.s8 %v7213
        %v7215 = vlaneseq
        %v7216 = vshrl.u32 %v7215, 7
        %v7217 = vsub.s32 %v7214, %v7216
        %v7218 = vrot.slane %v7204, %v7217
        %v7219 = vcombine.low %v7187, %v7202
        %v7220 = vcombine.high %v7187, %v7202
        %v7222 = vunpack.c.l.s4 1934713408
        %v7223 = vunpack.c.0.s8 %v7222
        %v7224 = vlaneseq
        %v7225 = vshrl.u32 %v7224, 7
        %v7226 = vsub.s32 %v7223, %v7225
        %v7227 = vrot.slane %v7219, %v7226
        %v7229 = vunpack.c.l.s4 1934713408
        %v7230 = vunpack.c.0.s8 %v7229
        %v7231 = vlaneseq
        %v7232 = vshrl.u32 %v7231, 7
        %v7233 = vsub.s32 %v7230, %v7232
        %v7234 = vrot.slane %v7220, %v7233
        %v7235 = vcombine.high %v7211, 0.0
        %v7236 = vcombine.high %v7218, 0.0
        %v7237 = vcombine.high %v7227, 0.0
        %v7238 = vcombine.high %v7234, 0.0
        %v7239 = vcombine.high %v6833, 0.0
        %v7241 = vunpack.c.l.s4 1983009808
        %v7242 = vunpack.c.0.s8 %v7241
        %v7243 = vlaneseq
        %v7244 = vshrl.u32 %v7243, 7
        %v7245 = vsub.s32 %v7242, %v7244
        %v7246 = vrot.slane %v6833, %v7245
        %v7248 = vunpack.c.l.s4 1983009808
        %v7249 = vunpack.c.0.s8 %v7248
        %v7250 = vlaneseq
        %v7251 = vshrl.u32 %v7250, 7
        %v7252 = vsub.s32 %v7249, %v7251
        %v7253 = vrot.slane %v7239, %v7252
        %v7254 = vcombine.high %v6898, 0.0
        %v7256 = vunpack.c.l.s4 1983009808
        %v7257 = vunpack.c.0.s8 %v7256
        %v7258 = vlaneseq
        %v7259 = vshrl.u32 %v7258, 7
        %v7260 = vsub.s32 %v7257, %v7259
        %v7261 = vrot.slane %v6898, %v7260
        %v7263 = vunpack.c.l.s4 1983009808
        %v7264 = vunpack.c.0.s8 %v7263
        %v7265 = vlaneseq
        %v7266 = vshrl.u32 %v7265, 7
        %v7267 = vsub.s32 %v7264, %v7266
        %v7268 = vrot.slane %v7254, %v7267
        %v7269 = vcombine.low %v7246, %v7261
        %v7270 = vcombine.high %v7246, %v7261
        %v7272 = vunpack.c.l.s4 1934713408
        %v7273 = vunpack.c.0.s8 %v7272
        %v7274 = vlaneseq
        %v7275 = vshrl.u32 %v7274, 7
        %v7276 = vsub.s32 %v7273, %v7275
        %v7277 = vrot.slane %v7269, %v7276
        %v7279 = vunpack.c.l.s4 1934713408
        %v7280 = vunpack.c.0.s8 %v7279
        %v7281 = vlaneseq
        %v7282 = vshrl.u32 %v7281, 7
        %v7283 = vsub.s32 %v7280, %v7282
        %v7284 = vrot.slane %v7270, %v7283
        %v7285 = vcombine.low %v7253, %v7268
        %v7286 = vcombine.high %v7253, %v7268
        %v7288 = vunpack.c.l.s4 1934713408
        %v7289 = vunpack.c.0.s8 %v7288
        %v7290 = vlaneseq
        %v7291 = vshrl.u32 %v7290, 7
        %v7292 = vsub.s32 %v7289, %v7291
        %v7293 = vrot.slane %v7285, %v7292
        %v7295 = vunpack.c.l.s4 1934713408
        %v7296 = vunpack.c.0.s8 %v7295
        %v7297 = vlaneseq
        %v7298 = vshrl.u32 %v7297, 7
        %v7299 = vsub.s32 %v7296, %v7298
        %v7300 = vrot.slane %v7286, %v7299
        %v7301 = vcombine.high %v7277, 0.0
        %v7302 = vcombine.high %v7284, 0.0
        %v7303 = vcombine.high %v7293, 0.0
        %v7304 = vcombine.high %v7300, 0.0
        %v7305 = vcombine.high %v6838, 0.0
        %v7307 = vunpack.c.l.s4 1983009808
        %v7308 = vunpack.c.0.s8 %v7307
        %v7309 = vlaneseq
        %v7310 = vshrl.u32 %v7309, 7
        %v7311 = vsub.s32 %v7308, %v7310
        %v7312 = vrot.slane %v6838, %v7311
        %v7314 = vunpack.c.l.s4 1983009808
        %v7315 = vunpack.c.0.s8 %v7314
        %v7316 = vlaneseq
        %v7317 = vshrl.u32 %v7316, 7
        %v7318 = vsub.s32 %v7315, %v7317
        %v7319 = vrot.slane %v7305, %v7318
        %v7320 = vcombine.high %v6903, 0.0
        %v7322 = vunpack.c.l.s4 1983009808
        %v7323 = vunpack.c.0.s8 %v7322
        %v7324 = vlaneseq
        %v7325 = vshrl.u32 %v7324, 7
        %v7326 = vsub.s32 %v7323, %v7325
        %v7327 = vrot.slane %v6903, %v7326
        %v7329 = vunpack.c.l.s4 1983009808
        %v7330 = vunpack.c.0.s8 %v7329
        %v7331 = vlaneseq
        %v7332 = vshrl.u32 %v7331, 7
        %v7333 = vsub.s32 %v7330, %v7332
        %v7334 = vrot.slane %v7320, %v7333
        %v7335 = vcombine.low %v7312, %v7327
        %v7336 = vcombine.high %v7312, %v7327
        %v7338 = vunpack.c.l.s4 1934713408
        %v7339 = vunpack.c.0.s8 %v7338
        %v7340 = vlaneseq
        %v7341 = vshrl.u32 %v7340, 7
        %v7342 = vsub.s32 %v7339, %v7341
        %v7343 = vrot.slane %v7335, %v7342
        %v7345 = vunpack.c.l.s4 1934713408
        %v7346 = vunpack.c.0.s8 %v7345
        %v7347 = vlaneseq
        %v7348 = vshrl.u32 %v7347, 7
        %v7349 = vsub.s32 %v7346, %v7348
        %v7350 = vrot.slane %v7336, %v7349
        %v7351 = vcombine.low %v7319, %v7334
        %v7352 = vcombine.high %v7319, %v7334
        %v7354 = vunpack.c.l.s4 1934713408
        %v7355 = vunpack.c.0.s8 %v7354
        %v7356 = vlaneseq
        %v7357 = vshrl.u32 %v7356, 7
        %v7358 = vsub.s32 %v7355, %v7357
        %v7359 = vrot.slane %v7351, %v7358
        %v7361 = vunpack.c.l.s4 1934713408
        %v7362 = vunpack.c.0.s8 %v7361
        %v7363 = vlaneseq
        %v7364 = vshrl.u32 %v7363, 7
        %v7365 = vsub.s32 %v7362, %v7364
        %v7366 = vrot.slane %v7352, %v7365
        %v7367 = vcombine.high %v7343, 0.0
        %v7368 = vcombine.high %v7350, 0.0
        %v7369 = vcombine.high %v7359, 0.0
        %v7370 = vcombine.high %v7366, 0.0
        %v7371 = vcombine.high %v6841, 0.0
        %v7373 = vunpack.c.l.s4 1983009808
        %v7374 = vunpack.c.0.s8 %v7373
        %v7375 = vlaneseq
        %v7376 = vshrl.u32 %v7375, 7
        %v7377 = vsub.s32 %v7374, %v7376
        %v7378 = vrot.slane %v6841, %v7377
        %v7380 = vunpack.c.l.s4 1983009808
        %v7381 = vunpack.c.0.s8 %v7380
        %v7382 = vlaneseq
        %v7383 = vshrl.u32 %v7382, 7
        %v7384 = vsub.s32 %v7381, %v7383
        %v7385 = vrot.slane %v7371, %v7384
        %v7386 = vcombine.high %v6906, 0.0
        %v7388 = vunpack.c.l.s4 1983009808
        %v7389 = vunpack.c.0.s8 %v7388
        %v7390 = vlaneseq
        %v7391 = vshrl.u32 %v7390, 7
        %v7392 = vsub.s32 %v7389, %v7391
        %v7393 = vrot.slane %v6906, %v7392
        %v7395 = vunpack.c.l.s4 1983009808
        %v7396 = vunpack.c.0.s8 %v7395
        %v7397 = vlaneseq
        %v7398 = vshrl.u32 %v7397, 7
        %v7399 = vsub.s32 %v7396, %v7398
        %v7400 = vrot.slane %v7386, %v7399
        %v7401 = vcombine.low %v7378, %v7393
        %v7402 = vcombine.high %v7378, %v7393
        %v7404 = vunpack.c.l.s4 1934713408
        %v7405 = vunpack.c.0.s8 %v7404
        %v7406 = vlaneseq
        %v7407 = vshrl.u32 %v7406, 7
        %v7408 = vsub.s32 %v7405, %v7407
        %v7409 = vrot.slane %v7401, %v7408
        %v7411 = vunpack.c.l.s4 1934713408
        %v7412 = vunpack.c.0.s8 %v7411
        %v7413 = vlaneseq
        %v7414 = vshrl.u32 %v7413, 7
        %v7415 = vsub.s32 %v7412, %v7414
        %v7416 = vrot.slane %v7402, %v7415
        %v7417 = vcombine.low %v7385, %v7400
        %v7418 = vcombine.high %v7385, %v7400
        %v7420 = vunpack.c.l.s4 1934713408
        %v7421 = vunpack.c.0.s8 %v7420
        %v7422 = vlaneseq
        %v7423 = vshrl.u32 %v7422, 7
        %v7424 = vsub.s32 %v7421, %v7423
        %v7425 = vrot.slane %v7417, %v7424
        %v7427 = vunpack.c.l.s4 1934713408
        %v7428 = vunpack.c.0.s8 %v7427
        %v7429 = vlaneseq
        %v7430 = vshrl.u32 %v7429, 7
        %v7431 = vsub.s32 %v7428, %v7430
        %v7432 = vrot.slane %v7418, %v7431
        %v7433 = vcombine.high %v7409, 0.0
        %v7434 = vcombine.high %v7416, 0.0
        %v7435 = vcombine.high %v7425, 0.0
        %v7436 = vcombine.high %v7432, 0.0
        %v7437 = vcombine.low %v6947, %v6954
        %v7439 = vunpack.c.l.s4 1983009808
        %v7440 = vunpack.c.0.s8 %v7439
        %v7441 = vlaneseq
        %v7442 = vshrl.u32 %v7441, 7
        %v7443 = vsub.s32 %v7440, %v7442
        %v7444 = vrot.slane %v7437, %v7443
        %v7445 = vcombine.low %v6971, %v6972
        %v7447 = vunpack.c.l.s4 1983009808
        %v7448 = vunpack.c.0.s8 %v7447
        %v7449 = vlaneseq
        %v7450 = vshrl.u32 %v7449, 7
        %v7451 = vsub.s32 %v7448, %v7450
        %v7452 = vrot.slane %v7445, %v7451
        %v7453 = vcombine.low %v6963, %v6970
        %v7455 = vunpack.c.l.s4 1983009808
        %v7456 = vunpack.c.0.s8 %v7455
        %v7457 = vlaneseq
        %v7458 = vshrl.u32 %v7457, 7
        %v7459 = vsub.s32 %v7456, %v7458
        %v7460 = vrot.slane %v7453, %v7459
        %v7461 = vcombine.low %v6973, %v6974
        %v7463 = vunpack.c.l.s4 1983009808
        %v7464 = vunpack.c.0.s8 %v7463
        %v7465 = vlaneseq
        %v7466 = vshrl.u32 %v7465, 7
        %v7467 = vsub.s32 %v7464, %v7466
        %v7468 = vrot.slane %v7461, %v7467
        %v7469 = vcombine.low %v7444, %v7452
        %v7471 = vunpack.c.l.s4 1934713408
        %v7472 = vunpack.c.0.s8 %v7471
        %v7473 = vlaneseq
        %v7474 = vshrl.u32 %v7473, 7
        %v7475 = vsub.s32 %v7472, %v7474
        %v7476 = vrot.slane %v7469, %v7475
        %v7477 = vcombine.low %v7460, %v7468
        %v7479 = vunpack.c.l.s4 1934713408
        %v7480 = vunpack.c.0.s8 %v7479
        %v7481 = vlaneseq
        %v7482 = vshrl.u32 %v7481, 7
        %v7483 = vsub.s32 %v7480, %v7482
        %v7484 = vrot.slane %v7477, %v7483
        %v7485 = vcombine.low %v7476, %v7484
        %v7486 = vcombine.high %v7476, %v7484
        %v7487 = vcombine.low %v7013, %v7020
        %v7489 = vunpack.c.l.s4 1983009808
        %v7490 = vunpack.c.0.s8 %v7489
        %v7491 = vlaneseq
        %v7492 = vshrl.u32 %v7491, 7
        %v7493 = vsub.s32 %v7490, %v7492
        %v7494 = vrot.slane %v7487, %v7493
        %v7495 = vcombine.low %v7037, %v7038
        %v7497 = vunpack.c.l.s4 1983009808
        %v7498 = vunpack.c.0.s8 %v7497
        %v7499 = vlaneseq
        %v7500 = vshrl.u32 %v7499, 7
        %v7501 = vsub.s32 %v7498, %v7500
        %v7502 = vrot.slane %v7495, %v7501
        %v7503 = vcombine.low %v7029, %v7036
        %v7505 = vunpack.c.l.s4 1983009808
        %v7506 = vunpack.c.0.s8 %v7505
        %v7507 = vlaneseq
        %v7508 = vshrl.u32 %v7507, 7
        %v7509 = vsub.s32 %v7506, %v7508
        %v7510 = vrot.slane %v7503, %v7509
        %v7511 = vcombine.low %v7039, %v7040
        %v7513 = vunpack.c.l.s4 1983009808
        %v7514 = vunpack.c.0.s8 %v7513
        %v7515 = vlaneseq
        %v7516 = vshrl.u32 %v7515, 7
        %v7517 = vsub.s32 %v7514, %v7516
        %v7518 = vrot.slane %v7511, %v7517
        %v7519 = vcombine.low %v7494, %v7502
        %v7521 = vunpack.c.l.s4 1934713408
        %v7522 = vunpack.c.0.s8 %v7521
        %v7523 = vlaneseq
        %v7524 = vshrl.u32 %v7523, 7
        %v7525 = vsub.s32 %v7522, %v7524
        %v7526 = vrot.slane %v7519, %v7525
        %v7527 = vcombine.low %v7510, %v7518
        %v7529 = vunpack.c.l.s4 1934713408
        %v7530 = vunpack.c.0.s8 %v7529
        %v7531 = vlaneseq
        %v7532 = vshrl.u32 %v7531, 7
        %v7533 = vsub.s32 %v7530, %v7532
        %v7534 = vrot.slane %v7527, %v7533
        %v7535 = vcombine.low %v7526, %v7534
        %v7536 = vcombine.high %v7526, %v7534
        %v7537 = vcombine.low %v7079, %v7086
        %v7539 = vunpack.c.l.s4 1983009808
        %v7540 = vunpack.c.0.s8 %v7539
        %v7541 = vlaneseq
        %v7542 = vshrl.u32 %v7541, 7
        %v7543 = vsub.s32 %v7540, %v7542
        %v7544 = vrot.slane %v7537, %v7543
        %v7545 = vcombine.low %v7103, %v7104
        %v7547 = vunpack.c.l.s4 1983009808
        %v7548 = vunpack.c.0.s8 %v7547
        %v7549 = vlaneseq
        %v7550 = vshrl.u32 %v7549, 7
        %v7551 = vsub.s32 %v7548, %v7550
        %v7552 = vrot.slane %v7545, %v7551
        %v7553 = vcombine.low %v7095, %v7102
        %v7555 = vunpack.c.l.s4 1983009808
        %v7556 = vunpack.c.0.s8 %v7555
        %v7557 = vlaneseq
        %v7558 = vshrl.u32 %v7557, 7
        %v7559 = vsub.s32 %v7556, %v7558
        %v7560 = vrot.slane %v7553, %v7559
        %v7561 = vcombine.low %v7105, %v7106
        %v7563 = vunpack.c.l.s4 1983009808
        %v7564 = vunpack.c.0.s8 %v7563
        %v7565 = vlaneseq
        %v7566 = vshrl.u32 %v7565, 7
        %v7567 = vsub.s32 %v7564, %v7566
        %v7568 = vrot.slane %v7561, %v7567
        %v7569 = vcombine.low %v7544, %v7552
        %v7571 = vunpack.c.l.s4 1934713408
        %v7572 = vunpack.c.0.s8 %v7571
        %v7573 = vlaneseq
        %v7574 = vshrl.u32 %v7573, 7
        %v7575 = vsub.s32 %v7572, %v7574
        %v7576 = vrot.slane %v7569, %v7575
        %v7577 = vcombine.low %v7560, %v7568
        %v7579 = vunpack.c.l.s4 1934713408
        %v7580 = vunpack.c.0.s8 %v7579
        %v7581 = vlaneseq
        %v7582 = vshrl.u32 %v7581, 7
        %v7583 = vsub.s32 %v7580, %v7582
        %v7584 = vrot.slane %v7577, %v7583
        %v7585 = vcombine.low %v7576, %v7584
        %v7586 = vcombine.high %v7576, %v7584
        %v7587 = vcombine.low %v7145, %v7152
        %v7589 = vunpack.c.l.s4 1983009808
        %v7590 = vunpack.c.0.s8 %v7589
        %v7591 = vlaneseq
        %v7592 = vshrl.u32 %v7591, 7
        %v7593 = vsub.s32 %v7590, %v7592
        %v7594 = vrot.slane %v7587, %v7593
        %v7595 = vcombine.low %v7169, %v7170
        %v7597 = vunpack.c.l.s4 1983009808
        %v7598 = vunpack.c.0.s8 %v7597
        %v7599 = vlaneseq
        %v7600 = vshrl.u32 %v7599, 7
        %v7601 = vsub.s32 %v7598, %v7600
        %v7602 = vrot.slane %v7595, %v7601
        %v7603 = vcombine.low %v7161, %v7168
        %v7605 = vunpack.c.l.s4 1983009808
        %v7606 = vunpack.c.0.s8 %v7605
        %v7607 = vlaneseq
        %v7608 = vshrl.u32 %v7607, 7
        %v7609 = vsub.s32 %v7606, %v7608
        %v7610 = vrot.slane %v7603, %v7609
        %v7611 = vcombine.low %v7171, %v7172
        %v7613 = vunpack.c.l.s4 1983009808
        %v7614 = vunpack.c.0.s8 %v7613
        %v7615 = vlaneseq
        %v7616 = vshrl.u32 %v7615, 7
        %v7617 = vsub.s32 %v7614, %v7616
        %v7618 = vrot.slane %v7611, %v7617
        %v7619 = vcombine.low %v7594, %v7602
        %v7621 = vunpack.c.l.s4 1934713408
        %v7622 = vunpack.c.0.s8 %v7621
        %v7623 = vlaneseq
        %v7624 = vshrl.u32 %v7623, 7
        %v7625 = vsub.s32 %v7622, %v7624
        %v7626 = vrot.slane %v7619, %v7625
        %v7627 = vcombine.low %v7610, %v7618
        %v7629 = vunpack.c.l.s4 1934713408
        %v7630 = vunpack.c.0.s8 %v7629
        %v7631 = vlaneseq
        %v7632 = vshrl.u32 %v7631, 7
        %v7633 = vsub.s32 %v7630, %v7632
        %v7634 = vrot.slane %v7627, %v7633
        %v7635 = vcombine.low %v7626, %v7634
        %v7636 = vcombine.high %v7626, %v7634
        %v7637 = vcombine.low %v7211, %v7218
        %v7639 = vunpack.c.l.s4 1983009808
        %v7640 = vunpack.c.0.s8 %v7639
        %v7641 = vlaneseq
        %v7642 = vshrl.u32 %v7641, 7
        %v7643 = vsub.s32 %v7640, %v7642
        %v7644 = vrot.slane %v7637, %v7643
        %v7645 = vcombine.low %v7235, %v7236
        %v7647 = vunpack.c.l.s4 1983009808
        %v7648 = vunpack.c.0.s8 %v7647
        %v7649 = vlaneseq
        %v7650 = vshrl.u32 %v7649, 7
        %v7651 = vsub.s32 %v7648, %v7650
        %v7652 = vrot.slane %v7645, %v7651
        %v7653 = vcombine.low %v7227, %v7234
        %v7655 = vunpack.c.l.s4 1983009808
        %v7656 = vunpack.c.0.s8 %v7655
        %v7657 = vlaneseq
        %v7658 = vshrl.u32 %v7657, 7
        %v7659 = vsub.s32 %v7656, %v7658
        %v7660 = vrot.slane %v7653, %v7659
        %v7661 = vcombine.low %v7237, %v7238
        %v7663 = vunpack.c.l.s4 1983009808
        %v7664 = vunpack.c.0.s8 %v7663
        %v7665 = vlaneseq
        %v7666 = vshrl.u32 %v7665, 7
        %v7667 = vsub.s32 %v7664, %v7666
        %v7668 = vrot.slane %v7661, %v7667
        %v7669 = vcombine.low %v7644, %v7652
        %v7671 = vunpack.c.l.s4 1934713408
        %v7672 = vunpack.c.0.s8 %v7671
        %v7673 = vlaneseq
        %v7674 = vshrl.u32 %v7673, 7
        %v7675 = vsub.s32 %v7672, %v7674
        %v7676 = vrot.slane %v7669, %v7675
        %v7677 = vcombine.low %v7660, %v7668
        %v7679 = vunpack.c.l.s4 1934713408
        %v7680 = vunpack.c.0.s8 %v7679
        %v7681 = vlaneseq
        %v7682 = vshrl.u32 %v7681, 7
        %v7683 = vsub.s32 %v7680, %v7682
        %v7684 = vrot.slane %v7677, %v7683
        %v7685 = vcombine.low %v7676, %v7684
        %v7686 = vcombine.high %v7676, %v7684
        %v7687 = vcombine.low %v7277, %v7284
        %v7689 = vunpack.c.l.s4 1983009808
        %v7690 = vunpack.c.0.s8 %v7689
        %v7691 = vlaneseq
        %v7692 = vshrl.u32 %v7691, 7
        %v7693 = vsub.s32 %v7690, %v7692
        %v7694 = vrot.slane %v7687, %v7693
        %v7695 = vcombine.low %v7301, %v7302
        %v7697 = vunpack.c.l.s4 1983009808
        %v7698 = vunpack.c.0.s8 %v7697
        %v7699 = vlaneseq
        %v7700 = vshrl.u32 %v7699, 7
        %v7701 = vsub.s32 %v7698, %v7700
        %v7702 = vrot.slane %v7695, %v7701
        %v7703 = vcombine.low %v7293, %v7300
        %v7705 = vunpack.c.l.s4 1983009808
        %v7706 = vunpack.c.0.s8 %v7705
        %v7707 = vlaneseq
        %v7708 = vshrl.u32 %v7707, 7
        %v7709 = vsub.s32 %v7706, %v7708
        %v7710 = vrot.slane %v7703, %v7709
        %v7711 = vcombine.low %v7303, %v7304
        %v7713 = vunpack.c.l.s4 1983009808
        %v7714 = vunpack.c.0.s8 %v7713
        %v7715 = vlaneseq
        %v7716 = vshrl.u32 %v7715, 7
        %v7717 = vsub.s32 %v7714, %v7716
        %v7718 = vrot.slane %v7711, %v7717
        %v7719 = vcombine.low %v7694, %v7702
        %v7721 = vunpack.c.l.s4 1934713408
        %v7722 = vunpack.c.0.s8 %v7721
        %v7723 = vlaneseq
        %v7724 = vshrl.u32 %v7723, 7
        %v7725 = vsub.s32 %v7722, %v7724
        %v7726 = vrot.slane %v7719, %v7725
        %v7727 = vcombine.low %v7710, %v7718
        %v7729 = vunpack.c.l.s4 1934713408
        %v7730 = vunpack.c.0.s8 %v7729
        %v7731 = vlaneseq
        %v7732 = vshrl.u32 %v7731, 7
        %v7733 = vsub.s32 %v7730, %v7732
        %v7734 = vrot.slane %v7727, %v7733
        %v7735 = vcombine.low %v7726, %v7734
        %v7736 = vcombine.high %v7726, %v7734
        %v7737 = vcombine.low %v7343, %v7350
        %v7739 = vunpack.c.l.s4 1983009808
        %v7740 = vunpack.c.0.s8 %v7739
        %v7741 = vlaneseq
        %v7742 = vshrl.u32 %v7741, 7
        %v7743 = vsub.s32 %v7740, %v7742
        %v7744 = vrot.slane %v7737, %v7743
        %v7745 = vcombine.low %v7367, %v7368
        %v7747 = vunpack.c.l.s4 1983009808
        %v7748 = vunpack.c.0.s8 %v7747
        %v7749 = vlaneseq
        %v7750 = vshrl.u32 %v7749, 7
        %v7751 = vsub.s32 %v7748, %v7750
        %v7752 = vrot.slane %v7745, %v7751
        %v7753 = vcombine.low %v7359, %v7366
        %v7755 = vunpack.c.l.s4 1983009808
        %v7756 = vunpack.c.0.s8 %v7755
        %v7757 = vlaneseq
        %v7758 = vshrl.u32 %v7757, 7
        %v7759 = vsub.s32 %v7756, %v7758
        %v7760 = vrot.slane %v7753, %v7759
        %v7761 = vcombine.low %v7369, %v7370
        %v7763 = vunpack.c.l.s4 1983009808
        %v7764 = vunpack.c.0.s8 %v7763
        %v7765 = vlaneseq
        %v7766 = vshrl.u32 %v7765, 7
        %v7767 = vsub.s32 %v7764, %v7766
        %v7768 = vrot.slane %v7761, %v7767
        %v7769 = vcombine.low %v7744, %v7752
        %v7771 = vunpack.c.l.s4 1934713408
        %v7772 = vunpack.c.0.s8 %v7771
        %v7773 = vlaneseq
        %v7774 = vshrl.u32 %v7773, 7
        %v7775 = vsub.s32 %v7772, %v7774
        %v7776 = vrot.slane %v7769, %v7775
        %v7777 = vcombine.low %v7760, %v7768
        %v7779 = vunpack.c.l.s4 1934713408
        %v7780 = vunpack.c.0.s8 %v7779
        %v7781 = vlaneseq
        %v7782 = vshrl.u32 %v7781, 7
        %v7783 = vsub.s32 %v7780, %v7782
        %v7784 = vrot.slane %v7777, %v7783
        %v7785 = vcombine.low %v7776, %v7784
        %v7786 = vcombine.high %v7776, %v7784
        %v7787 = vcombine.low %v7409, %v7416
        %v7789 = vunpack.c.l.s4 1983009808
        %v7790 = vunpack.c.0.s8 %v7789
        %v7791 = vlaneseq
        %v7792 = vshrl.u32 %v7791, 7
        %v7793 = vsub.s32 %v7790, %v7792
        %v7794 = vrot.slane %v7787, %v7793
        %v7795 = vcombine.low %v7433, %v7434
        %v7797 = vunpack.c.l.s4 1983009808
        %v7798 = vunpack.c.0.s8 %v7797
        %v7799 = vlaneseq
        %v7800 = vshrl.u32 %v7799, 7
        %v7801 = vsub.s32 %v7798, %v7800
        %v7802 = vrot.slane %v7795, %v7801
        %v7803 = vcombine.low %v7425, %v7432
        %v7805 = vunpack.c.l.s4 1983009808
        %v7806 = vunpack.c.0.s8 %v7805
        %v7807 = vlaneseq
        %v7808 = vshrl.u32 %v7807, 7
        %v7809 = vsub.s32 %v7806, %v7808
        %v7810 = vrot.slane %v7803, %v7809
        %v7811 = vcombine.low %v7435, %v7436
        %v7813 = vunpack.c.l.s4 1983009808
        %v7814 = vunpack.c.0.s8 %v7813
        %v7815 = vlaneseq
        %v7816 = vshrl.u32 %v7815, 7
        %v7817 = vsub.s32 %v7814, %v7816
        %v7818 = vrot.slane %v7811, %v7817
        %v7819 = vcombine.low %v7794, %v7802
        %v7821 = vunpack.c.l.s4 1934713408
        %v7822 = vunpack.c.0.s8 %v7821
        %v7823 = vlaneseq
        %v7824 = vshrl.u32 %v7823, 7
        %v7825 = vsub.s32 %v7822, %v7824
        %v7826 = vrot.slane %v7819, %v7825
        %v7827 = vcombine.low %v7810, %v7818
        %v7829 = vunpack.c.l.s4 1934713408
        %v7830 = vunpack.c.0.s8 %v7829
        %v7831 = vlaneseq
        %v7832 = vshrl.u32 %v7831, 7
        %v7833 = vsub.s32 %v7830, %v7832
        %v7834 = vrot.slane %v7827, %v7833
        %v7835 = vcombine.low %v7826, %v7834
        %v7836 = vcombine.high %v7826, %v7834
        %v7837 = vpack.c.bf16 %v7535, %v7485
        %v7838 = vpack.c.bf16 %v7536, %v7486
        %v7839 = vpack.c.bf16 %v7635, %v7585
        %v7840 = vpack.c.bf16 %v7636, %v7586
        %v7841 = vpack.c.bf16 %v7735, %v7685
        %v7842 = vpack.c.bf16 %v7736, %v7686
        %v7843 = vpack.c.bf16 %v7835, %v7785
        %v7844 = vpack.c.bf16 %v7836, %v7786
        %v7845 = vld [vmem:[#allocation15] sm:$0xff]
        %v7846 = vld [vmem:[#allocation15 + $0x8] sm:$0xff]
        %v7847 = vld [vmem:[#allocation15 + $0x10] sm:$0xff]
        %v7848 = vld [vmem:[#allocation15 + $0x18] sm:$0xff]
        %v7849 = vld [vmem:[#allocation15 + $0x20] sm:$0xff]
        %v7850 = vld [vmem:[#allocation15 + $0x28] sm:$0xff]
        %v7851 = vld [vmem:[#allocation15 + $0x30] sm:$0xff]
        %v7852 = vld [vmem:[#allocation15 + $0x38] sm:$0xff]
        %v7853 = vld [vmem:[#allocation15 + $0x40] sm:$0xff]
        %v7854 = vld [vmem:[#allocation15 + $0x48] sm:$0xff]
        %v7855 = vld [vmem:[#allocation15 + $0x50] sm:$0xff]
        %v7856 = vld [vmem:[#allocation15 + $0x58] sm:$0xff]
        %v7857 = vld [vmem:[#allocation15 + $0x60] sm:$0xff]
        %v7858 = vld [vmem:[#allocation15 + $0x68] sm:$0xff]
        %v7859 = vld [vmem:[#allocation15 + $0x70] sm:$0xff]
        %v7860 = vld [vmem:[#allocation15 + $0x78] sm:$0xff]
        %v7861 = vld [vmem:[#allocation15 + $0x80] sm:$0xff]
        %v7862 = vld [vmem:[#allocation15 + $0x88] sm:$0xff]
        %v7863 = vld [vmem:[#allocation15 + $0x90] sm:$0xff]
        %v7864 = vld [vmem:[#allocation15 + $0x98] sm:$0xff]
        %v7865 = vld [vmem:[#allocation15 + $0xa0] sm:$0xff]
        %v7866 = vld [vmem:[#allocation15 + $0xa8] sm:$0xff]
        %v7867 = vld [vmem:[#allocation15 + $0xb0] sm:$0xff]
        %v7868 = vld [vmem:[#allocation15 + $0xb8] sm:$0xff]
        %v7869 = vld [vmem:[#allocation15 + $0xc0] sm:$0xff]
        %v7870 = vld [vmem:[#allocation15 + $0xc8] sm:$0xff]
        %v7871 = vld [vmem:[#allocation15 + $0xd0] sm:$0xff]
        %v7872 = vld [vmem:[#allocation15 + $0xd8] sm:$0xff]
        %v7873 = vld [vmem:[#allocation15 + $0xe0] sm:$0xff]
        %v7874 = vld [vmem:[#allocation15 + $0xe8] sm:$0xff]
        %v7875 = vld [vmem:[#allocation15 + $0xf0] sm:$0xff]
        %v7876 = vld [vmem:[#allocation15 + $0xf8] sm:$0xff]
        %v7909 = vunpack.c.l.b16 %v7845
        %v7910 = vunpack.c.h.b16 %v7845
        %v7911 = vunpack.c.l.b16 %v7846
        %v7912 = vunpack.c.h.b16 %v7846
        %v7913 = vunpack.c.l.b16 %v7847
        %v7914 = vunpack.c.h.b16 %v7847
        %v7915 = vunpack.c.l.b16 %v7848
        %v7916 = vunpack.c.h.b16 %v7848
        %v7917 = vunpack.c.l.b16 %v7849
        %v7918 = vunpack.c.h.b16 %v7849
        %v7919 = vunpack.c.l.b16 %v7850
        %v7920 = vunpack.c.h.b16 %v7850
        %v7921 = vunpack.c.l.b16 %v7851
        %v7922 = vunpack.c.h.b16 %v7851
        %v7923 = vunpack.c.l.b16 %v7852
        %v7924 = vunpack.c.h.b16 %v7852
        %v7925 = vunpack.c.l.b16 %v7853
        %v7926 = vunpack.c.h.b16 %v7853
        %v7927 = vunpack.c.l.b16 %v7854
        %v7928 = vunpack.c.h.b16 %v7854
        %v7929 = vunpack.c.l.b16 %v7855
        %v7930 = vunpack.c.h.b16 %v7855
        %v7931 = vunpack.c.l.b16 %v7856
        %v7932 = vunpack.c.h.b16 %v7856
        %v7933 = vunpack.c.l.b16 %v7857
        %v7934 = vunpack.c.h.b16 %v7857
        %v7935 = vunpack.c.l.b16 %v7858
        %v7936 = vunpack.c.h.b16 %v7858
        %v7937 = vunpack.c.l.b16 %v7859
        %v7938 = vunpack.c.h.b16 %v7859
        %v7939 = vunpack.c.l.b16 %v7860
        %v7940 = vunpack.c.h.b16 %v7860
        %v7941 = vunpack.c.l.b16 %v7861
        %v7942 = vunpack.c.h.b16 %v7861
        %v7943 = vunpack.c.l.b16 %v7862
        %v7944 = vunpack.c.h.b16 %v7862
        %v7945 = vunpack.c.l.b16 %v7863
        %v7946 = vunpack.c.h.b16 %v7863
        %v7947 = vunpack.c.l.b16 %v7864
        %v7948 = vunpack.c.h.b16 %v7864
        %v7949 = vunpack.c.l.b16 %v7865
        %v7950 = vunpack.c.h.b16 %v7865
        %v7951 = vunpack.c.l.b16 %v7866
        %v7952 = vunpack.c.h.b16 %v7866
        %v7953 = vunpack.c.l.b16 %v7867
        %v7954 = vunpack.c.h.b16 %v7867
        %v7955 = vunpack.c.l.b16 %v7868
        %v7956 = vunpack.c.h.b16 %v7868
        %v7957 = vunpack.c.l.b16 %v7869
        %v7958 = vunpack.c.h.b16 %v7869
        %v7959 = vunpack.c.l.b16 %v7870
        %v7960 = vunpack.c.h.b16 %v7870
        %v7961 = vunpack.c.l.b16 %v7871
        %v7962 = vunpack.c.h.b16 %v7871
        %v7963 = vunpack.c.l.b16 %v7872
        %v7964 = vunpack.c.h.b16 %v7872
        %v7965 = vunpack.c.l.b16 %v7873
        %v7966 = vunpack.c.h.b16 %v7873
        %v7967 = vunpack.c.l.b16 %v7874
        %v7968 = vunpack.c.h.b16 %v7874
        %v7969 = vunpack.c.l.b16 %v7875
        %v7970 = vunpack.c.h.b16 %v7875
        %v7971 = vunpack.c.l.b16 %v7876
        %v7972 = vunpack.c.h.b16 %v7876
        %v7973 = vpack.c.b16 %v7911, %v7909
        %v7974 = vpack.c.b16 %v7912, %v7910
        %v7975 = vpack.c.b16 %v7915, %v7913
        %v7976 = vpack.c.b16 %v7916, %v7914
        %v7977 = vpack.c.b16 %v7919, %v7917
        %v7978 = vpack.c.b16 %v7920, %v7918
        %v7979 = vpack.c.b16 %v7923, %v7921
        %v7980 = vpack.c.b16 %v7924, %v7922
        %v7981 = vpack.c.b16 %v7927, %v7925
        %v7982 = vpack.c.b16 %v7928, %v7926
        %v7983 = vpack.c.b16 %v7931, %v7929
        %v7984 = vpack.c.b16 %v7932, %v7930
        %v7985 = vpack.c.b16 %v7935, %v7933
        %v7986 = vpack.c.b16 %v7936, %v7934
        %v7987 = vpack.c.b16 %v7939, %v7937
        %v7988 = vpack.c.b16 %v7940, %v7938
        %v7989 = vpack.c.b16 %v7943, %v7941
        %v7990 = vpack.c.b16 %v7944, %v7942
        %v7991 = vpack.c.b16 %v7947, %v7945
        %v7992 = vpack.c.b16 %v7948, %v7946
        %v7993 = vpack.c.b16 %v7951, %v7949
        %v7994 = vpack.c.b16 %v7952, %v7950
        %v7995 = vpack.c.b16 %v7955, %v7953
        %v7996 = vpack.c.b16 %v7956, %v7954
        %v7997 = vpack.c.b16 %v7959, %v7957
        %v7998 = vpack.c.b16 %v7960, %v7958
        %v7999 = vpack.c.b16 %v7963, %v7961
        %v8000 = vpack.c.b16 %v7964, %v7962
        %v8001 = vpack.c.b16 %v7967, %v7965
        %v8002 = vpack.c.b16 %v7968, %v7966
        %v8003 = vpack.c.b16 %v7971, %v7969
        %v8004 = vpack.c.b16 %v7972, %v7970
        %8037 = vmatprep.subr.bf16.mxu0 %v7974
        %8038 = vmatpush1.bf16.msra.mxu0 %v7973
        %8039 = vmatprep.subr.bf16.mxu0 %v7976
        %8040 = vmatpush1.bf16.msra.mxu0 %v7975
        %8041 = vmatprep.subr.bf16.mxu0 %v7978
        %8042 = vmatpush1.bf16.msra.mxu0 %v7977
        %8043 = vmatprep.subr.bf16.mxu0 %v7980
        %8044 = vmatpush1.bf16.msra.mxu0 %v7979
        %8045 = vmatprep.subr.bf16.mxu0 %v7982
        %8046 = vmatpush1.bf16.msra.mxu0 %v7981
        %8047 = vmatprep.subr.bf16.mxu0 %v7984
        %8048 = vmatpush1.bf16.msra.mxu0 %v7983
        %8049 = vmatprep.subr.bf16.mxu0 %v7986
        %8050 = vmatpush1.bf16.msra.mxu0 %v7985
        %8051 = vmatprep.subr.bf16.mxu0 %v7988
        %8052 = vmatpush1.bf16.msra.mxu0 %v7987
        %8053 = vmatprep.subr.bf16.mxu0 %v7990
        %8054 = vmatpush1.bf16.msra.mxu0 %v7989
        %8055 = vmatprep.subr.bf16.mxu0 %v7992
        %8056 = vmatpush1.bf16.msra.mxu0 %v7991
        %8057 = vmatprep.subr.bf16.mxu0 %v7994
        %8058 = vmatpush1.bf16.msra.mxu0 %v7993
        %8059 = vmatprep.subr.bf16.mxu0 %v7996
        %8060 = vmatpush1.bf16.msra.mxu0 %v7995
        %8061 = vmatprep.subr.bf16.mxu0 %v7998
        %8062 = vmatpush1.bf16.msra.mxu0 %v7997
        %8063 = vmatprep.subr.bf16.mxu0 %v8000
        %8064 = vmatpush1.bf16.msra.mxu0 %v7999
        %8065 = vmatprep.subr.bf16.mxu0 %v8002
        %8066 = vmatpush1.bf16.msra.mxu0 %v8001
        %8067 = vmatprep.subr.bf16.mxu0 %v8004
        %8068 = vmatpush1.bf16.msra.mxu0 %v8003
        %8069 = vmatprep.mubr.bf16.mxu0 %v7838
        %8070 = vmatmul.mubr.bf16.gmra.mrb[0].mxu0 %v7837
        %v8071 = vpop.f32.mrb[0].mxu0
        %v8072 = vadd.f32 0.0, %v8071
        %v8073 = vpop.f32.mrb[0].mxu0
        %v8074 = vadd.f32 0.0, %v8073
        %v8075 = vpop.f32.mrb[0].mxu0
        %v8076 = vadd.f32 0.0, %v8075
        %v8077 = vpop.f32.mrb[0].mxu0
        %v8078 = vadd.f32 0.0, %v8077
        %8079 = vmatprep.mubr.bf16.mxu0 %v7840
        %8080 = vmatmul.mubr.bf16.gmra.mrb[0].mxu0 %v7839
        %v8081 = vpop.f32.mrb[0].mxu0
        %v8082 = vadd.f32 0.0, %v8081
        %v8083 = vpop.f32.mrb[0].mxu0
        %v8084 = vadd.f32 0.0, %v8083
        %v8085 = vpop.f32.mrb[0].mxu0
        %v8086 = vadd.f32 0.0, %v8085
        %v8087 = vpop.f32.mrb[0].mxu0
        %v8088 = vadd.f32 0.0, %v8087
        %8089 = vmatprep.mubr.bf16.mxu0 %v7842
        %8090 = vmatmul.mubr.bf16.gmra.mrb[0].mxu0 %v7841
        %v8091 = vpop.f32.mrb[0].mxu0
        %v8092 = vadd.f32 0.0, %v8091
        %v8093 = vpop.f32.mrb[0].mxu0
        %v8094 = vadd.f32 0.0, %v8093
        %v8095 = vpop.f32.mrb[0].mxu0
        %v8096 = vadd.f32 0.0, %v8095
        %v8097 = vpop.f32.mrb[0].mxu0
        %v8098 = vadd.f32 0.0, %v8097
        %8099 = vmatprep.mubr.bf16.mxu0 %v7844
        %8100 = vmatmul.mubr.bf16.gmra.mrb[0].mxu0 %v7843
        %v8101 = vpop.f32.mrb[0].mxu0
        %v8102 = vadd.f32 0.0, %v8101
        %v8103 = vpop.f32.mrb[0].mxu0
        %v8104 = vadd.f32 0.0, %v8103
        %v8105 = vpop.f32.mrb[0].mxu0
        %v8106 = vadd.f32 0.0, %v8105
        %v8107 = vpop.f32.mrb[0].mxu0
        %v8108 = vadd.f32 0.0, %v8107
        %8109 = vdwg.mxu0
        %v8110 = vadd.f32 %v5190, %v8072
        %v8111 = vadd.f32 %v5191, %v8074
        %v8112 = vadd.f32 %v5192, %v8076
        %v8113 = vadd.f32 %v5193, %v8078
        %v8114 = vadd.f32 %v5194, %v8082
        %v8115 = vadd.f32 %v5195, %v8084
        %v8116 = vadd.f32 %v5196, %v8086
        %v8117 = vadd.f32 %v5197, %v8088
        %v8118 = vadd.f32 %v5198, %v8092
        %v8119 = vadd.f32 %v5199, %v8094
        %v8120 = vadd.f32 %v5200, %v8096
        %v8121 = vadd.f32 %v5201, %v8098
        %v8122 = vadd.f32 %v5202, %v8102
        %v8123 = vadd.f32 %v5203, %v8104
        %v8124 = vadd.f32 %v5204, %v8106
        %v8125 = vadd.f32 %v5205, %v8108
        %v8126 = vadd.f32 %v8110, %v8111
        %8127 = vadd.xlane.f32.xlu0 %v8126
        %v8128 = vpop.xlane.xlu0 %8127
        %v8129 = vadd.f32 %v8112, %v8113
        %8130 = vadd.xlane.f32.xlu0 %v8129
        %v8131 = vpop.xlane.xlu0 %8130
        %v8132 = vadd.f32 %v8114, %v8115
        %8133 = vadd.xlane.f32.xlu0 %v8132
        %v8134 = vpop.xlane.xlu0 %8133
        %v8135 = vadd.f32 %v8116, %v8117
        %8136 = vadd.xlane.f32.xlu0 %v8135
        %v8137 = vpop.xlane.xlu0 %8136
        %v8138 = vadd.f32 %v8118, %v8119
        %8139 = vadd.xlane.f32.xlu0 %v8138
        %v8140 = vpop.xlane.xlu0 %8139
        %v8141 = vadd.f32 %v8120, %v8121
        %8142 = vadd.xlane.f32.xlu0 %v8141
        %v8143 = vpop.xlane.xlu0 %8142
        %v8144 = vadd.f32 %v8122, %v8123
        %8145 = vadd.xlane.f32.xlu0 %v8144
        %v8146 = vpop.xlane.xlu0 %8145
        %v8147 = vadd.f32 %v8124, %v8125
        %8148 = vadd.xlane.f32.xlu0 %v8147
        %v8149 = vpop.xlane.xlu0 %8148
        %v8150 = vrcp.pop 256.0
        %v8151 = vmul.f32 %v8128, %v8150
        %v8152 = vmul.f32 %v8131, %v8150
        %v8153 = vmul.f32 %v8134, %v8150
        %v8154 = vmul.f32 %v8137, %v8150
        %v8155 = vmul.f32 %v8140, %v8150
        %v8156 = vmul.f32 %v8143, %v8150
        %v8157 = vmul.f32 %v8146, %v8150
        %v8158 = vmul.f32 %v8149, %v8150
        %v8159 = vsub.f32 %v8110, %v8151
        %v8160 = vsub.f32 %v8111, %v8151
        %v8161 = vsub.f32 %v8112, %v8152
        %v8162 = vsub.f32 %v8113, %v8152
        %v8163 = vsub.f32 %v8114, %v8153
        %v8164 = vsub.f32 %v8115, %v8153
        %v8165 = vsub.f32 %v8116, %v8154
        %v8166 = vsub.f32 %v8117, %v8154
        %v8167 = vsub.f32 %v8118, %v8155
        %v8168 = vsub.f32 %v8119, %v8155
        %v8169 = vsub.f32 %v8120, %v8156
        %v8170 = vsub.f32 %v8121, %v8156
        %v8171 = vsub.f32 %v8122, %v8157
        %v8172 = vsub.f32 %v8123, %v8157
        %v8173 = vsub.f32 %v8124, %v8158
        %v8174 = vsub.f32 %v8125, %v8158
        %v8175 = vmul.f32 %v8159, %v8159
        %v8176 = vmul.f32 %v8160, %v8160
        %v8177 = vmul.f32 %v8161, %v8161
        %v8178 = vmul.f32 %v8162, %v8162
        %v8179 = vmul.f32 %v8163, %v8163
        %v8180 = vmul.f32 %v8164, %v8164
        %v8181 = vmul.f32 %v8165, %v8165
        %v8182 = vmul.f32 %v8166, %v8166
        %v8183 = vmul.f32 %v8167, %v8167
        %v8184 = vmul.f32 %v8168, %v8168
        %v8185 = vmul.f32 %v8169, %v8169
        %v8186 = vmul.f32 %v8170, %v8170
        %v8187 = vmul.f32 %v8171, %v8171
        %v8188 = vmul.f32 %v8172, %v8172
        %v8189 = vmul.f32 %v8173, %v8173
        %v8190 = vmul.f32 %v8174, %v8174
        %v8191 = vadd.f32 %v8175, %v8176
        %8192 = vadd.xlane.f32.xlu0 %v8191
        %v8193 = vpop.xlane.xlu0 %8192
        %v8194 = vadd.f32 %v8177, %v8178
        %8195 = vadd.xlane.f32.xlu0 %v8194
        %v8196 = vpop.xlane.xlu0 %8195
        %v8197 = vadd.f32 %v8179, %v8180
        %8198 = vadd.xlane.f32.xlu0 %v8197
        %v8199 = vpop.xlane.xlu0 %8198
        %v8200 = vadd.f32 %v8181, %v8182
        %8201 = vadd.xlane.f32.xlu0 %v8200
        %v8202 = vpop.xlane.xlu0 %8201
        %v8203 = vadd.f32 %v8183, %v8184
        %8204 = vadd.xlane.f32.xlu0 %v8203
        %v8205 = vpop.xlane.xlu0 %8204
        %v8206 = vadd.f32 %v8185, %v8186
        %8207 = vadd.xlane.f32.xlu0 %v8206
        %v8208 = vpop.xlane.xlu0 %8207
        %v8209 = vadd.f32 %v8187, %v8188
        %8210 = vadd.xlane.f32.xlu0 %v8209
        %v8211 = vpop.xlane.xlu0 %8210
        %v8212 = vadd.f32 %v8189, %v8190
        %8213 = vadd.xlane.f32.xlu0 %v8212
        %v8214 = vpop.xlane.xlu0 %8213
        %v8215 = vmul.f32 %v8193, %v8150
        %v8216 = vmul.f32 %v8196, %v8150
        %v8217 = vmul.f32 %v8199, %v8150
        %v8218 = vmul.f32 %v8202, %v8150
        %v8219 = vmul.f32 %v8205, %v8150
        %v8220 = vmul.f32 %v8208, %v8150
        %v8221 = vmul.f32 %v8211, %v8150
        %v8222 = vmul.f32 %v8214, %v8150
        %v8223 = vadd.f32 %v8215, 1e-05
        %v8224 = vadd.f32 %v8216, 1e-05
        %v8225 = vadd.f32 %v8217, 1e-05
        %v8226 = vadd.f32 %v8218, 1e-05
        %v8227 = vadd.f32 %v8219, 1e-05
        %v8228 = vadd.f32 %v8220, 1e-05
        %v8229 = vadd.f32 %v8221, 1e-05
        %v8230 = vadd.f32 %v8222, 1e-05
        %v8231 = vrsqrt.pop %v8223
        %v8232 = vrsqrt.pop %v8224
        %v8233 = vrsqrt.pop %v8225
        %v8234 = vrsqrt.pop %v8226
        %v8235 = vrsqrt.pop %v8227
        %v8236 = vrsqrt.pop %v8228
        %v8237 = vrsqrt.pop %v8229
        %v8238 = vrsqrt.pop %v8230
        %v8239 = vmul.f32 %v8159, %v8231
        %v8240 = vmul.f32 %v8160, %v8231
        %v8241 = vmul.f32 %v8161, %v8232
        %v8242 = vmul.f32 %v8162, %v8232
        %v8243 = vmul.f32 %v8163, %v8233
        %v8244 = vmul.f32 %v8164, %v8233
        %v8245 = vmul.f32 %v8165, %v8234
        %v8246 = vmul.f32 %v8166, %v8234
        %v8247 = vmul.f32 %v8167, %v8235
        %v8248 = vmul.f32 %v8168, %v8235
        %v8249 = vmul.f32 %v8169, %v8236
        %v8250 = vmul.f32 %v8170, %v8236
        %v8251 = vmul.f32 %v8171, %v8237
        %v8252 = vmul.f32 %v8172, %v8237
        %v8253 = vmul.f32 %v8173, %v8238
        %v8254 = vmul.f32 %v8174, %v8238
        %v8255 = vld [vmem:[%s7] sm:$0x3]
        %v8257 = vlaneseq
        %v8258 = vshrl.u32 %v8257, 7
        %v8259 = vsub.s32 0, %v8258
        %v8260 = vrot.slane %v8255, %v8259
        %v8261 = vlaneseq
        %v8262 = vshrl.u32 %v8261, 7
        %v8263 = vsub.s32 1, %v8262
        %v8264 = vrot.slane %v8255, %v8263
        %v8267 = vmul.f32 %v8239, %v8260
        %v8268 = vmul.f32 %v8240, %v8264
        %v8269 = vmul.f32 %v8241, %v8260
        %v8270 = vmul.f32 %v8242, %v8264
        %v8271 = vmul.f32 %v8243, %v8260
        %v8272 = vmul.f32 %v8244, %v8264
        %v8273 = vmul.f32 %v8245, %v8260
        %v8274 = vmul.f32 %v8246, %v8264
        %v8275 = vmul.f32 %v8247, %v8260
        %v8276 = vmul.f32 %v8248, %v8264
        %v8277 = vmul.f32 %v8249, %v8260
        %v8278 = vmul.f32 %v8250, %v8264
        %v8279 = vmul.f32 %v8251, %v8260
        %v8280 = vmul.f32 %v8252, %v8264
        %v8281 = vmul.f32 %v8253, %v8260
        %v8282 = vmul.f32 %v8254, %v8264
        %v8283 = vld [vmem:[%s8] sm:$0x3]
        %v8285 = vlaneseq
        %v8286 = vshrl.u32 %v8285, 7
        %v8287 = vsub.s32 0, %v8286
        %v8288 = vrot.slane %v8283, %v8287
        %v8289 = vlaneseq
        %v8290 = vshrl.u32 %v8289, 7
        %v8291 = vsub.s32 1, %v8290
        %v8292 = vrot.slane %v8283, %v8291
        %v8295 = vadd.f32 %v8267, %v8288
        %v8296 = vadd.f32 %v8268, %v8292
        %v8297 = vadd.f32 %v8269, %v8288
        %v8298 = vadd.f32 %v8270, %v8292
        %v8299 = vadd.f32 %v8271, %v8288
        %v8300 = vadd.f32 %v8272, %v8292
        %v8301 = vadd.f32 %v8273, %v8288
        %v8302 = vadd.f32 %v8274, %v8292
        %v8303 = vadd.f32 %v8275, %v8288
        %v8304 = vadd.f32 %v8276, %v8292
        %v8305 = vadd.f32 %v8277, %v8288
        %v8306 = vadd.f32 %v8278, %v8292
        %v8307 = vadd.f32 %v8279, %v8288
        %v8308 = vadd.f32 %v8280, %v8292
        %v8309 = vadd.f32 %v8281, %v8288
        %v8310 = vadd.f32 %v8282, %v8292
        %v8311 = vpack.c.bf16 %v8297, %v8295
        %v8312 = vpack.c.bf16 %v8298, %v8296
        %v8313 = vpack.c.bf16 %v8301, %v8299
        %v8314 = vpack.c.bf16 %v8302, %v8300
        %v8315 = vpack.c.bf16 %v8305, %v8303
        %v8316 = vpack.c.bf16 %v8306, %v8304
        %v8317 = vpack.c.bf16 %v8309, %v8307
        %v8318 = vpack.c.bf16 %v8310, %v8308
        %v8319 = vld [vmem:[#allocation16] sm:$0xff]
        %v8320 = vld [vmem:[#allocation16 + $0x8] sm:$0xff]
        %v8321 = vld [vmem:[#allocation16 + $0x10] sm:$0xff]
        %v8322 = vld [vmem:[#allocation16 + $0x18] sm:$0xff]
        %v8323 = vld [vmem:[#allocation16 + $0x20] sm:$0xff]
        %v8324 = vld [vmem:[#allocation16 + $0x28] sm:$0xff]
        %v8325 = vld [vmem:[#allocation16 + $0x30] sm:$0xff]
        %v8326 = vld [vmem:[#allocation16 + $0x38] sm:$0xff]
        %v8327 = vld [vmem:[#allocation16 + $0x40] sm:$0xff]
        %v8328 = vld [vmem:[#allocation16 + $0x48] sm:$0xff]
        %v8329 = vld [vmem:[#allocation16 + $0x50] sm:$0xff]
        %v8330 = vld [vmem:[#allocation16 + $0x58] sm:$0xff]
        %v8331 = vld [vmem:[#allocation16 + $0x60] sm:$0xff]
        %v8332 = vld [vmem:[#allocation16 + $0x68] sm:$0xff]
        %v8333 = vld [vmem:[#allocation16 + $0x70] sm:$0xff]
        %v8334 = vld [vmem:[#allocation16 + $0x78] sm:$0xff]
        %v8335 = vld [vmem:[#allocation16 + $0x80] sm:$0xff]
        %v8336 = vld [vmem:[#allocation16 + $0x88] sm:$0xff]
        %v8337 = vld [vmem:[#allocation16 + $0x90] sm:$0xff]
        %v8338 = vld [vmem:[#allocation16 + $0x98] sm:$0xff]
        %v8339 = vld [vmem:[#allocation16 + $0xa0] sm:$0xff]
        %v8340 = vld [vmem:[#allocation16 + $0xa8] sm:$0xff]
        %v8341 = vld [vmem:[#allocation16 + $0xb0] sm:$0xff]
        %v8342 = vld [vmem:[#allocation16 + $0xb8] sm:$0xff]
        %v8343 = vld [vmem:[#allocation16 + $0xc0] sm:$0xff]
        %v8344 = vld [vmem:[#allocation16 + $0xc8] sm:$0xff]
        %v8345 = vld [vmem:[#allocation16 + $0xd0] sm:$0xff]
        %v8346 = vld [vmem:[#allocation16 + $0xd8] sm:$0xff]
        %v8347 = vld [vmem:[#allocation16 + $0xe0] sm:$0xff]
        %v8348 = vld [vmem:[#allocation16 + $0xe8] sm:$0xff]
        %v8349 = vld [vmem:[#allocation16 + $0xf0] sm:$0xff]
        %v8350 = vld [vmem:[#allocation16 + $0xf8] sm:$0xff]
        %v8351 = vld [vmem:[#allocation16 + $0x100] sm:$0xff]
        %v8352 = vld [vmem:[#allocation16 + $0x108] sm:$0xff]
        %v8353 = vld [vmem:[#allocation16 + $0x110] sm:$0xff]
        %v8354 = vld [vmem:[#allocation16 + $0x118] sm:$0xff]
        %v8355 = vld [vmem:[#allocation16 + $0x120] sm:$0xff]
        %v8356 = vld [vmem:[#allocation16 + $0x128] sm:$0xff]
        %v8357 = vld [vmem:[#allocation16 + $0x130] sm:$0xff]
        %v8358 = vld [vmem:[#allocation16 + $0x138] sm:$0xff]
        %v8359 = vld [vmem:[#allocation16 + $0x140] sm:$0xff]
        %v8360 = vld [vmem:[#allocation16 + $0x148] sm:$0xff]
        %v8361 = vld [vmem:[#allocation16 + $0x150] sm:$0xff]
        %v8362 = vld [vmem:[#allocation16 + $0x158] sm:$0xff]
        %v8363 = vld [vmem:[#allocation16 + $0x160] sm:$0xff]
        %v8364 = vld [vmem:[#allocation16 + $0x168] sm:$0xff]
        %v8365 = vld [vmem:[#allocation16 + $0x170] sm:$0xff]
        %v8366 = vld [vmem:[#allocation16 + $0x178] sm:$0xff]
        %v8367 = vld [vmem:[#allocation16 + $0x180] sm:$0xff]
        %v8368 = vld [vmem:[#allocation16 + $0x188] sm:$0xff]
        %v8369 = vld [vmem:[#allocation16 + $0x190] sm:$0xff]
        %v8370 = vld [vmem:[#allocation16 + $0x198] sm:$0xff]
        %v8371 = vld [vmem:[#allocation16 + $0x1a0] sm:$0xff]
        %v8372 = vld [vmem:[#allocation16 + $0x1a8] sm:$0xff]
        %v8373 = vld [vmem:[#allocation16 + $0x1b0] sm:$0xff]
        %v8374 = vld [vmem:[#allocation16 + $0x1b8] sm:$0xff]
        %v8375 = vld [vmem:[#allocation16 + $0x1c0] sm:$0xff]
        %v8376 = vld [vmem:[#allocation16 + $0x1c8] sm:$0xff]
        %v8377 = vld [vmem:[#allocation16 + $0x1d0] sm:$0xff]
        %v8378 = vld [vmem:[#allocation16 + $0x1d8] sm:$0xff]
        %v8379 = vld [vmem:[#allocation16 + $0x1e0] sm:$0xff]
        %v8380 = vld [vmem:[#allocation16 + $0x1e8] sm:$0xff]
        %v8381 = vld [vmem:[#allocation16 + $0x1f0] sm:$0xff]
        %v8382 = vld [vmem:[#allocation16 + $0x1f8] sm:$0xff]
        %v8383 = vld [vmem:[#allocation16 + $0x200] sm:$0xff]
        %v8384 = vld [vmem:[#allocation16 + $0x208] sm:$0xff]
        %v8385 = vld [vmem:[#allocation16 + $0x210] sm:$0xff]
        %v8386 = vld [vmem:[#allocation16 + $0x218] sm:$0xff]
        %v8387 = vld [vmem:[#allocation16 + $0x220] sm:$0xff]
        %v8388 = vld [vmem:[#allocation16 + $0x228] sm:$0xff]
        %v8389 = vld [vmem:[#allocation16 + $0x230] sm:$0xff]
        %v8390 = vld [vmem:[#allocation16 + $0x238] sm:$0xff]
        %v8391 = vld [vmem:[#allocation16 + $0x240] sm:$0xff]
        %v8392 = vld [vmem:[#allocation16 + $0x248] sm:$0xff]
        %v8393 = vld [vmem:[#allocation16 + $0x250] sm:$0xff]
        %v8394 = vld [vmem:[#allocation16 + $0x258] sm:$0xff]
        %v8395 = vld [vmem:[#allocation16 + $0x260] sm:$0xff]
        %v8396 = vld [vmem:[#allocation16 + $0x268] sm:$0xff]
        %v8397 = vld [vmem:[#allocation16 + $0x270] sm:$0xff]
        %v8398 = vld [vmem:[#allocation16 + $0x278] sm:$0xff]
        %v8399 = vld [vmem:[#allocation16 + $0x280] sm:$0xff]
        %v8400 = vld [vmem:[#allocation16 + $0x288] sm:$0xff]
        %v8401 = vld [vmem:[#allocation16 + $0x290] sm:$0xff]
        %v8402 = vld [vmem:[#allocation16 + $0x298] sm:$0xff]
        %v8403 = vld [vmem:[#allocation16 + $0x2a0] sm:$0xff]
        %v8404 = vld [vmem:[#allocation16 + $0x2a8] sm:$0xff]
        %v8405 = vld [vmem:[#allocation16 + $0x2b0] sm:$0xff]
        %v8406 = vld [vmem:[#allocation16 + $0x2b8] sm:$0xff]
        %v8407 = vld [vmem:[#allocation16 + $0x2c0] sm:$0xff]
        %v8408 = vld [vmem:[#allocation16 + $0x2c8] sm:$0xff]
        %v8409 = vld [vmem:[#allocation16 + $0x2d0] sm:$0xff]
        %v8410 = vld [vmem:[#allocation16 + $0x2d8] sm:$0xff]
        %v8411 = vld [vmem:[#allocation16 + $0x2e0] sm:$0xff]
        %v8412 = vld [vmem:[#allocation16 + $0x2e8] sm:$0xff]
        %v8413 = vld [vmem:[#allocation16 + $0x2f0] sm:$0xff]
        %v8414 = vld [vmem:[#allocation16 + $0x2f8] sm:$0xff]
        %v8415 = vld [vmem:[#allocation16 + $0x300] sm:$0xff]
        %v8416 = vld [vmem:[#allocation16 + $0x308] sm:$0xff]
        %v8417 = vld [vmem:[#allocation16 + $0x310] sm:$0xff]
        %v8418 = vld [vmem:[#allocation16 + $0x318] sm:$0xff]
        %v8419 = vld [vmem:[#allocation16 + $0x320] sm:$0xff]
        %v8420 = vld [vmem:[#allocation16 + $0x328] sm:$0xff]
        %v8421 = vld [vmem:[#allocation16 + $0x330] sm:$0xff]
        %v8422 = vld [vmem:[#allocation16 + $0x338] sm:$0xff]
        %v8423 = vld [vmem:[#allocation16 + $0x340] sm:$0xff]
        %v8424 = vld [vmem:[#allocation16 + $0x348] sm:$0xff]
        %v8425 = vld [vmem:[#allocation16 + $0x350] sm:$0xff]
        %v8426 = vld [vmem:[#allocation16 + $0x358] sm:$0xff]
        %v8427 = vld [vmem:[#allocation16 + $0x360] sm:$0xff]
        %v8428 = vld [vmem:[#allocation16 + $0x368] sm:$0xff]
        %v8429 = vld [vmem:[#allocation16 + $0x370] sm:$0xff]
        %v8430 = vld [vmem:[#allocation16 + $0x378] sm:$0xff]
        %v8431 = vld [vmem:[#allocation16 + $0x380] sm:$0xff]
        %v8432 = vld [vmem:[#allocation16 + $0x388] sm:$0xff]
        %v8433 = vld [vmem:[#allocation16 + $0x390] sm:$0xff]
        %v8434 = vld [vmem:[#allocation16 + $0x398] sm:$0xff]
        %v8435 = vld [vmem:[#allocation16 + $0x3a0] sm:$0xff]
        %v8436 = vld [vmem:[#allocation16 + $0x3a8] sm:$0xff]
        %v8437 = vld [vmem:[#allocation16 + $0x3b0] sm:$0xff]
        %v8438 = vld [vmem:[#allocation16 + $0x3b8] sm:$0xff]
        %v8439 = vld [vmem:[#allocation16 + $0x3c0] sm:$0xff]
        %v8440 = vld [vmem:[#allocation16 + $0x3c8] sm:$0xff]
        %v8441 = vld [vmem:[#allocation16 + $0x3d0] sm:$0xff]
        %v8442 = vld [vmem:[#allocation16 + $0x3d8] sm:$0xff]
        %v8443 = vld [vmem:[#allocation16 + $0x3e0] sm:$0xff]
        %v8444 = vld [vmem:[#allocation16 + $0x3e8] sm:$0xff]
        %v8445 = vld [vmem:[#allocation16 + $0x3f0] sm:$0xff]
        %v8446 = vld [vmem:[#allocation16 + $0x3f8] sm:$0xff]
        %v8447 = vld [vmem:[%s10] sm:$0xff]
        %v8449 = vlaneseq
        %v8450 = vshrl.u32 %v8449, 7
        %v8451 = vsub.s32 0, %v8450
        %v8452 = vrot.slane %v8447, %v8451
        %v8453 = vlaneseq
        %v8454 = vshrl.u32 %v8453, 7
        %v8455 = vsub.s32 1, %v8454
        %v8456 = vrot.slane %v8447, %v8455
        %v8457 = vlaneseq
        %v8458 = vshrl.u32 %v8457, 7
        %v8459 = vsub.s32 2, %v8458
        %v8460 = vrot.slane %v8447, %v8459
        %v8461 = vlaneseq
        %v8462 = vshrl.u32 %v8461, 7
        %v8463 = vsub.s32 3, %v8462
        %v8464 = vrot.slane %v8447, %v8463
        %v8465 = vlaneseq
        %v8466 = vshrl.u32 %v8465, 7
        %v8467 = vsub.s32 4, %v8466
        %v8468 = vrot.slane %v8447, %v8467
        %v8469 = vlaneseq
        %v8470 = vshrl.u32 %v8469, 7
        %v8471 = vsub.s32 5, %v8470
        %v8472 = vrot.slane %v8447, %v8471
        %v8473 = vlaneseq
        %v8474 = vshrl.u32 %v8473, 7
        %v8475 = vsub.s32 6, %v8474
        %v8476 = vrot.slane %v8447, %v8475
        %v8477 = vlaneseq
        %v8478 = vshrl.u32 %v8477, 7
        %v8479 = vsub.s32 7, %v8478
        %v8480 = vrot.slane %v8447, %v8479
        %v8617 = vunpack.c.l.b16 %v8319
        %v8618 = vunpack.c.h.b16 %v8319
        %v8619 = vunpack.c.l.b16 %v8320
        %v8620 = vunpack.c.h.b16 %v8320
        %v8621 = vunpack.c.l.b16 %v8321
        %v8622 = vunpack.c.h.b16 %v8321
        %v8623 = vunpack.c.l.b16 %v8322
        %v8624 = vunpack.c.h.b16 %v8322
        %v8625 = vunpack.c.l.b16 %v8323
        %v8626 = vunpack.c.h.b16 %v8323
        %v8627 = vunpack.c.l.b16 %v8324
        %v8628 = vunpack.c.h.b16 %v8324
        %v8629 = vunpack.c.l.b16 %v8325
        %v8630 = vunpack.c.h.b16 %v8325
        %v8631 = vunpack.c.l.b16 %v8326
        %v8632 = vunpack.c.h.b16 %v8326
        %v8633 = vunpack.c.l.b16 %v8327
        %v8634 = vunpack.c.h.b16 %v8327
        %v8635 = vunpack.c.l.b16 %v8328
        %v8636 = vunpack.c.h.b16 %v8328
        %v8637 = vunpack.c.l.b16 %v8329
        %v8638 = vunpack.c.h.b16 %v8329
        %v8639 = vunpack.c.l.b16 %v8330
        %v8640 = vunpack.c.h.b16 %v8330
        %v8641 = vunpack.c.l.b16 %v8331
        %v8642 = vunpack.c.h.b16 %v8331
        %v8643 = vunpack.c.l.b16 %v8332
        %v8644 = vunpack.c.h.b16 %v8332
        %v8645 = vunpack.c.l.b16 %v8333
        %v8646 = vunpack.c.h.b16 %v8333
        %v8647 = vunpack.c.l.b16 %v8334
        %v8648 = vunpack.c.h.b16 %v8334
        %v8649 = vunpack.c.l.b16 %v8335
        %v8650 = vunpack.c.h.b16 %v8335
        %v8651 = vunpack.c.l.b16 %v8336
        %v8652 = vunpack.c.h.b16 %v8336
        %v8653 = vunpack.c.l.b16 %v8337
        %v8654 = vunpack.c.h.b16 %v8337
        %v8655 = vunpack.c.l.b16 %v8338
        %v8656 = vunpack.c.h.b16 %v8338
        %v8657 = vunpack.c.l.b16 %v8339
        %v8658 = vunpack.c.h.b16 %v8339
        %v8659 = vunpack.c.l.b16 %v8340
        %v8660 = vunpack.c.h.b16 %v8340
        %v8661 = vunpack.c.l.b16 %v8341
        %v8662 = vunpack.c.h.b16 %v8341
        %v8663 = vunpack.c.l.b16 %v8342
        %v8664 = vunpack.c.h.b16 %v8342
        %v8665 = vunpack.c.l.b16 %v8343
        %v8666 = vunpack.c.h.b16 %v8343
        %v8667 = vunpack.c.l.b16 %v8344
        %v8668 = vunpack.c.h.b16 %v8344
        %v8669 = vunpack.c.l.b16 %v8345
        %v8670 = vunpack.c.h.b16 %v8345
        %v8671 = vunpack.c.l.b16 %v8346
        %v8672 = vunpack.c.h.b16 %v8346
        %v8673 = vunpack.c.l.b16 %v8347
        %v8674 = vunpack.c.h.b16 %v8347
        %v8675 = vunpack.c.l.b16 %v8348
        %v8676 = vunpack.c.h.b16 %v8348
        %v8677 = vunpack.c.l.b16 %v8349
        %v8678 = vunpack.c.h.b16 %v8349
        %v8679 = vunpack.c.l.b16 %v8350
        %v8680 = vunpack.c.h.b16 %v8350
        %v8681 = vunpack.c.l.b16 %v8351
        %v8682 = vunpack.c.h.b16 %v8351
        %v8683 = vunpack.c.l.b16 %v8352
        %v8684 = vunpack.c.h.b16 %v8352
        %v8685 = vunpack.c.l.b16 %v8353
        %v8686 = vunpack.c.h.b16 %v8353
        %v8687 = vunpack.c.l.b16 %v8354
        %v8688 = vunpack.c.h.b16 %v8354
        %v8689 = vunpack.c.l.b16 %v8355
        %v8690 = vunpack.c.h.b16 %v8355
        %v8691 = vunpack.c.l.b16 %v8356
        %v8692 = vunpack.c.h.b16 %v8356
        %v8693 = vunpack.c.l.b16 %v8357
        %v8694 = vunpack.c.h.b16 %v8357
        %v8695 = vunpack.c.l.b16 %v8358
        %v8696 = vunpack.c.h.b16 %v8358
        %v8697 = vunpack.c.l.b16 %v8359
        %v8698 = vunpack.c.h.b16 %v8359
        %v8699 = vunpack.c.l.b16 %v8360
        %v8700 = vunpack.c.h.b16 %v8360
        %v8701 = vunpack.c.l.b16 %v8361
        %v8702 = vunpack.c.h.b16 %v8361
        %v8703 = vunpack.c.l.b16 %v8362
        %v8704 = vunpack.c.h.b16 %v8362
        %v8705 = vunpack.c.l.b16 %v8363
        %v8706 = vunpack.c.h.b16 %v8363
        %v8707 = vunpack.c.l.b16 %v8364
        %v8708 = vunpack.c.h.b16 %v8364
        %v8709 = vunpack.c.l.b16 %v8365
        %v8710 = vunpack.c.h.b16 %v8365
        %v8711 = vunpack.c.l.b16 %v8366
        %v8712 = vunpack.c.h.b16 %v8366
        %v8713 = vunpack.c.l.b16 %v8367
        %v8714 = vunpack.c.h.b16 %v8367
        %v8715 = vunpack.c.l.b16 %v8368
        %v8716 = vunpack.c.h.b16 %v8368
        %v8717 = vunpack.c.l.b16 %v8369
        %v8718 = vunpack.c.h.b16 %v8369
        %v8719 = vunpack.c.l.b16 %v8370
        %v8720 = vunpack.c.h.b16 %v8370
        %v8721 = vunpack.c.l.b16 %v8371
        %v8722 = vunpack.c.h.b16 %v8371
        %v8723 = vunpack.c.l.b16 %v8372
        %v8724 = vunpack.c.h.b16 %v8372
        %v8725 = vunpack.c.l.b16 %v8373
        %v8726 = vunpack.c.h.b16 %v8373
        %v8727 = vunpack.c.l.b16 %v8374
        %v8728 = vunpack.c.h.b16 %v8374
        %v8729 = vunpack.c.l.b16 %v8375
        %v8730 = vunpack.c.h.b16 %v8375
        %v8731 = vunpack.c.l.b16 %v8376
        %v8732 = vunpack.c.h.b16 %v8376
        %v8733 = vunpack.c.l.b16 %v8377
        %v8734 = vunpack.c.h.b16 %v8377
        %v8735 = vunpack.c.l.b16 %v8378
        %v8736 = vunpack.c.h.b16 %v8378
        %v8737 = vunpack.c.l.b16 %v8379
        %v8738 = vunpack.c.h.b16 %v8379
        %v8739 = vunpack.c.l.b16 %v8380
        %v8740 = vunpack.c.h.b16 %v8380
        %v8741 = vunpack.c.l.b16 %v8381
        %v8742 = vunpack.c.h.b16 %v8381
        %v8743 = vunpack.c.l.b16 %v8382
        %v8744 = vunpack.c.h.b16 %v8382
        %v8745 = vunpack.c.l.b16 %v8383
        %v8746 = vunpack.c.h.b16 %v8383
        %v8747 = vunpack.c.l.b16 %v8384
        %v8748 = vunpack.c.h.b16 %v8384
        %v8749 = vunpack.c.l.b16 %v8385
        %v8750 = vunpack.c.h.b16 %v8385
        %v8751 = vunpack.c.l.b16 %v8386
        %v8752 = vunpack.c.h.b16 %v8386
        %v8753 = vunpack.c.l.b16 %v8387
        %v8754 = vunpack.c.h.b16 %v8387
        %v8755 = vunpack.c.l.b16 %v8388
        %v8756 = vunpack.c.h.b16 %v8388
        %v8757 = vunpack.c.l.b16 %v8389
        %v8758 = vunpack.c.h.b16 %v8389
        %v8759 = vunpack.c.l.b16 %v8390
        %v8760 = vunpack.c.h.b16 %v8390
        %v8761 = vunpack.c.l.b16 %v8391
        %v8762 = vunpack.c.h.b16 %v8391
        %v8763 = vunpack.c.l.b16 %v8392
        %v8764 = vunpack.c.h.b16 %v8392
        %v8765 = vunpack.c.l.b16 %v8393
        %v8766 = vunpack.c.h.b16 %v8393
        %v8767 = vunpack.c.l.b16 %v8394
        %v8768 = vunpack.c.h.b16 %v8394
        %v8769 = vunpack.c.l.b16 %v8395
        %v8770 = vunpack.c.h.b16 %v8395
        %v8771 = vunpack.c.l.b16 %v8396
        %v8772 = vunpack.c.h.b16 %v8396
        %v8773 = vunpack.c.l.b16 %v8397
        %v8774 = vunpack.c.h.b16 %v8397
        %v8775 = vunpack.c.l.b16 %v8398
        %v8776 = vunpack.c.h.b16 %v8398
        %v8777 = vunpack.c.l.b16 %v8399
        %v8778 = vunpack.c.h.b16 %v8399
        %v8779 = vunpack.c.l.b16 %v8400
        %v8780 = vunpack.c.h.b16 %v8400
        %v8781 = vunpack.c.l.b16 %v8401
        %v8782 = vunpack.c.h.b16 %v8401
        %v8783 = vunpack.c.l.b16 %v8402
        %v8784 = vunpack.c.h.b16 %v8402
        %v8785 = vunpack.c.l.b16 %v8403
        %v8786 = vunpack.c.h.b16 %v8403
        %v8787 = vunpack.c.l.b16 %v8404
        %v8788 = vunpack.c.h.b16 %v8404
        %v8789 = vunpack.c.l.b16 %v8405
        %v8790 = vunpack.c.h.b16 %v8405
        %v8791 = vunpack.c.l.b16 %v8406
        %v8792 = vunpack.c.h.b16 %v8406
        %v8793 = vunpack.c.l.b16 %v8407
        %v8794 = vunpack.c.h.b16 %v8407
        %v8795 = vunpack.c.l.b16 %v8408
        %v8796 = vunpack.c.h.b16 %v8408
        %v8797 = vunpack.c.l.b16 %v8409
        %v8798 = vunpack.c.h.b16 %v8409
        %v8799 = vunpack.c.l.b16 %v8410
        %v8800 = vunpack.c.h.b16 %v8410
        %v8801 = vunpack.c.l.b16 %v8411
        %v8802 = vunpack.c.h.b16 %v8411
        %v8803 = vunpack.c.l.b16 %v8412
        %v8804 = vunpack.c.h.b16 %v8412
        %v8805 = vunpack.c.l.b16 %v8413
        %v8806 = vunpack.c.h.b16 %v8413
        %v8807 = vunpack.c.l.b16 %v8414
        %v8808 = vunpack.c.h.b16 %v8414
        %v8809 = vunpack.c.l.b16 %v8415
        %v8810 = vunpack.c.h.b16 %v8415
        %v8811 = vunpack.c.l.b16 %v8416
        %v8812 = vunpack.c.h.b16 %v8416
        %v8813 = vunpack.c.l.b16 %v8417
        %v8814 = vunpack.c.h.b16 %v8417
        %v8815 = vunpack.c.l.b16 %v8418
        %v8816 = vunpack.c.h.b16 %v8418
        %v8817 = vunpack.c.l.b16 %v8419
        %v8818 = vunpack.c.h.b16 %v8419
        %v8819 = vunpack.c.l.b16 %v8420
        %v8820 = vunpack.c.h.b16 %v8420
        %v8821 = vunpack.c.l.b16 %v8421
        %v8822 = vunpack.c.h.b16 %v8421
        %v8823 = vunpack.c.l.b16 %v8422
        %v8824 = vunpack.c.h.b16 %v8422
        %v8825 = vunpack.c.l.b16 %v8423
        %v8826 = vunpack.c.h.b16 %v8423
        %v8827 = vunpack.c.l.b16 %v8424
        %v8828 = vunpack.c.h.b16 %v8424
        %v8829 = vunpack.c.l.b16 %v8425
        %v8830 = vunpack.c.h.b16 %v8425
        %v8831 = vunpack.c.l.b16 %v8426
        %v8832 = vunpack.c.h.b16 %v8426
        %v8833 = vunpack.c.l.b16 %v8427
        %v8834 = vunpack.c.h.b16 %v8427
        %v8835 = vunpack.c.l.b16 %v8428
        %v8836 = vunpack.c.h.b16 %v8428
        %v8837 = vunpack.c.l.b16 %v8429
        %v8838 = vunpack.c.h.b16 %v8429
        %v8839 = vunpack.c.l.b16 %v8430
        %v8840 = vunpack.c.h.b16 %v8430
        %v8841 = vunpack.c.l.b16 %v8431
        %v8842 = vunpack.c.h.b16 %v8431
        %v8843 = vunpack.c.l.b16 %v8432
        %v8844 = vunpack.c.h.b16 %v8432
        %v8845 = vunpack.c.l.b16 %v8433
        %v8846 = vunpack.c.h.b16 %v8433
        %v8847 = vunpack.c.l.b16 %v8434
        %v8848 = vunpack.c.h.b16 %v8434
        %v8849 = vunpack.c.l.b16 %v8435
        %v8850 = vunpack.c.h.b16 %v8435
        %v8851 = vunpack.c.l.b16 %v8436
        %v8852 = vunpack.c.h.b16 %v8436
        %v8853 = vunpack.c.l.b16 %v8437
        %v8854 = vunpack.c.h.b16 %v8437
        %v8855 = vunpack.c.l.b16 %v8438
        %v8856 = vunpack.c.h.b16 %v8438
        %v8857 = vunpack.c.l.b16 %v8439
        %v8858 = vunpack.c.h.b16 %v8439
        %v8859 = vunpack.c.l.b16 %v8440
        %v8860 = vunpack.c.h.b16 %v8440
        %v8861 = vunpack.c.l.b16 %v8441
        %v8862 = vunpack.c.h.b16 %v8441
        %v8863 = vunpack.c.l.b16 %v8442
        %v8864 = vunpack.c.h.b16 %v8442
        %v8865 = vunpack.c.l.b16 %v8443
        %v8866 = vunpack.c.h.b16 %v8443
        %v8867 = vunpack.c.l.b16 %v8444
        %v8868 = vunpack.c.h.b16 %v8444
        %v8869 = vunpack.c.l.b16 %v8445
        %v8870 = vunpack.c.h.b16 %v8445
        %v8871 = vunpack.c.l.b16 %v8446
        %v8872 = vunpack.c.h.b16 %v8446
        %v8873 = vpack.c.b16 %v8625, %v8617
        %v8874 = vpack.c.b16 %v8626, %v8618
        %v8875 = vpack.c.b16 %v8627, %v8619
        %v8876 = vpack.c.b16 %v8628, %v8620
        %v8877 = vpack.c.b16 %v8629, %v8621
        %v8878 = vpack.c.b16 %v8630, %v8622
        %v8879 = vpack.c.b16 %v8631, %v8623
        %v8880 = vpack.c.b16 %v8632, %v8624
        %v8881 = vpack.c.b16 %v8641, %v8633
        %v8882 = vpack.c.b16 %v8642, %v8634
        %v8883 = vpack.c.b16 %v8643, %v8635
        %v8884 = vpack.c.b16 %v8644, %v8636
        %v8885 = vpack.c.b16 %v8645, %v8637
        %v8886 = vpack.c.b16 %v8646, %v8638
        %v8887 = vpack.c.b16 %v8647, %v8639
        %v8888 = vpack.c.b16 %v8648, %v8640
        %v8889 = vpack.c.b16 %v8657, %v8649
        %v8890 = vpack.c.b16 %v8658, %v8650
        %v8891 = vpack.c.b16 %v8659, %v8651
        %v8892 = vpack.c.b16 %v8660, %v8652
        %v8893 = vpack.c.b16 %v8661, %v8653
        %v8894 = vpack.c.b16 %v8662, %v8654
        %v8895 = vpack.c.b16 %v8663, %v8655
        %v8896 = vpack.c.b16 %v8664, %v8656
        %v8897 = vpack.c.b16 %v8673, %v8665
        %v8898 = vpack.c.b16 %v8674, %v8666
        %v8899 = vpack.c.b16 %v8675, %v8667
        %v8900 = vpack.c.b16 %v8676, %v8668
        %v8901 = vpack.c.b16 %v8677, %v8669
        %v8902 = vpack.c.b16 %v8678, %v8670
        %v8903 = vpack.c.b16 %v8679, %v8671
        %v8904 = vpack.c.b16 %v8680, %v8672
        %v8905 = vpack.c.b16 %v8689, %v8681
        %v8906 = vpack.c.b16 %v8690, %v8682
        %v8907 = vpack.c.b16 %v8691, %v8683
        %v8908 = vpack.c.b16 %v8692, %v8684
        %v8909 = vpack.c.b16 %v8693, %v8685
        %v8910 = vpack.c.b16 %v8694, %v8686
        %v8911 = vpack.c.b16 %v8695, %v8687
        %v8912 = vpack.c.b16 %v8696, %v8688
        %v8913 = vpack.c.b16 %v8705, %v8697
        %v8914 = vpack.c.b16 %v8706, %v8698
        %v8915 = vpack.c.b16 %v8707, %v8699
        %v8916 = vpack.c.b16 %v8708, %v8700
        %v8917 = vpack.c.b16 %v8709, %v8701
        %v8918 = vpack.c.b16 %v8710, %v8702
        %v8919 = vpack.c.b16 %v8711, %v8703
        %v8920 = vpack.c.b16 %v8712, %v8704
        %v8921 = vpack.c.b16 %v8721, %v8713
        %v8922 = vpack.c.b16 %v8722, %v8714
        %v8923 = vpack.c.b16 %v8723, %v8715
        %v8924 = vpack.c.b16 %v8724, %v8716
        %v8925 = vpack.c.b16 %v8725, %v8717
        %v8926 = vpack.c.b16 %v8726, %v8718
        %v8927 = vpack.c.b16 %v8727, %v8719
        %v8928 = vpack.c.b16 %v8728, %v8720
        %v8929 = vpack.c.b16 %v8737, %v8729
        %v8930 = vpack.c.b16 %v8738, %v8730
        %v8931 = vpack.c.b16 %v8739, %v8731
        %v8932 = vpack.c.b16 %v8740, %v8732
        %v8933 = vpack.c.b16 %v8741, %v8733
        %v8934 = vpack.c.b16 %v8742, %v8734
        %v8935 = vpack.c.b16 %v8743, %v8735
        %v8936 = vpack.c.b16 %v8744, %v8736
        %v8937 = vpack.c.b16 %v8753, %v8745
        %v8938 = vpack.c.b16 %v8754, %v8746
        %v8939 = vpack.c.b16 %v8755, %v8747
        %v8940 = vpack.c.b16 %v8756, %v8748
        %v8941 = vpack.c.b16 %v8757, %v8749
        %v8942 = vpack.c.b16 %v8758, %v8750
        %v8943 = vpack.c.b16 %v8759, %v8751
        %v8944 = vpack.c.b16 %v8760, %v8752
        %v8945 = vpack.c.b16 %v8769, %v8761
        %v8946 = vpack.c.b16 %v8770, %v8762
        %v8947 = vpack.c.b16 %v8771, %v8763
        %v8948 = vpack.c.b16 %v8772, %v8764
        %v8949 = vpack.c.b16 %v8773, %v8765
        %v8950 = vpack.c.b16 %v8774, %v8766
        %v8951 = vpack.c.b16 %v8775, %v8767
        %v8952 = vpack.c.b16 %v8776, %v8768
        %v8953 = vpack.c.b16 %v8785, %v8777
        %v8954 = vpack.c.b16 %v8786, %v8778
        %v8955 = vpack.c.b16 %v8787, %v8779
        %v8956 = vpack.c.b16 %v8788, %v8780
        %v8957 = vpack.c.b16 %v8789, %v8781
        %v8958 = vpack.c.b16 %v8790, %v8782
        %v8959 = vpack.c.b16 %v8791, %v8783
        %v8960 = vpack.c.b16 %v8792, %v8784
        %v8961 = vpack.c.b16 %v8801, %v8793
        %v8962 = vpack.c.b16 %v8802, %v8794
        %v8963 = vpack.c.b16 %v8803, %v8795
        %v8964 = vpack.c.b16 %v8804, %v8796
        %v8965 = vpack.c.b16 %v8805, %v8797
        %v8966 = vpack.c.b16 %v8806, %v8798
        %v8967 = vpack.c.b16 %v8807, %v8799
        %v8968 = vpack.c.b16 %v8808, %v8800
        %v8969 = vpack.c.b16 %v8817, %v8809
        %v8970 = vpack.c.b16 %v8818, %v8810
        %v8971 = vpack.c.b16 %v8819, %v8811
        %v8972 = vpack.c.b16 %v8820, %v8812
        %v8973 = vpack.c.b16 %v8821, %v8813
        %v8974 = vpack.c.b16 %v8822, %v8814
        %v8975 = vpack.c.b16 %v8823, %v8815
        %v8976 = vpack.c.b16 %v8824, %v8816
        %v8977 = vpack.c.b16 %v8833, %v8825
        %v8978 = vpack.c.b16 %v8834, %v8826
        %v8979 = vpack.c.b16 %v8835, %v8827
        %v8980 = vpack.c.b16 %v8836, %v8828
        %v8981 = vpack.c.b16 %v8837, %v8829
        %v8982 = vpack.c.b16 %v8838, %v8830
        %v8983 = vpack.c.b16 %v8839, %v8831
        %v8984 = vpack.c.b16 %v8840, %v8832
        %v8985 = vpack.c.b16 %v8849, %v8841
        %v8986 = vpack.c.b16 %v8850, %v8842
        %v8987 = vpack.c.b16 %v8851, %v8843
        %v8988 = vpack.c.b16 %v8852, %v8844
        %v8989 = vpack.c.b16 %v8853, %v8845
        %v8990 = vpack.c.b16 %v8854, %v8846
        %v8991 = vpack.c.b16 %v8855, %v8847
        %v8992 = vpack.c.b16 %v8856, %v8848
        %v8993 = vpack.c.b16 %v8865, %v8857
        %v8994 = vpack.c.b16 %v8866, %v8858
        %v8995 = vpack.c.b16 %v8867, %v8859
        %v8996 = vpack.c.b16 %v8868, %v8860
        %v8997 = vpack.c.b16 %v8869, %v8861
        %v8998 = vpack.c.b16 %v8870, %v8862
        %v8999 = vpack.c.b16 %v8871, %v8863
        %v9000 = vpack.c.b16 %v8872, %v8864
        %9129 = vmatprep.subr.bf16.mxu0 %v8874
        %9130 = vmatpush1.bf16.msra.mxu0 %v8873
        %9131 = vmatprep.subr.bf16.mxu0 %v8882
        %9132 = vmatpush1.bf16.msra.mxu0 %v8881
        %9133 = vmatprep.subr.bf16.mxu0 %v8890
        %9134 = vmatpush1.bf16.msra.mxu0 %v8889
        %9135 = vmatprep.subr.bf16.mxu0 %v8898
        %9136 = vmatpush1.bf16.msra.mxu0 %v8897
        %9137 = vmatprep.subr.bf16.mxu0 %v8906
        %9138 = vmatpush1.bf16.msra.mxu0 %v8905
        %9139 = vmatprep.subr.bf16.mxu0 %v8914
        %9140 = vmatpush1.bf16.msra.mxu0 %v8913
        %9141 = vmatprep.subr.bf16.mxu0 %v8922
        %9142 = vmatpush1.bf16.msra.mxu0 %v8921
        %9143 = vmatprep.subr.bf16.mxu0 %v8930
        %9144 = vmatpush1.bf16.msra.mxu0 %v8929
        %9145 = vmatprep.subr.bf16.mxu0 %v8938
        %9146 = vmatpush1.bf16.msra.mxu0 %v8937
        %9147 = vmatprep.subr.bf16.mxu0 %v8946
        %9148 = vmatpush1.bf16.msra.mxu0 %v8945
        %9149 = vmatprep.subr.bf16.mxu0 %v8954
        %9150 = vmatpush1.bf16.msra.mxu0 %v8953
        %9151 = vmatprep.subr.bf16.mxu0 %v8962
        %9152 = vmatpush1.bf16.msra.mxu0 %v8961
        %9153 = vmatprep.subr.bf16.mxu0 %v8970
        %9154 = vmatpush1.bf16.msra.mxu0 %v8969
        %9155 = vmatprep.subr.bf16.mxu0 %v8978
        %9156 = vmatpush1.bf16.msra.mxu0 %v8977
        %9157 = vmatprep.subr.bf16.mxu0 %v8986
        %9158 = vmatpush1.bf16.msra.mxu0 %v8985
        %9159 = vmatprep.subr.bf16.mxu0 %v8994
        %9160 = vmatpush1.bf16.msra.mxu0 %v8993
        %9161 = vmatprep.mubr.bf16.mxu0 %v8312
        %9162 = vmatmul.mubr.bf16.gmra.mrb[0].mxu0 %v8311
        %v9163 = vpop.f32.mrb[0].mxu0
        %v9164 = vadd.f32 %v8452, %v9163
        %v9165 = vpop.f32.mrb[0].mxu0
        %v9166 = vadd.f32 %v8456, %v9165
        %v9167 = vpop.f32.mrb[0].mxu0
        %v9168 = vadd.f32 %v8452, %v9167
        %v9169 = vpop.f32.mrb[0].mxu0
        %v9170 = vadd.f32 %v8456, %v9169
        %9171 = vmatprep.mubr.bf16.mxu0 %v8314
        %9172 = vmatmul.mubr.bf16.gmra.mrb[0].mxu0 %v8313
        %v9173 = vpop.f32.mrb[0].mxu0
        %v9174 = vadd.f32 %v8452, %v9173
        %v9175 = vpop.f32.mrb[0].mxu0
        %v9176 = vadd.f32 %v8456, %v9175
        %v9177 = vpop.f32.mrb[0].mxu0
        %v9178 = vadd.f32 %v8452, %v9177
        %v9179 = vpop.f32.mrb[0].mxu0
        %v9180 = vadd.f32 %v8456, %v9179
        %9181 = vmatprep.mubr.bf16.mxu0 %v8316
        %9182 = vmatmul.mubr.bf16.gmra.mrb[0].mxu0 %v8315
        %v9183 = vpop.f32.mrb[0].mxu0
        %v9184 = vadd.f32 %v8452, %v9183
        %v9185 = vpop.f32.mrb[0].mxu0
        %v9186 = vadd.f32 %v8456, %v9185
        %v9187 = vpop.f32.mrb[0].mxu0
        %v9188 = vadd.f32 %v8452, %v9187
        %v9189 = vpop.f32.mrb[0].mxu0
        %v9190 = vadd.f32 %v8456, %v9189
        %9191 = vmatprep.mubr.bf16.mxu0 %v8318
        %9192 = vmatmul.mubr.bf16.gmra.mrb[0].mxu0 %v8317
        %v9193 = vpop.f32.mrb[0].mxu0
        %v9194 = vadd.f32 %v8452, %v9193
        %v9195 = vpop.f32.mrb[0].mxu0
        %v9196 = vadd.f32 %v8456, %v9195
        %v9197 = vpop.f32.mrb[0].mxu0
        %v9198 = vadd.f32 %v8452, %v9197
        %v9199 = vpop.f32.mrb[0].mxu0
        %v9200 = vadd.f32 %v8456, %v9199
        %9201 = vdwg.mxu0
        %9202 = vmatprep.subr.bf16.mxu0 %v8876
        %9203 = vmatpush1.bf16.msra.mxu0 %v8875
        %9204 = vmatprep.subr.bf16.mxu0 %v8884
        %9205 = vmatpush1.bf16.msra.mxu0 %v8883
        %9206 = vmatprep.subr.bf16.mxu0 %v8892
        %9207 = vmatpush1.bf16.msra.mxu0 %v8891
        %9208 = vmatprep.subr.bf16.mxu0 %v8900
        %9209 = vmatpush1.bf16.msra.mxu0 %v8899
        %9210 = vmatprep.subr.bf16.mxu0 %v8908
        %9211 = vmatpush1.bf16.msra.mxu0 %v8907
        %9212 = vmatprep.subr.bf16.mxu0 %v8916
        %9213 = vmatpush1.bf16.msra.mxu0 %v8915
        %9214 = vmatprep.subr.bf16.mxu0 %v8924
        %9215 = vmatpush1.bf16.msra.mxu0 %v8923
        %9216 = vmatprep.subr.bf16.mxu0 %v8932
        %9217 = vmatpush1.bf16.msra.mxu0 %v8931
        %9218 = vmatprep.subr.bf16.mxu0 %v8940
        %9219 = vmatpush1.bf16.msra.mxu0 %v8939
        %9220 = vmatprep.subr.bf16.mxu0 %v8948
        %9221 = vmatpush1.bf16.msra.mxu0 %v8947
        %9222 = vmatprep.subr.bf16.mxu0 %v8956
        %9223 = vmatpush1.bf16.msra.mxu0 %v8955
        %9224 = vmatprep.subr.bf16.mxu0 %v8964
        %9225 = vmatpush1.bf16.msra.mxu0 %v8963
        %9226 = vmatprep.subr.bf16.mxu0 %v8972
        %9227 = vmatpush1.bf16.msra.mxu0 %v8971
        %9228 = vmatprep.subr.bf16.mxu0 %v8980
        %9229 = vmatpush1.bf16.msra.mxu0 %v8979
        %9230 = vmatprep.subr.bf16.mxu0 %v8988
        %9231 = vmatpush1.bf16.msra.mxu0 %v8987
        %9232 = vmatprep.subr.bf16.mxu0 %v8996
        %9233 = vmatpush1.bf16.msra.mxu0 %v8995
        %9234 = vmatprep.mubr.bf16.mxu0 %v8312
        %9235 = vmatmul.mubr.bf16.gmra.mrb[0].mxu0 %v8311
        %v9236 = vpop.f32.mrb[0].mxu0
        %v9237 = vadd.f32 %v8460, %v9236
        %v9238 = vpop.f32.mrb[0].mxu0
        %v9239 = vadd.f32 %v8464, %v9238
        %v9240 = vpop.f32.mrb[0].mxu0
        %v9241 = vadd.f32 %v8460, %v9240
        %v9242 = vpop.f32.mrb[0].mxu0
        %v9243 = vadd.f32 %v8464, %v9242
        %9244 = vmatprep.mubr.bf16.mxu0 %v8314
        %9245 = vmatmul.mubr.bf16.gmra.mrb[0].mxu0 %v8313
        %v9246 = vpop.f32.mrb[0].mxu0
        %v9247 = vadd.f32 %v8460, %v9246
        %v9248 = vpop.f32.mrb[0].mxu0
        %v9249 = vadd.f32 %v8464, %v9248
        %v9250 = vpop.f32.mrb[0].mxu0
        %v9251 = vadd.f32 %v8460, %v9250
        %v9252 = vpop.f32.mrb[0].mxu0
        %v9253 = vadd.f32 %v8464, %v9252
        %9254 = vmatprep.mubr.bf16.mxu0 %v8316
        %9255 = vmatmul.mubr.bf16.gmra.mrb[0].mxu0 %v8315
        %v9256 = vpop.f32.mrb[0].mxu0
        %v9257 = vadd.f32 %v8460, %v9256
        %v9258 = vpop.f32.mrb[0].mxu0
        %v9259 = vadd.f32 %v8464, %v9258
        %v9260 = vpop.f32.mrb[0].mxu0
        %v9261 = vadd.f32 %v8460, %v9260
        %v9262 = vpop.f32.mrb[0].mxu0
        %v9263 = vadd.f32 %v8464, %v9262
        %9264 = vmatprep.mubr.bf16.mxu0 %v8318
        %9265 = vmatmul.mubr.bf16.gmra.mrb[0].mxu0 %v8317
        %v9266 = vpop.f32.mrb[0].mxu0
        %v9267 = vadd.f32 %v8460, %v9266
        %v9268 = vpop.f32.mrb[0].mxu0
        %v9269 = vadd.f32 %v8464, %v9268
        %v9270 = vpop.f32.mrb[0].mxu0
        %v9271 = vadd.f32 %v8460, %v9270
        %v9272 = vpop.f32.mrb[0].mxu0
        %v9273 = vadd.f32 %v8464, %v9272
        %9274 = vdwg.mxu0
        %9275 = vmatprep.subr.bf16.mxu0 %v8878
        %9276 = vmatpush1.bf16.msra.mxu0 %v8877
        %9277 = vmatprep.subr.bf16.mxu0 %v8886
        %9278 = vmatpush1.bf16.msra.mxu0 %v8885
        %9279 = vmatprep.subr.bf16.mxu0 %v8894
        %9280 = vmatpush1.bf16.msra.mxu0 %v8893
        %9281 = vmatprep.subr.bf16.mxu0 %v8902
        %9282 = vmatpush1.bf16.msra.mxu0 %v8901
        %9283 = vmatprep.subr.bf16.mxu0 %v8910
        %9284 = vmatpush1.bf16.msra.mxu0 %v8909
        %9285 = vmatprep.subr.bf16.mxu0 %v8918
        %9286 = vmatpush1.bf16.msra.mxu0 %v8917
        %9287 = vmatprep.subr.bf16.mxu0 %v8926
        %9288 = vmatpush1.bf16.msra.mxu0 %v8925
        %9289 = vmatprep.subr.bf16.mxu0 %v8934
        %9290 = vmatpush1.bf16.msra.mxu0 %v8933
        %9291 = vmatprep.subr.bf16.mxu0 %v8942
        %9292 = vmatpush1.bf16.msra.mxu0 %v8941
        %9293 = vmatprep.subr.bf16.mxu0 %v8950
        %9294 = vmatpush1.bf16.msra.mxu0 %v8949
        %9295 = vmatprep.subr.bf16.mxu0 %v8958
        %9296 = vmatpush1.bf16.msra.mxu0 %v8957
        %9297 = vmatprep.subr.bf16.mxu0 %v8966
        %9298 = vmatpush1.bf16.msra.mxu0 %v8965
        %9299 = vmatprep.subr.bf16.mxu0 %v8974
        %9300 = vmatpush1.bf16.msra.mxu0 %v8973
        %9301 = vmatprep.subr.bf16.mxu0 %v8982
        %9302 = vmatpush1.bf16.msra.mxu0 %v8981
        %9303 = vmatprep.subr.bf16.mxu0 %v8990
        %9304 = vmatpush1.bf16.msra.mxu0 %v8989
        %9305 = vmatprep.subr.bf16.mxu0 %v8998
        %9306 = vmatpush1.bf16.msra.mxu0 %v8997
        %9307 = vmatprep.mubr.bf16.mxu0 %v8312
        %9308 = vmatmul.mubr.bf16.gmra.mrb[0].mxu0 %v8311
        %v9309 = vpop.f32.mrb[0].mxu0
        %v9310 = vadd.f32 %v8468, %v9309
        %v9311 = vpop.f32.mrb[0].mxu0
        %v9312 = vadd.f32 %v8472, %v9311
        %v9313 = vpop.f32.mrb[0].mxu0
        %v9314 = vadd.f32 %v8468, %v9313
        %v9315 = vpop.f32.mrb[0].mxu0
        %v9316 = vadd.f32 %v8472, %v9315
        %9317 = vmatprep.mubr.bf16.mxu0 %v8314
        %9318 = vmatmul.mubr.bf16.gmra.mrb[0].mxu0 %v8313
        %v9319 = vpop.f32.mrb[0].mxu0
        %v9320 = vadd.f32 %v8468, %v9319
        %v9321 = vpop.f32.mrb[0].mxu0
        %v9322 = vadd.f32 %v8472, %v9321
        %v9323 = vpop.f32.mrb[0].mxu0
        %v9324 = vadd.f32 %v8468, %v9323
        %v9325 = vpop.f32.mrb[0].mxu0
        %v9326 = vadd.f32 %v8472, %v9325
        %9327 = vmatprep.mubr.bf16.mxu0 %v8316
        %9328 = vmatmul.mubr.bf16.gmra.mrb[0].mxu0 %v8315
        %v9329 = vpop.f32.mrb[0].mxu0
        %v9330 = vadd.f32 %v8468, %v9329
        %v9331 = vpop.f32.mrb[0].mxu0
        %v9332 = vadd.f32 %v8472, %v9331
        %v9333 = vpop.f32.mrb[0].mxu0
        %v9334 = vadd.f32 %v8468, %v9333
        %v9335 = vpop.f32.mrb[0].mxu0
        %v9336 = vadd.f32 %v8472, %v9335
        %9337 = vmatprep.mubr.bf16.mxu0 %v8318
        %9338 = vmatmul.mubr.bf16.gmra.mrb[0].mxu0 %v8317
        %v9339 = vpop.f32.mrb[0].mxu0
        %v9340 = vadd.f32 %v8468, %v9339
        %v9341 = vpop.f32.mrb[0].mxu0
        %v9342 = vadd.f32 %v8472, %v9341
        %v9343 = vpop.f32.mrb[0].mxu0
        %v9344 = vadd.f32 %v8468, %v9343
        %v9345 = vpop.f32.mrb[0].mxu0
        %v9346 = vadd.f32 %v8472, %v9345
        %9347 = vdwg.mxu0
        %9348 = vmatprep.subr.bf16.mxu0 %v8880
        %9349 = vmatpush1.bf16.msra.mxu0 %v8879
        %9350 = vmatprep.subr.bf16.mxu0 %v8888
        %9351 = vmatpush1.bf16.msra.mxu0 %v8887
        %9352 = vmatprep.subr.bf16.mxu0 %v8896
        %9353 = vmatpush1.bf16.msra.mxu0 %v8895
        %9354 = vmatprep.subr.bf16.mxu0 %v8904
        %9355 = vmatpush1.bf16.msra.mxu0 %v8903
        %9356 = vmatprep.subr.bf16.mxu0 %v8912
        %9357 = vmatpush1.bf16.msra.mxu0 %v8911
        %9358 = vmatprep.subr.bf16.mxu0 %v8920
        %9359 = vmatpush1.bf16.msra.mxu0 %v8919
        %9360 = vmatprep.subr.bf16.mxu0 %v8928
        %9361 = vmatpush1.bf16.msra.mxu0 %v8927
        %9362 = vmatprep.subr.bf16.mxu0 %v8936
        %9363 = vmatpush1.bf16.msra.mxu0 %v8935
        %9364 = vmatprep.subr.bf16.mxu0 %v8944
        %9365 = vmatpush1.bf16.msra.mxu0 %v8943
        %9366 = vmatprep.subr.bf16.mxu0 %v8952
        %9367 = vmatpush1.bf16.msra.mxu0 %v8951
        %9368 = vmatprep.subr.bf16.mxu0 %v8960
        %9369 = vmatpush1.bf16.msra.mxu0 %v8959
        %9370 = vmatprep.subr.bf16.mxu0 %v8968
        %9371 = vmatpush1.bf16.msra.mxu0 %v8967
        %9372 = vmatprep.subr.bf16.mxu0 %v8976
        %9373 = vmatpush1.bf16.msra.mxu0 %v8975
        %9374 = vmatprep.subr.bf16.mxu0 %v8984
        %9375 = vmatpush1.bf16.msra.mxu0 %v8983
        %9376 = vmatprep.subr.bf16.mxu0 %v8992
        %9377 = vmatpush1.bf16.msra.mxu0 %v8991
        %9378 = vmatprep.subr.bf16.mxu0 %v9000
        %9379 = vmatpush1.bf16.msra.mxu0 %v8999
        %9380 = vmatprep.mubr.bf16.mxu0 %v8312
        %9381 = vmatmul.mubr.bf16.gmra.mrb[0].mxu0 %v8311
        %v9382 = vpop.f32.mrb[0].mxu0
        %v9383 = vadd.f32 %v8476, %v9382
        %v9384 = vpop.f32.mrb[0].mxu0
        %v9385 = vadd.f32 %v8480, %v9384
        %v9386 = vpop.f32.mrb[0].mxu0
        %v9387 = vadd.f32 %v8476, %v9386
        %v9388 = vpop.f32.mrb[0].mxu0
        %v9389 = vadd.f32 %v8480, %v9388
        %9390 = vmatprep.mubr.bf16.mxu0 %v8314
        %9391 = vmatmul.mubr.bf16.gmra.mrb[0].mxu0 %v8313
        %v9392 = vpop.f32.mrb[0].mxu0
        %v9393 = vadd.f32 %v8476, %v9392
        %v9394 = vpop.f32.mrb[0].mxu0
        %v9395 = vadd.f32 %v8480, %v9394
        %v9396 = vpop.f32.mrb[0].mxu0
        %v9397 = vadd.f32 %v8476, %v9396
        %v9398 = vpop.f32.mrb[0].mxu0
        %v9399 = vadd.f32 %v8480, %v9398
        %9400 = vmatprep.mubr.bf16.mxu0 %v8316
        %9401 = vmatmul.mubr.bf16.gmra.mrb[0].mxu0 %v8315
        %v9402 = vpop.f32.mrb[0].mxu0
        %v9403 = vadd.f32 %v8476, %v9402
        %v9404 = vpop.f32.mrb[0].mxu0
        %v9405 = vadd.f32 %v8480, %v9404
        %v9406 = vpop.f32.mrb[0].mxu0
        %v9407 = vadd.f32 %v8476, %v9406
        %v9408 = vpop.f32.mrb[0].mxu0
        %v9409 = vadd.f32 %v8480, %v9408
        %9410 = vmatprep.mubr.bf16.mxu0 %v8318
        %9411 = vmatmul.mubr.bf16.gmra.mrb[0].mxu0 %v8317
        %v9412 = vpop.f32.mrb[0].mxu0
        %v9413 = vadd.f32 %v8476, %v9412
        %v9414 = vpop.f32.mrb[0].mxu0
        %v9415 = vadd.f32 %v8480, %v9414
        %v9416 = vpop.f32.mrb[0].mxu0
        %v9417 = vadd.f32 %v8476, %v9416
        %v9418 = vpop.f32.mrb[0].mxu0
        %v9419 = vadd.f32 %v8480, %v9418
        %9420 = vdwg.mxu0
        %v9421 = vmax.f32 %v9164, 0.0
        %v9422 = vmax.f32 %v9166, 0.0
        %v9423 = vmax.f32 %v9237, 0.0
        %v9424 = vmax.f32 %v9239, 0.0
        %v9425 = vmax.f32 %v9310, 0.0
        %v9426 = vmax.f32 %v9312, 0.0
        %v9427 = vmax.f32 %v9383, 0.0
        %v9428 = vmax.f32 %v9385, 0.0
        %v9429 = vmax.f32 %v9168, 0.0
        %v9430 = vmax.f32 %v9170, 0.0
        %v9431 = vmax.f32 %v9241, 0.0
        %v9432 = vmax.f32 %v9243, 0.0
        %v9433 = vmax.f32 %v9314, 0.0
        %v9434 = vmax.f32 %v9316, 0.0
        %v9435 = vmax.f32 %v9387, 0.0
        %v9436 = vmax.f32 %v9389, 0.0
        %v9437 = vmax.f32 %v9174, 0.0
        %v9438 = vmax.f32 %v9176, 0.0
        %v9439 = vmax.f32 %v9247, 0.0
        %v9440 = vmax.f32 %v9249, 0.0
        %v9441 = vmax.f32 %v9320, 0.0
        %v9442 = vmax.f32 %v9322, 0.0
        %v9443 = vmax.f32 %v9393, 0.0
        %v9444 = vmax.f32 %v9395, 0.0
        %v9445 = vmax.f32 %v9178, 0.0
        %v9446 = vmax.f32 %v9180, 0.0
        %v9447 = vmax.f32 %v9251, 0.0
        %v9448 = vmax.f32 %v9253, 0.0
        %v9449 = vmax.f32 %v9324, 0.0
        %v9450 = vmax.f32 %v9326, 0.0
        %v9451 = vmax.f32 %v9397, 0.0
        %v9452 = vmax.f32 %v9399, 0.0
        %v9453 = vmax.f32 %v9184, 0.0
        %v9454 = vmax.f32 %v9186, 0.0
        %v9455 = vmax.f32 %v9257, 0.0
        %v9456 = vmax.f32 %v9259, 0.0
        %v9457 = vmax.f32 %v9330, 0.0
        %v9458 = vmax.f32 %v9332, 0.0
        %v9459 = vmax.f32 %v9403, 0.0
        %v9460 = vmax.f32 %v9405, 0.0
        %v9461 = vmax.f32 %v9188, 0.0
        %v9462 = vmax.f32 %v9190, 0.0
        %v9463 = vmax.f32 %v9261, 0.0
        %v9464 = vmax.f32 %v9263, 0.0
        %v9465 = vmax.f32 %v9334, 0.0
        %v9466 = vmax.f32 %v9336, 0.0
        %v9467 = vmax.f32 %v9407, 0.0
        %v9468 = vmax.f32 %v9409, 0.0
        %v9469 = vmax.f32 %v9194, 0.0
        %v9470 = vmax.f32 %v9196, 0.0
        %v9471 = vmax.f32 %v9267, 0.0
        %v9472 = vmax.f32 %v9269, 0.0
        %v9473 = vmax.f32 %v9340, 0.0
        %v9474 = vmax.f32 %v9342, 0.0
        %v9475 = vmax.f32 %v9413, 0.0
        %v9476 = vmax.f32 %v9415, 0.0
        %v9477 = vmax.f32 %v9198, 0.0
        %v9478 = vmax.f32 %v9200, 0.0
        %v9479 = vmax.f32 %v9271, 0.0
        %v9480 = vmax.f32 %v9273, 0.0
        %v9481 = vmax.f32 %v9344, 0.0
        %v9482 = vmax.f32 %v9346, 0.0
        %v9483 = vmax.f32 %v9417, 0.0
        %v9484 = vmax.f32 %v9419, 0.0
        %v9485 = vpack.c.bf16 %v9429, %v9421
        %v9486 = vpack.c.bf16 %v9430, %v9422
        %v9487 = vpack.c.bf16 %v9431, %v9423
        %v9488 = vpack.c.bf16 %v9432, %v9424
        %v9489 = vpack.c.bf16 %v9433, %v9425
        %v9490 = vpack.c.bf16 %v9434, %v9426
        %v9491 = vpack.c.bf16 %v9435, %v9427
        %v9492 = vpack.c.bf16 %v9436, %v9428
        %v9493 = vpack.c.bf16 %v9445, %v9437
        %v9494 = vpack.c.bf16 %v9446, %v9438
        %v9495 = vpack.c.bf16 %v9447, %v9439
        %v9496 = vpack.c.bf16 %v9448, %v9440
        %v9497 = vpack.c.bf16 %v9449, %v9441
        %v9498 = vpack.c.bf16 %v9450, %v9442
        %v9499 = vpack.c.bf16 %v9451, %v9443
        %v9500 = vpack.c.bf16 %v9452, %v9444
        %v9501 = vpack.c.bf16 %v9461, %v9453
        %v9502 = vpack.c.bf16 %v9462, %v9454
        %v9503 = vpack.c.bf16 %v9463, %v9455
        %v9504 = vpack.c.bf16 %v9464, %v9456
        %v9505 = vpack.c.bf16 %v9465, %v9457
        %v9506 = vpack.c.bf16 %v9466, %v9458
        %v9507 = vpack.c.bf16 %v9467, %v9459
        %v9508 = vpack.c.bf16 %v9468, %v9460
        %v9509 = vpack.c.bf16 %v9477, %v9469
        %v9510 = vpack.c.bf16 %v9478, %v9470
        %v9511 = vpack.c.bf16 %v9479, %v9471
        %v9512 = vpack.c.bf16 %v9480, %v9472
        %v9513 = vpack.c.bf16 %v9481, %v9473
        %v9514 = vpack.c.bf16 %v9482, %v9474
        %v9515 = vpack.c.bf16 %v9483, %v9475
        %v9516 = vpack.c.bf16 %v9484, %v9476
        %v9517 = vld [vmem:[#allocation18] sm:$0xff]
        %v9518 = vld [vmem:[#allocation18 + $0x8] sm:$0xff]
        %v9519 = vld [vmem:[#allocation18 + $0x10] sm:$0xff]
        %v9520 = vld [vmem:[#allocation18 + $0x18] sm:$0xff]
        %v9521 = vld [vmem:[#allocation18 + $0x20] sm:$0xff]
        %v9522 = vld [vmem:[#allocation18 + $0x28] sm:$0xff]
        %v9523 = vld [vmem:[#allocation18 + $0x30] sm:$0xff]
        %v9524 = vld [vmem:[#allocation18 + $0x38] sm:$0xff]
        %v9525 = vld [vmem:[#allocation18 + $0x40] sm:$0xff]
        %v9526 = vld [vmem:[#allocation18 + $0x48] sm:$0xff]
        %v9527 = vld [vmem:[#allocation18 + $0x50] sm:$0xff]
        %v9528 = vld [vmem:[#allocation18 + $0x58] sm:$0xff]
        %v9529 = vld [vmem:[#allocation18 + $0x60] sm:$0xff]
        %v9530 = vld [vmem:[#allocation18 + $0x68] sm:$0xff]
        %v9531 = vld [vmem:[#allocation18 + $0x70] sm:$0xff]
        %v9532 = vld [vmem:[#allocation18 + $0x78] sm:$0xff]
        %v9533 = vld [vmem:[#allocation18 + $0x80] sm:$0xff]
        %v9534 = vld [vmem:[#allocation18 + $0x88] sm:$0xff]
        %v9535 = vld [vmem:[#allocation18 + $0x90] sm:$0xff]
        %v9536 = vld [vmem:[#allocation18 + $0x98] sm:$0xff]
        %v9537 = vld [vmem:[#allocation18 + $0xa0] sm:$0xff]
        %v9538 = vld [vmem:[#allocation18 + $0xa8] sm:$0xff]
        %v9539 = vld [vmem:[#allocation18 + $0xb0] sm:$0xff]
        %v9540 = vld [vmem:[#allocation18 + $0xb8] sm:$0xff]
        %v9541 = vld [vmem:[#allocation18 + $0xc0] sm:$0xff]
        %v9542 = vld [vmem:[#allocation18 + $0xc8] sm:$0xff]
        %v9543 = vld [vmem:[#allocation18 + $0xd0] sm:$0xff]
        %v9544 = vld [vmem:[#allocation18 + $0xd8] sm:$0xff]
        %v9545 = vld [vmem:[#allocation18 + $0xe0] sm:$0xff]
        %v9546 = vld [vmem:[#allocation18 + $0xe8] sm:$0xff]
        %v9547 = vld [vmem:[#allocation18 + $0xf0] sm:$0xff]
        %v9548 = vld [vmem:[#allocation18 + $0xf8] sm:$0xff]
        %v9549 = vld [vmem:[#allocation18 + $0x100] sm:$0xff]
        %v9550 = vld [vmem:[#allocation18 + $0x108] sm:$0xff]
        %v9551 = vld [vmem:[#allocation18 + $0x110] sm:$0xff]
        %v9552 = vld [vmem:[#allocation18 + $0x118] sm:$0xff]
        %v9553 = vld [vmem:[#allocation18 + $0x120] sm:$0xff]
        %v9554 = vld [vmem:[#allocation18 + $0x128] sm:$0xff]
        %v9555 = vld [vmem:[#allocation18 + $0x130] sm:$0xff]
        %v9556 = vld [vmem:[#allocation18 + $0x138] sm:$0xff]
        %v9557 = vld [vmem:[#allocation18 + $0x140] sm:$0xff]
        %v9558 = vld [vmem:[#allocation18 + $0x148] sm:$0xff]
        %v9559 = vld [vmem:[#allocation18 + $0x150] sm:$0xff]
        %v9560 = vld [vmem:[#allocation18 + $0x158] sm:$0xff]
        %v9561 = vld [vmem:[#allocation18 + $0x160] sm:$0xff]
        %v9562 = vld [vmem:[#allocation18 + $0x168] sm:$0xff]
        %v9563 = vld [vmem:[#allocation18 + $0x170] sm:$0xff]
        %v9564 = vld [vmem:[#allocation18 + $0x178] sm:$0xff]
        %v9565 = vld [vmem:[#allocation18 + $0x180] sm:$0xff]
        %v9566 = vld [vmem:[#allocation18 + $0x188] sm:$0xff]
        %v9567 = vld [vmem:[#allocation18 + $0x190] sm:$0xff]
        %v9568 = vld [vmem:[#allocation18 + $0x198] sm:$0xff]
        %v9569 = vld [vmem:[#allocation18 + $0x1a0] sm:$0xff]
        %v9570 = vld [vmem:[#allocation18 + $0x1a8] sm:$0xff]
        %v9571 = vld [vmem:[#allocation18 + $0x1b0] sm:$0xff]
        %v9572 = vld [vmem:[#allocation18 + $0x1b8] sm:$0xff]
        %v9573 = vld [vmem:[#allocation18 + $0x1c0] sm:$0xff]
        %v9574 = vld [vmem:[#allocation18 + $0x1c8] sm:$0xff]
        %v9575 = vld [vmem:[#allocation18 + $0x1d0] sm:$0xff]
        %v9576 = vld [vmem:[#allocation18 + $0x1d8] sm:$0xff]
        %v9577 = vld [vmem:[#allocation18 + $0x1e0] sm:$0xff]
        %v9578 = vld [vmem:[#allocation18 + $0x1e8] sm:$0xff]
        %v9579 = vld [vmem:[#allocation18 + $0x1f0] sm:$0xff]
        %v9580 = vld [vmem:[#allocation18 + $0x1f8] sm:$0xff]
        %v9581 = vld [vmem:[#allocation18 + $0x200] sm:$0xff]
        %v9582 = vld [vmem:[#allocation18 + $0x208] sm:$0xff]
        %v9583 = vld [vmem:[#allocation18 + $0x210] sm:$0xff]
        %v9584 = vld [vmem:[#allocation18 + $0x218] sm:$0xff]
        %v9585 = vld [vmem:[#allocation18 + $0x220] sm:$0xff]
        %v9586 = vld [vmem:[#allocation18 + $0x228] sm:$0xff]
        %v9587 = vld [vmem:[#allocation18 + $0x230] sm:$0xff]
        %v9588 = vld [vmem:[#allocation18 + $0x238] sm:$0xff]
        %v9589 = vld [vmem:[#allocation18 + $0x240] sm:$0xff]
        %v9590 = vld [vmem:[#allocation18 + $0x248] sm:$0xff]
        %v9591 = vld [vmem:[#allocation18 + $0x250] sm:$0xff]
        %v9592 = vld [vmem:[#allocation18 + $0x258] sm:$0xff]
        %v9593 = vld [vmem:[#allocation18 + $0x260] sm:$0xff]
        %v9594 = vld [vmem:[#allocation18 + $0x268] sm:$0xff]
        %v9595 = vld [vmem:[#allocation18 + $0x270] sm:$0xff]
        %v9596 = vld [vmem:[#allocation18 + $0x278] sm:$0xff]
        %v9597 = vld [vmem:[#allocation18 + $0x280] sm:$0xff]
        %v9598 = vld [vmem:[#allocation18 + $0x288] sm:$0xff]
        %v9599 = vld [vmem:[#allocation18 + $0x290] sm:$0xff]
        %v9600 = vld [vmem:[#allocation18 + $0x298] sm:$0xff]
        %v9601 = vld [vmem:[#allocation18 + $0x2a0] sm:$0xff]
        %v9602 = vld [vmem:[#allocation18 + $0x2a8] sm:$0xff]
        %v9603 = vld [vmem:[#allocation18 + $0x2b0] sm:$0xff]
        %v9604 = vld [vmem:[#allocation18 + $0x2b8] sm:$0xff]
        %v9605 = vld [vmem:[#allocation18 + $0x2c0] sm:$0xff]
        %v9606 = vld [vmem:[#allocation18 + $0x2c8] sm:$0xff]
        %v9607 = vld [vmem:[#allocation18 + $0x2d0] sm:$0xff]
        %v9608 = vld [vmem:[#allocation18 + $0x2d8] sm:$0xff]
        %v9609 = vld [vmem:[#allocation18 + $0x2e0] sm:$0xff]
        %v9610 = vld [vmem:[#allocation18 + $0x2e8] sm:$0xff]
        %v9611 = vld [vmem:[#allocation18 + $0x2f0] sm:$0xff]
        %v9612 = vld [vmem:[#allocation18 + $0x2f8] sm:$0xff]
        %v9613 = vld [vmem:[#allocation18 + $0x300] sm:$0xff]
        %v9614 = vld [vmem:[#allocation18 + $0x308] sm:$0xff]
        %v9615 = vld [vmem:[#allocation18 + $0x310] sm:$0xff]
        %v9616 = vld [vmem:[#allocation18 + $0x318] sm:$0xff]
        %v9617 = vld [vmem:[#allocation18 + $0x320] sm:$0xff]
        %v9618 = vld [vmem:[#allocation18 + $0x328] sm:$0xff]
        %v9619 = vld [vmem:[#allocation18 + $0x330] sm:$0xff]
        %v9620 = vld [vmem:[#allocation18 + $0x338] sm:$0xff]
        %v9621 = vld [vmem:[#allocation18 + $0x340] sm:$0xff]
        %v9622 = vld [vmem:[#allocation18 + $0x348] sm:$0xff]
        %v9623 = vld [vmem:[#allocation18 + $0x350] sm:$0xff]
        %v9624 = vld [vmem:[#allocation18 + $0x358] sm:$0xff]
        %v9625 = vld [vmem:[#allocation18 + $0x360] sm:$0xff]
        %v9626 = vld [vmem:[#allocation18 + $0x368] sm:$0xff]
        %v9627 = vld [vmem:[#allocation18 + $0x370] sm:$0xff]
        %v9628 = vld [vmem:[#allocation18 + $0x378] sm:$0xff]
        %v9629 = vld [vmem:[#allocation18 + $0x380] sm:$0xff]
        %v9630 = vld [vmem:[#allocation18 + $0x388] sm:$0xff]
        %v9631 = vld [vmem:[#allocation18 + $0x390] sm:$0xff]
        %v9632 = vld [vmem:[#allocation18 + $0x398] sm:$0xff]
        %v9633 = vld [vmem:[#allocation18 + $0x3a0] sm:$0xff]
        %v9634 = vld [vmem:[#allocation18 + $0x3a8] sm:$0xff]
        %v9635 = vld [vmem:[#allocation18 + $0x3b0] sm:$0xff]
        %v9636 = vld [vmem:[#allocation18 + $0x3b8] sm:$0xff]
        %v9637 = vld [vmem:[#allocation18 + $0x3c0] sm:$0xff]
        %v9638 = vld [vmem:[#allocation18 + $0x3c8] sm:$0xff]
        %v9639 = vld [vmem:[#allocation18 + $0x3d0] sm:$0xff]
        %v9640 = vld [vmem:[#allocation18 + $0x3d8] sm:$0xff]
        %v9641 = vld [vmem:[#allocation18 + $0x3e0] sm:$0xff]
        %v9642 = vld [vmem:[#allocation18 + $0x3e8] sm:$0xff]
        %v9643 = vld [vmem:[#allocation18 + $0x3f0] sm:$0xff]
        %v9644 = vld [vmem:[#allocation18 + $0x3f8] sm:$0xff]
        %v9645 = vld [vmem:[%s12] sm:$0x3]
        %v9647 = vlaneseq
        %v9648 = vshrl.u32 %v9647, 7
        %v9649 = vsub.s32 0, %v9648
        %v9650 = vrot.slane %v9645, %v9649
        %v9651 = vlaneseq
        %v9652 = vshrl.u32 %v9651, 7
        %v9653 = vsub.s32 1, %v9652
        %v9654 = vrot.slane %v9645, %v9653
        %v9785 = vunpack.c.l.b16 %v9517
        %v9786 = vunpack.c.h.b16 %v9517
        %v9787 = vunpack.c.l.b16 %v9518
        %v9788 = vunpack.c.h.b16 %v9518
        %v9789 = vunpack.c.l.b16 %v9519
        %v9790 = vunpack.c.h.b16 %v9519
        %v9791 = vunpack.c.l.b16 %v9520
        %v9792 = vunpack.c.h.b16 %v9520
        %v9793 = vunpack.c.l.b16 %v9521
        %v9794 = vunpack.c.h.b16 %v9521
        %v9795 = vunpack.c.l.b16 %v9522
        %v9796 = vunpack.c.h.b16 %v9522
        %v9797 = vunpack.c.l.b16 %v9523
        %v9798 = vunpack.c.h.b16 %v9523
        %v9799 = vunpack.c.l.b16 %v9524
        %v9800 = vunpack.c.h.b16 %v9524
        %v9801 = vunpack.c.l.b16 %v9525
        %v9802 = vunpack.c.h.b16 %v9525
        %v9803 = vunpack.c.l.b16 %v9526
        %v9804 = vunpack.c.h.b16 %v9526
        %v9805 = vunpack.c.l.b16 %v9527
        %v9806 = vunpack.c.h.b16 %v9527
        %v9807 = vunpack.c.l.b16 %v9528
        %v9808 = vunpack.c.h.b16 %v9528
        %v9809 = vunpack.c.l.b16 %v9529
        %v9810 = vunpack.c.h.b16 %v9529
        %v9811 = vunpack.c.l.b16 %v9530
        %v9812 = vunpack.c.h.b16 %v9530
        %v9813 = vunpack.c.l.b16 %v9531
        %v9814 = vunpack.c.h.b16 %v9531
        %v9815 = vunpack.c.l.b16 %v9532
        %v9816 = vunpack.c.h.b16 %v9532
        %v9817 = vunpack.c.l.b16 %v9533
        %v9818 = vunpack.c.h.b16 %v9533
        %v9819 = vunpack.c.l.b16 %v9534
        %v9820 = vunpack.c.h.b16 %v9534
        %v9821 = vunpack.c.l.b16 %v9535
        %v9822 = vunpack.c.h.b16 %v9535
        %v9823 = vunpack.c.l.b16 %v9536
        %v9824 = vunpack.c.h.b16 %v9536
        %v9825 = vunpack.c.l.b16 %v9537
        %v9826 = vunpack.c.h.b16 %v9537
        %v9827 = vunpack.c.l.b16 %v9538
        %v9828 = vunpack.c.h.b16 %v9538
        %v9829 = vunpack.c.l.b16 %v9539
        %v9830 = vunpack.c.h.b16 %v9539
        %v9831 = vunpack.c.l.b16 %v9540
        %v9832 = vunpack.c.h.b16 %v9540
        %v9833 = vunpack.c.l.b16 %v9541
        %v9834 = vunpack.c.h.b16 %v9541
        %v9835 = vunpack.c.l.b16 %v9542
        %v9836 = vunpack.c.h.b16 %v9542
        %v9837 = vunpack.c.l.b16 %v9543
        %v9838 = vunpack.c.h.b16 %v9543
        %v9839 = vunpack.c.l.b16 %v9544
        %v9840 = vunpack.c.h.b16 %v9544
        %v9841 = vunpack.c.l.b16 %v9545
        %v9842 = vunpack.c.h.b16 %v9545
        %v9843 = vunpack.c.l.b16 %v9546
        %v9844 = vunpack.c.h.b16 %v9546
        %v9845 = vunpack.c.l.b16 %v9547
        %v9846 = vunpack.c.h.b16 %v9547
        %v9847 = vunpack.c.l.b16 %v9548
        %v9848 = vunpack.c.h.b16 %v9548
        %v9849 = vunpack.c.l.b16 %v9549
        %v9850 = vunpack.c.h.b16 %v9549
        %v9851 = vunpack.c.l.b16 %v9550
        %v9852 = vunpack.c.h.b16 %v9550
        %v9853 = vunpack.c.l.b16 %v9551
        %v9854 = vunpack.c.h.b16 %v9551
        %v9855 = vunpack.c.l.b16 %v9552
        %v9856 = vunpack.c.h.b16 %v9552
        %v9857 = vunpack.c.l.b16 %v9553
        %v9858 = vunpack.c.h.b16 %v9553
        %v9859 = vunpack.c.l.b16 %v9554
        %v9860 = vunpack.c.h.b16 %v9554
        %v9861 = vunpack.c.l.b16 %v9555
        %v9862 = vunpack.c.h.b16 %v9555
        %v9863 = vunpack.c.l.b16 %v9556
        %v9864 = vunpack.c.h.b16 %v9556
        %v9865 = vunpack.c.l.b16 %v9557
        %v9866 = vunpack.c.h.b16 %v9557
        %v9867 = vunpack.c.l.b16 %v9558
        %v9868 = vunpack.c.h.b16 %v9558
        %v9869 = vunpack.c.l.b16 %v9559
        %v9870 = vunpack.c.h.b16 %v9559
        %v9871 = vunpack.c.l.b16 %v9560
        %v9872 = vunpack.c.h.b16 %v9560
        %v9873 = vunpack.c.l.b16 %v9561
        %v9874 = vunpack.c.h.b16 %v9561
        %v9875 = vunpack.c.l.b16 %v9562
        %v9876 = vunpack.c.h.b16 %v9562
        %v9877 = vunpack.c.l.b16 %v9563
        %v9878 = vunpack.c.h.b16 %v9563
        %v9879 = vunpack.c.l.b16 %v9564
        %v9880 = vunpack.c.h.b16 %v9564
        %v9881 = vunpack.c.l.b16 %v9565
        %v9882 = vunpack.c.h.b16 %v9565
        %v9883 = vunpack.c.l.b16 %v9566
        %v9884 = vunpack.c.h.b16 %v9566
        %v9885 = vunpack.c.l.b16 %v9567
        %v9886 = vunpack.c.h.b16 %v9567
        %v9887 = vunpack.c.l.b16 %v9568
        %v9888 = vunpack.c.h.b16 %v9568
        %v9889 = vunpack.c.l.b16 %v9569
        %v9890 = vunpack.c.h.b16 %v9569
        %v9891 = vunpack.c.l.b16 %v9570
        %v9892 = vunpack.c.h.b16 %v9570
        %v9893 = vunpack.c.l.b16 %v9571
        %v9894 = vunpack.c.h.b16 %v9571
        %v9895 = vunpack.c.l.b16 %v9572
        %v9896 = vunpack.c.h.b16 %v9572
        %v9897 = vunpack.c.l.b16 %v9573
        %v9898 = vunpack.c.h.b16 %v9573
        %v9899 = vunpack.c.l.b16 %v9574
        %v9900 = vunpack.c.h.b16 %v9574
        %v9901 = vunpack.c.l.b16 %v9575
        %v9902 = vunpack.c.h.b16 %v9575
        %v9903 = vunpack.c.l.b16 %v9576
        %v9904 = vunpack.c.h.b16 %v9576
        %v9905 = vunpack.c.l.b16 %v9577
        %v9906 = vunpack.c.h.b16 %v9577
        %v9907 = vunpack.c.l.b16 %v9578
        %v9908 = vunpack.c.h.b16 %v9578
        %v9909 = vunpack.c.l.b16 %v9579
        %v9910 = vunpack.c.h.b16 %v9579
        %v9911 = vunpack.c.l.b16 %v9580
        %v9912 = vunpack.c.h.b16 %v9580
        %v9913 = vunpack.c.l.b16 %v9581
        %v9914 = vunpack.c.h.b16 %v9581
        %v9915 = vunpack.c.l.b16 %v9582
        %v9916 = vunpack.c.h.b16 %v9582
        %v9917 = vunpack.c.l.b16 %v9583
        %v9918 = vunpack.c.h.b16 %v9583
        %v9919 = vunpack.c.l.b16 %v9584
        %v9920 = vunpack.c.h.b16 %v9584
        %v9921 = vunpack.c.l.b16 %v9585
        %v9922 = vunpack.c.h.b16 %v9585
        %v9923 = vunpack.c.l.b16 %v9586
        %v9924 = vunpack.c.h.b16 %v9586
        %v9925 = vunpack.c.l.b16 %v9587
        %v9926 = vunpack.c.h.b16 %v9587
        %v9927 = vunpack.c.l.b16 %v9588
        %v9928 = vunpack.c.h.b16 %v9588
        %v9929 = vunpack.c.l.b16 %v9589
        %v9930 = vunpack.c.h.b16 %v9589
        %v9931 = vunpack.c.l.b16 %v9590
        %v9932 = vunpack.c.h.b16 %v9590
        %v9933 = vunpack.c.l.b16 %v9591
        %v9934 = vunpack.c.h.b16 %v9591
        %v9935 = vunpack.c.l.b16 %v9592
        %v9936 = vunpack.c.h.b16 %v9592
        %v9937 = vunpack.c.l.b16 %v9593
        %v9938 = vunpack.c.h.b16 %v9593
        %v9939 = vunpack.c.l.b16 %v9594
        %v9940 = vunpack.c.h.b16 %v9594
        %v9941 = vunpack.c.l.b16 %v9595
        %v9942 = vunpack.c.h.b16 %v9595
        %v9943 = vunpack.c.l.b16 %v9596
        %v9944 = vunpack.c.h.b16 %v9596
        %v9945 = vunpack.c.l.b16 %v9597
        %v9946 = vunpack.c.h.b16 %v9597
        %v9947 = vunpack.c.l.b16 %v9598
        %v9948 = vunpack.c.h.b16 %v9598
        %v9949 = vunpack.c.l.b16 %v9599
        %v9950 = vunpack.c.h.b16 %v9599
        %v9951 = vunpack.c.l.b16 %v9600
        %v9952 = vunpack.c.h.b16 %v9600
        %v9953 = vunpack.c.l.b16 %v9601
        %v9954 = vunpack.c.h.b16 %v9601
        %v9955 = vunpack.c.l.b16 %v9602
        %v9956 = vunpack.c.h.b16 %v9602
        %v9957 = vunpack.c.l.b16 %v9603
        %v9958 = vunpack.c.h.b16 %v9603
        %v9959 = vunpack.c.l.b16 %v9604
        %v9960 = vunpack.c.h.b16 %v9604
        %v9961 = vunpack.c.l.b16 %v9605
        %v9962 = vunpack.c.h.b16 %v9605
        %v9963 = vunpack.c.l.b16 %v9606
        %v9964 = vunpack.c.h.b16 %v9606
        %v9965 = vunpack.c.l.b16 %v9607
        %v9966 = vunpack.c.h.b16 %v9607
        %v9967 = vunpack.c.l.b16 %v9608
        %v9968 = vunpack.c.h.b16 %v9608
        %v9969 = vunpack.c.l.b16 %v9609
        %v9970 = vunpack.c.h.b16 %v9609
        %v9971 = vunpack.c.l.b16 %v9610
        %v9972 = vunpack.c.h.b16 %v9610
        %v9973 = vunpack.c.l.b16 %v9611
        %v9974 = vunpack.c.h.b16 %v9611
        %v9975 = vunpack.c.l.b16 %v9612
        %v9976 = vunpack.c.h.b16 %v9612
        %v9977 = vunpack.c.l.b16 %v9613
        %v9978 = vunpack.c.h.b16 %v9613
        %v9979 = vunpack.c.l.b16 %v9614
        %v9980 = vunpack.c.h.b16 %v9614
        %v9981 = vunpack.c.l.b16 %v9615
        %v9982 = vunpack.c.h.b16 %v9615
        %v9983 = vunpack.c.l.b16 %v9616
        %v9984 = vunpack.c.h.b16 %v9616
        %v9985 = vunpack.c.l.b16 %v9617
        %v9986 = vunpack.c.h.b16 %v9617
        %v9987 = vunpack.c.l.b16 %v9618
        %v9988 = vunpack.c.h.b16 %v9618
        %v9989 = vunpack.c.l.b16 %v9619
        %v9990 = vunpack.c.h.b16 %v9619
        %v9991 = vunpack.c.l.b16 %v9620
        %v9992 = vunpack.c.h.b16 %v9620
        %v9993 = vunpack.c.l.b16 %v9621
        %v9994 = vunpack.c.h.b16 %v9621
        %v9995 = vunpack.c.l.b16 %v9622
        %v9996 = vunpack.c.h.b16 %v9622
        %v9997 = vunpack.c.l.b16 %v9623
        %v9998 = vunpack.c.h.b16 %v9623
        %v9999 = vunpack.c.l.b16 %v9624
        %v10000 = vunpack.c.h.b16 %v9624
        %v10001 = vunpack.c.l.b16 %v9625
        %v10002 = vunpack.c.h.b16 %v9625
        %v10003 = vunpack.c.l.b16 %v9626
        %v10004 = vunpack.c.h.b16 %v9626
        %v10005 = vunpack.c.l.b16 %v9627
        %v10006 = vunpack.c.h.b16 %v9627
        %v10007 = vunpack.c.l.b16 %v9628
        %v10008 = vunpack.c.h.b16 %v9628
        %v10009 = vunpack.c.l.b16 %v9629
        %v10010 = vunpack.c.h.b16 %v9629
        %v10011 = vunpack.c.l.b16 %v9630
        %v10012 = vunpack.c.h.b16 %v9630
        %v10013 = vunpack.c.l.b16 %v9631
        %v10014 = vunpack.c.h.b16 %v9631
        %v10015 = vunpack.c.l.b16 %v9632
        %v10016 = vunpack.c.h.b16 %v9632
        %v10017 = vunpack.c.l.b16 %v9633
        %v10018 = vunpack.c.h.b16 %v9633
        %v10019 = vunpack.c.l.b16 %v9634
        %v10020 = vunpack.c.h.b16 %v9634
        %v10021 = vunpack.c.l.b16 %v9635
        %v10022 = vunpack.c.h.b16 %v9635
        %v10023 = vunpack.c.l.b16 %v9636
        %v10024 = vunpack.c.h.b16 %v9636
        %v10025 = vunpack.c.l.b16 %v9637
        %v10026 = vunpack.c.h.b16 %v9637
        %v10027 = vunpack.c.l.b16 %v9638
        %v10028 = vunpack.c.h.b16 %v9638
        %v10029 = vunpack.c.l.b16 %v9639
        %v10030 = vunpack.c.h.b16 %v9639
        %v10031 = vunpack.c.l.b16 %v9640
        %v10032 = vunpack.c.h.b16 %v9640
        %v10033 = vunpack.c.l.b16 %v9641
        %v10034 = vunpack.c.h.b16 %v9641
        %v10035 = vunpack.c.l.b16 %v9642
        %v10036 = vunpack.c.h.b16 %v9642
        %v10037 = vunpack.c.l.b16 %v9643
        %v10038 = vunpack.c.h.b16 %v9643
        %v10039 = vunpack.c.l.b16 %v9644
        %v10040 = vunpack.c.h.b16 %v9644
        %v10041 = vpack.c.b16 %v9787, %v9785
        %v10042 = vpack.c.b16 %v9788, %v9786
        %v10043 = vpack.c.b16 %v9791, %v9789
        %v10044 = vpack.c.b16 %v9792, %v9790
        %v10045 = vpack.c.b16 %v9795, %v9793
        %v10046 = vpack.c.b16 %v9796, %v9794
        %v10047 = vpack.c.b16 %v9799, %v9797
        %v10048 = vpack.c.b16 %v9800, %v9798
        %v10049 = vpack.c.b16 %v9803, %v9801
        %v10050 = vpack.c.b16 %v9804, %v9802
        %v10051 = vpack.c.b16 %v9807, %v9805
        %v10052 = vpack.c.b16 %v9808, %v9806
        %v10053 = vpack.c.b16 %v9811, %v9809
        %v10054 = vpack.c.b16 %v9812, %v9810
        %v10055 = vpack.c.b16 %v9815, %v9813
        %v10056 = vpack.c.b16 %v9816, %v9814
        %v10057 = vpack.c.b16 %v9819, %v9817
        %v10058 = vpack.c.b16 %v9820, %v9818
        %v10059 = vpack.c.b16 %v9823, %v9821
        %v10060 = vpack.c.b16 %v9824, %v9822
        %v10061 = vpack.c.b16 %v9827, %v9825
        %v10062 = vpack.c.b16 %v9828, %v9826
        %v10063 = vpack.c.b16 %v9831, %v9829
        %v10064 = vpack.c.b16 %v9832, %v9830
        %v10065 = vpack.c.b16 %v9835, %v9833
        %v10066 = vpack.c.b16 %v9836, %v9834
        %v10067 = vpack.c.b16 %v9839, %v9837
        %v10068 = vpack.c.b16 %v9840, %v9838
        %v10069 = vpack.c.b16 %v9843, %v9841
        %v10070 = vpack.c.b16 %v9844, %v9842
        %v10071 = vpack.c.b16 %v9847, %v9845
        %v10072 = vpack.c.b16 %v9848, %v9846
        %v10073 = vpack.c.b16 %v9851, %v9849
        %v10074 = vpack.c.b16 %v9852, %v9850
        %v10075 = vpack.c.b16 %v9855, %v9853
        %v10076 = vpack.c.b16 %v9856, %v9854
        %v10077 = vpack.c.b16 %v9859, %v9857
        %v10078 = vpack.c.b16 %v9860, %v9858
        %v10079 = vpack.c.b16 %v9863, %v9861
        %v10080 = vpack.c.b16 %v9864, %v9862
        %v10081 = vpack.c.b16 %v9867, %v9865
        %v10082 = vpack.c.b16 %v9868, %v9866
        %v10083 = vpack.c.b16 %v9871, %v9869
        %v10084 = vpack.c.b16 %v9872, %v9870
        %v10085 = vpack.c.b16 %v9875, %v9873
        %v10086 = vpack.c.b16 %v9876, %v9874
        %v10087 = vpack.c.b16 %v9879, %v9877
        %v10088 = vpack.c.b16 %v9880, %v9878
        %v10089 = vpack.c.b16 %v9883, %v9881
        %v10090 = vpack.c.b16 %v9884, %v9882
        %v10091 = vpack.c.b16 %v9887, %v9885
        %v10092 = vpack.c.b16 %v9888, %v9886
        %v10093 = vpack.c.b16 %v9891, %v9889
        %v10094 = vpack.c.b16 %v9892, %v9890
        %v10095 = vpack.c.b16 %v9895, %v9893
        %v10096 = vpack.c.b16 %v9896, %v9894
        %v10097 = vpack.c.b16 %v9899, %v9897
        %v10098 = vpack.c.b16 %v9900, %v9898
        %v10099 = vpack.c.b16 %v9903, %v9901
        %v10100 = vpack.c.b16 %v9904, %v9902
        %v10101 = vpack.c.b16 %v9907, %v9905
        %v10102 = vpack.c.b16 %v9908, %v9906
        %v10103 = vpack.c.b16 %v9911, %v9909
        %v10104 = vpack.c.b16 %v9912, %v9910
        %v10105 = vpack.c.b16 %v9915, %v9913
        %v10106 = vpack.c.b16 %v9916, %v9914
        %v10107 = vpack.c.b16 %v9919, %v9917
        %v10108 = vpack.c.b16 %v9920, %v9918
        %v10109 = vpack.c.b16 %v9923, %v9921
        %v10110 = vpack.c.b16 %v9924, %v9922
        %v10111 = vpack.c.b16 %v9927, %v9925
        %v10112 = vpack.c.b16 %v9928, %v9926
        %v10113 = vpack.c.b16 %v9931, %v9929
        %v10114 = vpack.c.b16 %v9932, %v9930
        %v10115 = vpack.c.b16 %v9935, %v9933
        %v10116 = vpack.c.b16 %v9936, %v9934
        %v10117 = vpack.c.b16 %v9939, %v9937
        %v10118 = vpack.c.b16 %v9940, %v9938
        %v10119 = vpack.c.b16 %v9943, %v9941
        %v10120 = vpack.c.b16 %v9944, %v9942
        %v10121 = vpack.c.b16 %v9947, %v9945
        %v10122 = vpack.c.b16 %v9948, %v9946
        %v10123 = vpack.c.b16 %v9951, %v9949
        %v10124 = vpack.c.b16 %v9952, %v9950
        %v10125 = vpack.c.b16 %v9955, %v9953
        %v10126 = vpack.c.b16 %v9956, %v9954
        %v10127 = vpack.c.b16 %v9959, %v9957
        %v10128 = vpack.c.b16 %v9960, %v9958
        %v10129 = vpack.c.b16 %v9963, %v9961
        %v10130 = vpack.c.b16 %v9964, %v9962
        %v10131 = vpack.c.b16 %v9967, %v9965
        %v10132 = vpack.c.b16 %v9968, %v9966
        %v10133 = vpack.c.b16 %v9971, %v9969
        %v10134 = vpack.c.b16 %v9972, %v9970
        %v10135 = vpack.c.b16 %v9975, %v9973
        %v10136 = vpack.c.b16 %v9976, %v9974
        %v10137 = vpack.c.b16 %v9979, %v9977
        %v10138 = vpack.c.b16 %v9980, %v9978
        %v10139 = vpack.c.b16 %v9983, %v9981
        %v10140 = vpack.c.b16 %v9984, %v9982
        %v10141 = vpack.c.b16 %v9987, %v9985
        %v10142 = vpack.c.b16 %v9988, %v9986
        %v10143 = vpack.c.b16 %v9991, %v9989
        %v10144 = vpack.c.b16 %v9992, %v9990
        %v10145 = vpack.c.b16 %v9995, %v9993
        %v10146 = vpack.c.b16 %v9996, %v9994
        %v10147 = vpack.c.b16 %v9999, %v9997
        %v10148 = vpack.c.b16 %v10000, %v9998
        %v10149 = vpack.c.b16 %v10003, %v10001
        %v10150 = vpack.c.b16 %v10004, %v10002
        %v10151 = vpack.c.b16 %v10007, %v10005
        %v10152 = vpack.c.b16 %v10008, %v10006
        %v10153 = vpack.c.b16 %v10011, %v10009
        %v10154 = vpack.c.b16 %v10012, %v10010
        %v10155 = vpack.c.b16 %v10015, %v10013
        %v10156 = vpack.c.b16 %v10016, %v10014
        %v10157 = vpack.c.b16 %v10019, %v10017
        %v10158 = vpack.c.b16 %v10020, %v10018
        %v10159 = vpack.c.b16 %v10023, %v10021
        %v10160 = vpack.c.b16 %v10024, %v10022
        %v10161 = vpack.c.b16 %v10027, %v10025
        %v10162 = vpack.c.b16 %v10028, %v10026
        %v10163 = vpack.c.b16 %v10031, %v10029
        %v10164 = vpack.c.b16 %v10032, %v10030
        %v10165 = vpack.c.b16 %v10035, %v10033
        %v10166 = vpack.c.b16 %v10036, %v10034
        %v10167 = vpack.c.b16 %v10039, %v10037
        %v10168 = vpack.c.b16 %v10040, %v10038
        %10297 = vmatprep.subr.bf16.mxu0 %v10042
        %10298 = vmatpush1.bf16.msra.mxu0 %v10041
        %10299 = vmatprep.subr.bf16.mxu0 %v10044
        %10300 = vmatpush1.bf16.msra.mxu0 %v10043
        %10301 = vmatprep.subr.bf16.mxu0 %v10046
        %10302 = vmatpush1.bf16.msra.mxu0 %v10045
        %10303 = vmatprep.subr.bf16.mxu0 %v10048
        %10304 = vmatpush1.bf16.msra.mxu0 %v10047
        %10305 = vmatprep.subr.bf16.mxu0 %v10050
        %10306 = vmatpush1.bf16.msra.mxu0 %v10049
        %10307 = vmatprep.subr.bf16.mxu0 %v10052
        %10308 = vmatpush1.bf16.msra.mxu0 %v10051
        %10309 = vmatprep.subr.bf16.mxu0 %v10054
        %10310 = vmatpush1.bf16.msra.mxu0 %v10053
        %10311 = vmatprep.subr.bf16.mxu0 %v10056
        %10312 = vmatpush1.bf16.msra.mxu0 %v10055
        %10313 = vmatprep.subr.bf16.mxu0 %v10058
        %10314 = vmatpush1.bf16.msra.mxu0 %v10057
        %10315 = vmatprep.subr.bf16.mxu0 %v10060
        %10316 = vmatpush1.bf16.msra.mxu0 %v10059
        %10317 = vmatprep.subr.bf16.mxu0 %v10062
        %10318 = vmatpush1.bf16.msra.mxu0 %v10061
        %10319 = vmatprep.subr.bf16.mxu0 %v10064
        %10320 = vmatpush1.bf16.msra.mxu0 %v10063
        %10321 = vmatprep.subr.bf16.mxu0 %v10066
        %10322 = vmatpush1.bf16.msra.mxu0 %v10065
        %10323 = vmatprep.subr.bf16.mxu0 %v10068
        %10324 = vmatpush1.bf16.msra.mxu0 %v10067
        %10325 = vmatprep.subr.bf16.mxu0 %v10070
        %10326 = vmatpush1.bf16.msra.mxu0 %v10069
        %10327 = vmatprep.subr.bf16.mxu0 %v10072
        %10328 = vmatpush1.bf16.msra.mxu0 %v10071
        %10329 = vmatprep.mubr.bf16.mxu0 %v9486
        %10330 = vmatmul.mubr.bf16.gmra.mrb[0].mxu0 %v9485
        %v10331 = vpop.f32.mrb[0].mxu0
        %v10332 = vadd.f32 %v9650, %v10331
        %v10333 = vpop.f32.mrb[0].mxu0
        %v10334 = vadd.f32 %v9654, %v10333
        %v10335 = vpop.f32.mrb[0].mxu0
        %v10336 = vadd.f32 %v9650, %v10335
        %v10337 = vpop.f32.mrb[0].mxu0
        %v10338 = vadd.f32 %v9654, %v10337
        %10339 = vmatprep.mubr.bf16.mxu0 %v9494
        %10340 = vmatmul.mubr.bf16.gmra.mrb[0].mxu0 %v9493
        %v10341 = vpop.f32.mrb[0].mxu0
        %v10342 = vadd.f32 %v9650, %v10341
        %v10343 = vpop.f32.mrb[0].mxu0
        %v10344 = vadd.f32 %v9654, %v10343
        %v10345 = vpop.f32.mrb[0].mxu0
        %v10346 = vadd.f32 %v9650, %v10345
        %v10347 = vpop.f32.mrb[0].mxu0
        %v10348 = vadd.f32 %v9654, %v10347
        %10349 = vmatprep.mubr.bf16.mxu0 %v9502
        %10350 = vmatmul.mubr.bf16.gmra.mrb[0].mxu0 %v9501
        %v10351 = vpop.f32.mrb[0].mxu0
        %v10352 = vadd.f32 %v9650, %v10351
        %v10353 = vpop.f32.mrb[0].mxu0
        %v10354 = vadd.f32 %v9654, %v10353
        %v10355 = vpop.f32.mrb[0].mxu0
        %v10356 = vadd.f32 %v9650, %v10355
        %v10357 = vpop.f32.mrb[0].mxu0
        %v10358 = vadd.f32 %v9654, %v10357
        %10359 = vmatprep.mubr.bf16.mxu0 %v9510
        %10360 = vmatmul.mubr.bf16.gmra.mrb[0].mxu0 %v9509
        %v10361 = vpop.f32.mrb[0].mxu0
        %v10362 = vadd.f32 %v9650, %v10361
        %v10363 = vpop.f32.mrb[0].mxu0
        %v10364 = vadd.f32 %v9654, %v10363
        %v10365 = vpop.f32.mrb[0].mxu0
        %v10366 = vadd.f32 %v9650, %v10365
        %v10367 = vpop.f32.mrb[0].mxu0
        %v10368 = vadd.f32 %v9654, %v10367
        %10369 = vdwg.mxu0
        %10370 = vmatprep.subr.bf16.mxu0 %v10074
        %10371 = vmatpush1.bf16.msra.mxu0 %v10073
        %10372 = vmatprep.subr.bf16.mxu0 %v10076
        %10373 = vmatpush1.bf16.msra.mxu0 %v10075
        %10374 = vmatprep.subr.bf16.mxu0 %v10078
        %10375 = vmatpush1.bf16.msra.mxu0 %v10077
        %10376 = vmatprep.subr.bf16.mxu0 %v10080
        %10377 = vmatpush1.bf16.msra.mxu0 %v10079
        %10378 = vmatprep.subr.bf16.mxu0 %v10082
        %10379 = vmatpush1.bf16.msra.mxu0 %v10081
        %10380 = vmatprep.subr.bf16.mxu0 %v10084
        %10381 = vmatpush1.bf16.msra.mxu0 %v10083
        %10382 = vmatprep.subr.bf16.mxu0 %v10086
        %10383 = vmatpush1.bf16.msra.mxu0 %v10085
        %10384 = vmatprep.subr.bf16.mxu0 %v10088
        %10385 = vmatpush1.bf16.msra.mxu0 %v10087
        %10386 = vmatprep.subr.bf16.mxu0 %v10090
        %10387 = vmatpush1.bf16.msra.mxu0 %v10089
        %10388 = vmatprep.subr.bf16.mxu0 %v10092
        %10389 = vmatpush1.bf16.msra.mxu0 %v10091
        %10390 = vmatprep.subr.bf16.mxu0 %v10094
        %10391 = vmatpush1.bf16.msra.mxu0 %v10093
        %10392 = vmatprep.subr.bf16.mxu0 %v10096
        %10393 = vmatpush1.bf16.msra.mxu0 %v10095
        %10394 = vmatprep.subr.bf16.mxu0 %v10098
        %10395 = vmatpush1.bf16.msra.mxu0 %v10097
        %10396 = vmatprep.subr.bf16.mxu0 %v10100
        %10397 = vmatpush1.bf16.msra.mxu0 %v10099
        %10398 = vmatprep.subr.bf16.mxu0 %v10102
        %10399 = vmatpush1.bf16.msra.mxu0 %v10101
        %10400 = vmatprep.subr.bf16.mxu0 %v10104
        %10401 = vmatpush1.bf16.msra.mxu0 %v10103
        %10402 = vmatprep.mubr.bf16.mxu0 %v9488
        %10403 = vmatmul.mubr.bf16.gmra.mrb[0].mxu0 %v9487
        %v10404 = vpop.f32.mrb[0].mxu0
        %v10405 = vadd.f32 %v10332, %v10404
        %v10406 = vpop.f32.mrb[0].mxu0
        %v10407 = vadd.f32 %v10334, %v10406
        %v10408 = vpop.f32.mrb[0].mxu0
        %v10409 = vadd.f32 %v10336, %v10408
        %v10410 = vpop.f32.mrb[0].mxu0
        %v10411 = vadd.f32 %v10338, %v10410
        %10412 = vmatprep.mubr.bf16.mxu0 %v9496
        %10413 = vmatmul.mubr.bf16.gmra.mrb[0].mxu0 %v9495
        %v10414 = vpop.f32.mrb[0].mxu0
        %v10415 = vadd.f32 %v10342, %v10414
        %v10416 = vpop.f32.mrb[0].mxu0
        %v10417 = vadd.f32 %v10344, %v10416
        %v10418 = vpop.f32.mrb[0].mxu0
        %v10419 = vadd.f32 %v10346, %v10418
        %v10420 = vpop.f32.mrb[0].mxu0
        %v10421 = vadd.f32 %v10348, %v10420
        %10422 = vmatprep.mubr.bf16.mxu0 %v9504
        %10423 = vmatmul.mubr.bf16.gmra.mrb[0].mxu0 %v9503
        %v10424 = vpop.f32.mrb[0].mxu0
        %v10425 = vadd.f32 %v10352, %v10424
        %v10426 = vpop.f32.mrb[0].mxu0
        %v10427 = vadd.f32 %v10354, %v10426
        %v10428 = vpop.f32.mrb[0].mxu0
        %v10429 = vadd.f32 %v10356, %v10428
        %v10430 = vpop.f32.mrb[0].mxu0
        %v10431 = vadd.f32 %v10358, %v10430
        %10432 = vmatprep.mubr.bf16.mxu0 %v9512
        %10433 = vmatmul.mubr.bf16.gmra.mrb[0].mxu0 %v9511
        %v10434 = vpop.f32.mrb[0].mxu0
        %v10435 = vadd.f32 %v10362, %v10434
        %v10436 = vpop.f32.mrb[0].mxu0
        %v10437 = vadd.f32 %v10364, %v10436
        %v10438 = vpop.f32.mrb[0].mxu0
        %v10439 = vadd.f32 %v10366, %v10438
        %v10440 = vpop.f32.mrb[0].mxu0
        %v10441 = vadd.f32 %v10368, %v10440
        %10442 = vdwg.mxu0
        %10443 = vmatprep.subr.bf16.mxu0 %v10106
        %10444 = vmatpush1.bf16.msra.mxu0 %v10105
        %10445 = vmatprep.subr.bf16.mxu0 %v10108
        %10446 = vmatpush1.bf16.msra.mxu0 %v10107
        %10447 = vmatprep.subr.bf16.mxu0 %v10110
        %10448 = vmatpush1.bf16.msra.mxu0 %v10109
        %10449 = vmatprep.subr.bf16.mxu0 %v10112
        %10450 = vmatpush1.bf16.msra.mxu0 %v10111
        %10451 = vmatprep.subr.bf16.mxu0 %v10114
        %10452 = vmatpush1.bf16.msra.mxu0 %v10113
        %10453 = vmatprep.subr.bf16.mxu0 %v10116
        %10454 = vmatpush1.bf16.msra.mxu0 %v10115
        %10455 = vmatprep.subr.bf16.mxu0 %v10118
        %10456 = vmatpush1.bf16.msra.mxu0 %v10117
        %10457 = vmatprep.subr.bf16.mxu0 %v10120
        %10458 = vmatpush1.bf16.msra.mxu0 %v10119
        %10459 = vmatprep.subr.bf16.mxu0 %v10122
        %10460 = vmatpush1.bf16.msra.mxu0 %v10121
        %10461 = vmatprep.subr.bf16.mxu0 %v10124
        %10462 = vmatpush1.bf16.msra.mxu0 %v10123
        %10463 = vmatprep.subr.bf16.mxu0 %v10126
        %10464 = vmatpush1.bf16.msra.mxu0 %v10125
        %10465 = vmatprep.subr.bf16.mxu0 %v10128
        %10466 = vmatpush1.bf16.msra.mxu0 %v10127
        %10467 = vmatprep.subr.bf16.mxu0 %v10130
        %10468 = vmatpush1.bf16.msra.mxu0 %v10129
        %10469 = vmatprep.subr.bf16.mxu0 %v10132
        %10470 = vmatpush1.bf16.msra.mxu0 %v10131
        %10471 = vmatprep.subr.bf16.mxu0 %v10134
        %10472 = vmatpush1.bf16.msra.mxu0 %v10133
        %10473 = vmatprep.subr.bf16.mxu0 %v10136
        %10474 = vmatpush1.bf16.msra.mxu0 %v10135
        %10475 = vmatprep.mubr.bf16.mxu0 %v9490
        %10476 = vmatmul.mubr.bf16.gmra.mrb[0].mxu0 %v9489
        %v10477 = vpop.f32.mrb[0].mxu0
        %v10478 = vadd.f32 %v10405, %v10477
        %v10479 = vpop.f32.mrb[0].mxu0
        %v10480 = vadd.f32 %v10407, %v10479
        %v10481 = vpop.f32.mrb[0].mxu0
        %v10482 = vadd.f32 %v10409, %v10481
        %v10483 = vpop.f32.mrb[0].mxu0
        %v10484 = vadd.f32 %v10411, %v10483
        %10485 = vmatprep.mubr.bf16.mxu0 %v9498
        %10486 = vmatmul.mubr.bf16.gmra.mrb[0].mxu0 %v9497
        %v10487 = vpop.f32.mrb[0].mxu0
        %v10488 = vadd.f32 %v10415, %v10487
        %v10489 = vpop.f32.mrb[0].mxu0
        %v10490 = vadd.f32 %v10417, %v10489
        %v10491 = vpop.f32.mrb[0].mxu0
        %v10492 = vadd.f32 %v10419, %v10491
        %v10493 = vpop.f32.mrb[0].mxu0
        %v10494 = vadd.f32 %v10421, %v10493
        %10495 = vmatprep.mubr.bf16.mxu0 %v9506
        %10496 = vmatmul.mubr.bf16.gmra.mrb[0].mxu0 %v9505
        %v10497 = vpop.f32.mrb[0].mxu0
        %v10498 = vadd.f32 %v10425, %v10497
        %v10499 = vpop.f32.mrb[0].mxu0
        %v10500 = vadd.f32 %v10427, %v10499
        %v10501 = vpop.f32.mrb[0].mxu0
        %v10502 = vadd.f32 %v10429, %v10501
        %v10503 = vpop.f32.mrb[0].mxu0
        %v10504 = vadd.f32 %v10431, %v10503
        %10505 = vmatprep.mubr.bf16.mxu0 %v9514
        %10506 = vmatmul.mubr.bf16.gmra.mrb[0].mxu0 %v9513
        %v10507 = vpop.f32.mrb[0].mxu0
        %v10508 = vadd.f32 %v10435, %v10507
        %v10509 = vpop.f32.mrb[0].mxu0
        %v10510 = vadd.f32 %v10437, %v10509
        %v10511 = vpop.f32.mrb[0].mxu0
        %v10512 = vadd.f32 %v10439, %v10511
        %v10513 = vpop.f32.mrb[0].mxu0
        %v10514 = vadd.f32 %v10441, %v10513
        %10515 = vdwg.mxu0
        %10516 = vmatprep.subr.bf16.mxu0 %v10138
        %10517 = vmatpush1.bf16.msra.mxu0 %v10137
        %10518 = vmatprep.subr.bf16.mxu0 %v10140
        %10519 = vmatpush1.bf16.msra.mxu0 %v10139
        %10520 = vmatprep.subr.bf16.mxu0 %v10142
        %10521 = vmatpush1.bf16.msra.mxu0 %v10141
        %10522 = vmatprep.subr.bf16.mxu0 %v10144
        %10523 = vmatpush1.bf16.msra.mxu0 %v10143
        %10524 = vmatprep.subr.bf16.mxu0 %v10146
        %10525 = vmatpush1.bf16.msra.mxu0 %v10145
        %10526 = vmatprep.subr.bf16.mxu0 %v10148
        %10527 = vmatpush1.bf16.msra.mxu0 %v10147
        %10528 = vmatprep.subr.bf16.mxu0 %v10150
        %10529 = vmatpush1.bf16.msra.mxu0 %v10149
        %10530 = vmatprep.subr.bf16.mxu0 %v10152
        %10531 = vmatpush1.bf16.msra.mxu0 %v10151
        %10532 = vmatprep.subr.bf16.mxu0 %v10154
        %10533 = vmatpush1.bf16.msra.mxu0 %v10153
        %10534 = vmatprep.subr.bf16.mxu0 %v10156
        %10535 = vmatpush1.bf16.msra.mxu0 %v10155
        %10536 = vmatprep.subr.bf16.mxu0 %v10158
        %10537 = vmatpush1.bf16.msra.mxu0 %v10157
        %10538 = vmatprep.subr.bf16.mxu0 %v10160
        %10539 = vmatpush1.bf16.msra.mxu0 %v10159
        %10540 = vmatprep.subr.bf16.mxu0 %v10162
        %10541 = vmatpush1.bf16.msra.mxu0 %v10161
        %10542 = vmatprep.subr.bf16.mxu0 %v10164
        %10543 = vmatpush1.bf16.msra.mxu0 %v10163
        %10544 = vmatprep.subr.bf16.mxu0 %v10166
        %10545 = vmatpush1.bf16.msra.mxu0 %v10165
        %10546 = vmatprep.subr.bf16.mxu0 %v10168
        %10547 = vmatpush1.bf16.msra.mxu0 %v10167
        %10548 = vmatprep.mubr.bf16.mxu0 %v9492
        %10549 = vmatmul.mubr.bf16.gmra.mrb[0].mxu0 %v9491
        %v10550 = vpop.f32.mrb[0].mxu0
        %v10551 = vadd.f32 %v10478, %v10550
        %v10552 = vpop.f32.mrb[0].mxu0
        %v10553 = vadd.f32 %v10480, %v10552
        %v10554 = vpop.f32.mrb[0].mxu0
        %v10555 = vadd.f32 %v10482, %v10554
        %v10556 = vpop.f32.mrb[0].mxu0
        %v10557 = vadd.f32 %v10484, %v10556
        %10558 = vmatprep.mubr.bf16.mxu0 %v9500
        %10559 = vmatmul.mubr.bf16.gmra.mrb[0].mxu0 %v9499
        %v10560 = vpop.f32.mrb[0].mxu0
        %v10561 = vadd.f32 %v10488, %v10560
        %v10562 = vpop.f32.mrb[0].mxu0
        %v10563 = vadd.f32 %v10490, %v10562
        %v10564 = vpop.f32.mrb[0].mxu0
        %v10565 = vadd.f32 %v10492, %v10564
        %v10566 = vpop.f32.mrb[0].mxu0
        %v10567 = vadd.f32 %v10494, %v10566
        %10568 = vmatprep.mubr.bf16.mxu0 %v9508
        %10569 = vmatmul.mubr.bf16.gmra.mrb[0].mxu0 %v9507
        %v10570 = vpop.f32.mrb[0].mxu0
        %v10571 = vadd.f32 %v10498, %v10570
        %v10572 = vpop.f32.mrb[0].mxu0
        %v10573 = vadd.f32 %v10500, %v10572
        %v10574 = vpop.f32.mrb[0].mxu0
        %v10575 = vadd.f32 %v10502, %v10574
        %v10576 = vpop.f32.mrb[0].mxu0
        %v10577 = vadd.f32 %v10504, %v10576
        %10578 = vmatprep.mubr.bf16.mxu0 %v9516
        %10579 = vmatmul.mubr.bf16.gmra.mrb[0].mxu0 %v9515
        %v10580 = vpop.f32.mrb[0].mxu0
        %v10581 = vadd.f32 %v10508, %v10580
        %v10582 = vpop.f32.mrb[0].mxu0
        %v10583 = vadd.f32 %v10510, %v10582
        %v10584 = vpop.f32.mrb[0].mxu0
        %v10585 = vadd.f32 %v10512, %v10584
        %v10586 = vpop.f32.mrb[0].mxu0
        %v10587 = vadd.f32 %v10514, %v10586
        %10588 = vdwg.mxu0
        %v10589 = vadd.f32 %v8295, %v10551
        %v10590 = vadd.f32 %v8296, %v10553
        %v10591 = vadd.f32 %v8297, %v10555
        %v10592 = vadd.f32 %v8298, %v10557
        %v10593 = vadd.f32 %v8299, %v10561
        %v10594 = vadd.f32 %v8300, %v10563
        %v10595 = vadd.f32 %v8301, %v10565
        %v10596 = vadd.f32 %v8302, %v10567
        %v10597 = vadd.f32 %v8303, %v10571
        %v10598 = vadd.f32 %v8304, %v10573
        %v10599 = vadd.f32 %v8305, %v10575
        %v10600 = vadd.f32 %v8306, %v10577
        %v10601 = vadd.f32 %v8307, %v10581
        %v10602 = vadd.f32 %v8308, %v10583
        %v10603 = vadd.f32 %v8309, %v10585
        %v10604 = vadd.f32 %v8310, %v10587
        %v10605 = vadd.f32 %v10589, %v10590
        %10606 = vadd.xlane.f32.xlu0 %v10605
        %v10607 = vpop.xlane.xlu0 %10606
        %v10608 = vadd.f32 %v10591, %v10592
        %10609 = vadd.xlane.f32.xlu0 %v10608
        %v10610 = vpop.xlane.xlu0 %10609
        %v10611 = vadd.f32 %v10593, %v10594
        %10612 = vadd.xlane.f32.xlu0 %v10611
        %v10613 = vpop.xlane.xlu0 %10612
        %v10614 = vadd.f32 %v10595, %v10596
        %10615 = vadd.xlane.f32.xlu0 %v10614
        %v10616 = vpop.xlane.xlu0 %10615
        %v10617 = vadd.f32 %v10597, %v10598
        %10618 = vadd.xlane.f32.xlu0 %v10617
        %v10619 = vpop.xlane.xlu0 %10618
        %v10620 = vadd.f32 %v10599, %v10600
        %10621 = vadd.xlane.f32.xlu0 %v10620
        %v10622 = vpop.xlane.xlu0 %10621
        %v10623 = vadd.f32 %v10601, %v10602
        %10624 = vadd.xlane.f32.xlu0 %v10623
        %v10625 = vpop.xlane.xlu0 %10624
        %v10626 = vadd.f32 %v10603, %v10604
        %10627 = vadd.xlane.f32.xlu0 %v10626
        %v10628 = vpop.xlane.xlu0 %10627
        %v10629 = vmul.f32 %v10607, %v8150
        %v10630 = vmul.f32 %v10610, %v8150
        %v10631 = vmul.f32 %v10613, %v8150
        %v10632 = vmul.f32 %v10616, %v8150
        %v10633 = vmul.f32 %v10619, %v8150
        %v10634 = vmul.f32 %v10622, %v8150
        %v10635 = vmul.f32 %v10625, %v8150
        %v10636 = vmul.f32 %v10628, %v8150
        %v10637 = vsub.f32 %v10589, %v10629
        %v10638 = vsub.f32 %v10590, %v10629
        %v10639 = vsub.f32 %v10591, %v10630
        %v10640 = vsub.f32 %v10592, %v10630
        %v10641 = vsub.f32 %v10593, %v10631
        %v10642 = vsub.f32 %v10594, %v10631
        %v10643 = vsub.f32 %v10595, %v10632
        %v10644 = vsub.f32 %v10596, %v10632
        %v10645 = vsub.f32 %v10597, %v10633
        %v10646 = vsub.f32 %v10598, %v10633
        %v10647 = vsub.f32 %v10599, %v10634
        %v10648 = vsub.f32 %v10600, %v10634
        %v10649 = vsub.f32 %v10601, %v10635
        %v10650 = vsub.f32 %v10602, %v10635
        %v10651 = vsub.f32 %v10603, %v10636
        %v10652 = vsub.f32 %v10604, %v10636
        %v10653 = vmul.f32 %v10637, %v10637
        %v10654 = vmul.f32 %v10638, %v10638
        %v10655 = vmul.f32 %v10639, %v10639
        %v10656 = vmul.f32 %v10640, %v10640
        %v10657 = vmul.f32 %v10641, %v10641
        %v10658 = vmul.f32 %v10642, %v10642
        %v10659 = vmul.f32 %v10643, %v10643
        %v10660 = vmul.f32 %v10644, %v10644
        %v10661 = vmul.f32 %v10645, %v10645
        %v10662 = vmul.f32 %v10646, %v10646
        %v10663 = vmul.f32 %v10647, %v10647
        %v10664 = vmul.f32 %v10648, %v10648
        %v10665 = vmul.f32 %v10649, %v10649
        %v10666 = vmul.f32 %v10650, %v10650
        %v10667 = vmul.f32 %v10651, %v10651
        %v10668 = vmul.f32 %v10652, %v10652
        %v10669 = vadd.f32 %v10653, %v10654
        %10670 = vadd.xlane.f32.xlu0 %v10669
        %v10671 = vpop.xlane.xlu0 %10670
        %v10672 = vadd.f32 %v10655, %v10656
        %10673 = vadd.xlane.f32.xlu0 %v10672
        %v10674 = vpop.xlane.xlu0 %10673
        %v10675 = vadd.f32 %v10657, %v10658
        %10676 = vadd.xlane.f32.xlu0 %v10675
        %v10677 = vpop.xlane.xlu0 %10676
        %v10678 = vadd.f32 %v10659, %v10660
        %10679 = vadd.xlane.f32.xlu0 %v10678
        %v10680 = vpop.xlane.xlu0 %10679
        %v10681 = vadd.f32 %v10661, %v10662
        %10682 = vadd.xlane.f32.xlu0 %v10681
        %v10683 = vpop.xlane.xlu0 %10682
        %v10684 = vadd.f32 %v10663, %v10664
        %10685 = vadd.xlane.f32.xlu0 %v10684
        %v10686 = vpop.xlane.xlu0 %10685
        %v10687 = vadd.f32 %v10665, %v10666
        %10688 = vadd.xlane.f32.xlu0 %v10687
        %v10689 = vpop.xlane.xlu0 %10688
        %v10690 = vadd.f32 %v10667, %v10668
        %10691 = vadd.xlane.f32.xlu0 %v10690
        %v10692 = vpop.xlane.xlu0 %10691
        %v10693 = vmul.f32 %v10671, %v8150
        %v10694 = vmul.f32 %v10674, %v8150
        %v10695 = vmul.f32 %v10677, %v8150
        %v10696 = vmul.f32 %v10680, %v8150
        %v10697 = vmul.f32 %v10683, %v8150
        %v10698 = vmul.f32 %v10686, %v8150
        %v10699 = vmul.f32 %v10689, %v8150
        %v10700 = vmul.f32 %v10692, %v8150
        %v10701 = vadd.f32 %v10693, 1e-05
        %v10702 = vadd.f32 %v10694, 1e-05
        %v10703 = vadd.f32 %v10695, 1e-05
        %v10704 = vadd.f32 %v10696, 1e-05
        %v10705 = vadd.f32 %v10697, 1e-05
        %v10706 = vadd.f32 %v10698, 1e-05
        %v10707 = vadd.f32 %v10699, 1e-05
        %v10708 = vadd.f32 %v10700, 1e-05
        %v10709 = vrsqrt.pop %v10701
        %v10710 = vrsqrt.pop %v10702
        %v10711 = vrsqrt.pop %v10703
        %v10712 = vrsqrt.pop %v10704
        %v10713 = vrsqrt.pop %v10705
        %v10714 = vrsqrt.pop %v10706
        %v10715 = vrsqrt.pop %v10707
        %v10716 = vrsqrt.pop %v10708
        %v10717 = vmul.f32 %v10637, %v10709
        %v10718 = vmul.f32 %v10638, %v10709
        %v10719 = vmul.f32 %v10639, %v10710
        %v10720 = vmul.f32 %v10640, %v10710
        %v10721 = vmul.f32 %v10641, %v10711
        %v10722 = vmul.f32 %v10642, %v10711
        %v10723 = vmul.f32 %v10643, %v10712
        %v10724 = vmul.f32 %v10644, %v10712
        %v10725 = vmul.f32 %v10645, %v10713
        %v10726 = vmul.f32 %v10646, %v10713
        %v10727 = vmul.f32 %v10647, %v10714
        %v10728 = vmul.f32 %v10648, %v10714
        %v10729 = vmul.f32 %v10649, %v10715
        %v10730 = vmul.f32 %v10650, %v10715
        %v10731 = vmul.f32 %v10651, %v10716
        %v10732 = vmul.f32 %v10652, %v10716
        %v10733 = vld [vmem:[%s13] sm:$0x3]
        %v10735 = vlaneseq
        %v10736 = vshrl.u32 %v10735, 7
        %v10737 = vsub.s32 0, %v10736
        %v10738 = vrot.slane %v10733, %v10737
        %v10739 = vlaneseq
        %v10740 = vshrl.u32 %v10739, 7
        %v10741 = vsub.s32 1, %v10740
        %v10742 = vrot.slane %v10733, %v10741
        %v10745 = vmul.f32 %v10717, %v10738
        %v10746 = vmul.f32 %v10718, %v10742
        %v10747 = vmul.f32 %v10719, %v10738
        %v10748 = vmul.f32 %v10720, %v10742
        %v10749 = vmul.f32 %v10721, %v10738
        %v10750 = vmul.f32 %v10722, %v10742
        %v10751 = vmul.f32 %v10723, %v10738
        %v10752 = vmul.f32 %v10724, %v10742
        %v10753 = vmul.f32 %v10725, %v10738
        %v10754 = vmul.f32 %v10726, %v10742
        %v10755 = vmul.f32 %v10727, %v10738
        %v10756 = vmul.f32 %v10728, %v10742
        %v10757 = vmul.f32 %v10729, %v10738
        %v10758 = vmul.f32 %v10730, %v10742
        %v10759 = vmul.f32 %v10731, %v10738
        %v10760 = vmul.f32 %v10732, %v10742
        %v10761 = vld [vmem:[%s14] sm:$0x3]
        %v10763 = vlaneseq
        %v10764 = vshrl.u32 %v10763, 7
        %v10765 = vsub.s32 0, %v10764
        %v10766 = vrot.slane %v10761, %v10765
        %v10767 = vlaneseq
        %v10768 = vshrl.u32 %v10767, 7
        %v10769 = vsub.s32 1, %v10768
        %v10770 = vrot.slane %v10761, %v10769
        %v10773 = vadd.f32 %v10745, %v10766
        %v10774 = vadd.f32 %v10746, %v10770
        %v10775 = vadd.f32 %v10747, %v10766
        %v10776 = vadd.f32 %v10748, %v10770
        %v10777 = vadd.f32 %v10749, %v10766
        %v10778 = vadd.f32 %v10750, %v10770
        %v10779 = vadd.f32 %v10751, %v10766
        %v10780 = vadd.f32 %v10752, %v10770
        %v10781 = vadd.f32 %v10753, %v10766
        %v10782 = vadd.f32 %v10754, %v10770
        %v10783 = vadd.f32 %v10755, %v10766
        %v10784 = vadd.f32 %v10756, %v10770
        %v10785 = vadd.f32 %v10757, %v10766
        %v10786 = vadd.f32 %v10758, %v10770
        %v10787 = vadd.f32 %v10759, %v10766
        %v10788 = vadd.f32 %v10760, %v10770
        %10789 = vst [vmem:[%s699] sm:$0xff] %v10773
        %10790 = vst [vmem:[%s699 + $0x8] sm:$0xff] %v10774
        %10791 = vst [vmem:[%s699 + $0x10] sm:$0xff] %v10775
        %10792 = vst [vmem:[%s699 + $0x18] sm:$0xff] %v10776
        %10793 = vst [vmem:[%s699 + $0x20] sm:$0xff] %v10777
        %10794 = vst [vmem:[%s699 + $0x28] sm:$0xff] %v10778
        %10795 = vst [vmem:[%s699 + $0x30] sm:$0xff] %v10779
        %10796 = vst [vmem:[%s699 + $0x38] sm:$0xff] %v10780
        %10797 = vst [vmem:[%s699 + $0x40] sm:$0xff] %v10781
        %10798 = vst [vmem:[%s699 + $0x48] sm:$0xff] %v10782
        %10799 = vst [vmem:[%s699 + $0x50] sm:$0xff] %v10783
        %10800 = vst [vmem:[%s699 + $0x58] sm:$0xff] %v10784
        %10801 = vst [vmem:[%s699 + $0x60] sm:$0xff] %v10785
        %10802 = vst [vmem:[%s699 + $0x68] sm:$0xff] %v10786
        %10803 = vst [vmem:[%s699 + $0x70] sm:$0xff] %v10787
        %10804 = vst [vmem:[%s699 + $0x78] sm:$0xff] %v10788
        %s10805 = sand.u32 %s394, 1
        %s10806 = scalar_lea.sflag [#allocation6], %s10805
        %s10807 = sand.u32 %s394, 1
        %s10808 = smul.addr %s10807, 128
        %s10809 = scalar_lea.vmem [#allocation19], %s10808
        // Predicated region
        $region121: #{tpu_custom_call.1} parent=79 // pred_check
          %p10810 = pneg %p404
        $region122: #{tpu_custom_call.1} parent=79 // pred_check_branch
          %10812 = sbr.rel (%p10810) target = $region124
        $region123: #{tpu_custom_call.1} parent=79 // pred_region
          %s10813 = smul.u32 8, %s43
          %s10815 = ssub.s32 2048, 2048
          %10816 = vsyncadd %s10806, %s10815
          %s10817 = smul.addr %s10813, 2
          %s10818 = smul.addr %s42, 32
          %s10819 = sadd.s32 %s10817, %s10818
          %s10820 = smul.addr %s10819, 128
          %s10821 = scalar_lea.hbm %s15, %s10820
          %s10822 = sshll.u32 %s10809, 4
          %s10823 = int_to_ptr.vmem [resolvable:$true] %s10822
          %10828 = dma.vmem_to_hbm [thread:$0]  %s10823, 2048, %s10821, %s10806, 256, 256, 16
        $region124: #{tpu_custom_call.1} parent=79 // pred_fallthru
          _
      $region80: #{tpu_custom_call.1} parent=5 // pred_fallthru
        _
      %p10829 = scmp.le.s32.totalorder 2, %s33
      // Predicated region
      $region125: #{tpu_custom_call.1} parent=5 // pred_check
        %p10830 = pneg %p10829
      $region126: #{tpu_custom_call.1} parent=5 // pred_check_branch
        %10832 = sbr.rel (%p10830) target = $region128
      $region127: #{tpu_custom_call.1} parent=5 // pred_region
        %s10833 = ssub.s32 %s33, 2
        // Predicated region
        $region129: #{tpu_custom_call.1} parent=127 // pred_check
          %p10834 = pneg %p410
        $region130: #{tpu_custom_call.1} parent=127 // pred_check_branch
          %10836 = sbr.rel (%p10834) target = $region132
        $region131: #{tpu_custom_call.1} parent=127 // pred_region
          %s10837 = sand.u32 %s395, 1
          %s10838 = scalar_lea.sflag [#allocation6], %s10837
          %s10839 = sand.u32 %s395, 1
          %s10840 = smul.addr %s10839, 128
          %s10841 = scalar_lea.vmem [#allocation19], %s10840
          %10842 = dma.done %s10838, 2048
        $region132: #{tpu_custom_call.1} parent=127 // pred_fallthru
          _
      $region128: #{tpu_custom_call.1} parent=5 // pred_fallthru
        _
    $region6: #{tpu_custom_call.1} parent=1 // loop_footer
      %s37 = sadd.s32 1, %s33
    $region7: #{tpu_custom_call.1} parent=1 // loop_footer_branch
      %32 = sbr.rel target = $region3
    $region8: #{tpu_custom_call.1} parent=1 // loop_exit
      _
    %10843 = vsyncpa [#allocation5], 1
    %s10844 = scalar_lea.sflag [#allocation5], 1
    %10845 = vsyncpa %s10844, 1
    %10846 = vsyncpa [#allocation8], 1
    %s10847 = scalar_lea.sflag [#allocation8], 1
    %10848 = vsyncpa %s10847, 1
    %10849 = vsyncpa [#allocation11], 1
    %10850 = vsyncpa [#allocation14], 1
    %10851 = vsyncpa [#allocation17], 1
    %10852 = vsyncpa [#allocation6], 1
    %s10853 = scalar_lea.sflag [#allocation6], 1
    %10854 = vsyncpa %s10853, 1

</llo_original>
